<compile_context>
chip_gen: v5e
topology: v5e:2x2
jax: 0.10.0
libtpu: 0.0.40
codegen_flags: <defaults>
</compile_context>

<pallas_src>
import functools
import math

import jax
import jax.numpy as jnp
from jax import lax
from jax.experimental import pallas as pl
from jax.experimental.pallas import tpu as pltpu

_NEG_INF = -1e30  # finite "minus infinity": exp underflows to 0, no NaN, f32-safe


def _mha_kernel(q_ref, k_ref, v_ref, o_ref, m_sc, l_sc, acc_sc, qs_sc,
                *, scale, causal, tq, tk, hq, hk, d):
    qi = pl.program_id(1)
    ki = pl.program_id(2)
    rep = hq // hk                      # query heads per kv head (GQA)

    @pl.when(ki == 0)
    def _init():
        m_sc[...] = jnp.full(m_sc.shape, _NEG_INF, dtype=jnp.float32)
        l_sc[...] = jnp.zeros(l_sc.shape, dtype=jnp.float32)
        acc_sc[...] = jnp.zeros(acc_sc.shape, dtype=jnp.float32)
        # q block is resident across ki: scale it and cast to bf16 exactly once.
        qs_sc[...] = (q_ref[0].astype(jnp.float32) * scale).astype(jnp.bfloat16)

    def compute(apply_mask):
        if apply_mask:
            row = qi * tq + lax.broadcasted_iota(jnp.int32, (tq, tk), 0)
            col = ki * tk + lax.broadcasted_iota(jnp.int32, (tq, tk), 1)
            keep = row >= col           # shared across all heads

        # TODO(synk): for very large Hq (e.g. 32) switch this static unroll to a
        # lax.fori_loop over kv groups to bound live ranges and compile time.
        for g in range(hk):
            # One K/V slab per kv group, reused by its `rep` query heads (GQA).
            k_g = k_ref[0, :, g * d:(g + 1) * d].astype(jnp.bfloat16)     # (tk, d)
            v_g = v_ref[0, :, g * d:(g + 1) * d].astype(jnp.bfloat16)     # (tk, d)
            q_g = qs_sc[:, g * rep * d:(g + 1) * rep * d]                 # (tq, rep*d)
            m_prev_g = m_sc[:, g * rep:(g + 1) * rep]                     # (tq, rep)
            l_prev_g = l_sc[:, g * rep:(g + 1) * rep]
            acc_prev_g = acc_sc[:, g * rep * d:(g + 1) * rep * d]         # (tq, rep*d)

            m_cols, l_cols, acc_cols = [], [], []
            for r in range(rep):
                q_h = q_g[:, r * d:(r + 1) * d]                           # (tq, d) bf16
                # scores: bf16 x bf16 -> f32 accumulation on the MXU, no k.T.
                s = lax.dot_general(q_h, k_g, (((1,), (1,)), ((), ())),
                                    preferred_element_type=jnp.float32)   # (tq, tk)
                if apply_mask:
                    s = jnp.where(keep, s, _NEG_INF)                      # mask in f32
                m_prev = m_prev_g[:, r:r + 1]
                m_new = jnp.maximum(m_prev, s.max(axis=-1, keepdims=True))
                alpha = jnp.exp(m_prev - m_new)
                p = jnp.exp(s - m_new)
                l_cols.append(alpha * l_prev_g[:, r:r + 1]
                              + p.sum(axis=-1, keepdims=True))
                pv = jnp.dot(p.astype(jnp.bfloat16), v_g,
                             preferred_element_type=jnp.float32)          # (tq, d)
                acc_cols.append(alpha * acc_prev_g[:, r * d:(r + 1) * d] + pv)
                m_cols.append(m_new)

            # One lane-dense, group-aligned store per state per group.
            m_sc[:, g * rep:(g + 1) * rep] = jnp.concatenate(m_cols, axis=-1)
            l_sc[:, g * rep:(g + 1) * rep] = jnp.concatenate(l_cols, axis=-1)
            acc_sc[:, g * rep * d:(g + 1) * rep * d] = jnp.concatenate(acc_cols,
                                                                       axis=-1)

    if causal:
        any_visible = qi * tq + (tq - 1) >= ki * tk       # block not fully masked
        fully_visible = qi * tq >= ki * tk + (tk - 1)     # block needs no mask
        # Fully-masked blocks: skip everything (their K/V DMA is also elided by
        # the clamped index_map in the wrapper).
        pl.when(jnp.logical_and(any_visible, jnp.logical_not(fully_visible)))(
            lambda: compute(True))
        pl.when(fully_visible)(lambda: compute(False))
    else:
        compute(False)

    @pl.when(ki == pl.num_programs(2) - 1)
    def _finalize():
        # Single vectorized approximate reciprocal over all heads (EUP).
        inv_l = pl.reciprocal(l_sc[...], approx=True)                    # (tq, hq)
        inv_cols = jnp.concatenate(
            [jnp.broadcast_to(inv_l[:, h:h + 1], (tq, d)) for h in range(hq)],
            axis=-1)                                                      # (tq, hq*d)
        o_ref[0] = (acc_sc[...] * inv_cols).astype(o_ref.dtype)


def _pick_tile(s, target):
    """Largest multiple of 8 that divides s and is <= target (fallback: s)."""
    t = min(s, target)
    t -= t % 8
    while t >= 8:
        if s % t == 0:
            return t
        t -= 8
    return s


def _default_tiles(sq, sk, hq, d):
    tq_t, tk_t = 256, 256
    try:
        kind = jax.devices()[0].device_kind.lower()
    except Exception:
        kind = ""
    if "v5 lite" in kind or "v5lite" in kind or "v5e" in kind:
        tk_t = 128   # v5e: 1 vst slot + 128-wide MXU -> contain score-tile spills
    if hq * d >= 4096:
        tq_t = 128   # v7x: 64 MiB VMEM; wide head slabs need smaller q tiles
    return _pick_tile(sq, tq_t), _pick_tile(sk, tk_t)


def flash_attn_pallas(q, k, v, *, causal=False, softmax_scale=None,
                      tq=None, tk=None):
    """q: (B, Sq, Hq, D); k, v: (B, Sk, Hk, D) -> out: (B, Sq, Hq, D)."""
    B, Sq, Hq, D = q.shape
    Bk, Sk, Hk, Dk = k.shape
    assert Bk == B and Dk == D and v.shape == k.shape
    assert Hq % Hk == 0, "query heads must be a multiple of kv heads"
    scale = float(softmax_scale) if softmax_scale else 1.0 / math.sqrt(D)

    # Free reshapes (heads contiguous with D): lane-dense blocks, no GQA repeat.
    qf = q.reshape(B, Sq, Hq * D)
    kf = k.reshape(B, Sk, Hk * D)
    vf = v.reshape(B, Sk, Hk * D)

    dtq, dtk = _default_tiles(Sq, Sk, Hq, D)
    tq = dtq if tq is None else tq
    tk = dtk if tk is None else tk
    assert Sq % tq == 0 and Sk % tk == 0, "tile sizes must divide sequence lengths"

    if causal:
        # TODO(synk): causal mask is top-left aligned (row i sees keys <= i);
        # kv-cache style bottom-right alignment for Sq != Sk is not implemented.
        # Clamp: once a q tile has seen its last visible k block, later ki steps
        # revisit that resident block -> the pipeliner elides their HBM DMA.
        kv_map = lambda b, qi, ki: (b, jnp.minimum(ki, (qi * tq + tq - 1) // tk), 0)
    else:
        kv_map = lambda b, qi, ki: (b, ki, 0)

    kernel = functools.partial(
        _mha_kernel, scale=scale, causal=bool(causal),
        tq=tq, tk=tk, hq=Hq, hk=Hk, d=D)

    # Rough per-step VMEM budget (double-buffered blocks + scratch), used to set
    # an explicit limit (v7x: 64 MiB physical VMEM, 32 MiB scoped default).
    in_bytes = jnp.dtype(q.dtype).itemsize
    est = (2 * tq * Hq * D * in_bytes          # q blocks (double-buffered)
           + 2 * tq * Hq * D * in_bytes        # out blocks
           + 4 * tk * Hk * D * in_bytes        # k + v blocks
           + tq * Hq * D * 4                   # f32 accumulator
           + tq * Hq * D * 2                   # bf16 scaled-q scratch
           + 2 * tq * 128 * 4)                 # m / l (lane-padded)
    vmem_limit = int(min(max(2 * est, 32 * 1024 * 1024), 64 * 1024 * 1024))

    out = pl.pallas_call(
        kernel,
        out_shape=jax.ShapeDtypeStruct((B, Sq, Hq * D), q.dtype),
        grid_spec=pltpu.PrefetchScalarGridSpec(
            num_scalar_prefetch=0,
            grid=(B, Sq // tq, Sk // tk),
            in_specs=[
                pl.BlockSpec((1, tq, Hq * D), lambda b, qi, ki: (b, qi, 0)),
                pl.BlockSpec((1, tk, Hk * D), kv_map),
                pl.BlockSpec((1, tk, Hk * D), kv_map),
            ],
            out_specs=pl.BlockSpec((1, tq, Hq * D), lambda b, qi, ki: (b, qi, 0)),
            scratch_shapes=[
                pltpu.VMEM((tq, Hq), jnp.float32),       # running max (heads on lanes)
                pltpu.VMEM((tq, Hq), jnp.float32),       # running denominator
                pltpu.VMEM((tq, Hq * D), jnp.float32),   # output accumulator
                pltpu.VMEM((tq, Hq * D), jnp.bfloat16),  # scaled + bf16-cast q
            ],
        ),
        compiler_params=pltpu.CompilerParams(
            dimension_semantics=("parallel", "parallel", "arbitrary"),
            vmem_limit_bytes=vmem_limit),
    )(qf, kf, vf)

    # TODO(synk): if K/V DMA is still exposed after these changes, raise the k/v
    # BlockSpec pipeline depth via pipeline_mode=pl.Buffered(3).
    return out.reshape(B, Sq, Hq, D)


def _reference_attn(q, k, v, *, causal=False, softmax_scale=None):
    """Pure-JAX reference; mirrors the kernel's bf16 matmul operands."""
    B, Sq, Hq, D = q.shape
    _, Sk, Hk, _ = k.shape
    scale = softmax_scale if softmax_scale else 1.0 / math.sqrt(D)
    if Hk != Hq:
        rep = Hq // Hk
        k = jnp.repeat(k, rep, axis=2)
        v = jnp.repeat(v, rep, axis=2)
    qb, kb, vb = (x.astype(jnp.bfloat16) for x in (q, k, v))
    s = jnp.einsum("bqhd,bkhd->bhqk", qb, kb,
                   preferred_element_type=jnp.float32) * scale
    if causal:
        mask = jnp.tril(jnp.ones((Sq, Sk), dtype=bool))
        s = jnp.where(mask[None, None], s, -jnp.inf)
    p = jax.nn.softmax(s, axis=-1)
    o = jnp.einsum("bhqk,bkhd->bqhd", p.astype(jnp.bfloat16), vb,
                   preferred_element_type=jnp.float32)
    return o.astype(q.dtype)


class MHALayer:
    """Pallas port of the PyTorch MHALayer wrapper (no parameters)."""

    def __init__(self, causal=False, softmax_scale=None):
        self.causal = causal
        self.softmax_scale = softmax_scale

    def __call__(self, q, k, v):
        return flash_attn_pallas(q, k, v, causal=self.causal,
                                 softmax_scale=self.softmax_scale)


if __name__ == "__main__":
    # Small TPU-tile-friendly shapes with GQA: B=2, Sq=Sk=256, Hq=4, Hk=2, D=64.
    B, S, Hq, Hk, D = 2, 256, 4, 2, 64
    key = jax.random.PRNGKey(0)
    kq, kk, kv = jax.random.split(key, 3)
    q = jax.random.normal(kq, (B, S, Hq, D), dtype=jnp.float32).astype(jnp.bfloat16)
    k = jax.random.normal(kk, (B, S, Hk, D), dtype=jnp.float32).astype(jnp.bfloat16)
    v = jax.random.normal(kv, (B, S, Hk, D), dtype=jnp.float32).astype(jnp.bfloat16)

    # Non-causal, default (large) tiles, bf16 inputs.
    layer = MHALayer(causal=False, softmax_scale=None)
    out = jax.block_until_ready(layer(q, k, v))
    ref = _reference_attn(q, k, v, causal=False)
    assert out.shape == (B, S, Hq, D)
    assert jnp.allclose(out.astype(jnp.float32), ref.astype(jnp.float32),
                        atol=2e-2, rtol=2e-2), "non-causal mismatch"

    # Causal, f32 inputs, smaller tiles: exercises multi-step online softmax,
    # the masked / unmasked / fully-skipped block paths, and the DMA clamp.
    qf32, kf32, vf32 = (x.astype(jnp.float32) for x in (q, k, v))
    out_c = jax.block_until_ready(
        flash_attn_pallas(qf32, kf32, vf32, causal=True, tq=128, tk=128))
    ref_c = _reference_attn(qf32, kf32, vf32, causal=True)
    assert jnp.allclose(out_c, ref_c, atol=2e-2, rtol=2e-2), "causal mismatch"

    print("KERNEL_OK")
</pallas_src>

<mosaic_0001>
module attributes {stable_mosaic.version = 11 : i64} {
  func.func @_mha_kernel(%arg0: i32, %arg1: i32, %arg2: i32, %arg3: memref<1x256x256xbf16, #tpu.memory_space<vmem>>, %arg4: memref<1x256x128xbf16, #tpu.memory_space<vmem>>, %arg5: memref<1x256x128xbf16, #tpu.memory_space<vmem>>, %arg6: memref<1x256x256xbf16, #tpu.memory_space<vmem>>, %arg7: memref<256x4xf32, #tpu.memory_space<vmem>>, %arg8: memref<256x4xf32, #tpu.memory_space<vmem>>, %arg9: memref<256x256xf32, #tpu.memory_space<vmem>>, %arg10: memref<256x256xbf16, #tpu.memory_space<vmem>>) attributes {dimension_semantics = [#tpu.dimension_semantics<parallel>, #tpu.dimension_semantics<parallel>, #tpu.dimension_semantics<arbitrary>], iteration_bounds = array<i64: 2, 1, 1>, scalar_prefetch = 0 : i64, scratch_operands = 4 : i64, tpu.core_type = #tpu.core_type<tc>, window_params = [{transform_indices = @transform_0, window_bounds = array<i64: 1, 256, 256>}, {transform_indices = @transform_1, window_bounds = array<i64: 1, 256, 128>}, {transform_indices = @transform_2, window_bounds = array<i64: 1, 256, 128>}, {transform_indices = @transform_3, window_bounds = array<i64: 1, 256, 256>}]} {
    %c0_i32 = arith.constant 0 : i32
    %0 = arith.cmpi eq, %arg2, %c0_i32 : i32
    %1 = arith.extui %0 : i1 to i32
    %c0_i32_0 = arith.constant 0 : i32
    %2 = arith.cmpi ne, %1, %c0_i32_0 : i32
    scf.if %2 {
      %cst_54 = arith.constant -1.000000e+30 : f32
      %122 = vector.broadcast %cst_54 : f32 to vector<256x4xf32>
      %c0_55 = arith.constant 0 : index
      %c0_56 = arith.constant 0 : index
      %123 = vector.load %arg7[%c0_55, %c0_56] : memref<256x4xf32, #tpu.memory_space<vmem>>, vector<256x4xf32>
      tpu.vector_store %arg7[%c0_55, %c0_56], %122 {strides = array<i32>} : memref<256x4xf32, #tpu.memory_space<vmem>>, vector<256x4xf32>,
      %cst_57 = arith.constant 0.000000e+00 : f32
      %124 = vector.broadcast %cst_57 : f32 to vector<256x4xf32>
      %c0_58 = arith.constant 0 : index
      %c0_59 = arith.constant 0 : index
      %125 = vector.load %arg8[%c0_58, %c0_59] : memref<256x4xf32, #tpu.memory_space<vmem>>, vector<256x4xf32>
      tpu.vector_store %arg8[%c0_58, %c0_59], %124 {strides = array<i32>} : memref<256x4xf32, #tpu.memory_space<vmem>>, vector<256x4xf32>,
      %cst_60 = arith.constant 0.000000e+00 : f32
      %126 = vector.broadcast %cst_60 : f32 to vector<256x256xf32>
      %c0_61 = arith.constant 0 : index
      %c0_62 = arith.constant 0 : index
      %127 = vector.load %arg9[%c0_61, %c0_62] : memref<256x256xf32, #tpu.memory_space<vmem>>, vector<256x256xf32>
      tpu.vector_store %arg9[%c0_61, %c0_62], %126 {strides = array<i32>} : memref<256x256xf32, #tpu.memory_space<vmem>>, vector<256x256xf32>,
      %c0_63 = arith.constant 0 : index
      %c0_64 = arith.constant 0 : index
      %c0_65 = arith.constant 0 : index
      %128 = vector.load %arg3[%c0_63, %c0_64, %c0_65] : memref<1x256x256xbf16, #tpu.memory_space<vmem>>, vector<1x256x256xbf16>
      %129 = vector.shape_cast %128 : vector<1x256x256xbf16> to vector<256x256xbf16>
      %130 = arith.extf %129 : vector<256x256xbf16> to vector<256x256xf32>
      %cst_66 = arith.constant 1.250000e-01 : f32
      %131 = vector.broadcast %cst_66 : f32 to vector<256x256xf32>
      %132 = arith.mulf %130, %131 : vector<256x256xf32>
      %133 = arith.truncf %132 : vector<256x256xf32> to vector<256x256xbf16>
      %c0_67 = arith.constant 0 : index
      %c0_68 = arith.constant 0 : index
      %134 = vector.load %arg10[%c0_67, %c0_68] : memref<256x256xbf16, #tpu.memory_space<vmem>>, vector<256x256xbf16>
      tpu.vector_store %arg10[%c0_67, %c0_68], %133 {strides = array<i32>} : memref<256x256xbf16, #tpu.memory_space<vmem>>, vector<256x256xbf16>,
    } else {
    }
    %c0 = arith.constant 0 : index
    %c0_1 = arith.constant 0 : index
    %c0_2 = arith.constant 0 : index
    %3 = vector.load %arg4[%c0, %c0_1, %c0_2] : memref<1x256x128xbf16, #tpu.memory_space<vmem>>, vector<1x256x64xbf16>
    %4 = vector.shape_cast %3 : vector<1x256x64xbf16> to vector<256x64xbf16>
    %c0_3 = arith.constant 0 : index
    %c0_4 = arith.constant 0 : index
    %c0_5 = arith.constant 0 : index
    %5 = vector.load %arg5[%c0_3, %c0_4, %c0_5] : memref<1x256x128xbf16, #tpu.memory_space<vmem>>, vector<1x256x64xbf16>
    %6 = vector.shape_cast %5 : vector<1x256x64xbf16> to vector<256x64xbf16>
    %c0_6 = arith.constant 0 : index
    %c0_7 = arith.constant 0 : index
    %7 = vector.load %arg10[%c0_6, %c0_7] : memref<256x256xbf16, #tpu.memory_space<vmem>>, vector<256x128xbf16>
    %c0_8 = arith.constant 0 : index
    %c0_9 = arith.constant 0 : index
    %8 = vector.load %arg7[%c0_8, %c0_9] : memref<256x4xf32, #tpu.memory_space<vmem>>, vector<256x2xf32>
    %c0_10 = arith.constant 0 : index
    %c0_11 = arith.constant 0 : index
    %9 = vector.load %arg8[%c0_10, %c0_11] : memref<256x4xf32, #tpu.memory_space<vmem>>, vector<256x2xf32>
    %c0_12 = arith.constant 0 : index
    %c0_13 = arith.constant 0 : index
    %10 = vector.load %arg9[%c0_12, %c0_13] : memref<256x256xf32, #tpu.memory_space<vmem>>, vector<256x128xf32>
    %11 = vector.extract_strided_slice %7 {offsets = [0, 0], sizes = [256, 64], strides = [1, 1]} : vector<256x128xbf16> to vector<256x64xbf16>
    %cst = arith.constant dense<0.000000e+00> : vector<256x256xf32>
    %12 = tpu.matmul %11, %4, %cst {dimension_numbers = #tpu.dot_dimension_numbers<[1], [1], [0], [0], [0, 0, 1, 0], [], []>} : vector<256x64xbf16>, vector<256x64xbf16>, vector<256x256xf32> -> vector<256x256xf32>
    %13 = vector.extract_strided_slice %8 {offsets = [0, 0], sizes = [256, 1], strides = [1, 1]} : vector<256x2xf32> to vector<256x1xf32>
    %cst_14 = arith.constant dense<0xFF800000> : vector<256xf32>
    %14 = vector.multi_reduction <maximumf>, %12, %cst_14 [1] : vector<256x256xf32> to vector<256xf32>
    %15 = vector.shape_cast %14 : vector<256xf32> to vector<256x1xf32>
    %16 = arith.maximumf %13, %15 : vector<256x1xf32>
    %17 = arith.subf %13, %16 : vector<256x1xf32>
    %18 = math.exp %17 : vector<256x1xf32>
    %19 = vector.broadcast %16 : vector<256x1xf32> to vector<256x256xf32>
    %20 = arith.subf %12, %19 : vector<256x256xf32>
    %21 = math.exp %20 : vector<256x256xf32>
    %22 = vector.extract_strided_slice %9 {offsets = [0, 0], sizes = [256, 1], strides = [1, 1]} : vector<256x2xf32> to vector<256x1xf32>
    %23 = arith.mulf %18, %22 : vector<256x1xf32>
    %cst_15 = arith.constant dense<0.000000e+00> : vector<256xf32>
    %24 = vector.multi_reduction <add>, %21, %cst_15 [1] : vector<256x256xf32> to vector<256xf32>
    %25 = vector.shape_cast %24 : vector<256xf32> to vector<256x1xf32>
    %26 = arith.addf %23, %25 : vector<256x1xf32>
    %27 = arith.truncf %21 : vector<256x256xf32> to vector<256x256xbf16>
    %cst_16 = arith.constant dense<0.000000e+00> : vector<256x64xf32>
    %28 = tpu.matmul %27, %6, %cst_16 {dimension_numbers = #tpu.dot_dimension_numbers<[1], [0], [0], [1], [0, 0, 1, 1], [], []>} : vector<256x256xbf16>, vector<256x64xbf16>, vector<256x64xf32> -> vector<256x64xf32>
    %29 = vector.extract_strided_slice %10 {offsets = [0, 0], sizes = [256, 64], strides = [1, 1]} : vector<256x128xf32> to vector<256x64xf32>
    %30 = vector.broadcast %18 : vector<256x1xf32> to vector<256x64xf32>
    %31 = arith.mulf %30, %29 : vector<256x64xf32>
    %32 = arith.addf %31, %28 : vector<256x64xf32>
    %33 = vector.extract_strided_slice %7 {offsets = [0, 64], sizes = [256, 64], strides = [1, 1]} : vector<256x128xbf16> to vector<256x64xbf16>
    %cst_17 = arith.constant dense<0.000000e+00> : vector<256x256xf32>
    %34 = tpu.matmul %33, %4, %cst_17 {dimension_numbers = #tpu.dot_dimension_numbers<[1], [1], [0], [0], [0, 0, 1, 0], [], []>} : vector<256x64xbf16>, vector<256x64xbf16>, vector<256x256xf32> -> vector<256x256xf32>
    %35 = vector.extract_strided_slice %8 {offsets = [0, 1], sizes = [256, 1], strides = [1, 1]} : vector<256x2xf32> to vector<256x1xf32>
    %cst_18 = arith.constant dense<0xFF800000> : vector<256xf32>
    %36 = vector.multi_reduction <maximumf>, %34, %cst_18 [1] : vector<256x256xf32> to vector<256xf32>
    %37 = vector.shape_cast %36 : vector<256xf32> to vector<256x1xf32>
    %38 = arith.maximumf %35, %37 : vector<256x1xf32>
    %39 = arith.subf %35, %38 : vector<256x1xf32>
    %40 = math.exp %39 : vector<256x1xf32>
    %41 = vector.broadcast %38 : vector<256x1xf32> to vector<256x256xf32>
    %42 = arith.subf %34, %41 : vector<256x256xf32>
    %43 = math.exp %42 : vector<256x256xf32>
    %44 = vector.extract_strided_slice %9 {offsets = [0, 1], sizes = [256, 1], strides = [1, 1]} : vector<256x2xf32> to vector<256x1xf32>
    %45 = arith.mulf %40, %44 : vector<256x1xf32>
    %cst_19 = arith.constant dense<0.000000e+00> : vector<256xf32>
    %46 = vector.multi_reduction <add>, %43, %cst_19 [1] : vector<256x256xf32> to vector<256xf32>
    %47 = vector.shape_cast %46 : vector<256xf32> to vector<256x1xf32>
    %48 = arith.addf %45, %47 : vector<256x1xf32>
    %49 = arith.truncf %43 : vector<256x256xf32> to vector<256x256xbf16>
    %cst_20 = arith.constant dense<0.000000e+00> : vector<256x64xf32>
    %50 = tpu.matmul %49, %6, %cst_20 {dimension_numbers = #tpu.dot_dimension_numbers<[1], [0], [0], [1], [0, 0, 1, 1], [], []>} : vector<256x256xbf16>, vector<256x64xbf16>, vector<256x64xf32> -> vector<256x64xf32>
    %51 = vector.extract_strided_slice %10 {offsets = [0, 64], sizes = [256, 64], strides = [1, 1]} : vector<256x128xf32> to vector<256x64xf32>
    %52 = vector.broadcast %40 : vector<256x1xf32> to vector<256x64xf32>
    %53 = arith.mulf %52, %51 : vector<256x64xf32>
    %54 = arith.addf %53, %50 : vector<256x64xf32>
    %55 = tpu.concatenate %16, %38 in 1 : vector<256x1xf32>, vector<256x1xf32> -> vector<256x2xf32>
    %c0_21 = arith.constant 0 : index
    %c0_22 = arith.constant 0 : index
    %56 = vector.load %arg7[%c0_21, %c0_22] : memref<256x4xf32, #tpu.memory_space<vmem>>, vector<256x2xf32>
    tpu.vector_store %arg7[%c0_21, %c0_22], %55 {strides = array<i32>} : memref<256x4xf32, #tpu.memory_space<vmem>>, vector<256x2xf32>,
    %57 = tpu.concatenate %26, %48 in 1 : vector<256x1xf32>, vector<256x1xf32> -> vector<256x2xf32>
    %c0_23 = arith.constant 0 : index
    %c0_24 = arith.constant 0 : index
    %58 = vector.load %arg8[%c0_23, %c0_24] : memref<256x4xf32, #tpu.memory_space<vmem>>, vector<256x2xf32>
    tpu.vector_store %arg8[%c0_23, %c0_24], %57 {strides = array<i32>} : memref<256x4xf32, #tpu.memory_space<vmem>>, vector<256x2xf32>,
    %59 = tpu.concatenate %32, %54 in 1 : vector<256x64xf32>, vector<256x64xf32> -> vector<256x128xf32>
    %c0_25 = arith.constant 0 : index
    %c0_26 = arith.constant 0 : index
    %60 = vector.load %arg9[%c0_25, %c0_26] : memref<256x256xf32, #tpu.memory_space<vmem>>, vector<256x128xf32>
    tpu.vector_store %arg9[%c0_25, %c0_26], %59 {strides = array<i32>} : memref<256x256xf32, #tpu.memory_space<vmem>>, vector<256x128xf32>,
    %c0_27 = arith.constant 0 : index
    %c0_28 = arith.constant 0 : index
    %c64 = arith.constant 64 : index
    %61 = vector.load %arg4[%c0_27, %c0_28, %c64] : memref<1x256x128xbf16, #tpu.memory_space<vmem>>, vector<1x256x64xbf16>
    %62 = vector.shape_cast %61 : vector<1x256x64xbf16> to vector<256x64xbf16>
    %c0_29 = arith.constant 0 : index
    %c0_30 = arith.constant 0 : index
    %c64_31 = arith.constant 64 : index
    %63 = vector.load %arg5[%c0_29, %c0_30, %c64_31] : memref<1x256x128xbf16, #tpu.memory_space<vmem>>, vector<1x256x64xbf16>
    %64 = vector.shape_cast %63 : vector<1x256x64xbf16> to vector<256x64xbf16>
    %c0_32 = arith.constant 0 : index
    %c128 = arith.constant 128 : index
    %65 = vector.load %arg10[%c0_32, %c128] : memref<256x256xbf16, #tpu.memory_space<vmem>>, vector<256x128xbf16>
    %c0_33 = arith.constant 0 : index
    %c2 = arith.constant 2 : index
    %66 = vector.load %arg7[%c0_33, %c2] : memref<256x4xf32, #tpu.memory_space<vmem>>, vector<256x2xf32>
    %c0_34 = arith.constant 0 : index
    %c2_35 = arith.constant 2 : index
    %67 = vector.load %arg8[%c0_34, %c2_35] : memref<256x4xf32, #tpu.memory_space<vmem>>, vector<256x2xf32>
    %c0_36 = arith.constant 0 : index
    %c128_37 = arith.constant 128 : index
    %68 = vector.load %arg9[%c0_36, %c128_37] : memref<256x256xf32, #tpu.memory_space<vmem>>, vector<256x128xf32>
    %69 = vector.extract_strided_slice %65 {offsets = [0, 0], sizes = [256, 64], strides = [1, 1]} : vector<256x128xbf16> to vector<256x64xbf16>
    %cst_38 = arith.constant dense<0.000000e+00> : vector<256x256xf32>
    %70 = tpu.matmul %69, %62, %cst_38 {dimension_numbers = #tpu.dot_dimension_numbers<[1], [1], [0], [0], [0, 0, 1, 0], [], []>} : vector<256x64xbf16>, vector<256x64xbf16>, vector<256x256xf32> -> vector<256x256xf32>
    %71 = vector.extract_strided_slice %66 {offsets = [0, 0], sizes = [256, 1], strides = [1, 1]} : vector<256x2xf32> to vector<256x1xf32>
    %cst_39 = arith.constant dense<0xFF800000> : vector<256xf32>
    %72 = vector.multi_reduction <maximumf>, %70, %cst_39 [1] : vector<256x256xf32> to vector<256xf32>
    %73 = vector.shape_cast %72 : vector<256xf32> to vector<256x1xf32>
    %74 = arith.maximumf %71, %73 : vector<256x1xf32>
    %75 = arith.subf %71, %74 : vector<256x1xf32>
    %76 = math.exp %75 : vector<256x1xf32>
    %77 = vector.broadcast %74 : vector<256x1xf32> to vector<256x256xf32>
    %78 = arith.subf %70, %77 : vector<256x256xf32>
    %79 = math.exp %78 : vector<256x256xf32>
    %80 = vector.extract_strided_slice %67 {offsets = [0, 0], sizes = [256, 1], strides = [1, 1]} : vector<256x2xf32> to vector<256x1xf32>
    %81 = arith.mulf %76, %80 : vector<256x1xf32>
    %cst_40 = arith.constant dense<0.000000e+00> : vector<256xf32>
    %82 = vector.multi_reduction <add>, %79, %cst_40 [1] : vector<256x256xf32> to vector<256xf32>
    %83 = vector.shape_cast %82 : vector<256xf32> to vector<256x1xf32>
    %84 = arith.addf %81, %83 : vector<256x1xf32>
    %85 = arith.truncf %79 : vector<256x256xf32> to vector<256x256xbf16>
    %cst_41 = arith.constant dense<0.000000e+00> : vector<256x64xf32>
    %86 = tpu.matmul %85, %64, %cst_41 {dimension_numbers = #tpu.dot_dimension_numbers<[1], [0], [0], [1], [0, 0, 1, 1], [], []>} : vector<256x256xbf16>, vector<256x64xbf16>, vector<256x64xf32> -> vector<256x64xf32>
    %87 = vector.extract_strided_slice %68 {offsets = [0, 0], sizes = [256, 64], strides = [1, 1]} : vector<256x128xf32> to vector<256x64xf32>
    %88 = vector.broadcast %76 : vector<256x1xf32> to vector<256x64xf32>
    %89 = arith.mulf %88, %87 : vector<256x64xf32>
    %90 = arith.addf %89, %86 : vector<256x64xf32>
    %91 = vector.extract_strided_slice %65 {offsets = [0, 64], sizes = [256, 64], strides = [1, 1]} : vector<256x128xbf16> to vector<256x64xbf16>
    %cst_42 = arith.constant dense<0.000000e+00> : vector<256x256xf32>
    %92 = tpu.matmul %91, %62, %cst_42 {dimension_numbers = #tpu.dot_dimension_numbers<[1], [1], [0], [0], [0, 0, 1, 0], [], []>} : vector<256x64xbf16>, vector<256x64xbf16>, vector<256x256xf32> -> vector<256x256xf32>
    %93 = vector.extract_strided_slice %66 {offsets = [0, 1], sizes = [256, 1], strides = [1, 1]} : vector<256x2xf32> to vector<256x1xf32>
    %cst_43 = arith.constant dense<0xFF800000> : vector<256xf32>
    %94 = vector.multi_reduction <maximumf>, %92, %cst_43 [1] : vector<256x256xf32> to vector<256xf32>
    %95 = vector.shape_cast %94 : vector<256xf32> to vector<256x1xf32>
    %96 = arith.maximumf %93, %95 : vector<256x1xf32>
    %97 = arith.subf %93, %96 : vector<256x1xf32>
    %98 = math.exp %97 : vector<256x1xf32>
    %99 = vector.broadcast %96 : vector<256x1xf32> to vector<256x256xf32>
    %100 = arith.subf %92, %99 : vector<256x256xf32>
    %101 = math.exp %100 : vector<256x256xf32>
    %102 = vector.extract_strided_slice %67 {offsets = [0, 1], sizes = [256, 1], strides = [1, 1]} : vector<256x2xf32> to vector<256x1xf32>
    %103 = arith.mulf %98, %102 : vector<256x1xf32>
    %cst_44 = arith.constant dense<0.000000e+00> : vector<256xf32>
    %104 = vector.multi_reduction <add>, %101, %cst_44 [1] : vector<256x256xf32> to vector<256xf32>
    %105 = vector.shape_cast %104 : vector<256xf32> to vector<256x1xf32>
    %106 = arith.addf %103, %105 : vector<256x1xf32>
    %107 = arith.truncf %101 : vector<256x256xf32> to vector<256x256xbf16>
    %cst_45 = arith.constant dense<0.000000e+00> : vector<256x64xf32>
    %108 = tpu.matmul %107, %64, %cst_45 {dimension_numbers = #tpu.dot_dimension_numbers<[1], [0], [0], [1], [0, 0, 1, 1], [], []>} : vector<256x256xbf16>, vector<256x64xbf16>, vector<256x64xf32> -> vector<256x64xf32>
    %109 = vector.extract_strided_slice %68 {offsets = [0, 64], sizes = [256, 64], strides = [1, 1]} : vector<256x128xf32> to vector<256x64xf32>
    %110 = vector.broadcast %98 : vector<256x1xf32> to vector<256x64xf32>
    %111 = arith.mulf %110, %109 : vector<256x64xf32>
    %112 = arith.addf %111, %108 : vector<256x64xf32>
    %113 = tpu.concatenate %74, %96 in 1 : vector<256x1xf32>, vector<256x1xf32> -> vector<256x2xf32>
    %c0_46 = arith.constant 0 : index
    %c2_47 = arith.constant 2 : index
    %114 = vector.load %arg7[%c0_46, %c2_47] : memref<256x4xf32, #tpu.memory_space<vmem>>, vector<256x2xf32>
    tpu.vector_store %arg7[%c0_46, %c2_47], %113 {strides = array<i32>} : memref<256x4xf32, #tpu.memory_space<vmem>>, vector<256x2xf32>,
    %115 = tpu.concatenate %84, %106 in 1 : vector<256x1xf32>, vector<256x1xf32> -> vector<256x2xf32>
    %c0_48 = arith.constant 0 : index
    %c2_49 = arith.constant 2 : index
    %116 = vector.load %arg8[%c0_48, %c2_49] : memref<256x4xf32, #tpu.memory_space<vmem>>, vector<256x2xf32>
    tpu.vector_store %arg8[%c0_48, %c2_49], %115 {strides = array<i32>} : memref<256x4xf32, #tpu.memory_space<vmem>>, vector<256x2xf32>,
    %117 = tpu.concatenate %90, %112 in 1 : vector<256x64xf32>, vector<256x64xf32> -> vector<256x128xf32>
    %c0_50 = arith.constant 0 : index
    %c128_51 = arith.constant 128 : index
    %118 = vector.load %arg9[%c0_50, %c128_51] : memref<256x256xf32, #tpu.memory_space<vmem>>, vector<256x128xf32>
    tpu.vector_store %arg9[%c0_50, %c128_51], %117 {strides = array<i32>} : memref<256x256xf32, #tpu.memory_space<vmem>>, vector<256x128xf32>,
    %c0_i32_52 = arith.constant 0 : i32
    %119 = arith.cmpi eq, %arg2, %c0_i32_52 : i32
    %120 = arith.extui %119 : i1 to i32
    %c0_i32_53 = arith.constant 0 : i32
    %121 = arith.cmpi ne, %120, %c0_i32_53 : i32
    scf.if %121 {
      %c0_54 = arith.constant 0 : index
      %c0_55 = arith.constant 0 : index
      %122 = vector.load %arg8[%c0_54, %c0_55] : memref<256x4xf32, #tpu.memory_space<vmem>>, vector<256x4xf32>
      %123 = tpu.reciprocal %122 {approx = true} : vector<256x4xf32> -> vector<256x4xf32>
      %124 = vector.extract_strided_slice %123 {offsets = [0, 0], sizes = [256, 1], strides = [1, 1]} : vector<256x4xf32> to vector<256x1xf32>
      %125 = vector.shape_cast %124 : vector<256x1xf32> to vector<256x1xf32>
      %126 = vector.broadcast %125 : vector<256x1xf32> to vector<256x64xf32>
      %127 = vector.extract_strided_slice %123 {offsets = [0, 1], sizes = [256, 1], strides = [1, 1]} : vector<256x4xf32> to vector<256x1xf32>
      %128 = vector.shape_cast %127 : vector<256x1xf32> to vector<256x1xf32>
      %129 = vector.broadcast %128 : vector<256x1xf32> to vector<256x64xf32>
      %130 = vector.extract_strided_slice %123 {offsets = [0, 2], sizes = [256, 1], strides = [1, 1]} : vector<256x4xf32> to vector<256x1xf32>
      %131 = vector.shape_cast %130 : vector<256x1xf32> to vector<256x1xf32>
      %132 = vector.broadcast %131 : vector<256x1xf32> to vector<256x64xf32>
      %133 = vector.extract_strided_slice %123 {offsets = [0, 3], sizes = [256, 1], strides = [1, 1]} : vector<256x4xf32> to vector<256x1xf32>
      %134 = vector.shape_cast %133 : vector<256x1xf32> to vector<256x1xf32>
      %135 = vector.broadcast %134 : vector<256x1xf32> to vector<256x64xf32>
      %136 = tpu.concatenate %126, %129, %132, %135 in 1 : vector<256x64xf32>, vector<256x64xf32>, vector<256x64xf32>, vector<256x64xf32> -> vector<256x256xf32>
      %c0_56 = arith.constant 0 : index
      %c0_57 = arith.constant 0 : index
      %137 = vector.load %arg9[%c0_56, %c0_57] : memref<256x256xf32, #tpu.memory_space<vmem>>, vector<256x256xf32>
      %138 = arith.mulf %137, %136 : vector<256x256xf32>
      %139 = arith.truncf %138 : vector<256x256xf32> to vector<256x256xbf16>
      %c0_58 = arith.constant 0 : index
      %c0_59 = arith.constant 0 : index
      %c0_60 = arith.constant 0 : index
      %140 = vector.load %arg6[%c0_58, %c0_59, %c0_60] : memref<1x256x256xbf16, #tpu.memory_space<vmem>>, vector<1x256x256xbf16>
      %141 = vector.shape_cast %140 : vector<1x256x256xbf16> to vector<256x256xbf16>
      %142 = vector.shape_cast %139 : vector<256x256xbf16> to vector<1x256x256xbf16>
      tpu.vector_store %arg6[%c0_58, %c0_59, %c0_60], %142 {strides = array<i32>} : memref<1x256x256xbf16, #tpu.memory_space<vmem>>, vector<1x256x256xbf16>,
    } else {
    }
    return
  }
  func.func @transform_0(%arg0: i32, %arg1: i32, %arg2: i32) -> (i32, i32, i32) {
    %c0_i32 = arith.constant 0 : i32
    %c0_i32_0 = arith.constant 0 : i32
    return %arg0, %arg1, %c0_i32 : i32, i32, i32
  }
  func.func @transform_1(%arg0: i32, %arg1: i32, %arg2: i32) -> (i32, i32, i32) {
    %c0_i32 = arith.constant 0 : i32
    %c0_i32_0 = arith.constant 0 : i32
    return %arg0, %arg2, %c0_i32 : i32, i32, i32
  }
  func.func @transform_2(%arg0: i32, %arg1: i32, %arg2: i32) -> (i32, i32, i32) {
    %c0_i32 = arith.constant 0 : i32
    %c0_i32_0 = arith.constant 0 : i32
    return %arg0, %arg2, %c0_i32 : i32, i32, i32
  }
  func.func @transform_3(%arg0: i32, %arg1: i32, %arg2: i32) -> (i32, i32, i32) {
    %c0_i32 = arith.constant 0 : i32
    %c0_i32_0 = arith.constant 0 : i32
    return %arg0, %arg1, %c0_i32 : i32, i32, i32
  }
}

</mosaic_0001>

<llo_original>
// kernel: tpu_custom_call.1
$region0: #{tpu_custom_call.1}
  #allocation0 [shape = 'u32[]', space=smem, size = 0x4, offset = 0x4, fixed_abs, tag = 'smem constant byte address 0x4 - core index']
  #allocation1 [shape = 'u32[72,128]{1,0:T(1,128)}', space=vmem, size = 0x9000, scoped, tag = 'internal scratch']
  #allocation2 [shape = 'f32[256,4]{1,0:T(8,128)}', space=vmem, size = 0x20000, scoped, tag = 'scratch operand']
  #allocation3 [shape = 'f32[256,4]{1,0:T(8,128)}', space=vmem, size = 0x20000, scoped, tag = 'scratch operand']
  #allocation4 [shape = 'f32[256,256]{1,0:T(8,128)}', space=vmem, size = 0x40000, scoped, tag = 'scratch operand']
  #allocation5 [shape = 'bf16[256,256]{1,0:T(8,128)(2,1)}', space=vmem, size = 0x20000, scoped, tag = 'scratch operand']
  %s0 = inlined_call_operand.hbm [shape: bf16[2,256,256], index: 0, kind: input, shape index: {}]
  %s1 = inlined_call_operand.hbm [shape: bf16[2,256,128], index: 1, kind: input, shape index: {}]
  %s2 = inlined_call_operand.hbm [shape: bf16[2,256,128], index: 2, kind: input, shape index: {}]
  %s3 = inlined_call_operand.hbm [shape: bf16[2,256,256], index: 3, kind: output, shape index: {}]
  %s4 = sld [smem:[#allocation0]]
  $region65: #{tpu_custom_call.1} parent=0
    _
  %s6 = ssub.s32 1, %s4
  %s7 = scalar_select 0, %s6, %s4
  $region1: #{tpu_custom_call.1} parent=0
    #allocation6 [shape = 'u8[262144]{0}', space=vmem, size = 0x40000, scoped, tag = 'input window, operand 0']
    #allocation7 [shape = 's32[2]{0}', space=sflag, size = 0x8, scoped, tag = 'scoped memory for tpu_custom_call.1']
    #allocation8 [shape = 's32[2]{0}', space=sflag, size = 0x8, scoped, tag = 'scoped memory for tpu_custom_call.1']
    #allocation9 [shape = 'u8[131072]{0}', space=vmem, size = 0x20000, scoped, tag = 'input window, operand 1']
    #allocation10 [shape = 's32[2]{0}', space=sflag, size = 0x8, scoped, tag = 'scoped memory for tpu_custom_call.1']
    #allocation11 [shape = 'u8[131072]{0}', space=vmem, size = 0x20000, scoped, tag = 'input window, operand 2']
    #allocation12 [shape = 'u8[262144]{0}', space=vmem, size = 0x40000, scoped, tag = 'output window, operand 0']
    %8 = vsyncpa [#allocation7], 0
    %s9 = scalar_lea.sflag [#allocation7], 1
    %10 = vsyncpa %s9, 0
    %11 = vsyncpa [#allocation10], 0
    %s12 = scalar_lea.sflag [#allocation10], 1
    %13 = vsyncpa %s12, 0
    %14 = vsyncpa [#allocation8], 0
    %s15 = scalar_lea.sflag [#allocation8], 1
    %16 = vsyncpa %s15, 0
    loop: start=0, step=1, limit=4
    $region2: #{tpu_custom_call.1} parent=1 // loop_pre_header
      _
    $region3: #{tpu_custom_call.1} parent=1 // loop_header
      %s18 = sphi 0, %s22
      %p19 = scmp.ge.s32.totalorder %s18, 4
      %s25 = sphi 0, %s44
      %s26 = sphi 0, %s40
      %s27 = sphi 0, %s36
      %s28 = sphi 0, %s25
      %s29 = sphi 0, %s26
      %s30 = sphi 0, %s27
      %s31 = sphi 0, %s28
      %s32 = sphi 0, %s29
      %s33 = sphi 0, %s30
      %s49 = sphi 0, %s51
      %s52 = sphi 0, %s49
      %s53 = sphi 0, %s52
      %s69 = sphi 0, %s53
      %s77 = sphi 0, %s79
      %s80 = sphi 0, %s77
      %s81 = sphi 0, %s80
      %s97 = sphi 0, %s81
      %s105 = sphi 0, %s107
      %s108 = sphi 0, %s105
      %s109 = sphi 0, %s108
      %s125 = sphi 0, %s109
      %s133 = sphi 0, %s135
      %s136 = sphi 0, %s133
      %s137 = sphi 0, %s136
      %s153 = sphi 0, %s137
    $region4: #{tpu_custom_call.1} parent=1 // loop_header_branch
      %21 = sbr.rel (%p19) target = $region8
    $region5: #{tpu_custom_call.1} parent=1 // loop_body
      %s23 = ssub.s32 %s18, 1
      %s24 = ssub.s32 %s18, 2
      %s34 = sadd.s32 1, %s27
      %p35 = scmp.ge.s32.totalorder %s34, 1
      %s36 = scalar_select %p35, 0, %s34
      %s37 = sadd.s32 1, %s26
      %s38 = scalar_select %p35, %s37, %s26
      %p39 = scmp.ge.s32.totalorder %s38, 1
      %s40 = scalar_select %p39, 0, %s38
      %s41 = sadd.s32 1, %s25
      %s42 = scalar_select %p39, %s41, %s25
      %p43 = scmp.ge.s32.totalorder %s42, 2
      %s44 = scalar_select %p43, 0, %s42
      %s45 = ssub.s32 %s25, %s44
      %s46 = ssub.s32 %s26, %s40
      %s47 = sor.u32 %s45, %s46
      %p48 = scmp.eq.s32.totalorder %s47, 0
      %s50 = sadd.s32 %s49, 1
      %s51 = scalar_select %p48, %s49, %s50
      %p54 = pneg %p48
      %p55 = scmp.eq.s32.totalorder %s18, 1
      %p56 = por %p54, %p55
      %p57 = scmp.ne.s32.totalorder %s49, %s52
      %p58 = scmp.eq.s32.totalorder %s18, 0
      %p59 = por %p57, %p58
      %p60 = scmp.ne.s32.totalorder %s49, %s52
      %p61 = scmp.eq.s32.totalorder %s23, 1
      %p62 = por %p60, %p61
      %p63 = scmp.ne.s32.totalorder %s52, %s53
      %p64 = scmp.eq.s32.totalorder %s23, 0
      %p65 = por %p63, %p64
      %p66 = scmp.ne.s32.totalorder %s52, %s53
      %p67 = scmp.eq.s32.totalorder %s24, 1
      %p68 = por %p66, %p67
      %p70 = scmp.ne.s32.totalorder %s53, %s69
      %p71 = scmp.eq.s32.totalorder %s24, 0
      %p72 = por %p70, %p71
      %s73 = ssub.s32 %s25, %s44
      %s74 = ssub.s32 %s27, %s36
      %s75 = sor.u32 %s73, %s74
      %p76 = scmp.eq.s32.totalorder %s75, 0
      %s78 = sadd.s32 %s77, 1
      %s79 = scalar_select %p76, %s77, %s78
      %p82 = pneg %p76
      %p83 = scmp.eq.s32.totalorder %s18, 1
      %p84 = por %p82, %p83
      %p85 = scmp.ne.s32.totalorder %s77, %s80
      %p86 = scmp.eq.s32.totalorder %s18, 0
      %p87 = por %p85, %p86
      %p88 = scmp.ne.s32.totalorder %s77, %s80
      %p89 = scmp.eq.s32.totalorder %s23, 1
      %p90 = por %p88, %p89
      %p91 = scmp.ne.s32.totalorder %s80, %s81
      %p92 = scmp.eq.s32.totalorder %s23, 0
      %p93 = por %p91, %p92
      %p94 = scmp.ne.s32.totalorder %s80, %s81
      %p95 = scmp.eq.s32.totalorder %s24, 1
      %p96 = por %p94, %p95
      %p98 = scmp.ne.s32.totalorder %s81, %s97
      %p99 = scmp.eq.s32.totalorder %s24, 0
      %p100 = por %p98, %p99
      %s101 = ssub.s32 %s25, %s44
      %s102 = ssub.s32 %s27, %s36
      %s103 = sor.u32 %s101, %s102
      %p104 = scmp.eq.s32.totalorder %s103, 0
      %s106 = sadd.s32 %s105, 1
      %s107 = scalar_select %p104, %s105, %s106
      %p110 = pneg %p104
      %p111 = scmp.eq.s32.totalorder %s18, 1
      %p112 = por %p110, %p111
      %p113 = scmp.ne.s32.totalorder %s105, %s108
      %p114 = scmp.eq.s32.totalorder %s18, 0
      %p115 = por %p113, %p114
      %p116 = scmp.ne.s32.totalorder %s105, %s108
      %p117 = scmp.eq.s32.totalorder %s23, 1
      %p118 = por %p116, %p117
      %p119 = scmp.ne.s32.totalorder %s108, %s109
      %p120 = scmp.eq.s32.totalorder %s23, 0
      %p121 = por %p119, %p120
      %p122 = scmp.ne.s32.totalorder %s108, %s109
      %p123 = scmp.eq.s32.totalorder %s24, 1
      %p124 = por %p122, %p123
      %p126 = scmp.ne.s32.totalorder %s109, %s125
      %p127 = scmp.eq.s32.totalorder %s24, 0
      %p128 = por %p126, %p127
      %s129 = ssub.s32 %s25, %s44
      %s130 = ssub.s32 %s26, %s40
      %s131 = sor.u32 %s129, %s130
      %p132 = scmp.eq.s32.totalorder %s131, 0
      %s134 = sadd.s32 %s133, 1
      %s135 = scalar_select %p132, %s133, %s134
      %p138 = pneg %p132
      %p139 = scmp.eq.s32.totalorder %s18, 1
      %p140 = por %p138, %p139
      %p141 = scmp.ne.s32.totalorder %s133, %s136
      %p142 = scmp.eq.s32.totalorder %s18, 0
      %p143 = por %p141, %p142
      %p144 = scmp.ne.s32.totalorder %s133, %s136
      %p145 = scmp.eq.s32.totalorder %s23, 1
      %p146 = por %p144, %p145
      %p147 = scmp.ne.s32.totalorder %s136, %s137
      %p148 = scmp.eq.s32.totalorder %s23, 0
      %p149 = por %p147, %p148
      %p150 = scmp.ne.s32.totalorder %s136, %s137
      %p151 = scmp.eq.s32.totalorder %s24, 1
      %p152 = por %p150, %p151
      %p154 = scmp.ne.s32.totalorder %s137, %s153
      %p155 = scmp.eq.s32.totalorder %s24, 0
      %p156 = por %p154, %p155
      %p157 = scmp.le.s32.totalorder 1, %s18
      %p158 = scmp.lt.s32.totalorder %s18, 3
      %p159 = pnand %p157, %p158
      %p160 = pneg %p159
      // Predicated region
      $region9: #{tpu_custom_call.1} parent=5 // pred_check
        _
      $region10: #{tpu_custom_call.1} parent=5 // pred_check_branch
        %162 = sbr.rel (%p159) target = $region12
      $region11: #{tpu_custom_call.1} parent=5 // pred_region
        %s163 = ssub.s32 %s18, 1
      $region12: #{tpu_custom_call.1} parent=5 // pred_fallthru
        _
      %p164 = scmp.lt.s32.totalorder %s18, 2
      // Predicated region
      $region13: #{tpu_custom_call.1} parent=5 // pred_check
        %p165 = pneg %p164
      $region14: #{tpu_custom_call.1} parent=5 // pred_check_branch
        %167 = sbr.rel (%p165) target = $region16
      $region15: #{tpu_custom_call.1} parent=5 // pred_region
        // Predicated region
        $region17: #{tpu_custom_call.1} parent=15 // pred_check
          %p168 = pneg %p59
        $region18: #{tpu_custom_call.1} parent=15 // pred_check_branch
          %170 = sbr.rel (%p168) target = $region20
        $region19: #{tpu_custom_call.1} parent=15 // pred_region
          %s171 = sand.u32 %s49, 1
          %s172 = scalar_lea.sflag [#allocation7], %s171
          %s173 = sand.u32 %s49, 1
          %s174 = smul.addr %s173, 256
          %s175 = scalar_lea.vmem [#allocation6], %s174
          %s176 = smul.u32 32, %s26
          %178 = vsyncadd %s172, 0
          %s179 = smul.addr %s176, 2
          %s180 = smul.addr %s25, 64
          %s181 = sadd.s32 %s179, %s180
          %s182 = smul.addr %s181, 4
          %s183 = scalar_lea.hbm %s0, %s182
          %s184 = sshll.u32 %s183, 4
          %s185 = int_to_ptr.hbm [resolvable:$true] %s184
          %s186 = sshll.u32 %s175, 4
          %s187 = int_to_ptr.vmem [resolvable:$true] %s186
          %192 = dma.hbm_to_vmem [thread:$0]  %s185, 4096, %s187, %s172, 128, 128, 8
        $region20: #{tpu_custom_call.1} parent=15 // pred_fallthru
          _
        // Predicated region
        $region21: #{tpu_custom_call.1} parent=15 // pred_check
          %p193 = pneg %p87
        $region22: #{tpu_custom_call.1} parent=15 // pred_check_branch
          %195 = sbr.rel (%p193) target = $region24
        $region23: #{tpu_custom_call.1} parent=15 // pred_region
          %s196 = sand.u32 %s18, 1
          %s197 = scalar_lea.sflag [#allocation10], %s196
          %s198 = sand.u32 %s77, 1
          %s199 = smul.addr %s198, 128
          %s200 = scalar_lea.vmem [#allocation9], %s199
          %s201 = smul.u32 32, %s27
          %203 = vsyncadd %s197, 0
          %s204 = smul.addr %s25, 32
          %s205 = sadd.s32 %s201, %s204
          %s206 = smul.addr %s205, 4
          %s207 = scalar_lea.hbm %s1, %s206
          %s208 = sshll.u32 %s207, 4
          %s209 = int_to_ptr.hbm [resolvable:$true] %s208
          %s210 = sshll.u32 %s200, 4
          %s211 = int_to_ptr.vmem [resolvable:$true] %s210
          %216 = dma.hbm_to_vmem [thread:$0]  %s209, 2048, %s211, %s197, 64, 64, 4
        $region24: #{tpu_custom_call.1} parent=15 // pred_fallthru
          _
        // Predicated region
        $region25: #{tpu_custom_call.1} parent=15 // pred_check
          %p217 = pneg %p115
        $region26: #{tpu_custom_call.1} parent=15 // pred_check_branch
          %219 = sbr.rel (%p217) target = $region28
        $region27: #{tpu_custom_call.1} parent=15 // pred_region
          %s220 = sand.u32 %s18, 1
          %s221 = scalar_lea.sflag [#allocation10], %s220
          %s222 = sand.u32 %s105, 1
          %s223 = smul.addr %s222, 128
          %s224 = scalar_lea.vmem [#allocation11], %s223
          %s225 = smul.u32 32, %s27
          %227 = vsyncadd %s221, 0
          %s228 = smul.addr %s25, 32
          %s229 = sadd.s32 %s225, %s228
          %s230 = smul.addr %s229, 4
          %s231 = scalar_lea.hbm %s2, %s230
          %s232 = sshll.u32 %s231, 4
          %s233 = int_to_ptr.hbm [resolvable:$true] %s232
          %s234 = sshll.u32 %s224, 4
          %s235 = int_to_ptr.vmem [resolvable:$true] %s234
          %240 = dma.hbm_to_vmem [thread:$0]  %s233, 2048, %s235, %s221, 64, 64, 4
        $region28: #{tpu_custom_call.1} parent=15 // pred_fallthru
          _
      $region16: #{tpu_custom_call.1} parent=5 // pred_fallthru
        _
      %p241 = scmp.le.s32.totalorder 1, %s18
      %p242 = scmp.lt.s32.totalorder %s18, 3
      %p243 = pnand %p241, %p242
      %p244 = pneg %p243
      // Predicated region
      $region29: #{tpu_custom_call.1} parent=5 // pred_check
        _
      $region30: #{tpu_custom_call.1} parent=5 // pred_check_branch
        %246 = sbr.rel (%p243) target = $region32
      $region31: #{tpu_custom_call.1} parent=5 // pred_region
        %s247 = ssub.s32 %s18, 1
        %s248 = sand.u32 %s52, 1
        %s249 = scalar_lea.sflag [#allocation7], %s248
        %s250 = sand.u32 %s52, 1
        %s251 = smul.addr %s250, 256
        %s252 = scalar_lea.vmem [#allocation6], %s251
        // Predicated region
        $region33: #{tpu_custom_call.1} parent=31 // pred_check
          %p253 = pneg %p65
        $region34: #{tpu_custom_call.1} parent=31 // pred_check_branch
          %255 = sbr.rel (%p253) target = $region36
        $region35: #{tpu_custom_call.1} parent=31 // pred_region
          %257 = dma.done %s249, 4096
        $region36: #{tpu_custom_call.1} parent=31 // pred_fallthru
          _
        %s258 = sand.u32 %s23, 1
        %s259 = scalar_lea.sflag [#allocation10], %s258
        %s260 = sand.u32 %s80, 1
        %s261 = smul.addr %s260, 128
        %s262 = scalar_lea.vmem [#allocation9], %s261
        // Predicated region
        $region37: #{tpu_custom_call.1} parent=31 // pred_check
          %p263 = pneg %p93
        $region38: #{tpu_custom_call.1} parent=31 // pred_check_branch
          %265 = sbr.rel (%p263) target = $region40
        $region39: #{tpu_custom_call.1} parent=31 // pred_region
          %267 = dma.done %s259, 2048
        $region40: #{tpu_custom_call.1} parent=31 // pred_fallthru
          _
        %s268 = sand.u32 %s23, 1
        %s269 = scalar_lea.sflag [#allocation10], %s268
        %s270 = sand.u32 %s108, 1
        %s271 = smul.addr %s270, 128
        %s272 = scalar_lea.vmem [#allocation11], %s271
        // Predicated region
        $region41: #{tpu_custom_call.1} parent=31 // pred_check
          %p273 = pneg %p121
        $region42: #{tpu_custom_call.1} parent=31 // pred_check_branch
          %275 = sbr.rel (%p273) target = $region44
        $region43: #{tpu_custom_call.1} parent=31 // pred_region
          %277 = dma.done %s269, 2048
        $region44: #{tpu_custom_call.1} parent=31 // pred_fallthru
          _
        %s278 = sand.u32 %s52, 1
        %s279 = scalar_lea.sflag [#allocation7], %s278
        %s280 = sand.u32 %s52, 1
        %s281 = smul.addr %s280, 256
        %s282 = scalar_lea.vmem [#allocation6], %s281
        %p283 = pneg %p65
        %p284 = pneg %p62
        %s285 = sand.u32 %s23, 1
        %s286 = scalar_lea.sflag [#allocation10], %s285
        %s287 = sand.u32 %s80, 1
        %s288 = smul.addr %s287, 128
        %s289 = scalar_lea.vmem [#allocation9], %s288
        %p290 = pneg %p93
        %p291 = pneg %p90
        %s292 = sand.u32 %s23, 1
        %s293 = scalar_lea.sflag [#allocation10], %s292
        %s294 = sand.u32 %s108, 1
        %s295 = smul.addr %s294, 128
        %s296 = scalar_lea.vmem [#allocation11], %s295
        %p297 = pneg %p121
        %p298 = pneg %p118
        %p299 = pneg %p149
        %p300 = pneg %p146
        %s301 = sand.u32 %s136, 1
        %s302 = scalar_lea.sflag [#allocation8], %s301
        %s303 = sand.u32 %s136, 1
        %s304 = smul.addr %s303, 256
        %s305 = scalar_lea.vmem [#allocation12], %s304
        %s306 = smul.u32 32, %s29
        %s307 = smul.u32 32, %s30
        %s308 = smul.u32 32, %s30
        %s309 = smul.u32 32, %s29
        %p310 = scmp.eq.s32.totalorder %s30, 0
        // Predicated region
        $region45: #{tpu_custom_call.1} parent=31 // pred_check
          %p311 = pneg %p310
        $region46: #{tpu_custom_call.1} parent=31 // pred_check_branch
          %313 = sbr.rel (%p311) target = $region48
        $region47: #{tpu_custom_call.1} parent=31 // pred_region
          %vm314 = vcmask 31744
          %315 = vst.msk [vmem:[#allocation2] sm:$0xff] %vm314, -1e+30
          %316 = vst.msk [vmem:[#allocation2 + $0x8] sm:$0xff] %vm314, -1e+30
          %317 = vst.msk [vmem:[#allocation2 + $0x10] sm:$0xff] %vm314, -1e+30
          %318 = vst.msk [vmem:[#allocation2 + $0x18] sm:$0xff] %vm314, -1e+30
          %319 = vst.msk [vmem:[#allocation2 + $0x20] sm:$0xff] %vm314, -1e+30
          %320 = vst.msk [vmem:[#allocation2 + $0x28] sm:$0xff] %vm314, -1e+30
          %321 = vst.msk [vmem:[#allocation2 + $0x30] sm:$0xff] %vm314, -1e+30
          %322 = vst.msk [vmem:[#allocation2 + $0x38] sm:$0xff] %vm314, -1e+30
          %323 = vst.msk [vmem:[#allocation2 + $0x40] sm:$0xff] %vm314, -1e+30
          %324 = vst.msk [vmem:[#allocation2 + $0x48] sm:$0xff] %vm314, -1e+30
          %325 = vst.msk [vmem:[#allocation2 + $0x50] sm:$0xff] %vm314, -1e+30
          %326 = vst.msk [vmem:[#allocation2 + $0x58] sm:$0xff] %vm314, -1e+30
          %327 = vst.msk [vmem:[#allocation2 + $0x60] sm:$0xff] %vm314, -1e+30
          %328 = vst.msk [vmem:[#allocation2 + $0x68] sm:$0xff] %vm314, -1e+30
          %329 = vst.msk [vmem:[#allocation2 + $0x70] sm:$0xff] %vm314, -1e+30
          %330 = vst.msk [vmem:[#allocation2 + $0x78] sm:$0xff] %vm314, -1e+30
          %331 = vst.msk [vmem:[#allocation2 + $0x80] sm:$0xff] %vm314, -1e+30
          %332 = vst.msk [vmem:[#allocation2 + $0x88] sm:$0xff] %vm314, -1e+30
          %333 = vst.msk [vmem:[#allocation2 + $0x90] sm:$0xff] %vm314, -1e+30
          %334 = vst.msk [vmem:[#allocation2 + $0x98] sm:$0xff] %vm314, -1e+30
          %335 = vst.msk [vmem:[#allocation2 + $0xa0] sm:$0xff] %vm314, -1e+30
          %336 = vst.msk [vmem:[#allocation2 + $0xa8] sm:$0xff] %vm314, -1e+30
          %337 = vst.msk [vmem:[#allocation2 + $0xb0] sm:$0xff] %vm314, -1e+30
          %338 = vst.msk [vmem:[#allocation2 + $0xb8] sm:$0xff] %vm314, -1e+30
          %339 = vst.msk [vmem:[#allocation2 + $0xc0] sm:$0xff] %vm314, -1e+30
          %340 = vst.msk [vmem:[#allocation2 + $0xc8] sm:$0xff] %vm314, -1e+30
          %341 = vst.msk [vmem:[#allocation2 + $0xd0] sm:$0xff] %vm314, -1e+30
          %342 = vst.msk [vmem:[#allocation2 + $0xd8] sm:$0xff] %vm314, -1e+30
          %343 = vst.msk [vmem:[#allocation2 + $0xe0] sm:$0xff] %vm314, -1e+30
          %344 = vst.msk [vmem:[#allocation2 + $0xe8] sm:$0xff] %vm314, -1e+30
          %345 = vst.msk [vmem:[#allocation2 + $0xf0] sm:$0xff] %vm314, -1e+30
          %346 = vst.msk [vmem:[#allocation2 + $0xf8] sm:$0xff] %vm314, -1e+30
          %347 = vst.msk [vmem:[#allocation3] sm:$0xff] %vm314, 0.0
          %348 = vst.msk [vmem:[#allocation3 + $0x8] sm:$0xff] %vm314, 0.0
          %349 = vst.msk [vmem:[#allocation3 + $0x10] sm:$0xff] %vm314, 0.0
          %350 = vst.msk [vmem:[#allocation3 + $0x18] sm:$0xff] %vm314, 0.0
          %351 = vst.msk [vmem:[#allocation3 + $0x20] sm:$0xff] %vm314, 0.0
          %352 = vst.msk [vmem:[#allocation3 + $0x28] sm:$0xff] %vm314, 0.0
          %353 = vst.msk [vmem:[#allocation3 + $0x30] sm:$0xff] %vm314, 0.0
          %354 = vst.msk [vmem:[#allocation3 + $0x38] sm:$0xff] %vm314, 0.0
          %355 = vst.msk [vmem:[#allocation3 + $0x40] sm:$0xff] %vm314, 0.0
          %356 = vst.msk [vmem:[#allocation3 + $0x48] sm:$0xff] %vm314, 0.0
          %357 = vst.msk [vmem:[#allocation3 + $0x50] sm:$0xff] %vm314, 0.0
          %358 = vst.msk [vmem:[#allocation3 + $0x58] sm:$0xff] %vm314, 0.0
          %359 = vst.msk [vmem:[#allocation3 + $0x60] sm:$0xff] %vm314, 0.0
          %360 = vst.msk [vmem:[#allocation3 + $0x68] sm:$0xff] %vm314, 0.0
          %361 = vst.msk [vmem:[#allocation3 + $0x70] sm:$0xff] %vm314, 0.0
          %362 = vst.msk [vmem:[#allocation3 + $0x78] sm:$0xff] %vm314, 0.0
          %363 = vst.msk [vmem:[#allocation3 + $0x80] sm:$0xff] %vm314, 0.0
          %364 = vst.msk [vmem:[#allocation3 + $0x88] sm:$0xff] %vm314, 0.0
          %365 = vst.msk [vmem:[#allocation3 + $0x90] sm:$0xff] %vm314, 0.0
          %366 = vst.msk [vmem:[#allocation3 + $0x98] sm:$0xff] %vm314, 0.0
          %367 = vst.msk [vmem:[#allocation3 + $0xa0] sm:$0xff] %vm314, 0.0
          %368 = vst.msk [vmem:[#allocation3 + $0xa8] sm:$0xff] %vm314, 0.0
          %369 = vst.msk [vmem:[#allocation3 + $0xb0] sm:$0xff] %vm314, 0.0
          %370 = vst.msk [vmem:[#allocation3 + $0xb8] sm:$0xff] %vm314, 0.0
          %371 = vst.msk [vmem:[#allocation3 + $0xc0] sm:$0xff] %vm314, 0.0
          %372 = vst.msk [vmem:[#allocation3 + $0xc8] sm:$0xff] %vm314, 0.0
          %373 = vst.msk [vmem:[#allocation3 + $0xd0] sm:$0xff] %vm314, 0.0
          %374 = vst.msk [vmem:[#allocation3 + $0xd8] sm:$0xff] %vm314, 0.0
          %375 = vst.msk [vmem:[#allocation3 + $0xe0] sm:$0xff] %vm314, 0.0
          %376 = vst.msk [vmem:[#allocation3 + $0xe8] sm:$0xff] %vm314, 0.0
          %377 = vst.msk [vmem:[#allocation3 + $0xf0] sm:$0xff] %vm314, 0.0
          %378 = vst.msk [vmem:[#allocation3 + $0xf8] sm:$0xff] %vm314, 0.0
          %379 = vst [vmem:[#allocation4] sm:$0xff] 0.0
          %380 = vst [vmem:[#allocation4 + $0x8] sm:$0xff] 0.0
          %381 = vst [vmem:[#allocation4 + $0x10] sm:$0xff] 0.0
          %382 = vst [vmem:[#allocation4 + $0x18] sm:$0xff] 0.0
          %383 = vst [vmem:[#allocation4 + $0x20] sm:$0xff] 0.0
          %384 = vst [vmem:[#allocation4 + $0x28] sm:$0xff] 0.0
          %385 = vst [vmem:[#allocation4 + $0x30] sm:$0xff] 0.0
          %386 = vst [vmem:[#allocation4 + $0x38] sm:$0xff] 0.0
          %387 = vst [vmem:[#allocation4 + $0x40] sm:$0xff] 0.0
          %388 = vst [vmem:[#allocation4 + $0x48] sm:$0xff] 0.0
          %389 = vst [vmem:[#allocation4 + $0x50] sm:$0xff] 0.0
          %390 = vst [vmem:[#allocation4 + $0x58] sm:$0xff] 0.0
          %391 = vst [vmem:[#allocation4 + $0x60] sm:$0xff] 0.0
          %392 = vst [vmem:[#allocation4 + $0x68] sm:$0xff] 0.0
          %393 = vst [vmem:[#allocation4 + $0x70] sm:$0xff] 0.0
          %394 = vst [vmem:[#allocation4 + $0x78] sm:$0xff] 0.0
          %395 = vst [vmem:[#allocation4 + $0x80] sm:$0xff] 0.0
          %396 = vst [vmem:[#allocation4 + $0x88] sm:$0xff] 0.0
          %397 = vst [vmem:[#allocation4 + $0x90] sm:$0xff] 0.0
          %398 = vst [vmem:[#allocation4 + $0x98] sm:$0xff] 0.0
          %399 = vst [vmem:[#allocation4 + $0xa0] sm:$0xff] 0.0
          %400 = vst [vmem:[#allocation4 + $0xa8] sm:$0xff] 0.0
          %401 = vst [vmem:[#allocation4 + $0xb0] sm:$0xff] 0.0
          %402 = vst [vmem:[#allocation4 + $0xb8] sm:$0xff] 0.0
          %403 = vst [vmem:[#allocation4 + $0xc0] sm:$0xff] 0.0
          %404 = vst [vmem:[#allocation4 + $0xc8] sm:$0xff] 0.0
          %405 = vst [vmem:[#allocation4 + $0xd0] sm:$0xff] 0.0
          %406 = vst [vmem:[#allocation4 + $0xd8] sm:$0xff] 0.0
          %407 = vst [vmem:[#allocation4 + $0xe0] sm:$0xff] 0.0
          %408 = vst [vmem:[#allocation4 + $0xe8] sm:$0xff] 0.0
          %409 = vst [vmem:[#allocation4 + $0xf0] sm:$0xff] 0.0
          %410 = vst [vmem:[#allocation4 + $0xf8] sm:$0xff] 0.0
          %411 = vst [vmem:[#allocation4 + $0x100] sm:$0xff] 0.0
          %412 = vst [vmem:[#allocation4 + $0x108] sm:$0xff] 0.0
          %413 = vst [vmem:[#allocation4 + $0x110] sm:$0xff] 0.0
          %414 = vst [vmem:[#allocation4 + $0x118] sm:$0xff] 0.0
          %415 = vst [vmem:[#allocation4 + $0x120] sm:$0xff] 0.0
          %416 = vst [vmem:[#allocation4 + $0x128] sm:$0xff] 0.0
          %417 = vst [vmem:[#allocation4 + $0x130] sm:$0xff] 0.0
          %418 = vst [vmem:[#allocation4 + $0x138] sm:$0xff] 0.0
          %419 = vst [vmem:[#allocation4 + $0x140] sm:$0xff] 0.0
          %420 = vst [vmem:[#allocation4 + $0x148] sm:$0xff] 0.0
          %421 = vst [vmem:[#allocation4 + $0x150] sm:$0xff] 0.0
          %422 = vst [vmem:[#allocation4 + $0x158] sm:$0xff] 0.0
          %423 = vst [vmem:[#allocation4 + $0x160] sm:$0xff] 0.0
          %424 = vst [vmem:[#allocation4 + $0x168] sm:$0xff] 0.0
          %425 = vst [vmem:[#allocation4 + $0x170] sm:$0xff] 0.0
          %426 = vst [vmem:[#allocation4 + $0x178] sm:$0xff] 0.0
          %427 = vst [vmem:[#allocation4 + $0x180] sm:$0xff] 0.0
          %428 = vst [vmem:[#allocation4 + $0x188] sm:$0xff] 0.0
          %429 = vst [vmem:[#allocation4 + $0x190] sm:$0xff] 0.0
          %430 = vst [vmem:[#allocation4 + $0x198] sm:$0xff] 0.0
          %431 = vst [vmem:[#allocation4 + $0x1a0] sm:$0xff] 0.0
          %432 = vst [vmem:[#allocation4 + $0x1a8] sm:$0xff] 0.0
          %433 = vst [vmem:[#allocation4 + $0x1b0] sm:$0xff] 0.0
          %434 = vst [vmem:[#allocation4 + $0x1b8] sm:$0xff] 0.0
          %435 = vst [vmem:[#allocation4 + $0x1c0] sm:$0xff] 0.0
          %436 = vst [vmem:[#allocation4 + $0x1c8] sm:$0xff] 0.0
          %437 = vst [vmem:[#allocation4 + $0x1d0] sm:$0xff] 0.0
          %438 = vst [vmem:[#allocation4 + $0x1d8] sm:$0xff] 0.0
          %439 = vst [vmem:[#allocation4 + $0x1e0] sm:$0xff] 0.0
          %440 = vst [vmem:[#allocation4 + $0x1e8] sm:$0xff] 0.0
          %441 = vst [vmem:[#allocation4 + $0x1f0] sm:$0xff] 0.0
          %442 = vst [vmem:[#allocation4 + $0x1f8] sm:$0xff] 0.0
          %v443 = vld [vmem:[%s252] sm:$0xff]
          %v444 = vld [vmem:[%s252 + $0x8] sm:$0xff]
          %v445 = vld [vmem:[%s252 + $0x10] sm:$0xff]
          %v446 = vld [vmem:[%s252 + $0x18] sm:$0xff]
          %v447 = vld [vmem:[%s252 + $0x20] sm:$0xff]
          %v448 = vld [vmem:[%s252 + $0x28] sm:$0xff]
          %v449 = vld [vmem:[%s252 + $0x30] sm:$0xff]
          %v450 = vld [vmem:[%s252 + $0x38] sm:$0xff]
          %v451 = vld [vmem:[%s252 + $0x40] sm:$0xff]
          %v452 = vld [vmem:[%s252 + $0x48] sm:$0xff]
          %v453 = vld [vmem:[%s252 + $0x50] sm:$0xff]
          %v454 = vld [vmem:[%s252 + $0x58] sm:$0xff]
          %v455 = vld [vmem:[%s252 + $0x60] sm:$0xff]
          %v456 = vld [vmem:[%s252 + $0x68] sm:$0xff]
          %v457 = vld [vmem:[%s252 + $0x70] sm:$0xff]
          %v458 = vld [vmem:[%s252 + $0x78] sm:$0xff]
          %v459 = vld [vmem:[%s252 + $0x80] sm:$0xff]
          %v460 = vld [vmem:[%s252 + $0x88] sm:$0xff]
          %v461 = vld [vmem:[%s252 + $0x90] sm:$0xff]
          %v462 = vld [vmem:[%s252 + $0x98] sm:$0xff]
          %v463 = vld [vmem:[%s252 + $0xa0] sm:$0xff]
          %v464 = vld [vmem:[%s252 + $0xa8] sm:$0xff]
          %v465 = vld [vmem:[%s252 + $0xb0] sm:$0xff]
          %v466 = vld [vmem:[%s252 + $0xb8] sm:$0xff]
          %v467 = vld [vmem:[%s252 + $0xc0] sm:$0xff]
          %v468 = vld [vmem:[%s252 + $0xc8] sm:$0xff]
          %v469 = vld [vmem:[%s252 + $0xd0] sm:$0xff]
          %v470 = vld [vmem:[%s252 + $0xd8] sm:$0xff]
          %v471 = vld [vmem:[%s252 + $0xe0] sm:$0xff]
          %v472 = vld [vmem:[%s252 + $0xe8] sm:$0xff]
          %v473 = vld [vmem:[%s252 + $0xf0] sm:$0xff]
          %v474 = vld [vmem:[%s252 + $0xf8] sm:$0xff]
          %v475 = vunpack.c.l.bf16 %v443
          %v476 = vunpack.c.h.bf16 %v443
          %v477 = vunpack.c.l.bf16 %v444
          %v478 = vunpack.c.h.bf16 %v444
          %v479 = vunpack.c.l.bf16 %v445
          %v480 = vunpack.c.h.bf16 %v445
          %v481 = vunpack.c.l.bf16 %v446
          %v482 = vunpack.c.h.bf16 %v446
          %v483 = vunpack.c.l.bf16 %v447
          %v484 = vunpack.c.h.bf16 %v447
          %v485 = vunpack.c.l.bf16 %v448
          %v486 = vunpack.c.h.bf16 %v448
          %v487 = vunpack.c.l.bf16 %v449
          %v488 = vunpack.c.h.bf16 %v449
          %v489 = vunpack.c.l.bf16 %v450
          %v490 = vunpack.c.h.bf16 %v450
          %v491 = vunpack.c.l.bf16 %v451
          %v492 = vunpack.c.h.bf16 %v451
          %v493 = vunpack.c.l.bf16 %v452
          %v494 = vunpack.c.h.bf16 %v452
          %v495 = vunpack.c.l.bf16 %v453
          %v496 = vunpack.c.h.bf16 %v453
          %v497 = vunpack.c.l.bf16 %v454
          %v498 = vunpack.c.h.bf16 %v454
          %v499 = vunpack.c.l.bf16 %v455
          %v500 = vunpack.c.h.bf16 %v455
          %v501 = vunpack.c.l.bf16 %v456
          %v502 = vunpack.c.h.bf16 %v456
          %v503 = vunpack.c.l.bf16 %v457
          %v504 = vunpack.c.h.bf16 %v457
          %v505 = vunpack.c.l.bf16 %v458
          %v506 = vunpack.c.h.bf16 %v458
          %v507 = vunpack.c.l.bf16 %v459
          %v508 = vunpack.c.h.bf16 %v459
          %v509 = vunpack.c.l.bf16 %v460
          %v510 = vunpack.c.h.bf16 %v460
          %v511 = vunpack.c.l.bf16 %v461
          %v512 = vunpack.c.h.bf16 %v461
          %v513 = vunpack.c.l.bf16 %v462
          %v514 = vunpack.c.h.bf16 %v462
          %v515 = vunpack.c.l.bf16 %v463
          %v516 = vunpack.c.h.bf16 %v463
          %v517 = vunpack.c.l.bf16 %v464
          %v518 = vunpack.c.h.bf16 %v464
          %v519 = vunpack.c.l.bf16 %v465
          %v520 = vunpack.c.h.bf16 %v465
          %v521 = vunpack.c.l.bf16 %v466
          %v522 = vunpack.c.h.bf16 %v466
          %v523 = vunpack.c.l.bf16 %v467
          %v524 = vunpack.c.h.bf16 %v467
          %v525 = vunpack.c.l.bf16 %v468
          %v526 = vunpack.c.h.bf16 %v468
          %v527 = vunpack.c.l.bf16 %v469
          %v528 = vunpack.c.h.bf16 %v469
          %v529 = vunpack.c.l.bf16 %v470
          %v530 = vunpack.c.h.bf16 %v470
          %v531 = vunpack.c.l.bf16 %v471
          %v532 = vunpack.c.h.bf16 %v471
          %v533 = vunpack.c.l.bf16 %v472
          %v534 = vunpack.c.h.bf16 %v472
          %v535 = vunpack.c.l.bf16 %v473
          %v536 = vunpack.c.h.bf16 %v473
          %v537 = vunpack.c.l.bf16 %v474
          %v538 = vunpack.c.h.bf16 %v474
          %v539 = vmul.f32 %v475, 0.125
          %v540 = vmul.f32 %v476, 0.125
          %v541 = vmul.f32 %v477, 0.125
          %v542 = vmul.f32 %v478, 0.125
          %v543 = vmul.f32 %v479, 0.125
          %v544 = vmul.f32 %v480, 0.125
          %v545 = vmul.f32 %v481, 0.125
          %v546 = vmul.f32 %v482, 0.125
          %v547 = vmul.f32 %v483, 0.125
          %v548 = vmul.f32 %v484, 0.125
          %v549 = vmul.f32 %v485, 0.125
          %v550 = vmul.f32 %v486, 0.125
          %v551 = vmul.f32 %v487, 0.125
          %v552 = vmul.f32 %v488, 0.125
          %v553 = vmul.f32 %v489, 0.125
          %v554 = vmul.f32 %v490, 0.125
          %v555 = vmul.f32 %v491, 0.125
          %v556 = vmul.f32 %v492, 0.125
          %v557 = vmul.f32 %v493, 0.125
          %v558 = vmul.f32 %v494, 0.125
          %v559 = vmul.f32 %v495, 0.125
          %v560 = vmul.f32 %v496, 0.125
          %v561 = vmul.f32 %v497, 0.125
          %v562 = vmul.f32 %v498, 0.125
          %v563 = vmul.f32 %v499, 0.125
          %v564 = vmul.f32 %v500, 0.125
          %v565 = vmul.f32 %v501, 0.125
          %v566 = vmul.f32 %v502, 0.125
          %v567 = vmul.f32 %v503, 0.125
          %v568 = vmul.f32 %v504, 0.125
          %v569 = vmul.f32 %v505, 0.125
          %v570 = vmul.f32 %v506, 0.125
          %v571 = vmul.f32 %v507, 0.125
          %v572 = vmul.f32 %v508, 0.125
          %v573 = vmul.f32 %v509, 0.125
          %v574 = vmul.f32 %v510, 0.125
          %v575 = vmul.f32 %v511, 0.125
          %v576 = vmul.f32 %v512, 0.125
          %v577 = vmul.f32 %v513, 0.125
          %v578 = vmul.f32 %v514, 0.125
          %v579 = vmul.f32 %v515, 0.125
          %v580 = vmul.f32 %v516, 0.125
          %v581 = vmul.f32 %v517, 0.125
          %v582 = vmul.f32 %v518, 0.125
          %v583 = vmul.f32 %v519, 0.125
          %v584 = vmul.f32 %v520, 0.125
          %v585 = vmul.f32 %v521, 0.125
          %v586 = vmul.f32 %v522, 0.125
          %v587 = vmul.f32 %v523, 0.125
          %v588 = vmul.f32 %v524, 0.125
          %v589 = vmul.f32 %v525, 0.125
          %v590 = vmul.f32 %v526, 0.125
          %v591 = vmul.f32 %v527, 0.125
          %v592 = vmul.f32 %v528, 0.125
          %v593 = vmul.f32 %v529, 0.125
          %v594 = vmul.f32 %v530, 0.125
          %v595 = vmul.f32 %v531, 0.125
          %v596 = vmul.f32 %v532, 0.125
          %v597 = vmul.f32 %v533, 0.125
          %v598 = vmul.f32 %v534, 0.125
          %v599 = vmul.f32 %v535, 0.125
          %v600 = vmul.f32 %v536, 0.125
          %v601 = vmul.f32 %v537, 0.125
          %v602 = vmul.f32 %v538, 0.125
          %v603 = vpack.c.bf16 %v540, %v539
          %v604 = vpack.c.bf16 %v542, %v541
          %v605 = vpack.c.bf16 %v544, %v543
          %v606 = vpack.c.bf16 %v546, %v545
          %v607 = vpack.c.bf16 %v548, %v547
          %v608 = vpack.c.bf16 %v550, %v549
          %v609 = vpack.c.bf16 %v552, %v551
          %v610 = vpack.c.bf16 %v554, %v553
          %v611 = vpack.c.bf16 %v556, %v555
          %v612 = vpack.c.bf16 %v558, %v557
          %v613 = vpack.c.bf16 %v560, %v559
          %v614 = vpack.c.bf16 %v562, %v561
          %v615 = vpack.c.bf16 %v564, %v563
          %v616 = vpack.c.bf16 %v566, %v565
          %v617 = vpack.c.bf16 %v568, %v567
          %v618 = vpack.c.bf16 %v570, %v569
          %v619 = vpack.c.bf16 %v572, %v571
          %v620 = vpack.c.bf16 %v574, %v573
          %v621 = vpack.c.bf16 %v576, %v575
          %v622 = vpack.c.bf16 %v578, %v577
          %v623 = vpack.c.bf16 %v580, %v579
          %v624 = vpack.c.bf16 %v582, %v581
          %v625 = vpack.c.bf16 %v584, %v583
          %v626 = vpack.c.bf16 %v586, %v585
          %v627 = vpack.c.bf16 %v588, %v587
          %v628 = vpack.c.bf16 %v590, %v589
          %v629 = vpack.c.bf16 %v592, %v591
          %v630 = vpack.c.bf16 %v594, %v593
          %v631 = vpack.c.bf16 %v596, %v595
          %v632 = vpack.c.bf16 %v598, %v597
          %v633 = vpack.c.bf16 %v600, %v599
          %v634 = vpack.c.bf16 %v602, %v601
          %635 = vst [vmem:[#allocation5] sm:$0xff] %v603
          %636 = vst [vmem:[#allocation5 + $0x8] sm:$0xff] %v604
          %637 = vst [vmem:[#allocation5 + $0x10] sm:$0xff] %v605
          %638 = vst [vmem:[#allocation5 + $0x18] sm:$0xff] %v606
          %639 = vst [vmem:[#allocation5 + $0x20] sm:$0xff] %v607
          %640 = vst [vmem:[#allocation5 + $0x28] sm:$0xff] %v608
          %641 = vst [vmem:[#allocation5 + $0x30] sm:$0xff] %v609
          %642 = vst [vmem:[#allocation5 + $0x38] sm:$0xff] %v610
          %643 = vst [vmem:[#allocation5 + $0x40] sm:$0xff] %v611
          %644 = vst [vmem:[#allocation5 + $0x48] sm:$0xff] %v612
          %645 = vst [vmem:[#allocation5 + $0x50] sm:$0xff] %v613
          %646 = vst [vmem:[#allocation5 + $0x58] sm:$0xff] %v614
          %647 = vst [vmem:[#allocation5 + $0x60] sm:$0xff] %v615
          %648 = vst [vmem:[#allocation5 + $0x68] sm:$0xff] %v616
          %649 = vst [vmem:[#allocation5 + $0x70] sm:$0xff] %v617
          %650 = vst [vmem:[#allocation5 + $0x78] sm:$0xff] %v618
          %651 = vst [vmem:[#allocation5 + $0x80] sm:$0xff] %v619
          %652 = vst [vmem:[#allocation5 + $0x88] sm:$0xff] %v620
          %653 = vst [vmem:[#allocation5 + $0x90] sm:$0xff] %v621
          %654 = vst [vmem:[#allocation5 + $0x98] sm:$0xff] %v622
          %655 = vst [vmem:[#allocation5 + $0xa0] sm:$0xff] %v623
          %656 = vst [vmem:[#allocation5 + $0xa8] sm:$0xff] %v624
          %657 = vst [vmem:[#allocation5 + $0xb0] sm:$0xff] %v625
          %658 = vst [vmem:[#allocation5 + $0xb8] sm:$0xff] %v626
          %659 = vst [vmem:[#allocation5 + $0xc0] sm:$0xff] %v627
          %660 = vst [vmem:[#allocation5 + $0xc8] sm:$0xff] %v628
          %661 = vst [vmem:[#allocation5 + $0xd0] sm:$0xff] %v629
          %662 = vst [vmem:[#allocation5 + $0xd8] sm:$0xff] %v630
          %663 = vst [vmem:[#allocation5 + $0xe0] sm:$0xff] %v631
          %664 = vst [vmem:[#allocation5 + $0xe8] sm:$0xff] %v632
          %665 = vst [vmem:[#allocation5 + $0xf0] sm:$0xff] %v633
          %666 = vst [vmem:[#allocation5 + $0xf8] sm:$0xff] %v634
        $region48: #{tpu_custom_call.1} parent=31 // pred_fallthru
          _
        %v667 = vld [vmem:[%s262] sm:$0xf]
        %v668 = vld [vmem:[%s262 + $0x4] sm:$0xf]
        %v669 = vld [vmem:[%s262 + $0x8] sm:$0xf]
        %v670 = vld [vmem:[%s262 + $0xc] sm:$0xf]
        %v671 = vld [vmem:[%s262 + $0x10] sm:$0xf]
        %v672 = vld [vmem:[%s262 + $0x14] sm:$0xf]
        %v673 = vld [vmem:[%s262 + $0x18] sm:$0xf]
        %v674 = vld [vmem:[%s262 + $0x1c] sm:$0xf]
        %v675 = vld [vmem:[%s262 + $0x20] sm:$0xf]
        %v676 = vld [vmem:[%s262 + $0x24] sm:$0xf]
        %v677 = vld [vmem:[%s262 + $0x28] sm:$0xf]
        %v678 = vld [vmem:[%s262 + $0x2c] sm:$0xf]
        %v679 = vld [vmem:[%s262 + $0x30] sm:$0xf]
        %v680 = vld [vmem:[%s262 + $0x34] sm:$0xf]
        %v681 = vld [vmem:[%s262 + $0x38] sm:$0xf]
        %v682 = vld [vmem:[%s262 + $0x3c] sm:$0xf]
        %v683 = vld [vmem:[%s262 + $0x40] sm:$0xf]
        %v684 = vld [vmem:[%s262 + $0x44] sm:$0xf]
        %v685 = vld [vmem:[%s262 + $0x48] sm:$0xf]
        %v686 = vld [vmem:[%s262 + $0x4c] sm:$0xf]
        %v687 = vld [vmem:[%s262 + $0x50] sm:$0xf]
        %v688 = vld [vmem:[%s262 + $0x54] sm:$0xf]
        %v689 = vld [vmem:[%s262 + $0x58] sm:$0xf]
        %v690 = vld [vmem:[%s262 + $0x5c] sm:$0xf]
        %v691 = vld [vmem:[%s262 + $0x60] sm:$0xf]
        %v692 = vld [vmem:[%s262 + $0x64] sm:$0xf]
        %v693 = vld [vmem:[%s262 + $0x68] sm:$0xf]
        %v694 = vld [vmem:[%s262 + $0x6c] sm:$0xf]
        %v695 = vld [vmem:[%s262 + $0x70] sm:$0xf]
        %v696 = vld [vmem:[%s262 + $0x74] sm:$0xf]
        %v697 = vld [vmem:[%s262 + $0x78] sm:$0xf]
        %v698 = vld [vmem:[%s262 + $0x7c] sm:$0xf]
        %v699 = vld [vmem:[%s272] sm:$0xf]
        %v700 = vld [vmem:[%s272 + $0x4] sm:$0xf]
        %v701 = vld [vmem:[%s272 + $0x8] sm:$0xf]
        %v702 = vld [vmem:[%s272 + $0xc] sm:$0xf]
        %v703 = vld [vmem:[%s272 + $0x10] sm:$0xf]
        %v704 = vld [vmem:[%s272 + $0x14] sm:$0xf]
        %v705 = vld [vmem:[%s272 + $0x18] sm:$0xf]
        %v706 = vld [vmem:[%s272 + $0x1c] sm:$0xf]
        %v707 = vld [vmem:[%s272 + $0x20] sm:$0xf]
        %v708 = vld [vmem:[%s272 + $0x24] sm:$0xf]
        %v709 = vld [vmem:[%s272 + $0x28] sm:$0xf]
        %v710 = vld [vmem:[%s272 + $0x2c] sm:$0xf]
        %v711 = vld [vmem:[%s272 + $0x30] sm:$0xf]
        %v712 = vld [vmem:[%s272 + $0x34] sm:$0xf]
        %v713 = vld [vmem:[%s272 + $0x38] sm:$0xf]
        %v714 = vld [vmem:[%s272 + $0x3c] sm:$0xf]
        %v715 = vld [vmem:[%s272 + $0x40] sm:$0xf]
        %v716 = vld [vmem:[%s272 + $0x44] sm:$0xf]
        %v717 = vld [vmem:[%s272 + $0x48] sm:$0xf]
        %v718 = vld [vmem:[%s272 + $0x4c] sm:$0xf]
        %v719 = vld [vmem:[%s272 + $0x50] sm:$0xf]
        %v720 = vld [vmem:[%s272 + $0x54] sm:$0xf]
        %v721 = vld [vmem:[%s272 + $0x58] sm:$0xf]
        %v722 = vld [vmem:[%s272 + $0x5c] sm:$0xf]
        %v723 = vld [vmem:[%s272 + $0x60] sm:$0xf]
        %v724 = vld [vmem:[%s272 + $0x64] sm:$0xf]
        %v725 = vld [vmem:[%s272 + $0x68] sm:$0xf]
        %v726 = vld [vmem:[%s272 + $0x6c] sm:$0xf]
        %v727 = vld [vmem:[%s272 + $0x70] sm:$0xf]
        %v728 = vld [vmem:[%s272 + $0x74] sm:$0xf]
        %v729 = vld [vmem:[%s272 + $0x78] sm:$0xf]
        %v730 = vld [vmem:[%s272 + $0x7c] sm:$0xf]
        %v731 = vld [vmem:[#allocation5] sm:$0xf]
        %v732 = vld [vmem:[#allocation5 + $0x8] sm:$0xf]
        %v733 = vld [vmem:[#allocation5 + $0x10] sm:$0xf]
        %v734 = vld [vmem:[#allocation5 + $0x18] sm:$0xf]
        %v735 = vld [vmem:[#allocation5 + $0x20] sm:$0xf]
        %v736 = vld [vmem:[#allocation5 + $0x28] sm:$0xf]
        %v737 = vld [vmem:[#allocation5 + $0x30] sm:$0xf]
        %v738 = vld [vmem:[#allocation5 + $0x38] sm:$0xf]
        %v739 = vld [vmem:[#allocation5 + $0x40] sm:$0xf]
        %v740 = vld [vmem:[#allocation5 + $0x48] sm:$0xf]
        %v741 = vld [vmem:[#allocation5 + $0x50] sm:$0xf]
        %v742 = vld [vmem:[#allocation5 + $0x58] sm:$0xf]
        %v743 = vld [vmem:[#allocation5 + $0x60] sm:$0xf]
        %v744 = vld [vmem:[#allocation5 + $0x68] sm:$0xf]
        %v745 = vld [vmem:[#allocation5 + $0x70] sm:$0xf]
        %v746 = vld [vmem:[#allocation5 + $0x78] sm:$0xf]
        %v747 = vld [vmem:[#allocation5 + $0x80] sm:$0xf]
        %v748 = vld [vmem:[#allocation5 + $0x88] sm:$0xf]
        %v749 = vld [vmem:[#allocation5 + $0x90] sm:$0xf]
        %v750 = vld [vmem:[#allocation5 + $0x98] sm:$0xf]
        %v751 = vld [vmem:[#allocation5 + $0xa0] sm:$0xf]
        %v752 = vld [vmem:[#allocation5 + $0xa8] sm:$0xf]
        %v753 = vld [vmem:[#allocation5 + $0xb0] sm:$0xf]
        %v754 = vld [vmem:[#allocation5 + $0xb8] sm:$0xf]
        %v755 = vld [vmem:[#allocation5 + $0xc0] sm:$0xf]
        %v756 = vld [vmem:[#allocation5 + $0xc8] sm:$0xf]
        %v757 = vld [vmem:[#allocation5 + $0xd0] sm:$0xf]
        %v758 = vld [vmem:[#allocation5 + $0xd8] sm:$0xf]
        %v759 = vld [vmem:[#allocation5 + $0xe0] sm:$0xf]
        %v760 = vld [vmem:[#allocation5 + $0xe8] sm:$0xf]
        %v761 = vld [vmem:[#allocation5 + $0xf0] sm:$0xf]
        %v762 = vld [vmem:[#allocation5 + $0xf8] sm:$0xf]
        %v763 = vld [vmem:[#allocation2] sm:$0xff]
        %v764 = vld [vmem:[#allocation2 + $0x8] sm:$0xff]
        %v765 = vld [vmem:[#allocation2 + $0x10] sm:$0xff]
        %v766 = vld [vmem:[#allocation2 + $0x18] sm:$0xff]
        %v767 = vld [vmem:[#allocation2 + $0x20] sm:$0xff]
        %v768 = vld [vmem:[#allocation2 + $0x28] sm:$0xff]
        %v769 = vld [vmem:[#allocation2 + $0x30] sm:$0xff]
        %v770 = vld [vmem:[#allocation2 + $0x38] sm:$0xff]
        %v771 = vld [vmem:[#allocation2 + $0x40] sm:$0xff]
        %v772 = vld [vmem:[#allocation2 + $0x48] sm:$0xff]
        %v773 = vld [vmem:[#allocation2 + $0x50] sm:$0xff]
        %v774 = vld [vmem:[#allocation2 + $0x58] sm:$0xff]
        %v775 = vld [vmem:[#allocation2 + $0x60] sm:$0xff]
        %v776 = vld [vmem:[#allocation2 + $0x68] sm:$0xff]
        %v777 = vld [vmem:[#allocation2 + $0x70] sm:$0xff]
        %v778 = vld [vmem:[#allocation2 + $0x78] sm:$0xff]
        %v779 = vld [vmem:[#allocation2 + $0x80] sm:$0xff]
        %v780 = vld [vmem:[#allocation2 + $0x88] sm:$0xff]
        %v781 = vld [vmem:[#allocation2 + $0x90] sm:$0xff]
        %v782 = vld [vmem:[#allocation2 + $0x98] sm:$0xff]
        %v783 = vld [vmem:[#allocation2 + $0xa0] sm:$0xff]
        %v784 = vld [vmem:[#allocation2 + $0xa8] sm:$0xff]
        %v785 = vld [vmem:[#allocation2 + $0xb0] sm:$0xff]
        %v786 = vld [vmem:[#allocation2 + $0xb8] sm:$0xff]
        %v787 = vld [vmem:[#allocation2 + $0xc0] sm:$0xff]
        %v788 = vld [vmem:[#allocation2 + $0xc8] sm:$0xff]
        %v789 = vld [vmem:[#allocation2 + $0xd0] sm:$0xff]
        %v790 = vld [vmem:[#allocation2 + $0xd8] sm:$0xff]
        %v791 = vld [vmem:[#allocation2 + $0xe0] sm:$0xff]
        %v792 = vld [vmem:[#allocation2 + $0xe8] sm:$0xff]
        %v793 = vld [vmem:[#allocation2 + $0xf0] sm:$0xff]
        %v794 = vld [vmem:[#allocation2 + $0xf8] sm:$0xff]
        %v795 = vld [vmem:[#allocation3] sm:$0xff]
        %v796 = vld [vmem:[#allocation3 + $0x8] sm:$0xff]
        %v797 = vld [vmem:[#allocation3 + $0x10] sm:$0xff]
        %v798 = vld [vmem:[#allocation3 + $0x18] sm:$0xff]
        %v799 = vld [vmem:[#allocation3 + $0x20] sm:$0xff]
        %v800 = vld [vmem:[#allocation3 + $0x28] sm:$0xff]
        %v801 = vld [vmem:[#allocation3 + $0x30] sm:$0xff]
        %v802 = vld [vmem:[#allocation3 + $0x38] sm:$0xff]
        %v803 = vld [vmem:[#allocation3 + $0x40] sm:$0xff]
        %v804 = vld [vmem:[#allocation3 + $0x48] sm:$0xff]
        %v805 = vld [vmem:[#allocation3 + $0x50] sm:$0xff]
        %v806 = vld [vmem:[#allocation3 + $0x58] sm:$0xff]
        %v807 = vld [vmem:[#allocation3 + $0x60] sm:$0xff]
        %v808 = vld [vmem:[#allocation3 + $0x68] sm:$0xff]
        %v809 = vld [vmem:[#allocation3 + $0x70] sm:$0xff]
        %v810 = vld [vmem:[#allocation3 + $0x78] sm:$0xff]
        %v811 = vld [vmem:[#allocation3 + $0x80] sm:$0xff]
        %v812 = vld [vmem:[#allocation3 + $0x88] sm:$0xff]
        %v813 = vld [vmem:[#allocation3 + $0x90] sm:$0xff]
        %v814 = vld [vmem:[#allocation3 + $0x98] sm:$0xff]
        %v815 = vld [vmem:[#allocation3 + $0xa0] sm:$0xff]
        %v816 = vld [vmem:[#allocation3 + $0xa8] sm:$0xff]
        %v817 = vld [vmem:[#allocation3 + $0xb0] sm:$0xff]
        %v818 = vld [vmem:[#allocation3 + $0xb8] sm:$0xff]
        %v819 = vld [vmem:[#allocation3 + $0xc0] sm:$0xff]
        %v820 = vld [vmem:[#allocation3 + $0xc8] sm:$0xff]
        %v821 = vld [vmem:[#allocation3 + $0xd0] sm:$0xff]
        %v822 = vld [vmem:[#allocation3 + $0xd8] sm:$0xff]
        %v823 = vld [vmem:[#allocation3 + $0xe0] sm:$0xff]
        %v824 = vld [vmem:[#allocation3 + $0xe8] sm:$0xff]
        %v825 = vld [vmem:[#allocation3 + $0xf0] sm:$0xff]
        %v826 = vld [vmem:[#allocation3 + $0xf8] sm:$0xff]
        %v827 = vld [vmem:[#allocation4] sm:$0xff]
        %v828 = vld [vmem:[#allocation4 + $0x10] sm:$0xff]
        %v829 = vld [vmem:[#allocation4 + $0x20] sm:$0xff]
        %v830 = vld [vmem:[#allocation4 + $0x30] sm:$0xff]
        %v831 = vld [vmem:[#allocation4 + $0x40] sm:$0xff]
        %v832 = vld [vmem:[#allocation4 + $0x50] sm:$0xff]
        %v833 = vld [vmem:[#allocation4 + $0x60] sm:$0xff]
        %v834 = vld [vmem:[#allocation4 + $0x70] sm:$0xff]
        %v835 = vld [vmem:[#allocation4 + $0x80] sm:$0xff]
        %v836 = vld [vmem:[#allocation4 + $0x90] sm:$0xff]
        %v837 = vld [vmem:[#allocation4 + $0xa0] sm:$0xff]
        %v838 = vld [vmem:[#allocation4 + $0xb0] sm:$0xff]
        %v839 = vld [vmem:[#allocation4 + $0xc0] sm:$0xff]
        %v840 = vld [vmem:[#allocation4 + $0xd0] sm:$0xff]
        %v841 = vld [vmem:[#allocation4 + $0xe0] sm:$0xff]
        %v842 = vld [vmem:[#allocation4 + $0xf0] sm:$0xff]
        %v843 = vld [vmem:[#allocation4 + $0x100] sm:$0xff]
        %v844 = vld [vmem:[#allocation4 + $0x110] sm:$0xff]
        %v845 = vld [vmem:[#allocation4 + $0x120] sm:$0xff]
        %v846 = vld [vmem:[#allocation4 + $0x130] sm:$0xff]
        %v847 = vld [vmem:[#allocation4 + $0x140] sm:$0xff]
        %v848 = vld [vmem:[#allocation4 + $0x150] sm:$0xff]
        %v849 = vld [vmem:[#allocation4 + $0x160] sm:$0xff]
        %v850 = vld [vmem:[#allocation4 + $0x170] sm:$0xff]
        %v851 = vld [vmem:[#allocation4 + $0x180] sm:$0xff]
        %v852 = vld [vmem:[#allocation4 + $0x190] sm:$0xff]
        %v853 = vld [vmem:[#allocation4 + $0x1a0] sm:$0xff]
        %v854 = vld [vmem:[#allocation4 + $0x1b0] sm:$0xff]
        %v855 = vld [vmem:[#allocation4 + $0x1c0] sm:$0xff]
        %v856 = vld [vmem:[#allocation4 + $0x1d0] sm:$0xff]
        %v857 = vld [vmem:[#allocation4 + $0x1e0] sm:$0xff]
        %v858 = vld [vmem:[#allocation4 + $0x1f0] sm:$0xff]
        %v891 = vunpack.c.l.b16 %v731
        %v892 = vunpack.c.l.b16 %v732
        %v893 = vunpack.c.l.b16 %v733
        %v894 = vunpack.c.l.b16 %v734
        %v895 = vunpack.c.l.b16 %v735
        %v896 = vunpack.c.l.b16 %v736
        %v897 = vunpack.c.l.b16 %v737
        %v898 = vunpack.c.l.b16 %v738
        %v899 = vunpack.c.l.b16 %v739
        %v900 = vunpack.c.l.b16 %v740
        %v901 = vunpack.c.l.b16 %v741
        %v902 = vunpack.c.l.b16 %v742
        %v903 = vunpack.c.l.b16 %v743
        %v904 = vunpack.c.l.b16 %v744
        %v905 = vunpack.c.l.b16 %v745
        %v906 = vunpack.c.l.b16 %v746
        %v907 = vunpack.c.l.b16 %v747
        %v908 = vunpack.c.l.b16 %v748
        %v909 = vunpack.c.l.b16 %v749
        %v910 = vunpack.c.l.b16 %v750
        %v911 = vunpack.c.l.b16 %v751
        %v912 = vunpack.c.l.b16 %v752
        %v913 = vunpack.c.l.b16 %v753
        %v914 = vunpack.c.l.b16 %v754
        %v915 = vunpack.c.l.b16 %v755
        %v916 = vunpack.c.l.b16 %v756
        %v917 = vunpack.c.l.b16 %v757
        %v918 = vunpack.c.l.b16 %v758
        %v919 = vunpack.c.l.b16 %v759
        %v920 = vunpack.c.l.b16 %v760
        %v921 = vunpack.c.l.b16 %v761
        %v922 = vunpack.c.l.b16 %v762
        %v923 = vpack.c.b16 %v892, %v891
        %v924 = vpack.c.b16 %v894, %v893
        %v925 = vpack.c.b16 %v896, %v895
        %v926 = vpack.c.b16 %v898, %v897
        %v927 = vpack.c.b16 %v900, %v899
        %v928 = vpack.c.b16 %v902, %v901
        %v929 = vpack.c.b16 %v904, %v903
        %v930 = vpack.c.b16 %v906, %v905
        %v931 = vpack.c.b16 %v908, %v907
        %v932 = vpack.c.b16 %v910, %v909
        %v933 = vpack.c.b16 %v912, %v911
        %v934 = vpack.c.b16 %v914, %v913
        %v935 = vpack.c.b16 %v916, %v915
        %v936 = vpack.c.b16 %v918, %v917
        %v937 = vpack.c.b16 %v920, %v919
        %v938 = vpack.c.b16 %v922, %v921
        %v971 = vunpack.c.l.b16 %v667
        %v972 = vunpack.c.l.b16 %v668
        %v973 = vunpack.c.l.b16 %v669
        %v974 = vunpack.c.l.b16 %v670
        %v975 = vunpack.c.l.b16 %v671
        %v976 = vunpack.c.l.b16 %v672
        %v977 = vunpack.c.l.b16 %v673
        %v978 = vunpack.c.l.b16 %v674
        %v979 = vunpack.c.l.b16 %v675
        %v980 = vunpack.c.l.b16 %v676
        %v981 = vunpack.c.l.b16 %v677
        %v982 = vunpack.c.l.b16 %v678
        %v983 = vunpack.c.l.b16 %v679
        %v984 = vunpack.c.l.b16 %v680
        %v985 = vunpack.c.l.b16 %v681
        %v986 = vunpack.c.l.b16 %v682
        %v987 = vunpack.c.l.b16 %v683
        %v988 = vunpack.c.l.b16 %v684
        %v989 = vunpack.c.l.b16 %v685
        %v990 = vunpack.c.l.b16 %v686
        %v991 = vunpack.c.l.b16 %v687
        %v992 = vunpack.c.l.b16 %v688
        %v993 = vunpack.c.l.b16 %v689
        %v994 = vunpack.c.l.b16 %v690
        %v995 = vunpack.c.l.b16 %v691
        %v996 = vunpack.c.l.b16 %v692
        %v997 = vunpack.c.l.b16 %v693
        %v998 = vunpack.c.l.b16 %v694
        %v999 = vunpack.c.l.b16 %v695
        %v1000 = vunpack.c.l.b16 %v696
        %v1001 = vunpack.c.l.b16 %v697
        %v1002 = vunpack.c.l.b16 %v698
        %v1003 = vpack.c.b16 %v972, %v971
        %v1004 = vpack.c.b16 %v974, %v973
        %v1005 = vpack.c.b16 %v976, %v975
        %v1006 = vpack.c.b16 %v978, %v977
        %v1007 = vpack.c.b16 %v980, %v979
        %v1008 = vpack.c.b16 %v982, %v981
        %v1009 = vpack.c.b16 %v984, %v983
        %v1010 = vpack.c.b16 %v986, %v985
        %v1011 = vpack.c.b16 %v988, %v987
        %v1012 = vpack.c.b16 %v990, %v989
        %v1013 = vpack.c.b16 %v992, %v991
        %v1014 = vpack.c.b16 %v994, %v993
        %v1015 = vpack.c.b16 %v996, %v995
        %v1016 = vpack.c.b16 %v998, %v997
        %v1017 = vpack.c.b16 %v1000, %v999
        %v1018 = vpack.c.b16 %v1002, %v1001
        %vm1019 = vcmask 523264
        %v1021 = vsel %vm1019, %v923, 0
        %v1024 = vsel %vm1019, %v924, 0
        %v1027 = vsel %vm1019, %v925, 0
        %v1030 = vsel %vm1019, %v926, 0
        %v1033 = vsel %vm1019, %v927, 0
        %v1036 = vsel %vm1019, %v928, 0
        %v1039 = vsel %vm1019, %v929, 0
        %v1042 = vsel %vm1019, %v930, 0
        %v1045 = vsel %vm1019, %v931, 0
        %v1048 = vsel %vm1019, %v932, 0
        %v1051 = vsel %vm1019, %v933, 0
        %v1054 = vsel %vm1019, %v934, 0
        %v1057 = vsel %vm1019, %v935, 0
        %v1060 = vsel %vm1019, %v936, 0
        %v1063 = vsel %vm1019, %v937, 0
        %v1066 = vsel %vm1019, %v938, 0
        %v1069 = vsel %vm1019, %v1003, 0
        %v1072 = vsel %vm1019, %v1004, 0
        %v1075 = vsel %vm1019, %v1005, 0
        %v1078 = vsel %vm1019, %v1006, 0
        %v1081 = vsel %vm1019, %v1007, 0
        %v1084 = vsel %vm1019, %v1008, 0
        %v1087 = vsel %vm1019, %v1009, 0
        %v1090 = vsel %vm1019, %v1010, 0
        %v1093 = vsel %vm1019, %v1011, 0
        %v1096 = vsel %vm1019, %v1012, 0
        %v1099 = vsel %vm1019, %v1013, 0
        %v1102 = vsel %vm1019, %v1014, 0
        %v1105 = vsel %vm1019, %v1015, 0
        %v1108 = vsel %vm1019, %v1016, 0
        %v1111 = vsel %vm1019, %v1017, 0
        %v1114 = vsel %vm1019, %v1018, 0
        %1116 = vmatpush.bf16.xpose.msra.mxu0 %v1090
        %1117 = vmatpush.bf16.xpose.msra.mxu0 %v1087
        %1118 = vmatpush.bf16.xpose.msra.mxu0 %v1084
        %1119 = vmatpush.bf16.xpose.msra.mxu0 %v1081
        %1120 = vmatpush.bf16.xpose.msra.mxu0 %v1078
        %1121 = vmatpush.bf16.xpose.msra.mxu0 %v1075
        %1122 = vmatpush.bf16.xpose.msra.mxu0 %v1072
        %1123 = vmatpush.bf16.xpose.msra.mxu0 %v1069
        %1124 = vmatmul.bf16.gmra.mxu0 %v1021
        %v1125 = vpop.f32.mrf.mxu0
        %v1126 = vadd.f32 0.0, %v1125
        %v1127 = vpop.f32.mrf.mxu0
        %v1128 = vadd.f32 0.0, %v1127
        %1129 = vmatmul.bf16.gmra.mxu0 %v1024
        %v1130 = vpop.f32.mrf.mxu0
        %v1131 = vadd.f32 0.0, %v1130
        %v1132 = vpop.f32.mrf.mxu0
        %v1133 = vadd.f32 0.0, %v1132
        %1134 = vmatmul.bf16.gmra.mxu0 %v1027
        %v1135 = vpop.f32.mrf.mxu0
        %v1136 = vadd.f32 0.0, %v1135
        %v1137 = vpop.f32.mrf.mxu0
        %v1138 = vadd.f32 0.0, %v1137
        %1139 = vmatmul.bf16.gmra.mxu0 %v1030
        %v1140 = vpop.f32.mrf.mxu0
        %v1141 = vadd.f32 0.0, %v1140
        %v1142 = vpop.f32.mrf.mxu0
        %v1143 = vadd.f32 0.0, %v1142
        %1144 = vmatmul.bf16.gmra.mxu0 %v1033
        %v1145 = vpop.f32.mrf.mxu0
        %v1146 = vadd.f32 0.0, %v1145
        %v1147 = vpop.f32.mrf.mxu0
        %v1148 = vadd.f32 0.0, %v1147
        %1149 = vmatmul.bf16.gmra.mxu0 %v1036
        %v1150 = vpop.f32.mrf.mxu0
        %v1151 = vadd.f32 0.0, %v1150
        %v1152 = vpop.f32.mrf.mxu0
        %v1153 = vadd.f32 0.0, %v1152
        %1154 = vmatmul.bf16.gmra.mxu0 %v1039
        %v1155 = vpop.f32.mrf.mxu0
        %v1156 = vadd.f32 0.0, %v1155
        %v1157 = vpop.f32.mrf.mxu0
        %v1158 = vadd.f32 0.0, %v1157
        %1159 = vmatmul.bf16.gmra.mxu0 %v1042
        %v1160 = vpop.f32.mrf.mxu0
        %v1161 = vadd.f32 0.0, %v1160
        %v1162 = vpop.f32.mrf.mxu0
        %v1163 = vadd.f32 0.0, %v1162
        %1164 = vmatmul.bf16.gmra.mxu0 %v1045
        %v1165 = vpop.f32.mrf.mxu0
        %v1166 = vadd.f32 0.0, %v1165
        %v1167 = vpop.f32.mrf.mxu0
        %v1168 = vadd.f32 0.0, %v1167
        %1169 = vmatmul.bf16.gmra.mxu0 %v1048
        %v1170 = vpop.f32.mrf.mxu0
        %v1171 = vadd.f32 0.0, %v1170
        %v1172 = vpop.f32.mrf.mxu0
        %v1173 = vadd.f32 0.0, %v1172
        %1174 = vmatmul.bf16.gmra.mxu0 %v1051
        %v1175 = vpop.f32.mrf.mxu0
        %v1176 = vadd.f32 0.0, %v1175
        %v1177 = vpop.f32.mrf.mxu0
        %v1178 = vadd.f32 0.0, %v1177
        %1179 = vmatmul.bf16.gmra.mxu0 %v1054
        %v1180 = vpop.f32.mrf.mxu0
        %v1181 = vadd.f32 0.0, %v1180
        %v1182 = vpop.f32.mrf.mxu0
        %v1183 = vadd.f32 0.0, %v1182
        %1184 = vmatmul.bf16.gmra.mxu0 %v1057
        %v1185 = vpop.f32.mrf.mxu0
        %v1186 = vadd.f32 0.0, %v1185
        %v1187 = vpop.f32.mrf.mxu0
        %v1188 = vadd.f32 0.0, %v1187
        %1189 = vmatmul.bf16.gmra.mxu0 %v1060
        %v1190 = vpop.f32.mrf.mxu0
        %v1191 = vadd.f32 0.0, %v1190
        %v1192 = vpop.f32.mrf.mxu0
        %v1193 = vadd.f32 0.0, %v1192
        %1194 = vmatmul.bf16.gmra.mxu0 %v1063
        %v1195 = vpop.f32.mrf.mxu0
        %v1196 = vadd.f32 0.0, %v1195
        %v1197 = vpop.f32.mrf.mxu0
        %v1198 = vadd.f32 0.0, %v1197
        %1199 = vmatmul.bf16.gmra.mxu0 %v1066
        %v1200 = vpop.f32.mrf.mxu0
        %v1201 = vadd.f32 0.0, %v1200
        %v1202 = vpop.f32.mrf.mxu0
        %v1203 = vadd.f32 0.0, %v1202
        %1204 = vdwg.mxu0
        %1205 = vmatpush.bf16.xpose.msra.mxu0 %v1114
        %1206 = vmatpush.bf16.xpose.msra.mxu0 %v1111
        %1207 = vmatpush.bf16.xpose.msra.mxu0 %v1108
        %1208 = vmatpush.bf16.xpose.msra.mxu0 %v1105
        %1209 = vmatpush.bf16.xpose.msra.mxu0 %v1102
        %1210 = vmatpush.bf16.xpose.msra.mxu0 %v1099
        %1211 = vmatpush.bf16.xpose.msra.mxu0 %v1096
        %1212 = vmatpush.bf16.xpose.msra.mxu0 %v1093
        %1213 = vmatmul.bf16.gmra.mxu0 %v1021
        %v1214 = vpop.f32.mrf.mxu0
        %v1215 = vadd.f32 0.0, %v1214
        %v1216 = vpop.f32.mrf.mxu0
        %v1217 = vadd.f32 0.0, %v1216
        %1218 = vmatmul.bf16.gmra.mxu0 %v1024
        %v1219 = vpop.f32.mrf.mxu0
        %v1220 = vadd.f32 0.0, %v1219
        %v1221 = vpop.f32.mrf.mxu0
        %v1222 = vadd.f32 0.0, %v1221
        %1223 = vmatmul.bf16.gmra.mxu0 %v1027
        %v1224 = vpop.f32.mrf.mxu0
        %v1225 = vadd.f32 0.0, %v1224
        %v1226 = vpop.f32.mrf.mxu0
        %v1227 = vadd.f32 0.0, %v1226
        %1228 = vmatmul.bf16.gmra.mxu0 %v1030
        %v1229 = vpop.f32.mrf.mxu0
        %v1230 = vadd.f32 0.0, %v1229
        %v1231 = vpop.f32.mrf.mxu0
        %v1232 = vadd.f32 0.0, %v1231
        %1233 = vmatmul.bf16.gmra.mxu0 %v1033
        %v1234 = vpop.f32.mrf.mxu0
        %v1235 = vadd.f32 0.0, %v1234
        %v1236 = vpop.f32.mrf.mxu0
        %v1237 = vadd.f32 0.0, %v1236
        %1238 = vmatmul.bf16.gmra.mxu0 %v1036
        %v1239 = vpop.f32.mrf.mxu0
        %v1240 = vadd.f32 0.0, %v1239
        %v1241 = vpop.f32.mrf.mxu0
        %v1242 = vadd.f32 0.0, %v1241
        %1243 = vmatmul.bf16.gmra.mxu0 %v1039
        %v1244 = vpop.f32.mrf.mxu0
        %v1245 = vadd.f32 0.0, %v1244
        %v1246 = vpop.f32.mrf.mxu0
        %v1247 = vadd.f32 0.0, %v1246
        %1248 = vmatmul.bf16.gmra.mxu0 %v1042
        %v1249 = vpop.f32.mrf.mxu0
        %v1250 = vadd.f32 0.0, %v1249
        %v1251 = vpop.f32.mrf.mxu0
        %v1252 = vadd.f32 0.0, %v1251
        %1253 = vmatmul.bf16.gmra.mxu0 %v1045
        %v1254 = vpop.f32.mrf.mxu0
        %v1255 = vadd.f32 0.0, %v1254
        %v1256 = vpop.f32.mrf.mxu0
        %v1257 = vadd.f32 0.0, %v1256
        %1258 = vmatmul.bf16.gmra.mxu0 %v1048
        %v1259 = vpop.f32.mrf.mxu0
        %v1260 = vadd.f32 0.0, %v1259
        %v1261 = vpop.f32.mrf.mxu0
        %v1262 = vadd.f32 0.0, %v1261
        %1263 = vmatmul.bf16.gmra.mxu0 %v1051
        %v1264 = vpop.f32.mrf.mxu0
        %v1265 = vadd.f32 0.0, %v1264
        %v1266 = vpop.f32.mrf.mxu0
        %v1267 = vadd.f32 0.0, %v1266
        %1268 = vmatmul.bf16.gmra.mxu0 %v1054
        %v1269 = vpop.f32.mrf.mxu0
        %v1270 = vadd.f32 0.0, %v1269
        %v1271 = vpop.f32.mrf.mxu0
        %v1272 = vadd.f32 0.0, %v1271
        %1273 = vmatmul.bf16.gmra.mxu0 %v1057
        %v1274 = vpop.f32.mrf.mxu0
        %v1275 = vadd.f32 0.0, %v1274
        %v1276 = vpop.f32.mrf.mxu0
        %v1277 = vadd.f32 0.0, %v1276
        %1278 = vmatmul.bf16.gmra.mxu0 %v1060
        %v1279 = vpop.f32.mrf.mxu0
        %v1280 = vadd.f32 0.0, %v1279
        %v1281 = vpop.f32.mrf.mxu0
        %v1282 = vadd.f32 0.0, %v1281
        %1283 = vmatmul.bf16.gmra.mxu0 %v1063
        %v1284 = vpop.f32.mrf.mxu0
        %v1285 = vadd.f32 0.0, %v1284
        %v1286 = vpop.f32.mrf.mxu0
        %v1287 = vadd.f32 0.0, %v1286
        %1288 = vmatmul.bf16.gmra.mxu0 %v1066
        %v1289 = vpop.f32.mrf.mxu0
        %v1290 = vadd.f32 0.0, %v1289
        %v1291 = vpop.f32.mrf.mxu0
        %v1292 = vadd.f32 0.0, %v1291
        %1293 = vdwg.mxu0
        %v1294 = vmax.f32 %v1126, %v1215
        %1295 = vmax.xlane.f32.xlu0 %v1294
        %v1296 = vpop.xlane.xlu0 %1295
        %v1297 = vmax.f32 %v1128, %v1217
        %1298 = vmax.xlane.f32.xlu0 %v1297
        %v1299 = vpop.xlane.xlu0 %1298
        %v1300 = vmax.f32 %v1131, %v1220
        %1301 = vmax.xlane.f32.xlu0 %v1300
        %v1302 = vpop.xlane.xlu0 %1301
        %v1303 = vmax.f32 %v1133, %v1222
        %1304 = vmax.xlane.f32.xlu0 %v1303
        %v1305 = vpop.xlane.xlu0 %1304
        %v1306 = vmax.f32 %v1136, %v1225
        %1307 = vmax.xlane.f32.xlu0 %v1306
        %v1308 = vpop.xlane.xlu0 %1307
        %v1309 = vmax.f32 %v1138, %v1227
        %1310 = vmax.xlane.f32.xlu0 %v1309
        %v1311 = vpop.xlane.xlu0 %1310
        %v1312 = vmax.f32 %v1141, %v1230
        %1313 = vmax.xlane.f32.xlu0 %v1312
        %v1314 = vpop.xlane.xlu0 %1313
        %v1315 = vmax.f32 %v1143, %v1232
        %1316 = vmax.xlane.f32.xlu0 %v1315
        %v1317 = vpop.xlane.xlu0 %1316
        %v1318 = vmax.f32 %v1146, %v1235
        %1319 = vmax.xlane.f32.xlu0 %v1318
        %v1320 = vpop.xlane.xlu0 %1319
        %v1321 = vmax.f32 %v1148, %v1237
        %1322 = vmax.xlane.f32.xlu0 %v1321
        %v1323 = vpop.xlane.xlu0 %1322
        %v1324 = vmax.f32 %v1151, %v1240
        %1325 = vmax.xlane.f32.xlu0 %v1324
        %v1326 = vpop.xlane.xlu0 %1325
        %v1327 = vmax.f32 %v1153, %v1242
        %1328 = vmax.xlane.f32.xlu0 %v1327
        %v1329 = vpop.xlane.xlu0 %1328
        %v1330 = vmax.f32 %v1156, %v1245
        %1331 = vmax.xlane.f32.xlu0 %v1330
        %v1332 = vpop.xlane.xlu0 %1331
        %v1333 = vmax.f32 %v1158, %v1247
        %1334 = vmax.xlane.f32.xlu0 %v1333
        %v1335 = vpop.xlane.xlu0 %1334
        %v1336 = vmax.f32 %v1161, %v1250
        %1337 = vmax.xlane.f32.xlu0 %v1336
        %v1338 = vpop.xlane.xlu0 %1337
        %v1339 = vmax.f32 %v1163, %v1252
        %1340 = vmax.xlane.f32.xlu0 %v1339
        %v1341 = vpop.xlane.xlu0 %1340
        %v1342 = vmax.f32 %v1166, %v1255
        %1343 = vmax.xlane.f32.xlu0 %v1342
        %v1344 = vpop.xlane.xlu0 %1343
        %v1345 = vmax.f32 %v1168, %v1257
        %1346 = vmax.xlane.f32.xlu0 %v1345
        %v1347 = vpop.xlane.xlu0 %1346
        %v1348 = vmax.f32 %v1171, %v1260
        %1349 = vmax.xlane.f32.xlu0 %v1348
        %v1350 = vpop.xlane.xlu0 %1349
        %v1351 = vmax.f32 %v1173, %v1262
        %1352 = vmax.xlane.f32.xlu0 %v1351
        %v1353 = vpop.xlane.xlu0 %1352
        %v1354 = vmax.f32 %v1176, %v1265
        %1355 = vmax.xlane.f32.xlu0 %v1354
        %v1356 = vpop.xlane.xlu0 %1355
        %v1357 = vmax.f32 %v1178, %v1267
        %1358 = vmax.xlane.f32.xlu0 %v1357
        %v1359 = vpop.xlane.xlu0 %1358
        %v1360 = vmax.f32 %v1181, %v1270
        %1361 = vmax.xlane.f32.xlu0 %v1360
        %v1362 = vpop.xlane.xlu0 %1361
        %v1363 = vmax.f32 %v1183, %v1272
        %1364 = vmax.xlane.f32.xlu0 %v1363
        %v1365 = vpop.xlane.xlu0 %1364
        %v1366 = vmax.f32 %v1186, %v1275
        %1367 = vmax.xlane.f32.xlu0 %v1366
        %v1368 = vpop.xlane.xlu0 %1367
        %v1369 = vmax.f32 %v1188, %v1277
        %1370 = vmax.xlane.f32.xlu0 %v1369
        %v1371 = vpop.xlane.xlu0 %1370
        %v1372 = vmax.f32 %v1191, %v1280
        %1373 = vmax.xlane.f32.xlu0 %v1372
        %v1374 = vpop.xlane.xlu0 %1373
        %v1375 = vmax.f32 %v1193, %v1282
        %1376 = vmax.xlane.f32.xlu0 %v1375
        %v1377 = vpop.xlane.xlu0 %1376
        %v1378 = vmax.f32 %v1196, %v1285
        %1379 = vmax.xlane.f32.xlu0 %v1378
        %v1380 = vpop.xlane.xlu0 %1379
        %v1381 = vmax.f32 %v1198, %v1287
        %1382 = vmax.xlane.f32.xlu0 %v1381
        %v1383 = vpop.xlane.xlu0 %1382
        %v1384 = vmax.f32 %v1201, %v1290
        %1385 = vmax.xlane.f32.xlu0 %v1384
        %v1386 = vpop.xlane.xlu0 %1385
        %v1387 = vmax.f32 %v1203, %v1292
        %1388 = vmax.xlane.f32.xlu0 %v1387
        %v1389 = vpop.xlane.xlu0 %1388
        %v1390 = vmax.f32 %v763, %v1296
        %v1391 = vmax.f32 %v764, %v1299
        %v1392 = vmax.f32 %v765, %v1302
        %v1393 = vmax.f32 %v766, %v1305
        %v1394 = vmax.f32 %v767, %v1308
        %v1395 = vmax.f32 %v768, %v1311
        %v1396 = vmax.f32 %v769, %v1314
        %v1397 = vmax.f32 %v770, %v1317
        %v1398 = vmax.f32 %v771, %v1320
        %v1399 = vmax.f32 %v772, %v1323
        %v1400 = vmax.f32 %v773, %v1326
        %v1401 = vmax.f32 %v774, %v1329
        %v1402 = vmax.f32 %v775, %v1332
        %v1403 = vmax.f32 %v776, %v1335
        %v1404 = vmax.f32 %v777, %v1338
        %v1405 = vmax.f32 %v778, %v1341
        %v1406 = vmax.f32 %v779, %v1344
        %v1407 = vmax.f32 %v780, %v1347
        %v1408 = vmax.f32 %v781, %v1350
        %v1409 = vmax.f32 %v782, %v1353
        %v1410 = vmax.f32 %v783, %v1356
        %v1411 = vmax.f32 %v784, %v1359
        %v1412 = vmax.f32 %v785, %v1362
        %v1413 = vmax.f32 %v786, %v1365
        %v1414 = vmax.f32 %v787, %v1368
        %v1415 = vmax.f32 %v788, %v1371
        %v1416 = vmax.f32 %v789, %v1374
        %v1417 = vmax.f32 %v790, %v1377
        %v1418 = vmax.f32 %v791, %v1380
        %v1419 = vmax.f32 %v792, %v1383
        %v1420 = vmax.f32 %v793, %v1386
        %v1421 = vmax.f32 %v794, %v1389
        %v1422 = vsub.f32 %v763, %v1390
        %v1423 = vsub.f32 %v764, %v1391
        %v1424 = vsub.f32 %v765, %v1392
        %v1425 = vsub.f32 %v766, %v1393
        %v1426 = vsub.f32 %v767, %v1394
        %v1427 = vsub.f32 %v768, %v1395
        %v1428 = vsub.f32 %v769, %v1396
        %v1429 = vsub.f32 %v770, %v1397
        %v1430 = vsub.f32 %v771, %v1398
        %v1431 = vsub.f32 %v772, %v1399
        %v1432 = vsub.f32 %v773, %v1400
        %v1433 = vsub.f32 %v774, %v1401
        %v1434 = vsub.f32 %v775, %v1402
        %v1435 = vsub.f32 %v776, %v1403
        %v1436 = vsub.f32 %v777, %v1404
        %v1437 = vsub.f32 %v778, %v1405
        %v1438 = vsub.f32 %v779, %v1406
        %v1439 = vsub.f32 %v780, %v1407
        %v1440 = vsub.f32 %v781, %v1408
        %v1441 = vsub.f32 %v782, %v1409
        %v1442 = vsub.f32 %v783, %v1410
        %v1443 = vsub.f32 %v784, %v1411
        %v1444 = vsub.f32 %v785, %v1412
        %v1445 = vsub.f32 %v786, %v1413
        %v1446 = vsub.f32 %v787, %v1414
        %v1447 = vsub.f32 %v788, %v1415
        %v1448 = vsub.f32 %v789, %v1416
        %v1449 = vsub.f32 %v790, %v1417
        %v1450 = vsub.f32 %v791, %v1418
        %v1451 = vsub.f32 %v792, %v1419
        %v1452 = vsub.f32 %v793, %v1420
        %v1453 = vsub.f32 %v794, %v1421
        %v1454 = vmul.f32 %v1422, 1.442695
        %v1455 = vpow.pop %v1454
        %v1456 = vmul.f32 %v1423, 1.442695
        %v1457 = vpow.pop %v1456
        %v1458 = vmul.f32 %v1424, 1.442695
        %v1459 = vpow.pop %v1458
        %v1460 = vmul.f32 %v1425, 1.442695
        %v1461 = vpow.pop %v1460
        %v1462 = vmul.f32 %v1426, 1.442695
        %v1463 = vpow.pop %v1462
        %v1464 = vmul.f32 %v1427, 1.442695
        %v1465 = vpow.pop %v1464
        %v1466 = vmul.f32 %v1428, 1.442695
        %v1467 = vpow.pop %v1466
        %v1468 = vmul.f32 %v1429, 1.442695
        %v1469 = vpow.pop %v1468
        %v1470 = vmul.f32 %v1430, 1.442695
        %v1471 = vpow.pop %v1470
        %v1472 = vmul.f32 %v1431, 1.442695
        %v1473 = vpow.pop %v1472
        %v1474 = vmul.f32 %v1432, 1.442695
        %v1475 = vpow.pop %v1474
        %v1476 = vmul.f32 %v1433, 1.442695
        %v1477 = vpow.pop %v1476
        %v1478 = vmul.f32 %v1434, 1.442695
        %v1479 = vpow.pop %v1478
        %v1480 = vmul.f32 %v1435, 1.442695
        %v1481 = vpow.pop %v1480
        %v1482 = vmul.f32 %v1436, 1.442695
        %v1483 = vpow.pop %v1482
        %v1484 = vmul.f32 %v1437, 1.442695
        %v1485 = vpow.pop %v1484
        %v1486 = vmul.f32 %v1438, 1.442695
        %v1487 = vpow.pop %v1486
        %v1488 = vmul.f32 %v1439, 1.442695
        %v1489 = vpow.pop %v1488
        %v1490 = vmul.f32 %v1440, 1.442695
        %v1491 = vpow.pop %v1490
        %v1492 = vmul.f32 %v1441, 1.442695
        %v1493 = vpow.pop %v1492
        %v1494 = vmul.f32 %v1442, 1.442695
        %v1495 = vpow.pop %v1494
        %v1496 = vmul.f32 %v1443, 1.442695
        %v1497 = vpow.pop %v1496
        %v1498 = vmul.f32 %v1444, 1.442695
        %v1499 = vpow.pop %v1498
        %v1500 = vmul.f32 %v1445, 1.442695
        %v1501 = vpow.pop %v1500
        %v1502 = vmul.f32 %v1446, 1.442695
        %v1503 = vpow.pop %v1502
        %v1504 = vmul.f32 %v1447, 1.442695
        %v1505 = vpow.pop %v1504
        %v1506 = vmul.f32 %v1448, 1.442695
        %v1507 = vpow.pop %v1506
        %v1508 = vmul.f32 %v1449, 1.442695
        %v1509 = vpow.pop %v1508
        %v1510 = vmul.f32 %v1450, 1.442695
        %v1511 = vpow.pop %v1510
        %v1512 = vmul.f32 %v1451, 1.442695
        %v1513 = vpow.pop %v1512
        %v1514 = vmul.f32 %v1452, 1.442695
        %v1515 = vpow.pop %v1514
        %v1516 = vmul.f32 %v1453, 1.442695
        %v1517 = vpow.pop %v1516
        %1519 = vset.pattern.permute.xlu0 0
        %1520 = vperm.xlu0 %1519, %v1390
        %v1521 = vpop.permute.xlu0 %1520
        %1524 = vset.pattern.permute.xlu0 0
        %1525 = vperm.xlu0 %1524, %v1391
        %v1526 = vpop.permute.xlu0 %1525
        %1529 = vset.pattern.permute.xlu0 0
        %1530 = vperm.xlu0 %1529, %v1392
        %v1531 = vpop.permute.xlu0 %1530
        %1534 = vset.pattern.permute.xlu0 0
        %1535 = vperm.xlu0 %1534, %v1393
        %v1536 = vpop.permute.xlu0 %1535
        %1539 = vset.pattern.permute.xlu0 0
        %1540 = vperm.xlu0 %1539, %v1394
        %v1541 = vpop.permute.xlu0 %1540
        %1544 = vset.pattern.permute.xlu0 0
        %1545 = vperm.xlu0 %1544, %v1395
        %v1546 = vpop.permute.xlu0 %1545
        %1549 = vset.pattern.permute.xlu0 0
        %1550 = vperm.xlu0 %1549, %v1396
        %v1551 = vpop.permute.xlu0 %1550
        %1554 = vset.pattern.permute.xlu0 0
        %1555 = vperm.xlu0 %1554, %v1397
        %v1556 = vpop.permute.xlu0 %1555
        %1559 = vset.pattern.permute.xlu0 0
        %1560 = vperm.xlu0 %1559, %v1398
        %v1561 = vpop.permute.xlu0 %1560
        %1564 = vset.pattern.permute.xlu0 0
        %1565 = vperm.xlu0 %1564, %v1399
        %v1566 = vpop.permute.xlu0 %1565
        %1569 = vset.pattern.permute.xlu0 0
        %1570 = vperm.xlu0 %1569, %v1400
        %v1571 = vpop.permute.xlu0 %1570
        %1574 = vset.pattern.permute.xlu0 0
        %1575 = vperm.xlu0 %1574, %v1401
        %v1576 = vpop.permute.xlu0 %1575
        %1579 = vset.pattern.permute.xlu0 0
        %1580 = vperm.xlu0 %1579, %v1402
        %v1581 = vpop.permute.xlu0 %1580
        %1584 = vset.pattern.permute.xlu0 0
        %1585 = vperm.xlu0 %1584, %v1403
        %v1586 = vpop.permute.xlu0 %1585
        %1589 = vset.pattern.permute.xlu0 0
        %1590 = vperm.xlu0 %1589, %v1404
        %v1591 = vpop.permute.xlu0 %1590
        %1594 = vset.pattern.permute.xlu0 0
        %1595 = vperm.xlu0 %1594, %v1405
        %v1596 = vpop.permute.xlu0 %1595
        %1599 = vset.pattern.permute.xlu0 0
        %1600 = vperm.xlu0 %1599, %v1406
        %v1601 = vpop.permute.xlu0 %1600
        %1604 = vset.pattern.permute.xlu0 0
        %1605 = vperm.xlu0 %1604, %v1407
        %v1606 = vpop.permute.xlu0 %1605
        %1609 = vset.pattern.permute.xlu0 0
        %1610 = vperm.xlu0 %1609, %v1408
        %v1611 = vpop.permute.xlu0 %1610
        %1614 = vset.pattern.permute.xlu0 0
        %1615 = vperm.xlu0 %1614, %v1409
        %v1616 = vpop.permute.xlu0 %1615
        %1619 = vset.pattern.permute.xlu0 0
        %1620 = vperm.xlu0 %1619, %v1410
        %v1621 = vpop.permute.xlu0 %1620
        %1624 = vset.pattern.permute.xlu0 0
        %1625 = vperm.xlu0 %1624, %v1411
        %v1626 = vpop.permute.xlu0 %1625
        %1629 = vset.pattern.permute.xlu0 0
        %1630 = vperm.xlu0 %1629, %v1412
        %v1631 = vpop.permute.xlu0 %1630
        %1634 = vset.pattern.permute.xlu0 0
        %1635 = vperm.xlu0 %1634, %v1413
        %v1636 = vpop.permute.xlu0 %1635
        %1639 = vset.pattern.permute.xlu0 0
        %1640 = vperm.xlu0 %1639, %v1414
        %v1641 = vpop.permute.xlu0 %1640
        %1644 = vset.pattern.permute.xlu0 0
        %1645 = vperm.xlu0 %1644, %v1415
        %v1646 = vpop.permute.xlu0 %1645
        %1649 = vset.pattern.permute.xlu0 0
        %1650 = vperm.xlu0 %1649, %v1416
        %v1651 = vpop.permute.xlu0 %1650
        %1654 = vset.pattern.permute.xlu0 0
        %1655 = vperm.xlu0 %1654, %v1417
        %v1656 = vpop.permute.xlu0 %1655
        %1659 = vset.pattern.permute.xlu0 0
        %1660 = vperm.xlu0 %1659, %v1418
        %v1661 = vpop.permute.xlu0 %1660
        %1664 = vset.pattern.permute.xlu0 0
        %1665 = vperm.xlu0 %1664, %v1419
        %v1666 = vpop.permute.xlu0 %1665
        %1669 = vset.pattern.permute.xlu0 0
        %1670 = vperm.xlu0 %1669, %v1420
        %v1671 = vpop.permute.xlu0 %1670
        %1674 = vset.pattern.permute.xlu0 0
        %1675 = vperm.xlu0 %1674, %v1421
        %v1676 = vpop.permute.xlu0 %1675
        %v1678 = vsub.f32 %v1126, %v1521
        %v1679 = vsub.f32 %v1215, %v1521
        %v1680 = vsub.f32 %v1128, %v1526
        %v1681 = vsub.f32 %v1217, %v1526
        %v1682 = vsub.f32 %v1131, %v1531
        %v1683 = vsub.f32 %v1220, %v1531
        %v1684 = vsub.f32 %v1133, %v1536
        %v1685 = vsub.f32 %v1222, %v1536
        %v1686 = vsub.f32 %v1136, %v1541
        %v1687 = vsub.f32 %v1225, %v1541
        %v1688 = vsub.f32 %v1138, %v1546
        %v1689 = vsub.f32 %v1227, %v1546
        %v1690 = vsub.f32 %v1141, %v1551
        %v1691 = vsub.f32 %v1230, %v1551
        %v1692 = vsub.f32 %v1143, %v1556
        %v1693 = vsub.f32 %v1232, %v1556
        %v1694 = vsub.f32 %v1146, %v1561
        %v1695 = vsub.f32 %v1235, %v1561
        %v1696 = vsub.f32 %v1148, %v1566
        %v1697 = vsub.f32 %v1237, %v1566
        %v1698 = vsub.f32 %v1151, %v1571
        %v1699 = vsub.f32 %v1240, %v1571
        %v1700 = vsub.f32 %v1153, %v1576
        %v1701 = vsub.f32 %v1242, %v1576
        %v1702 = vsub.f32 %v1156, %v1581
        %v1703 = vsub.f32 %v1245, %v1581
        %v1704 = vsub.f32 %v1158, %v1586
        %v1705 = vsub.f32 %v1247, %v1586
        %v1706 = vsub.f32 %v1161, %v1591
        %v1707 = vsub.f32 %v1250, %v1591
        %v1708 = vsub.f32 %v1163, %v1596
        %v1709 = vsub.f32 %v1252, %v1596
        %v1710 = vsub.f32 %v1166, %v1601
        %v1711 = vsub.f32 %v1255, %v1601
        %v1712 = vsub.f32 %v1168, %v1606
        %v1713 = vsub.f32 %v1257, %v1606
        %v1714 = vsub.f32 %v1171, %v1611
        %v1715 = vsub.f32 %v1260, %v1611
        %v1716 = vsub.f32 %v1173, %v1616
        %v1717 = vsub.f32 %v1262, %v1616
        %v1718 = vsub.f32 %v1176, %v1621
        %v1719 = vsub.f32 %v1265, %v1621
        %v1720 = vsub.f32 %v1178, %v1626
        %v1721 = vsub.f32 %v1267, %v1626
        %v1722 = vsub.f32 %v1181, %v1631
        %v1723 = vsub.f32 %v1270, %v1631
        %v1724 = vsub.f32 %v1183, %v1636
        %v1725 = vsub.f32 %v1272, %v1636
        %v1726 = vsub.f32 %v1186, %v1641
        %v1727 = vsub.f32 %v1275, %v1641
        %v1728 = vsub.f32 %v1188, %v1646
        %v1729 = vsub.f32 %v1277, %v1646
        %v1730 = vsub.f32 %v1191, %v1651
        %v1731 = vsub.f32 %v1280, %v1651
        %v1732 = vsub.f32 %v1193, %v1656
        %v1733 = vsub.f32 %v1282, %v1656
        %v1734 = vsub.f32 %v1196, %v1661
        %v1735 = vsub.f32 %v1285, %v1661
        %v1736 = vsub.f32 %v1198, %v1666
        %v1737 = vsub.f32 %v1287, %v1666
        %v1738 = vsub.f32 %v1201, %v1671
        %v1739 = vsub.f32 %v1290, %v1671
        %v1740 = vsub.f32 %v1203, %v1676
        %v1741 = vsub.f32 %v1292, %v1676
        %v1742 = vmul.f32 %v1678, 1.442695
        %v1743 = vpow.pop %v1742
        %v1744 = vmul.f32 %v1679, 1.442695
        %v1745 = vpow.pop %v1744
        %v1746 = vmul.f32 %v1680, 1.442695
        %v1747 = vpow.pop %v1746
        %v1748 = vmul.f32 %v1681, 1.442695
        %v1749 = vpow.pop %v1748
        %v1750 = vmul.f32 %v1682, 1.442695
        %v1751 = vpow.pop %v1750
        %v1752 = vmul.f32 %v1683, 1.442695
        %v1753 = vpow.pop %v1752
        %v1754 = vmul.f32 %v1684, 1.442695
        %v1755 = vpow.pop %v1754
        %v1756 = vmul.f32 %v1685, 1.442695
        %v1757 = vpow.pop %v1756
        %v1758 = vmul.f32 %v1686, 1.442695
        %v1759 = vpow.pop %v1758
        %v1760 = vmul.f32 %v1687, 1.442695
        %v1761 = vpow.pop %v1760
        %v1762 = vmul.f32 %v1688, 1.442695
        %v1763 = vpow.pop %v1762
        %v1764 = vmul.f32 %v1689, 1.442695
        %v1765 = vpow.pop %v1764
        %v1766 = vmul.f32 %v1690, 1.442695
        %v1767 = vpow.pop %v1766
        %v1768 = vmul.f32 %v1691, 1.442695
        %v1769 = vpow.pop %v1768
        %v1770 = vmul.f32 %v1692, 1.442695
        %v1771 = vpow.pop %v1770
        %v1772 = vmul.f32 %v1693, 1.442695
        %v1773 = vpow.pop %v1772
        %v1774 = vmul.f32 %v1694, 1.442695
        %v1775 = vpow.pop %v1774
        %v1776 = vmul.f32 %v1695, 1.442695
        %v1777 = vpow.pop %v1776
        %v1778 = vmul.f32 %v1696, 1.442695
        %v1779 = vpow.pop %v1778
        %v1780 = vmul.f32 %v1697, 1.442695
        %v1781 = vpow.pop %v1780
        %v1782 = vmul.f32 %v1698, 1.442695
        %v1783 = vpow.pop %v1782
        %v1784 = vmul.f32 %v1699, 1.442695
        %v1785 = vpow.pop %v1784
        %v1786 = vmul.f32 %v1700, 1.442695
        %v1787 = vpow.pop %v1786
        %v1788 = vmul.f32 %v1701, 1.442695
        %v1789 = vpow.pop %v1788
        %v1790 = vmul.f32 %v1702, 1.442695
        %v1791 = vpow.pop %v1790
        %v1792 = vmul.f32 %v1703, 1.442695
        %v1793 = vpow.pop %v1792
        %v1794 = vmul.f32 %v1704, 1.442695
        %v1795 = vpow.pop %v1794
        %v1796 = vmul.f32 %v1705, 1.442695
        %v1797 = vpow.pop %v1796
        %v1798 = vmul.f32 %v1706, 1.442695
        %v1799 = vpow.pop %v1798
        %v1800 = vmul.f32 %v1707, 1.442695
        %v1801 = vpow.pop %v1800
        %v1802 = vmul.f32 %v1708, 1.442695
        %v1803 = vpow.pop %v1802
        %v1804 = vmul.f32 %v1709, 1.442695
        %v1805 = vpow.pop %v1804
        %v1806 = vmul.f32 %v1710, 1.442695
        %v1807 = vpow.pop %v1806
        %v1808 = vmul.f32 %v1711, 1.442695
        %v1809 = vpow.pop %v1808
        %v1810 = vmul.f32 %v1712, 1.442695
        %v1811 = vpow.pop %v1810
        %v1812 = vmul.f32 %v1713, 1.442695
        %v1813 = vpow.pop %v1812
        %v1814 = vmul.f32 %v1714, 1.442695
        %v1815 = vpow.pop %v1814
        %v1816 = vmul.f32 %v1715, 1.442695
        %v1817 = vpow.pop %v1816
        %v1818 = vmul.f32 %v1716, 1.442695
        %v1819 = vpow.pop %v1818
        %v1820 = vmul.f32 %v1717, 1.442695
        %v1821 = vpow.pop %v1820
        %v1822 = vmul.f32 %v1718, 1.442695
        %v1823 = vpow.pop %v1822
        %v1824 = vmul.f32 %v1719, 1.442695
        %v1825 = vpow.pop %v1824
        %v1826 = vmul.f32 %v1720, 1.442695
        %v1827 = vpow.pop %v1826
        %v1828 = vmul.f32 %v1721, 1.442695
        %v1829 = vpow.pop %v1828
        %v1830 = vmul.f32 %v1722, 1.442695
        %v1831 = vpow.pop %v1830
        %v1832 = vmul.f32 %v1723, 1.442695
        %v1833 = vpow.pop %v1832
        %v1834 = vmul.f32 %v1724, 1.442695
        %v1835 = vpow.pop %v1834
        %v1836 = vmul.f32 %v1725, 1.442695
        %v1837 = vpow.pop %v1836
        %v1838 = vmul.f32 %v1726, 1.442695
        %v1839 = vpow.pop %v1838
        %v1840 = vmul.f32 %v1727, 1.442695
        %v1841 = vpow.pop %v1840
        %v1842 = vmul.f32 %v1728, 1.442695
        %v1843 = vpow.pop %v1842
        %v1844 = vmul.f32 %v1729, 1.442695
        %v1845 = vpow.pop %v1844
        %v1846 = vmul.f32 %v1730, 1.442695
        %v1847 = vpow.pop %v1846
        %v1848 = vmul.f32 %v1731, 1.442695
        %v1849 = vpow.pop %v1848
        %v1850 = vmul.f32 %v1732, 1.442695
        %v1851 = vpow.pop %v1850
        %v1852 = vmul.f32 %v1733, 1.442695
        %v1853 = vpow.pop %v1852
        %v1854 = vmul.f32 %v1734, 1.442695
        %v1855 = vpow.pop %v1854
        %v1856 = vmul.f32 %v1735, 1.442695
        %v1857 = vpow.pop %v1856
        %v1858 = vmul.f32 %v1736, 1.442695
        %v1859 = vpow.pop %v1858
        %v1860 = vmul.f32 %v1737, 1.442695
        %v1861 = vpow.pop %v1860
        %v1862 = vmul.f32 %v1738, 1.442695
        %v1863 = vpow.pop %v1862
        %v1864 = vmul.f32 %v1739, 1.442695
        %v1865 = vpow.pop %v1864
        %v1866 = vmul.f32 %v1740, 1.442695
        %v1867 = vpow.pop %v1866
        %v1868 = vmul.f32 %v1741, 1.442695
        %v1869 = vpow.pop %v1868
        %v1870 = vmul.f32 %v1455, %v795
        %v1871 = vmul.f32 %v1457, %v796
        %v1872 = vmul.f32 %v1459, %v797
        %v1873 = vmul.f32 %v1461, %v798
        %v1874 = vmul.f32 %v1463, %v799
        %v1875 = vmul.f32 %v1465, %v800
        %v1876 = vmul.f32 %v1467, %v801
        %v1877 = vmul.f32 %v1469, %v802
        %v1878 = vmul.f32 %v1471, %v803
        %v1879 = vmul.f32 %v1473, %v804
        %v1880 = vmul.f32 %v1475, %v805
        %v1881 = vmul.f32 %v1477, %v806
        %v1882 = vmul.f32 %v1479, %v807
        %v1883 = vmul.f32 %v1481, %v808
        %v1884 = vmul.f32 %v1483, %v809
        %v1885 = vmul.f32 %v1485, %v810
        %v1886 = vmul.f32 %v1487, %v811
        %v1887 = vmul.f32 %v1489, %v812
        %v1888 = vmul.f32 %v1491, %v813
        %v1889 = vmul.f32 %v1493, %v814
        %v1890 = vmul.f32 %v1495, %v815
        %v1891 = vmul.f32 %v1497, %v816
        %v1892 = vmul.f32 %v1499, %v817
        %v1893 = vmul.f32 %v1501, %v818
        %v1894 = vmul.f32 %v1503, %v819
        %v1895 = vmul.f32 %v1505, %v820
        %v1896 = vmul.f32 %v1507, %v821
        %v1897 = vmul.f32 %v1509, %v822
        %v1898 = vmul.f32 %v1511, %v823
        %v1899 = vmul.f32 %v1513, %v824
        %v1900 = vmul.f32 %v1515, %v825
        %v1901 = vmul.f32 %v1517, %v826
        %v1902 = vadd.f32 %v1743, %v1745
        %1903 = vadd.xlane.f32.xlu0 %v1902
        %v1904 = vpop.xlane.xlu0 %1903
        %v1905 = vadd.f32 %v1747, %v1749
        %1906 = vadd.xlane.f32.xlu0 %v1905
        %v1907 = vpop.xlane.xlu0 %1906
        %v1908 = vadd.f32 %v1751, %v1753
        %1909 = vadd.xlane.f32.xlu0 %v1908
        %v1910 = vpop.xlane.xlu0 %1909
        %v1911 = vadd.f32 %v1755, %v1757
        %1912 = vadd.xlane.f32.xlu0 %v1911
        %v1913 = vpop.xlane.xlu0 %1912
        %v1914 = vadd.f32 %v1759, %v1761
        %1915 = vadd.xlane.f32.xlu0 %v1914
        %v1916 = vpop.xlane.xlu0 %1915
        %v1917 = vadd.f32 %v1763, %v1765
        %1918 = vadd.xlane.f32.xlu0 %v1917
        %v1919 = vpop.xlane.xlu0 %1918
        %v1920 = vadd.f32 %v1767, %v1769
        %1921 = vadd.xlane.f32.xlu0 %v1920
        %v1922 = vpop.xlane.xlu0 %1921
        %v1923 = vadd.f32 %v1771, %v1773
        %1924 = vadd.xlane.f32.xlu0 %v1923
        %v1925 = vpop.xlane.xlu0 %1924
        %v1926 = vadd.f32 %v1775, %v1777
        %1927 = vadd.xlane.f32.xlu0 %v1926
        %v1928 = vpop.xlane.xlu0 %1927
        %v1929 = vadd.f32 %v1779, %v1781
        %1930 = vadd.xlane.f32.xlu0 %v1929
        %v1931 = vpop.xlane.xlu0 %1930
        %v1932 = vadd.f32 %v1783, %v1785
        %1933 = vadd.xlane.f32.xlu0 %v1932
        %v1934 = vpop.xlane.xlu0 %1933
        %v1935 = vadd.f32 %v1787, %v1789
        %1936 = vadd.xlane.f32.xlu0 %v1935
        %v1937 = vpop.xlane.xlu0 %1936
        %v1938 = vadd.f32 %v1791, %v1793
        %1939 = vadd.xlane.f32.xlu0 %v1938
        %v1940 = vpop.xlane.xlu0 %1939
        %v1941 = vadd.f32 %v1795, %v1797
        %1942 = vadd.xlane.f32.xlu0 %v1941
        %v1943 = vpop.xlane.xlu0 %1942
        %v1944 = vadd.f32 %v1799, %v1801
        %1945 = vadd.xlane.f32.xlu0 %v1944
        %v1946 = vpop.xlane.xlu0 %1945
        %v1947 = vadd.f32 %v1803, %v1805
        %1948 = vadd.xlane.f32.xlu0 %v1947
        %v1949 = vpop.xlane.xlu0 %1948
        %v1950 = vadd.f32 %v1807, %v1809
        %1951 = vadd.xlane.f32.xlu0 %v1950
        %v1952 = vpop.xlane.xlu0 %1951
        %v1953 = vadd.f32 %v1811, %v1813
        %1954 = vadd.xlane.f32.xlu0 %v1953
        %v1955 = vpop.xlane.xlu0 %1954
        %v1956 = vadd.f32 %v1815, %v1817
        %1957 = vadd.xlane.f32.xlu0 %v1956
        %v1958 = vpop.xlane.xlu0 %1957
        %v1959 = vadd.f32 %v1819, %v1821
        %1960 = vadd.xlane.f32.xlu0 %v1959
        %v1961 = vpop.xlane.xlu0 %1960
        %v1962 = vadd.f32 %v1823, %v1825
        %1963 = vadd.xlane.f32.xlu0 %v1962
        %v1964 = vpop.xlane.xlu0 %1963
        %v1965 = vadd.f32 %v1827, %v1829
        %1966 = vadd.xlane.f32.xlu0 %v1965
        %v1967 = vpop.xlane.xlu0 %1966
        %v1968 = vadd.f32 %v1831, %v1833
        %1969 = vadd.xlane.f32.xlu0 %v1968
        %v1970 = vpop.xlane.xlu0 %1969
        %v1971 = vadd.f32 %v1835, %v1837
        %1972 = vadd.xlane.f32.xlu0 %v1971
        %v1973 = vpop.xlane.xlu0 %1972
        %v1974 = vadd.f32 %v1839, %v1841
        %1975 = vadd.xlane.f32.xlu0 %v1974
        %v1976 = vpop.xlane.xlu0 %1975
        %v1977 = vadd.f32 %v1843, %v1845
        %1978 = vadd.xlane.f32.xlu0 %v1977
        %v1979 = vpop.xlane.xlu0 %1978
        %v1980 = vadd.f32 %v1847, %v1849
        %1981 = vadd.xlane.f32.xlu0 %v1980
        %v1982 = vpop.xlane.xlu0 %1981
        %v1983 = vadd.f32 %v1851, %v1853
        %1984 = vadd.xlane.f32.xlu0 %v1983
        %v1985 = vpop.xlane.xlu0 %1984
        %v1986 = vadd.f32 %v1855, %v1857
        %1987 = vadd.xlane.f32.xlu0 %v1986
        %v1988 = vpop.xlane.xlu0 %1987
        %v1989 = vadd.f32 %v1859, %v1861
        %1990 = vadd.xlane.f32.xlu0 %v1989
        %v1991 = vpop.xlane.xlu0 %1990
        %v1992 = vadd.f32 %v1863, %v1865
        %1993 = vadd.xlane.f32.xlu0 %v1992
        %v1994 = vpop.xlane.xlu0 %1993
        %v1995 = vadd.f32 %v1867, %v1869
        %1996 = vadd.xlane.f32.xlu0 %v1995
        %v1997 = vpop.xlane.xlu0 %1996
        %v1998 = vadd.f32 %v1870, %v1904
        %v1999 = vadd.f32 %v1871, %v1907
        %v2000 = vadd.f32 %v1872, %v1910
        %v2001 = vadd.f32 %v1873, %v1913
        %v2002 = vadd.f32 %v1874, %v1916
        %v2003 = vadd.f32 %v1875, %v1919
        %v2004 = vadd.f32 %v1876, %v1922
        %v2005 = vadd.f32 %v1877, %v1925
        %v2006 = vadd.f32 %v1878, %v1928
        %v2007 = vadd.f32 %v1879, %v1931
        %v2008 = vadd.f32 %v1880, %v1934
        %v2009 = vadd.f32 %v1881, %v1937
        %v2010 = vadd.f32 %v1882, %v1940
        %v2011 = vadd.f32 %v1883, %v1943
        %v2012 = vadd.f32 %v1884, %v1946
        %v2013 = vadd.f32 %v1885, %v1949
        %v2014 = vadd.f32 %v1886, %v1952
        %v2015 = vadd.f32 %v1887, %v1955
        %v2016 = vadd.f32 %v1888, %v1958
        %v2017 = vadd.f32 %v1889, %v1961
        %v2018 = vadd.f32 %v1890, %v1964
        %v2019 = vadd.f32 %v1891, %v1967
        %v2020 = vadd.f32 %v1892, %v1970
        %v2021 = vadd.f32 %v1893, %v1973
        %v2022 = vadd.f32 %v1894, %v1976
        %v2023 = vadd.f32 %v1895, %v1979
        %v2024 = vadd.f32 %v1896, %v1982
        %v2025 = vadd.f32 %v1897, %v1985
        %v2026 = vadd.f32 %v1898, %v1988
        %v2027 = vadd.f32 %v1899, %v1991
        %v2028 = vadd.f32 %v1900, %v1994
        %v2029 = vadd.f32 %v1901, %v1997
        %v2030 = vpack.c.bf16 %v1747, %v1743
        %v2031 = vpack.c.bf16 %v1749, %v1745
        %v2032 = vpack.c.bf16 %v1755, %v1751
        %v2033 = vpack.c.bf16 %v1757, %v1753
        %v2034 = vpack.c.bf16 %v1763, %v1759
        %v2035 = vpack.c.bf16 %v1765, %v1761
        %v2036 = vpack.c.bf16 %v1771, %v1767
        %v2037 = vpack.c.bf16 %v1773, %v1769
        %v2038 = vpack.c.bf16 %v1779, %v1775
        %v2039 = vpack.c.bf16 %v1781, %v1777
        %v2040 = vpack.c.bf16 %v1787, %v1783
        %v2041 = vpack.c.bf16 %v1789, %v1785
        %v2042 = vpack.c.bf16 %v1795, %v1791
        %v2043 = vpack.c.bf16 %v1797, %v1793
        %v2044 = vpack.c.bf16 %v1803, %v1799
        %v2045 = vpack.c.bf16 %v1805, %v1801
        %v2046 = vpack.c.bf16 %v1811, %v1807
        %v2047 = vpack.c.bf16 %v1813, %v1809
        %v2048 = vpack.c.bf16 %v1819, %v1815
        %v2049 = vpack.c.bf16 %v1821, %v1817
        %v2050 = vpack.c.bf16 %v1827, %v1823
        %v2051 = vpack.c.bf16 %v1829, %v1825
        %v2052 = vpack.c.bf16 %v1835, %v1831
        %v2053 = vpack.c.bf16 %v1837, %v1833
        %v2054 = vpack.c.bf16 %v1843, %v1839
        %v2055 = vpack.c.bf16 %v1845, %v1841
        %v2056 = vpack.c.bf16 %v1851, %v1847
        %v2057 = vpack.c.bf16 %v1853, %v1849
        %v2058 = vpack.c.bf16 %v1859, %v1855
        %v2059 = vpack.c.bf16 %v1861, %v1857
        %v2060 = vpack.c.bf16 %v1867, %v1863
        %v2061 = vpack.c.bf16 %v1869, %v1865
        %v2094 = vunpack.c.l.b16 %v699
        %v2095 = vunpack.c.l.b16 %v700
        %v2096 = vunpack.c.l.b16 %v701
        %v2097 = vunpack.c.l.b16 %v702
        %v2098 = vunpack.c.l.b16 %v703
        %v2099 = vunpack.c.l.b16 %v704
        %v2100 = vunpack.c.l.b16 %v705
        %v2101 = vunpack.c.l.b16 %v706
        %v2102 = vunpack.c.l.b16 %v707
        %v2103 = vunpack.c.l.b16 %v708
        %v2104 = vunpack.c.l.b16 %v709
        %v2105 = vunpack.c.l.b16 %v710
        %v2106 = vunpack.c.l.b16 %v711
        %v2107 = vunpack.c.l.b16 %v712
        %v2108 = vunpack.c.l.b16 %v713
        %v2109 = vunpack.c.l.b16 %v714
        %v2110 = vunpack.c.l.b16 %v715
        %v2111 = vunpack.c.l.b16 %v716
        %v2112 = vunpack.c.l.b16 %v717
        %v2113 = vunpack.c.l.b16 %v718
        %v2114 = vunpack.c.l.b16 %v719
        %v2115 = vunpack.c.l.b16 %v720
        %v2116 = vunpack.c.l.b16 %v721
        %v2117 = vunpack.c.l.b16 %v722
        %v2118 = vunpack.c.l.b16 %v723
        %v2119 = vunpack.c.l.b16 %v724
        %v2120 = vunpack.c.l.b16 %v725
        %v2121 = vunpack.c.l.b16 %v726
        %v2122 = vunpack.c.l.b16 %v727
        %v2123 = vunpack.c.l.b16 %v728
        %v2124 = vunpack.c.l.b16 %v729
        %v2125 = vunpack.c.l.b16 %v730
        %v2126 = vpack.c.b16 %v2095, %v2094
        %v2127 = vpack.c.b16 %v2097, %v2096
        %v2128 = vpack.c.b16 %v2099, %v2098
        %v2129 = vpack.c.b16 %v2101, %v2100
        %v2130 = vpack.c.b16 %v2103, %v2102
        %v2131 = vpack.c.b16 %v2105, %v2104
        %v2132 = vpack.c.b16 %v2107, %v2106
        %v2133 = vpack.c.b16 %v2109, %v2108
        %v2134 = vpack.c.b16 %v2111, %v2110
        %v2135 = vpack.c.b16 %v2113, %v2112
        %v2136 = vpack.c.b16 %v2115, %v2114
        %v2137 = vpack.c.b16 %v2117, %v2116
        %v2138 = vpack.c.b16 %v2119, %v2118
        %v2139 = vpack.c.b16 %v2121, %v2120
        %v2140 = vpack.c.b16 %v2123, %v2122
        %v2141 = vpack.c.b16 %v2125, %v2124
        %2158 = vmatpush.bf16.msra.mxu0 %v2133
        %2159 = vmatpush.bf16.msra.mxu0 %v2132
        %2160 = vmatpush.bf16.msra.mxu0 %v2131
        %2161 = vmatpush.bf16.msra.mxu0 %v2130
        %2162 = vmatpush.bf16.msra.mxu0 %v2129
        %2163 = vmatpush.bf16.msra.mxu0 %v2128
        %2164 = vmatpush.bf16.msra.mxu0 %v2127
        %2165 = vmatpush.bf16.msra.mxu0 %v2126
        %2166 = vmatmul.bf16.gmra.mxu0 %v2030
        %v2167 = vpop.f32.mrf.mxu0
        %v2168 = vadd.f32 0.0, %v2167
        %v2169 = vpop.f32.mrf.mxu0
        %v2170 = vadd.f32 0.0, %v2169
        %2171 = vmatmul.bf16.gmra.mxu0 %v2032
        %v2172 = vpop.f32.mrf.mxu0
        %v2173 = vadd.f32 0.0, %v2172
        %v2174 = vpop.f32.mrf.mxu0
        %v2175 = vadd.f32 0.0, %v2174
        %2176 = vmatmul.bf16.gmra.mxu0 %v2034
        %v2177 = vpop.f32.mrf.mxu0
        %v2178 = vadd.f32 0.0, %v2177
        %v2179 = vpop.f32.mrf.mxu0
        %v2180 = vadd.f32 0.0, %v2179
        %2181 = vmatmul.bf16.gmra.mxu0 %v2036
        %v2182 = vpop.f32.mrf.mxu0
        %v2183 = vadd.f32 0.0, %v2182
        %v2184 = vpop.f32.mrf.mxu0
        %v2185 = vadd.f32 0.0, %v2184
        %2186 = vmatmul.bf16.gmra.mxu0 %v2038
        %v2187 = vpop.f32.mrf.mxu0
        %v2188 = vadd.f32 0.0, %v2187
        %v2189 = vpop.f32.mrf.mxu0
        %v2190 = vadd.f32 0.0, %v2189
        %2191 = vmatmul.bf16.gmra.mxu0 %v2040
        %v2192 = vpop.f32.mrf.mxu0
        %v2193 = vadd.f32 0.0, %v2192
        %v2194 = vpop.f32.mrf.mxu0
        %v2195 = vadd.f32 0.0, %v2194
        %2196 = vmatmul.bf16.gmra.mxu0 %v2042
        %v2197 = vpop.f32.mrf.mxu0
        %v2198 = vadd.f32 0.0, %v2197
        %v2199 = vpop.f32.mrf.mxu0
        %v2200 = vadd.f32 0.0, %v2199
        %2201 = vmatmul.bf16.gmra.mxu0 %v2044
        %v2202 = vpop.f32.mrf.mxu0
        %v2203 = vadd.f32 0.0, %v2202
        %v2204 = vpop.f32.mrf.mxu0
        %v2205 = vadd.f32 0.0, %v2204
        %2206 = vmatmul.bf16.gmra.mxu0 %v2046
        %v2207 = vpop.f32.mrf.mxu0
        %v2208 = vadd.f32 0.0, %v2207
        %v2209 = vpop.f32.mrf.mxu0
        %v2210 = vadd.f32 0.0, %v2209
        %2211 = vmatmul.bf16.gmra.mxu0 %v2048
        %v2212 = vpop.f32.mrf.mxu0
        %v2213 = vadd.f32 0.0, %v2212
        %v2214 = vpop.f32.mrf.mxu0
        %v2215 = vadd.f32 0.0, %v2214
        %2216 = vmatmul.bf16.gmra.mxu0 %v2050
        %v2217 = vpop.f32.mrf.mxu0
        %v2218 = vadd.f32 0.0, %v2217
        %v2219 = vpop.f32.mrf.mxu0
        %v2220 = vadd.f32 0.0, %v2219
        %2221 = vmatmul.bf16.gmra.mxu0 %v2052
        %v2222 = vpop.f32.mrf.mxu0
        %v2223 = vadd.f32 0.0, %v2222
        %v2224 = vpop.f32.mrf.mxu0
        %v2225 = vadd.f32 0.0, %v2224
        %2226 = vmatmul.bf16.gmra.mxu0 %v2054
        %v2227 = vpop.f32.mrf.mxu0
        %v2228 = vadd.f32 0.0, %v2227
        %v2229 = vpop.f32.mrf.mxu0
        %v2230 = vadd.f32 0.0, %v2229
        %2231 = vmatmul.bf16.gmra.mxu0 %v2056
        %v2232 = vpop.f32.mrf.mxu0
        %v2233 = vadd.f32 0.0, %v2232
        %v2234 = vpop.f32.mrf.mxu0
        %v2235 = vadd.f32 0.0, %v2234
        %2236 = vmatmul.bf16.gmra.mxu0 %v2058
        %v2237 = vpop.f32.mrf.mxu0
        %v2238 = vadd.f32 0.0, %v2237
        %v2239 = vpop.f32.mrf.mxu0
        %v2240 = vadd.f32 0.0, %v2239
        %2241 = vmatmul.bf16.gmra.mxu0 %v2060
        %v2242 = vpop.f32.mrf.mxu0
        %v2243 = vadd.f32 0.0, %v2242
        %v2244 = vpop.f32.mrf.mxu0
        %v2245 = vadd.f32 0.0, %v2244
        %2246 = vdwg.mxu0
        %2247 = vmatpush.bf16.msra.mxu0 %v2141
        %2248 = vmatpush.bf16.msra.mxu0 %v2140
        %2249 = vmatpush.bf16.msra.mxu0 %v2139
        %2250 = vmatpush.bf16.msra.mxu0 %v2138
        %2251 = vmatpush.bf16.msra.mxu0 %v2137
        %2252 = vmatpush.bf16.msra.mxu0 %v2136
        %2253 = vmatpush.bf16.msra.mxu0 %v2135
        %2254 = vmatpush.bf16.msra.mxu0 %v2134
        %2255 = vmatmul.bf16.gmra.mxu0 %v2031
        %v2256 = vpop.f32.mrf.mxu0
        %v2257 = vadd.f32 %v2168, %v2256
        %v2258 = vpop.f32.mrf.mxu0
        %v2259 = vadd.f32 %v2170, %v2258
        %2260 = vmatmul.bf16.gmra.mxu0 %v2033
        %v2261 = vpop.f32.mrf.mxu0
        %v2262 = vadd.f32 %v2173, %v2261
        %v2263 = vpop.f32.mrf.mxu0
        %v2264 = vadd.f32 %v2175, %v2263
        %2265 = vmatmul.bf16.gmra.mxu0 %v2035
        %v2266 = vpop.f32.mrf.mxu0
        %v2267 = vadd.f32 %v2178, %v2266
        %v2268 = vpop.f32.mrf.mxu0
        %v2269 = vadd.f32 %v2180, %v2268
        %2270 = vmatmul.bf16.gmra.mxu0 %v2037
        %v2271 = vpop.f32.mrf.mxu0
        %v2272 = vadd.f32 %v2183, %v2271
        %v2273 = vpop.f32.mrf.mxu0
        %v2274 = vadd.f32 %v2185, %v2273
        %2275 = vmatmul.bf16.gmra.mxu0 %v2039
        %v2276 = vpop.f32.mrf.mxu0
        %v2277 = vadd.f32 %v2188, %v2276
        %v2278 = vpop.f32.mrf.mxu0
        %v2279 = vadd.f32 %v2190, %v2278
        %2280 = vmatmul.bf16.gmra.mxu0 %v2041
        %v2281 = vpop.f32.mrf.mxu0
        %v2282 = vadd.f32 %v2193, %v2281
        %v2283 = vpop.f32.mrf.mxu0
        %v2284 = vadd.f32 %v2195, %v2283
        %2285 = vmatmul.bf16.gmra.mxu0 %v2043
        %v2286 = vpop.f32.mrf.mxu0
        %v2287 = vadd.f32 %v2198, %v2286
        %v2288 = vpop.f32.mrf.mxu0
        %v2289 = vadd.f32 %v2200, %v2288
        %2290 = vmatmul.bf16.gmra.mxu0 %v2045
        %v2291 = vpop.f32.mrf.mxu0
        %v2292 = vadd.f32 %v2203, %v2291
        %v2293 = vpop.f32.mrf.mxu0
        %v2294 = vadd.f32 %v2205, %v2293
        %2295 = vmatmul.bf16.gmra.mxu0 %v2047
        %v2296 = vpop.f32.mrf.mxu0
        %v2297 = vadd.f32 %v2208, %v2296
        %v2298 = vpop.f32.mrf.mxu0
        %v2299 = vadd.f32 %v2210, %v2298
        %2300 = vmatmul.bf16.gmra.mxu0 %v2049
        %v2301 = vpop.f32.mrf.mxu0
        %v2302 = vadd.f32 %v2213, %v2301
        %v2303 = vpop.f32.mrf.mxu0
        %v2304 = vadd.f32 %v2215, %v2303
        %2305 = vmatmul.bf16.gmra.mxu0 %v2051
        %v2306 = vpop.f32.mrf.mxu0
        %v2307 = vadd.f32 %v2218, %v2306
        %v2308 = vpop.f32.mrf.mxu0
        %v2309 = vadd.f32 %v2220, %v2308
        %2310 = vmatmul.bf16.gmra.mxu0 %v2053
        %v2311 = vpop.f32.mrf.mxu0
        %v2312 = vadd.f32 %v2223, %v2311
        %v2313 = vpop.f32.mrf.mxu0
        %v2314 = vadd.f32 %v2225, %v2313
        %2315 = vmatmul.bf16.gmra.mxu0 %v2055
        %v2316 = vpop.f32.mrf.mxu0
        %v2317 = vadd.f32 %v2228, %v2316
        %v2318 = vpop.f32.mrf.mxu0
        %v2319 = vadd.f32 %v2230, %v2318
        %2320 = vmatmul.bf16.gmra.mxu0 %v2057
        %v2321 = vpop.f32.mrf.mxu0
        %v2322 = vadd.f32 %v2233, %v2321
        %v2323 = vpop.f32.mrf.mxu0
        %v2324 = vadd.f32 %v2235, %v2323
        %2325 = vmatmul.bf16.gmra.mxu0 %v2059
        %v2326 = vpop.f32.mrf.mxu0
        %v2327 = vadd.f32 %v2238, %v2326
        %v2328 = vpop.f32.mrf.mxu0
        %v2329 = vadd.f32 %v2240, %v2328
        %2330 = vmatmul.bf16.gmra.mxu0 %v2061
        %v2331 = vpop.f32.mrf.mxu0
        %v2332 = vadd.f32 %v2243, %v2331
        %v2333 = vpop.f32.mrf.mxu0
        %v2334 = vadd.f32 %v2245, %v2333
        %2335 = vdwg.mxu0
        %2337 = vset.pattern.permute.xlu0 0
        %2338 = vperm.xlu0 %2337, %v1455
        %v2339 = vpop.permute.xlu0 %2338
        %2342 = vset.pattern.permute.xlu0 0
        %2343 = vperm.xlu0 %2342, %v1457
        %v2344 = vpop.permute.xlu0 %2343
        %2347 = vset.pattern.permute.xlu0 0
        %2348 = vperm.xlu0 %2347, %v1459
        %v2349 = vpop.permute.xlu0 %2348
        %2352 = vset.pattern.permute.xlu0 0
        %2353 = vperm.xlu0 %2352, %v1461
        %v2354 = vpop.permute.xlu0 %2353
        %2357 = vset.pattern.permute.xlu0 0
        %2358 = vperm.xlu0 %2357, %v1463
        %v2359 = vpop.permute.xlu0 %2358
        %2362 = vset.pattern.permute.xlu0 0
        %2363 = vperm.xlu0 %2362, %v1465
        %v2364 = vpop.permute.xlu0 %2363
        %2367 = vset.pattern.permute.xlu0 0
        %2368 = vperm.xlu0 %2367, %v1467
        %v2369 = vpop.permute.xlu0 %2368
        %2372 = vset.pattern.permute.xlu0 0
        %2373 = vperm.xlu0 %2372, %v1469
        %v2374 = vpop.permute.xlu0 %2373
        %2377 = vset.pattern.permute.xlu0 0
        %2378 = vperm.xlu0 %2377, %v1471
        %v2379 = vpop.permute.xlu0 %2378
        %2382 = vset.pattern.permute.xlu0 0
        %2383 = vperm.xlu0 %2382, %v1473
        %v2384 = vpop.permute.xlu0 %2383
        %2387 = vset.pattern.permute.xlu0 0
        %2388 = vperm.xlu0 %2387, %v1475
        %v2389 = vpop.permute.xlu0 %2388
        %2392 = vset.pattern.permute.xlu0 0
        %2393 = vperm.xlu0 %2392, %v1477
        %v2394 = vpop.permute.xlu0 %2393
        %2397 = vset.pattern.permute.xlu0 0
        %2398 = vperm.xlu0 %2397, %v1479
        %v2399 = vpop.permute.xlu0 %2398
        %2402 = vset.pattern.permute.xlu0 0
        %2403 = vperm.xlu0 %2402, %v1481
        %v2404 = vpop.permute.xlu0 %2403
        %2407 = vset.pattern.permute.xlu0 0
        %2408 = vperm.xlu0 %2407, %v1483
        %v2409 = vpop.permute.xlu0 %2408
        %2412 = vset.pattern.permute.xlu0 0
        %2413 = vperm.xlu0 %2412, %v1485
        %v2414 = vpop.permute.xlu0 %2413
        %2417 = vset.pattern.permute.xlu0 0
        %2418 = vperm.xlu0 %2417, %v1487
        %v2419 = vpop.permute.xlu0 %2418
        %2422 = vset.pattern.permute.xlu0 0
        %2423 = vperm.xlu0 %2422, %v1489
        %v2424 = vpop.permute.xlu0 %2423
        %2427 = vset.pattern.permute.xlu0 0
        %2428 = vperm.xlu0 %2427, %v1491
        %v2429 = vpop.permute.xlu0 %2428
        %2432 = vset.pattern.permute.xlu0 0
        %2433 = vperm.xlu0 %2432, %v1493
        %v2434 = vpop.permute.xlu0 %2433
        %2437 = vset.pattern.permute.xlu0 0
        %2438 = vperm.xlu0 %2437, %v1495
        %v2439 = vpop.permute.xlu0 %2438
        %2442 = vset.pattern.permute.xlu0 0
        %2443 = vperm.xlu0 %2442, %v1497
        %v2444 = vpop.permute.xlu0 %2443
        %2447 = vset.pattern.permute.xlu0 0
        %2448 = vperm.xlu0 %2447, %v1499
        %v2449 = vpop.permute.xlu0 %2448
        %2452 = vset.pattern.permute.xlu0 0
        %2453 = vperm.xlu0 %2452, %v1501
        %v2454 = vpop.permute.xlu0 %2453
        %2457 = vset.pattern.permute.xlu0 0
        %2458 = vperm.xlu0 %2457, %v1503
        %v2459 = vpop.permute.xlu0 %2458
        %2462 = vset.pattern.permute.xlu0 0
        %2463 = vperm.xlu0 %2462, %v1505
        %v2464 = vpop.permute.xlu0 %2463
        %2467 = vset.pattern.permute.xlu0 0
        %2468 = vperm.xlu0 %2467, %v1507
        %v2469 = vpop.permute.xlu0 %2468
        %2472 = vset.pattern.permute.xlu0 0
        %2473 = vperm.xlu0 %2472, %v1509
        %v2474 = vpop.permute.xlu0 %2473
        %2477 = vset.pattern.permute.xlu0 0
        %2478 = vperm.xlu0 %2477, %v1511
        %v2479 = vpop.permute.xlu0 %2478
        %2482 = vset.pattern.permute.xlu0 0
        %2483 = vperm.xlu0 %2482, %v1513
        %v2484 = vpop.permute.xlu0 %2483
        %2487 = vset.pattern.permute.xlu0 0
        %2488 = vperm.xlu0 %2487, %v1515
        %v2489 = vpop.permute.xlu0 %2488
        %2492 = vset.pattern.permute.xlu0 0
        %2493 = vperm.xlu0 %2492, %v1517
        %v2494 = vpop.permute.xlu0 %2493
        %v2496 = vmul.f32 %v2339, %v827
        %v2497 = vmul.f32 %v2344, %v828
        %v2498 = vmul.f32 %v2349, %v829
        %v2499 = vmul.f32 %v2354, %v830
        %v2500 = vmul.f32 %v2359, %v831
        %v2501 = vmul.f32 %v2364, %v832
        %v2502 = vmul.f32 %v2369, %v833
        %v2503 = vmul.f32 %v2374, %v834
        %v2504 = vmul.f32 %v2379, %v835
        %v2505 = vmul.f32 %v2384, %v836
        %v2506 = vmul.f32 %v2389, %v837
        %v2507 = vmul.f32 %v2394, %v838
        %v2508 = vmul.f32 %v2399, %v839
        %v2509 = vmul.f32 %v2404, %v840
        %v2510 = vmul.f32 %v2409, %v841
        %v2511 = vmul.f32 %v2414, %v842
        %v2512 = vmul.f32 %v2419, %v843
        %v2513 = vmul.f32 %v2424, %v844
        %v2514 = vmul.f32 %v2429, %v845
        %v2515 = vmul.f32 %v2434, %v846
        %v2516 = vmul.f32 %v2439, %v847
        %v2517 = vmul.f32 %v2444, %v848
        %v2518 = vmul.f32 %v2449, %v849
        %v2519 = vmul.f32 %v2454, %v850
        %v2520 = vmul.f32 %v2459, %v851
        %v2521 = vmul.f32 %v2464, %v852
        %v2522 = vmul.f32 %v2469, %v853
        %v2523 = vmul.f32 %v2474, %v854
        %v2524 = vmul.f32 %v2479, %v855
        %v2525 = vmul.f32 %v2484, %v856
        %v2526 = vmul.f32 %v2489, %v857
        %v2527 = vmul.f32 %v2494, %v858
        %v2528 = vadd.f32 %v2496, %v2257
        %v2529 = vadd.f32 %v2497, %v2259
        %v2530 = vadd.f32 %v2498, %v2262
        %v2531 = vadd.f32 %v2499, %v2264
        %v2532 = vadd.f32 %v2500, %v2267
        %v2533 = vadd.f32 %v2501, %v2269
        %v2534 = vadd.f32 %v2502, %v2272
        %v2535 = vadd.f32 %v2503, %v2274
        %v2536 = vadd.f32 %v2504, %v2277
        %v2537 = vadd.f32 %v2505, %v2279
        %v2538 = vadd.f32 %v2506, %v2282
        %v2539 = vadd.f32 %v2507, %v2284
        %v2540 = vadd.f32 %v2508, %v2287
        %v2541 = vadd.f32 %v2509, %v2289
        %v2542 = vadd.f32 %v2510, %v2292
        %v2543 = vadd.f32 %v2511, %v2294
        %v2544 = vadd.f32 %v2512, %v2297
        %v2545 = vadd.f32 %v2513, %v2299
        %v2546 = vadd.f32 %v2514, %v2302
        %v2547 = vadd.f32 %v2515, %v2304
        %v2548 = vadd.f32 %v2516, %v2307
        %v2549 = vadd.f32 %v2517, %v2309
        %v2550 = vadd.f32 %v2518, %v2312
        %v2551 = vadd.f32 %v2519, %v2314
        %v2552 = vadd.f32 %v2520, %v2317
        %v2553 = vadd.f32 %v2521, %v2319
        %v2554 = vadd.f32 %v2522, %v2322
        %v2555 = vadd.f32 %v2523, %v2324
        %v2556 = vadd.f32 %v2524, %v2327
        %v2557 = vadd.f32 %v2525, %v2329
        %v2558 = vadd.f32 %v2526, %v2332
        %v2559 = vadd.f32 %v2527, %v2334
        %2560 = vrot.lane.b32.xlu0 %v923, 64
        %v2561 = vpop.permute.xlu0 %2560
        %2562 = vrot.lane.b32.xlu0 %v924, 64
        %v2563 = vpop.permute.xlu0 %2562
        %2564 = vrot.lane.b32.xlu0 %v925, 64
        %v2565 = vpop.permute.xlu0 %2564
        %2566 = vrot.lane.b32.xlu0 %v926, 64
        %v2567 = vpop.permute.xlu0 %2566
        %2568 = vrot.lane.b32.xlu0 %v927, 64
        %v2569 = vpop.permute.xlu0 %2568
        %2570 = vrot.lane.b32.xlu0 %v928, 64
        %v2571 = vpop.permute.xlu0 %2570
        %2572 = vrot.lane.b32.xlu0 %v929, 64
        %v2573 = vpop.permute.xlu0 %2572
        %2574 = vrot.lane.b32.xlu0 %v930, 64
        %v2575 = vpop.permute.xlu0 %2574
        %2576 = vrot.lane.b32.xlu0 %v931, 64
        %v2577 = vpop.permute.xlu0 %2576
        %2578 = vrot.lane.b32.xlu0 %v932, 64
        %v2579 = vpop.permute.xlu0 %2578
        %2580 = vrot.lane.b32.xlu0 %v933, 64
        %v2581 = vpop.permute.xlu0 %2580
        %2582 = vrot.lane.b32.xlu0 %v934, 64
        %v2583 = vpop.permute.xlu0 %2582
        %2584 = vrot.lane.b32.xlu0 %v935, 64
        %v2585 = vpop.permute.xlu0 %2584
        %2586 = vrot.lane.b32.xlu0 %v936, 64
        %v2587 = vpop.permute.xlu0 %2586
        %2588 = vrot.lane.b32.xlu0 %v937, 64
        %v2589 = vpop.permute.xlu0 %2588
        %2590 = vrot.lane.b32.xlu0 %v938, 64
        %v2591 = vpop.permute.xlu0 %2590
        %v2593 = vsel %vm1019, %v2561, 0
        %v2596 = vsel %vm1019, %v2563, 0
        %v2599 = vsel %vm1019, %v2565, 0
        %v2602 = vsel %vm1019, %v2567, 0
        %v2605 = vsel %vm1019, %v2569, 0
        %v2608 = vsel %vm1019, %v2571, 0
        %v2611 = vsel %vm1019, %v2573, 0
        %v2614 = vsel %vm1019, %v2575, 0
        %v2617 = vsel %vm1019, %v2577, 0
        %v2620 = vsel %vm1019, %v2579, 0
        %v2623 = vsel %vm1019, %v2581, 0
        %v2626 = vsel %vm1019, %v2583, 0
        %v2629 = vsel %vm1019, %v2585, 0
        %v2632 = vsel %vm1019, %v2587, 0
        %v2635 = vsel %vm1019, %v2589, 0
        %v2638 = vsel %vm1019, %v2591, 0
        %2640 = vmatpush.bf16.xpose.msra.mxu0 %v1090
        %2641 = vmatpush.bf16.xpose.msra.mxu0 %v1087
        %2642 = vmatpush.bf16.xpose.msra.mxu0 %v1084
        %2643 = vmatpush.bf16.xpose.msra.mxu0 %v1081
        %2644 = vmatpush.bf16.xpose.msra.mxu0 %v1078
        %2645 = vmatpush.bf16.xpose.msra.mxu0 %v1075
        %2646 = vmatpush.bf16.xpose.msra.mxu0 %v1072
        %2647 = vmatpush.bf16.xpose.msra.mxu0 %v1069
        %2648 = vmatmul.bf16.gmra.mxu0 %v2593
        %v2649 = vpop.f32.mrf.mxu0
        %v2650 = vadd.f32 0.0, %v2649
        %v2651 = vpop.f32.mrf.mxu0
        %v2652 = vadd.f32 0.0, %v2651
        %2653 = vmatmul.bf16.gmra.mxu0 %v2596
        %v2654 = vpop.f32.mrf.mxu0
        %v2655 = vadd.f32 0.0, %v2654
        %v2656 = vpop.f32.mrf.mxu0
        %v2657 = vadd.f32 0.0, %v2656
        %2658 = vmatmul.bf16.gmra.mxu0 %v2599
        %v2659 = vpop.f32.mrf.mxu0
        %v2660 = vadd.f32 0.0, %v2659
        %v2661 = vpop.f32.mrf.mxu0
        %v2662 = vadd.f32 0.0, %v2661
        %2663 = vmatmul.bf16.gmra.mxu0 %v2602
        %v2664 = vpop.f32.mrf.mxu0
        %v2665 = vadd.f32 0.0, %v2664
        %v2666 = vpop.f32.mrf.mxu0
        %v2667 = vadd.f32 0.0, %v2666
        %2668 = vmatmul.bf16.gmra.mxu0 %v2605
        %v2669 = vpop.f32.mrf.mxu0
        %v2670 = vadd.f32 0.0, %v2669
        %v2671 = vpop.f32.mrf.mxu0
        %v2672 = vadd.f32 0.0, %v2671
        %2673 = vmatmul.bf16.gmra.mxu0 %v2608
        %v2674 = vpop.f32.mrf.mxu0
        %v2675 = vadd.f32 0.0, %v2674
        %v2676 = vpop.f32.mrf.mxu0
        %v2677 = vadd.f32 0.0, %v2676
        %2678 = vmatmul.bf16.gmra.mxu0 %v2611
        %v2679 = vpop.f32.mrf.mxu0
        %v2680 = vadd.f32 0.0, %v2679
        %v2681 = vpop.f32.mrf.mxu0
        %v2682 = vadd.f32 0.0, %v2681
        %2683 = vmatmul.bf16.gmra.mxu0 %v2614
        %v2684 = vpop.f32.mrf.mxu0
        %v2685 = vadd.f32 0.0, %v2684
        %v2686 = vpop.f32.mrf.mxu0
        %v2687 = vadd.f32 0.0, %v2686
        %2688 = vmatmul.bf16.gmra.mxu0 %v2617
        %v2689 = vpop.f32.mrf.mxu0
        %v2690 = vadd.f32 0.0, %v2689
        %v2691 = vpop.f32.mrf.mxu0
        %v2692 = vadd.f32 0.0, %v2691
        %2693 = vmatmul.bf16.gmra.mxu0 %v2620
        %v2694 = vpop.f32.mrf.mxu0
        %v2695 = vadd.f32 0.0, %v2694
        %v2696 = vpop.f32.mrf.mxu0
        %v2697 = vadd.f32 0.0, %v2696
        %2698 = vmatmul.bf16.gmra.mxu0 %v2623
        %v2699 = vpop.f32.mrf.mxu0
        %v2700 = vadd.f32 0.0, %v2699
        %v2701 = vpop.f32.mrf.mxu0
        %v2702 = vadd.f32 0.0, %v2701
        %2703 = vmatmul.bf16.gmra.mxu0 %v2626
        %v2704 = vpop.f32.mrf.mxu0
        %v2705 = vadd.f32 0.0, %v2704
        %v2706 = vpop.f32.mrf.mxu0
        %v2707 = vadd.f32 0.0, %v2706
        %2708 = vmatmul.bf16.gmra.mxu0 %v2629
        %v2709 = vpop.f32.mrf.mxu0
        %v2710 = vadd.f32 0.0, %v2709
        %v2711 = vpop.f32.mrf.mxu0
        %v2712 = vadd.f32 0.0, %v2711
        %2713 = vmatmul.bf16.gmra.mxu0 %v2632
        %v2714 = vpop.f32.mrf.mxu0
        %v2715 = vadd.f32 0.0, %v2714
        %v2716 = vpop.f32.mrf.mxu0
        %v2717 = vadd.f32 0.0, %v2716
        %2718 = vmatmul.bf16.gmra.mxu0 %v2635
        %v2719 = vpop.f32.mrf.mxu0
        %v2720 = vadd.f32 0.0, %v2719
        %v2721 = vpop.f32.mrf.mxu0
        %v2722 = vadd.f32 0.0, %v2721
        %2723 = vmatmul.bf16.gmra.mxu0 %v2638
        %v2724 = vpop.f32.mrf.mxu0
        %v2725 = vadd.f32 0.0, %v2724
        %v2726 = vpop.f32.mrf.mxu0
        %v2727 = vadd.f32 0.0, %v2726
        %2728 = vdwg.mxu0
        %2729 = vmatpush.bf16.xpose.msra.mxu0 %v1114
        %2730 = vmatpush.bf16.xpose.msra.mxu0 %v1111
        %2731 = vmatpush.bf16.xpose.msra.mxu0 %v1108
        %2732 = vmatpush.bf16.xpose.msra.mxu0 %v1105
        %2733 = vmatpush.bf16.xpose.msra.mxu0 %v1102
        %2734 = vmatpush.bf16.xpose.msra.mxu0 %v1099
        %2735 = vmatpush.bf16.xpose.msra.mxu0 %v1096
        %2736 = vmatpush.bf16.xpose.msra.mxu0 %v1093
        %2737 = vmatmul.bf16.gmra.mxu0 %v2593
        %v2738 = vpop.f32.mrf.mxu0
        %v2739 = vadd.f32 0.0, %v2738
        %v2740 = vpop.f32.mrf.mxu0
        %v2741 = vadd.f32 0.0, %v2740
        %2742 = vmatmul.bf16.gmra.mxu0 %v2596
        %v2743 = vpop.f32.mrf.mxu0
        %v2744 = vadd.f32 0.0, %v2743
        %v2745 = vpop.f32.mrf.mxu0
        %v2746 = vadd.f32 0.0, %v2745
        %2747 = vmatmul.bf16.gmra.mxu0 %v2599
        %v2748 = vpop.f32.mrf.mxu0
        %v2749 = vadd.f32 0.0, %v2748
        %v2750 = vpop.f32.mrf.mxu0
        %v2751 = vadd.f32 0.0, %v2750
        %2752 = vmatmul.bf16.gmra.mxu0 %v2602
        %v2753 = vpop.f32.mrf.mxu0
        %v2754 = vadd.f32 0.0, %v2753
        %v2755 = vpop.f32.mrf.mxu0
        %v2756 = vadd.f32 0.0, %v2755
        %2757 = vmatmul.bf16.gmra.mxu0 %v2605
        %v2758 = vpop.f32.mrf.mxu0
        %v2759 = vadd.f32 0.0, %v2758
        %v2760 = vpop.f32.mrf.mxu0
        %v2761 = vadd.f32 0.0, %v2760
        %2762 = vmatmul.bf16.gmra.mxu0 %v2608
        %v2763 = vpop.f32.mrf.mxu0
        %v2764 = vadd.f32 0.0, %v2763
        %v2765 = vpop.f32.mrf.mxu0
        %v2766 = vadd.f32 0.0, %v2765
        %2767 = vmatmul.bf16.gmra.mxu0 %v2611
        %v2768 = vpop.f32.mrf.mxu0
        %v2769 = vadd.f32 0.0, %v2768
        %v2770 = vpop.f32.mrf.mxu0
        %v2771 = vadd.f32 0.0, %v2770
        %2772 = vmatmul.bf16.gmra.mxu0 %v2614
        %v2773 = vpop.f32.mrf.mxu0
        %v2774 = vadd.f32 0.0, %v2773
        %v2775 = vpop.f32.mrf.mxu0
        %v2776 = vadd.f32 0.0, %v2775
        %2777 = vmatmul.bf16.gmra.mxu0 %v2617
        %v2778 = vpop.f32.mrf.mxu0
        %v2779 = vadd.f32 0.0, %v2778
        %v2780 = vpop.f32.mrf.mxu0
        %v2781 = vadd.f32 0.0, %v2780
        %2782 = vmatmul.bf16.gmra.mxu0 %v2620
        %v2783 = vpop.f32.mrf.mxu0
        %v2784 = vadd.f32 0.0, %v2783
        %v2785 = vpop.f32.mrf.mxu0
        %v2786 = vadd.f32 0.0, %v2785
        %2787 = vmatmul.bf16.gmra.mxu0 %v2623
        %v2788 = vpop.f32.mrf.mxu0
        %v2789 = vadd.f32 0.0, %v2788
        %v2790 = vpop.f32.mrf.mxu0
        %v2791 = vadd.f32 0.0, %v2790
        %2792 = vmatmul.bf16.gmra.mxu0 %v2626
        %v2793 = vpop.f32.mrf.mxu0
        %v2794 = vadd.f32 0.0, %v2793
        %v2795 = vpop.f32.mrf.mxu0
        %v2796 = vadd.f32 0.0, %v2795
        %2797 = vmatmul.bf16.gmra.mxu0 %v2629
        %v2798 = vpop.f32.mrf.mxu0
        %v2799 = vadd.f32 0.0, %v2798
        %v2800 = vpop.f32.mrf.mxu0
        %v2801 = vadd.f32 0.0, %v2800
        %2802 = vmatmul.bf16.gmra.mxu0 %v2632
        %v2803 = vpop.f32.mrf.mxu0
        %v2804 = vadd.f32 0.0, %v2803
        %v2805 = vpop.f32.mrf.mxu0
        %v2806 = vadd.f32 0.0, %v2805
        %2807 = vmatmul.bf16.gmra.mxu0 %v2635
        %v2808 = vpop.f32.mrf.mxu0
        %v2809 = vadd.f32 0.0, %v2808
        %v2810 = vpop.f32.mrf.mxu0
        %v2811 = vadd.f32 0.0, %v2810
        %2812 = vmatmul.bf16.gmra.mxu0 %v2638
        %v2813 = vpop.f32.mrf.mxu0
        %v2814 = vadd.f32 0.0, %v2813
        %v2815 = vpop.f32.mrf.mxu0
        %v2816 = vadd.f32 0.0, %v2815
        %2817 = vdwg.mxu0
        %v2818 = vmax.f32 %v2650, %v2739
        %2819 = vmax.xlane.f32.xlu0 %v2818
        %v2820 = vpop.xlane.xlu0 %2819
        %v2821 = vmax.f32 %v2652, %v2741
        %2822 = vmax.xlane.f32.xlu0 %v2821
        %v2823 = vpop.xlane.xlu0 %2822
        %v2824 = vmax.f32 %v2655, %v2744
        %2825 = vmax.xlane.f32.xlu0 %v2824
        %v2826 = vpop.xlane.xlu0 %2825
        %v2827 = vmax.f32 %v2657, %v2746
        %2828 = vmax.xlane.f32.xlu0 %v2827
        %v2829 = vpop.xlane.xlu0 %2828
        %v2830 = vmax.f32 %v2660, %v2749
        %2831 = vmax.xlane.f32.xlu0 %v2830
        %v2832 = vpop.xlane.xlu0 %2831
        %v2833 = vmax.f32 %v2662, %v2751
        %2834 = vmax.xlane.f32.xlu0 %v2833
        %v2835 = vpop.xlane.xlu0 %2834
        %v2836 = vmax.f32 %v2665, %v2754
        %2837 = vmax.xlane.f32.xlu0 %v2836
        %v2838 = vpop.xlane.xlu0 %2837
        %v2839 = vmax.f32 %v2667, %v2756
        %2840 = vmax.xlane.f32.xlu0 %v2839
        %v2841 = vpop.xlane.xlu0 %2840
        %v2842 = vmax.f32 %v2670, %v2759
        %2843 = vmax.xlane.f32.xlu0 %v2842
        %v2844 = vpop.xlane.xlu0 %2843
        %v2845 = vmax.f32 %v2672, %v2761
        %2846 = vmax.xlane.f32.xlu0 %v2845
        %v2847 = vpop.xlane.xlu0 %2846
        %v2848 = vmax.f32 %v2675, %v2764
        %2849 = vmax.xlane.f32.xlu0 %v2848
        %v2850 = vpop.xlane.xlu0 %2849
        %v2851 = vmax.f32 %v2677, %v2766
        %2852 = vmax.xlane.f32.xlu0 %v2851
        %v2853 = vpop.xlane.xlu0 %2852
        %v2854 = vmax.f32 %v2680, %v2769
        %2855 = vmax.xlane.f32.xlu0 %v2854
        %v2856 = vpop.xlane.xlu0 %2855
        %v2857 = vmax.f32 %v2682, %v2771
        %2858 = vmax.xlane.f32.xlu0 %v2857
        %v2859 = vpop.xlane.xlu0 %2858
        %v2860 = vmax.f32 %v2685, %v2774
        %2861 = vmax.xlane.f32.xlu0 %v2860
        %v2862 = vpop.xlane.xlu0 %2861
        %v2863 = vmax.f32 %v2687, %v2776
        %2864 = vmax.xlane.f32.xlu0 %v2863
        %v2865 = vpop.xlane.xlu0 %2864
        %v2866 = vmax.f32 %v2690, %v2779
        %2867 = vmax.xlane.f32.xlu0 %v2866
        %v2868 = vpop.xlane.xlu0 %2867
        %v2869 = vmax.f32 %v2692, %v2781
        %2870 = vmax.xlane.f32.xlu0 %v2869
        %v2871 = vpop.xlane.xlu0 %2870
        %v2872 = vmax.f32 %v2695, %v2784
        %2873 = vmax.xlane.f32.xlu0 %v2872
        %v2874 = vpop.xlane.xlu0 %2873
        %v2875 = vmax.f32 %v2697, %v2786
        %2876 = vmax.xlane.f32.xlu0 %v2875
        %v2877 = vpop.xlane.xlu0 %2876
        %v2878 = vmax.f32 %v2700, %v2789
        %2879 = vmax.xlane.f32.xlu0 %v2878
        %v2880 = vpop.xlane.xlu0 %2879
        %v2881 = vmax.f32 %v2702, %v2791
        %2882 = vmax.xlane.f32.xlu0 %v2881
        %v2883 = vpop.xlane.xlu0 %2882
        %v2884 = vmax.f32 %v2705, %v2794
        %2885 = vmax.xlane.f32.xlu0 %v2884
        %v2886 = vpop.xlane.xlu0 %2885
        %v2887 = vmax.f32 %v2707, %v2796
        %2888 = vmax.xlane.f32.xlu0 %v2887
        %v2889 = vpop.xlane.xlu0 %2888
        %v2890 = vmax.f32 %v2710, %v2799
        %2891 = vmax.xlane.f32.xlu0 %v2890
        %v2892 = vpop.xlane.xlu0 %2891
        %v2893 = vmax.f32 %v2712, %v2801
        %2894 = vmax.xlane.f32.xlu0 %v2893
        %v2895 = vpop.xlane.xlu0 %2894
        %v2896 = vmax.f32 %v2715, %v2804
        %2897 = vmax.xlane.f32.xlu0 %v2896
        %v2898 = vpop.xlane.xlu0 %2897
        %v2899 = vmax.f32 %v2717, %v2806
        %2900 = vmax.xlane.f32.xlu0 %v2899
        %v2901 = vpop.xlane.xlu0 %2900
        %v2902 = vmax.f32 %v2720, %v2809
        %2903 = vmax.xlane.f32.xlu0 %v2902
        %v2904 = vpop.xlane.xlu0 %2903
        %v2905 = vmax.f32 %v2722, %v2811
        %2906 = vmax.xlane.f32.xlu0 %v2905
        %v2907 = vpop.xlane.xlu0 %2906
        %v2908 = vmax.f32 %v2725, %v2814
        %2909 = vmax.xlane.f32.xlu0 %v2908
        %v2910 = vpop.xlane.xlu0 %2909
        %v2911 = vmax.f32 %v2727, %v2816
        %2912 = vmax.xlane.f32.xlu0 %v2911
        %v2913 = vpop.xlane.xlu0 %2912
        %v2914 = vmax.f32 %v763, %v2820
        %v2915 = vmax.f32 %v764, %v2823
        %v2916 = vmax.f32 %v765, %v2826
        %v2917 = vmax.f32 %v766, %v2829
        %v2918 = vmax.f32 %v767, %v2832
        %v2919 = vmax.f32 %v768, %v2835
        %v2920 = vmax.f32 %v769, %v2838
        %v2921 = vmax.f32 %v770, %v2841
        %v2922 = vmax.f32 %v771, %v2844
        %v2923 = vmax.f32 %v772, %v2847
        %v2924 = vmax.f32 %v773, %v2850
        %v2925 = vmax.f32 %v774, %v2853
        %v2926 = vmax.f32 %v775, %v2856
        %v2927 = vmax.f32 %v776, %v2859
        %v2928 = vmax.f32 %v777, %v2862
        %v2929 = vmax.f32 %v778, %v2865
        %v2930 = vmax.f32 %v779, %v2868
        %v2931 = vmax.f32 %v780, %v2871
        %v2932 = vmax.f32 %v781, %v2874
        %v2933 = vmax.f32 %v782, %v2877
        %v2934 = vmax.f32 %v783, %v2880
        %v2935 = vmax.f32 %v784, %v2883
        %v2936 = vmax.f32 %v785, %v2886
        %v2937 = vmax.f32 %v786, %v2889
        %v2938 = vmax.f32 %v787, %v2892
        %v2939 = vmax.f32 %v788, %v2895
        %v2940 = vmax.f32 %v789, %v2898
        %v2941 = vmax.f32 %v790, %v2901
        %v2942 = vmax.f32 %v791, %v2904
        %v2943 = vmax.f32 %v792, %v2907
        %v2944 = vmax.f32 %v793, %v2910
        %v2945 = vmax.f32 %v794, %v2913
        %v2946 = vsub.f32 %v763, %v2914
        %v2947 = vsub.f32 %v764, %v2915
        %v2948 = vsub.f32 %v765, %v2916
        %v2949 = vsub.f32 %v766, %v2917
        %v2950 = vsub.f32 %v767, %v2918
        %v2951 = vsub.f32 %v768, %v2919
        %v2952 = vsub.f32 %v769, %v2920
        %v2953 = vsub.f32 %v770, %v2921
        %v2954 = vsub.f32 %v771, %v2922
        %v2955 = vsub.f32 %v772, %v2923
        %v2956 = vsub.f32 %v773, %v2924
        %v2957 = vsub.f32 %v774, %v2925
        %v2958 = vsub.f32 %v775, %v2926
        %v2959 = vsub.f32 %v776, %v2927
        %v2960 = vsub.f32 %v777, %v2928
        %v2961 = vsub.f32 %v778, %v2929
        %v2962 = vsub.f32 %v779, %v2930
        %v2963 = vsub.f32 %v780, %v2931
        %v2964 = vsub.f32 %v781, %v2932
        %v2965 = vsub.f32 %v782, %v2933
        %v2966 = vsub.f32 %v783, %v2934
        %v2967 = vsub.f32 %v784, %v2935
        %v2968 = vsub.f32 %v785, %v2936
        %v2969 = vsub.f32 %v786, %v2937
        %v2970 = vsub.f32 %v787, %v2938
        %v2971 = vsub.f32 %v788, %v2939
        %v2972 = vsub.f32 %v789, %v2940
        %v2973 = vsub.f32 %v790, %v2941
        %v2974 = vsub.f32 %v791, %v2942
        %v2975 = vsub.f32 %v792, %v2943
        %v2976 = vsub.f32 %v793, %v2944
        %v2977 = vsub.f32 %v794, %v2945
        %v2978 = vmul.f32 %v2946, 1.442695
        %v2979 = vpow.pop %v2978
        %v2980 = vmul.f32 %v2947, 1.442695
        %v2981 = vpow.pop %v2980
        %v2982 = vmul.f32 %v2948, 1.442695
        %v2983 = vpow.pop %v2982
        %v2984 = vmul.f32 %v2949, 1.442695
        %v2985 = vpow.pop %v2984
        %v2986 = vmul.f32 %v2950, 1.442695
        %v2987 = vpow.pop %v2986
        %v2988 = vmul.f32 %v2951, 1.442695
        %v2989 = vpow.pop %v2988
        %v2990 = vmul.f32 %v2952, 1.442695
        %v2991 = vpow.pop %v2990
        %v2992 = vmul.f32 %v2953, 1.442695
        %v2993 = vpow.pop %v2992
        %v2994 = vmul.f32 %v2954, 1.442695
        %v2995 = vpow.pop %v2994
        %v2996 = vmul.f32 %v2955, 1.442695
        %v2997 = vpow.pop %v2996
        %v2998 = vmul.f32 %v2956, 1.442695
        %v2999 = vpow.pop %v2998
        %v3000 = vmul.f32 %v2957, 1.442695
        %v3001 = vpow.pop %v3000
        %v3002 = vmul.f32 %v2958, 1.442695
        %v3003 = vpow.pop %v3002
        %v3004 = vmul.f32 %v2959, 1.442695
        %v3005 = vpow.pop %v3004
        %v3006 = vmul.f32 %v2960, 1.442695
        %v3007 = vpow.pop %v3006
        %v3008 = vmul.f32 %v2961, 1.442695
        %v3009 = vpow.pop %v3008
        %v3010 = vmul.f32 %v2962, 1.442695
        %v3011 = vpow.pop %v3010
        %v3012 = vmul.f32 %v2963, 1.442695
        %v3013 = vpow.pop %v3012
        %v3014 = vmul.f32 %v2964, 1.442695
        %v3015 = vpow.pop %v3014
        %v3016 = vmul.f32 %v2965, 1.442695
        %v3017 = vpow.pop %v3016
        %v3018 = vmul.f32 %v2966, 1.442695
        %v3019 = vpow.pop %v3018
        %v3020 = vmul.f32 %v2967, 1.442695
        %v3021 = vpow.pop %v3020
        %v3022 = vmul.f32 %v2968, 1.442695
        %v3023 = vpow.pop %v3022
        %v3024 = vmul.f32 %v2969, 1.442695
        %v3025 = vpow.pop %v3024
        %v3026 = vmul.f32 %v2970, 1.442695
        %v3027 = vpow.pop %v3026
        %v3028 = vmul.f32 %v2971, 1.442695
        %v3029 = vpow.pop %v3028
        %v3030 = vmul.f32 %v2972, 1.442695
        %v3031 = vpow.pop %v3030
        %v3032 = vmul.f32 %v2973, 1.442695
        %v3033 = vpow.pop %v3032
        %v3034 = vmul.f32 %v2974, 1.442695
        %v3035 = vpow.pop %v3034
        %v3036 = vmul.f32 %v2975, 1.442695
        %v3037 = vpow.pop %v3036
        %v3038 = vmul.f32 %v2976, 1.442695
        %v3039 = vpow.pop %v3038
        %v3040 = vmul.f32 %v2977, 1.442695
        %v3041 = vpow.pop %v3040
        %3043 = vset.pattern.permute.xlu0 1
        %3044 = vperm.xlu0 %3043, %v2914
        %v3045 = vpop.permute.xlu0 %3044
        %3048 = vset.pattern.permute.xlu0 1
        %3049 = vperm.xlu0 %3048, %v2915
        %v3050 = vpop.permute.xlu0 %3049
        %3053 = vset.pattern.permute.xlu0 1
        %3054 = vperm.xlu0 %3053, %v2916
        %v3055 = vpop.permute.xlu0 %3054
        %3058 = vset.pattern.permute.xlu0 1
        %3059 = vperm.xlu0 %3058, %v2917
        %v3060 = vpop.permute.xlu0 %3059
        %3063 = vset.pattern.permute.xlu0 1
        %3064 = vperm.xlu0 %3063, %v2918
        %v3065 = vpop.permute.xlu0 %3064
        %3068 = vset.pattern.permute.xlu0 1
        %3069 = vperm.xlu0 %3068, %v2919
        %v3070 = vpop.permute.xlu0 %3069
        %3073 = vset.pattern.permute.xlu0 1
        %3074 = vperm.xlu0 %3073, %v2920
        %v3075 = vpop.permute.xlu0 %3074
        %3078 = vset.pattern.permute.xlu0 1
        %3079 = vperm.xlu0 %3078, %v2921
        %v3080 = vpop.permute.xlu0 %3079
        %3083 = vset.pattern.permute.xlu0 1
        %3084 = vperm.xlu0 %3083, %v2922
        %v3085 = vpop.permute.xlu0 %3084
        %3088 = vset.pattern.permute.xlu0 1
        %3089 = vperm.xlu0 %3088, %v2923
        %v3090 = vpop.permute.xlu0 %3089
        %3093 = vset.pattern.permute.xlu0 1
        %3094 = vperm.xlu0 %3093, %v2924
        %v3095 = vpop.permute.xlu0 %3094
        %3098 = vset.pattern.permute.xlu0 1
        %3099 = vperm.xlu0 %3098, %v2925
        %v3100 = vpop.permute.xlu0 %3099
        %3103 = vset.pattern.permute.xlu0 1
        %3104 = vperm.xlu0 %3103, %v2926
        %v3105 = vpop.permute.xlu0 %3104
        %3108 = vset.pattern.permute.xlu0 1
        %3109 = vperm.xlu0 %3108, %v2927
        %v3110 = vpop.permute.xlu0 %3109
        %3113 = vset.pattern.permute.xlu0 1
        %3114 = vperm.xlu0 %3113, %v2928
        %v3115 = vpop.permute.xlu0 %3114
        %3118 = vset.pattern.permute.xlu0 1
        %3119 = vperm.xlu0 %3118, %v2929
        %v3120 = vpop.permute.xlu0 %3119
        %3123 = vset.pattern.permute.xlu0 1
        %3124 = vperm.xlu0 %3123, %v2930
        %v3125 = vpop.permute.xlu0 %3124
        %3128 = vset.pattern.permute.xlu0 1
        %3129 = vperm.xlu0 %3128, %v2931
        %v3130 = vpop.permute.xlu0 %3129
        %3133 = vset.pattern.permute.xlu0 1
        %3134 = vperm.xlu0 %3133, %v2932
        %v3135 = vpop.permute.xlu0 %3134
        %3138 = vset.pattern.permute.xlu0 1
        %3139 = vperm.xlu0 %3138, %v2933
        %v3140 = vpop.permute.xlu0 %3139
        %3143 = vset.pattern.permute.xlu0 1
        %3144 = vperm.xlu0 %3143, %v2934
        %v3145 = vpop.permute.xlu0 %3144
        %3148 = vset.pattern.permute.xlu0 1
        %3149 = vperm.xlu0 %3148, %v2935
        %v3150 = vpop.permute.xlu0 %3149
        %3153 = vset.pattern.permute.xlu0 1
        %3154 = vperm.xlu0 %3153, %v2936
        %v3155 = vpop.permute.xlu0 %3154
        %3158 = vset.pattern.permute.xlu0 1
        %3159 = vperm.xlu0 %3158, %v2937
        %v3160 = vpop.permute.xlu0 %3159
        %3163 = vset.pattern.permute.xlu0 1
        %3164 = vperm.xlu0 %3163, %v2938
        %v3165 = vpop.permute.xlu0 %3164
        %3168 = vset.pattern.permute.xlu0 1
        %3169 = vperm.xlu0 %3168, %v2939
        %v3170 = vpop.permute.xlu0 %3169
        %3173 = vset.pattern.permute.xlu0 1
        %3174 = vperm.xlu0 %3173, %v2940
        %v3175 = vpop.permute.xlu0 %3174
        %3178 = vset.pattern.permute.xlu0 1
        %3179 = vperm.xlu0 %3178, %v2941
        %v3180 = vpop.permute.xlu0 %3179
        %3183 = vset.pattern.permute.xlu0 1
        %3184 = vperm.xlu0 %3183, %v2942
        %v3185 = vpop.permute.xlu0 %3184
        %3188 = vset.pattern.permute.xlu0 1
        %3189 = vperm.xlu0 %3188, %v2943
        %v3190 = vpop.permute.xlu0 %3189
        %3193 = vset.pattern.permute.xlu0 1
        %3194 = vperm.xlu0 %3193, %v2944
        %v3195 = vpop.permute.xlu0 %3194
        %3198 = vset.pattern.permute.xlu0 1
        %3199 = vperm.xlu0 %3198, %v2945
        %v3200 = vpop.permute.xlu0 %3199
        %v3202 = vsub.f32 %v2650, %v3045
        %v3203 = vsub.f32 %v2739, %v3045
        %v3204 = vsub.f32 %v2652, %v3050
        %v3205 = vsub.f32 %v2741, %v3050
        %v3206 = vsub.f32 %v2655, %v3055
        %v3207 = vsub.f32 %v2744, %v3055
        %v3208 = vsub.f32 %v2657, %v3060
        %v3209 = vsub.f32 %v2746, %v3060
        %v3210 = vsub.f32 %v2660, %v3065
        %v3211 = vsub.f32 %v2749, %v3065
        %v3212 = vsub.f32 %v2662, %v3070
        %v3213 = vsub.f32 %v2751, %v3070
        %v3214 = vsub.f32 %v2665, %v3075
        %v3215 = vsub.f32 %v2754, %v3075
        %v3216 = vsub.f32 %v2667, %v3080
        %v3217 = vsub.f32 %v2756, %v3080
        %v3218 = vsub.f32 %v2670, %v3085
        %v3219 = vsub.f32 %v2759, %v3085
        %v3220 = vsub.f32 %v2672, %v3090
        %v3221 = vsub.f32 %v2761, %v3090
        %v3222 = vsub.f32 %v2675, %v3095
        %v3223 = vsub.f32 %v2764, %v3095
        %v3224 = vsub.f32 %v2677, %v3100
        %v3225 = vsub.f32 %v2766, %v3100
        %v3226 = vsub.f32 %v2680, %v3105
        %v3227 = vsub.f32 %v2769, %v3105
        %v3228 = vsub.f32 %v2682, %v3110
        %v3229 = vsub.f32 %v2771, %v3110
        %v3230 = vsub.f32 %v2685, %v3115
        %v3231 = vsub.f32 %v2774, %v3115
        %v3232 = vsub.f32 %v2687, %v3120
        %v3233 = vsub.f32 %v2776, %v3120
        %v3234 = vsub.f32 %v2690, %v3125
        %v3235 = vsub.f32 %v2779, %v3125
        %v3236 = vsub.f32 %v2692, %v3130
        %v3237 = vsub.f32 %v2781, %v3130
        %v3238 = vsub.f32 %v2695, %v3135
        %v3239 = vsub.f32 %v2784, %v3135
        %v3240 = vsub.f32 %v2697, %v3140
        %v3241 = vsub.f32 %v2786, %v3140
        %v3242 = vsub.f32 %v2700, %v3145
        %v3243 = vsub.f32 %v2789, %v3145
        %v3244 = vsub.f32 %v2702, %v3150
        %v3245 = vsub.f32 %v2791, %v3150
        %v3246 = vsub.f32 %v2705, %v3155
        %v3247 = vsub.f32 %v2794, %v3155
        %v3248 = vsub.f32 %v2707, %v3160
        %v3249 = vsub.f32 %v2796, %v3160
        %v3250 = vsub.f32 %v2710, %v3165
        %v3251 = vsub.f32 %v2799, %v3165
        %v3252 = vsub.f32 %v2712, %v3170
        %v3253 = vsub.f32 %v2801, %v3170
        %v3254 = vsub.f32 %v2715, %v3175
        %v3255 = vsub.f32 %v2804, %v3175
        %v3256 = vsub.f32 %v2717, %v3180
        %v3257 = vsub.f32 %v2806, %v3180
        %v3258 = vsub.f32 %v2720, %v3185
        %v3259 = vsub.f32 %v2809, %v3185
        %v3260 = vsub.f32 %v2722, %v3190
        %v3261 = vsub.f32 %v2811, %v3190
        %v3262 = vsub.f32 %v2725, %v3195
        %v3263 = vsub.f32 %v2814, %v3195
        %v3264 = vsub.f32 %v2727, %v3200
        %v3265 = vsub.f32 %v2816, %v3200
        %v3266 = vmul.f32 %v3202, 1.442695
        %v3267 = vpow.pop %v3266
        %v3268 = vmul.f32 %v3203, 1.442695
        %v3269 = vpow.pop %v3268
        %v3270 = vmul.f32 %v3204, 1.442695
        %v3271 = vpow.pop %v3270
        %v3272 = vmul.f32 %v3205, 1.442695
        %v3273 = vpow.pop %v3272
        %v3274 = vmul.f32 %v3206, 1.442695
        %v3275 = vpow.pop %v3274
        %v3276 = vmul.f32 %v3207, 1.442695
        %v3277 = vpow.pop %v3276
        %v3278 = vmul.f32 %v3208, 1.442695
        %v3279 = vpow.pop %v3278
        %v3280 = vmul.f32 %v3209, 1.442695
        %v3281 = vpow.pop %v3280
        %v3282 = vmul.f32 %v3210, 1.442695
        %v3283 = vpow.pop %v3282
        %v3284 = vmul.f32 %v3211, 1.442695
        %v3285 = vpow.pop %v3284
        %v3286 = vmul.f32 %v3212, 1.442695
        %v3287 = vpow.pop %v3286
        %v3288 = vmul.f32 %v3213, 1.442695
        %v3289 = vpow.pop %v3288
        %v3290 = vmul.f32 %v3214, 1.442695
        %v3291 = vpow.pop %v3290
        %v3292 = vmul.f32 %v3215, 1.442695
        %v3293 = vpow.pop %v3292
        %v3294 = vmul.f32 %v3216, 1.442695
        %v3295 = vpow.pop %v3294
        %v3296 = vmul.f32 %v3217, 1.442695
        %v3297 = vpow.pop %v3296
        %v3298 = vmul.f32 %v3218, 1.442695
        %v3299 = vpow.pop %v3298
        %v3300 = vmul.f32 %v3219, 1.442695
        %v3301 = vpow.pop %v3300
        %v3302 = vmul.f32 %v3220, 1.442695
        %v3303 = vpow.pop %v3302
        %v3304 = vmul.f32 %v3221, 1.442695
        %v3305 = vpow.pop %v3304
        %v3306 = vmul.f32 %v3222, 1.442695
        %v3307 = vpow.pop %v3306
        %v3308 = vmul.f32 %v3223, 1.442695
        %v3309 = vpow.pop %v3308
        %v3310 = vmul.f32 %v3224, 1.442695
        %v3311 = vpow.pop %v3310
        %v3312 = vmul.f32 %v3225, 1.442695
        %v3313 = vpow.pop %v3312
        %v3314 = vmul.f32 %v3226, 1.442695
        %v3315 = vpow.pop %v3314
        %v3316 = vmul.f32 %v3227, 1.442695
        %v3317 = vpow.pop %v3316
        %v3318 = vmul.f32 %v3228, 1.442695
        %v3319 = vpow.pop %v3318
        %v3320 = vmul.f32 %v3229, 1.442695
        %v3321 = vpow.pop %v3320
        %v3322 = vmul.f32 %v3230, 1.442695
        %v3323 = vpow.pop %v3322
        %v3324 = vmul.f32 %v3231, 1.442695
        %v3325 = vpow.pop %v3324
        %v3326 = vmul.f32 %v3232, 1.442695
        %v3327 = vpow.pop %v3326
        %v3328 = vmul.f32 %v3233, 1.442695
        %v3329 = vpow.pop %v3328
        %v3330 = vmul.f32 %v3234, 1.442695
        %v3331 = vpow.pop %v3330
        %v3332 = vmul.f32 %v3235, 1.442695
        %v3333 = vpow.pop %v3332
        %v3334 = vmul.f32 %v3236, 1.442695
        %v3335 = vpow.pop %v3334
        %v3336 = vmul.f32 %v3237, 1.442695
        %v3337 = vpow.pop %v3336
        %v3338 = vmul.f32 %v3238, 1.442695
        %v3339 = vpow.pop %v3338
        %v3340 = vmul.f32 %v3239, 1.442695
        %v3341 = vpow.pop %v3340
        %v3342 = vmul.f32 %v3240, 1.442695
        %v3343 = vpow.pop %v3342
        %v3344 = vmul.f32 %v3241, 1.442695
        %v3345 = vpow.pop %v3344
        %v3346 = vmul.f32 %v3242, 1.442695
        %v3347 = vpow.pop %v3346
        %v3348 = vmul.f32 %v3243, 1.442695
        %v3349 = vpow.pop %v3348
        %v3350 = vmul.f32 %v3244, 1.442695
        %v3351 = vpow.pop %v3350
        %v3352 = vmul.f32 %v3245, 1.442695
        %v3353 = vpow.pop %v3352
        %v3354 = vmul.f32 %v3246, 1.442695
        %v3355 = vpow.pop %v3354
        %v3356 = vmul.f32 %v3247, 1.442695
        %v3357 = vpow.pop %v3356
        %v3358 = vmul.f32 %v3248, 1.442695
        %v3359 = vpow.pop %v3358
        %v3360 = vmul.f32 %v3249, 1.442695
        %v3361 = vpow.pop %v3360
        %v3362 = vmul.f32 %v3250, 1.442695
        %v3363 = vpow.pop %v3362
        %v3364 = vmul.f32 %v3251, 1.442695
        %v3365 = vpow.pop %v3364
        %v3366 = vmul.f32 %v3252, 1.442695
        %v3367 = vpow.pop %v3366
        %v3368 = vmul.f32 %v3253, 1.442695
        %v3369 = vpow.pop %v3368
        %v3370 = vmul.f32 %v3254, 1.442695
        %v3371 = vpow.pop %v3370
        %v3372 = vmul.f32 %v3255, 1.442695
        %v3373 = vpow.pop %v3372
        %v3374 = vmul.f32 %v3256, 1.442695
        %v3375 = vpow.pop %v3374
        %v3376 = vmul.f32 %v3257, 1.442695
        %v3377 = vpow.pop %v3376
        %v3378 = vmul.f32 %v3258, 1.442695
        %v3379 = vpow.pop %v3378
        %v3380 = vmul.f32 %v3259, 1.442695
        %v3381 = vpow.pop %v3380
        %v3382 = vmul.f32 %v3260, 1.442695
        %v3383 = vpow.pop %v3382
        %v3384 = vmul.f32 %v3261, 1.442695
        %v3385 = vpow.pop %v3384
        %v3386 = vmul.f32 %v3262, 1.442695
        %v3387 = vpow.pop %v3386
        %v3388 = vmul.f32 %v3263, 1.442695
        %v3389 = vpow.pop %v3388
        %v3390 = vmul.f32 %v3264, 1.442695
        %v3391 = vpow.pop %v3390
        %v3392 = vmul.f32 %v3265, 1.442695
        %v3393 = vpow.pop %v3392
        %v3394 = vmul.f32 %v2979, %v795
        %v3395 = vmul.f32 %v2981, %v796
        %v3396 = vmul.f32 %v2983, %v797
        %v3397 = vmul.f32 %v2985, %v798
        %v3398 = vmul.f32 %v2987, %v799
        %v3399 = vmul.f32 %v2989, %v800
        %v3400 = vmul.f32 %v2991, %v801
        %v3401 = vmul.f32 %v2993, %v802
        %v3402 = vmul.f32 %v2995, %v803
        %v3403 = vmul.f32 %v2997, %v804
        %v3404 = vmul.f32 %v2999, %v805
        %v3405 = vmul.f32 %v3001, %v806
        %v3406 = vmul.f32 %v3003, %v807
        %v3407 = vmul.f32 %v3005, %v808
        %v3408 = vmul.f32 %v3007, %v809
        %v3409 = vmul.f32 %v3009, %v810
        %v3410 = vmul.f32 %v3011, %v811
        %v3411 = vmul.f32 %v3013, %v812
        %v3412 = vmul.f32 %v3015, %v813
        %v3413 = vmul.f32 %v3017, %v814
        %v3414 = vmul.f32 %v3019, %v815
        %v3415 = vmul.f32 %v3021, %v816
        %v3416 = vmul.f32 %v3023, %v817
        %v3417 = vmul.f32 %v3025, %v818
        %v3418 = vmul.f32 %v3027, %v819
        %v3419 = vmul.f32 %v3029, %v820
        %v3420 = vmul.f32 %v3031, %v821
        %v3421 = vmul.f32 %v3033, %v822
        %v3422 = vmul.f32 %v3035, %v823
        %v3423 = vmul.f32 %v3037, %v824
        %v3424 = vmul.f32 %v3039, %v825
        %v3425 = vmul.f32 %v3041, %v826
        %v3426 = vadd.f32 %v3267, %v3269
        %3427 = vadd.xlane.f32.xlu0 %v3426
        %v3428 = vpop.xlane.xlu0 %3427
        %v3429 = vadd.f32 %v3271, %v3273
        %3430 = vadd.xlane.f32.xlu0 %v3429
        %v3431 = vpop.xlane.xlu0 %3430
        %v3432 = vadd.f32 %v3275, %v3277
        %3433 = vadd.xlane.f32.xlu0 %v3432
        %v3434 = vpop.xlane.xlu0 %3433
        %v3435 = vadd.f32 %v3279, %v3281
        %3436 = vadd.xlane.f32.xlu0 %v3435
        %v3437 = vpop.xlane.xlu0 %3436
        %v3438 = vadd.f32 %v3283, %v3285
        %3439 = vadd.xlane.f32.xlu0 %v3438
        %v3440 = vpop.xlane.xlu0 %3439
        %v3441 = vadd.f32 %v3287, %v3289
        %3442 = vadd.xlane.f32.xlu0 %v3441
        %v3443 = vpop.xlane.xlu0 %3442
        %v3444 = vadd.f32 %v3291, %v3293
        %3445 = vadd.xlane.f32.xlu0 %v3444
        %v3446 = vpop.xlane.xlu0 %3445
        %v3447 = vadd.f32 %v3295, %v3297
        %3448 = vadd.xlane.f32.xlu0 %v3447
        %v3449 = vpop.xlane.xlu0 %3448
        %v3450 = vadd.f32 %v3299, %v3301
        %3451 = vadd.xlane.f32.xlu0 %v3450
        %v3452 = vpop.xlane.xlu0 %3451
        %v3453 = vadd.f32 %v3303, %v3305
        %3454 = vadd.xlane.f32.xlu0 %v3453
        %v3455 = vpop.xlane.xlu0 %3454
        %v3456 = vadd.f32 %v3307, %v3309
        %3457 = vadd.xlane.f32.xlu0 %v3456
        %v3458 = vpop.xlane.xlu0 %3457
        %v3459 = vadd.f32 %v3311, %v3313
        %3460 = vadd.xlane.f32.xlu0 %v3459
        %v3461 = vpop.xlane.xlu0 %3460
        %v3462 = vadd.f32 %v3315, %v3317
        %3463 = vadd.xlane.f32.xlu0 %v3462
        %v3464 = vpop.xlane.xlu0 %3463
        %v3465 = vadd.f32 %v3319, %v3321
        %3466 = vadd.xlane.f32.xlu0 %v3465
        %v3467 = vpop.xlane.xlu0 %3466
        %v3468 = vadd.f32 %v3323, %v3325
        %3469 = vadd.xlane.f32.xlu0 %v3468
        %v3470 = vpop.xlane.xlu0 %3469
        %v3471 = vadd.f32 %v3327, %v3329
        %3472 = vadd.xlane.f32.xlu0 %v3471
        %v3473 = vpop.xlane.xlu0 %3472
        %v3474 = vadd.f32 %v3331, %v3333
        %3475 = vadd.xlane.f32.xlu0 %v3474
        %v3476 = vpop.xlane.xlu0 %3475
        %v3477 = vadd.f32 %v3335, %v3337
        %3478 = vadd.xlane.f32.xlu0 %v3477
        %v3479 = vpop.xlane.xlu0 %3478
        %v3480 = vadd.f32 %v3339, %v3341
        %3481 = vadd.xlane.f32.xlu0 %v3480
        %v3482 = vpop.xlane.xlu0 %3481
        %v3483 = vadd.f32 %v3343, %v3345
        %3484 = vadd.xlane.f32.xlu0 %v3483
        %v3485 = vpop.xlane.xlu0 %3484
        %v3486 = vadd.f32 %v3347, %v3349
        %3487 = vadd.xlane.f32.xlu0 %v3486
        %v3488 = vpop.xlane.xlu0 %3487
        %v3489 = vadd.f32 %v3351, %v3353
        %3490 = vadd.xlane.f32.xlu0 %v3489
        %v3491 = vpop.xlane.xlu0 %3490
        %v3492 = vadd.f32 %v3355, %v3357
        %3493 = vadd.xlane.f32.xlu0 %v3492
        %v3494 = vpop.xlane.xlu0 %3493
        %v3495 = vadd.f32 %v3359, %v3361
        %3496 = vadd.xlane.f32.xlu0 %v3495
        %v3497 = vpop.xlane.xlu0 %3496
        %v3498 = vadd.f32 %v3363, %v3365
        %3499 = vadd.xlane.f32.xlu0 %v3498
        %v3500 = vpop.xlane.xlu0 %3499
        %v3501 = vadd.f32 %v3367, %v3369
        %3502 = vadd.xlane.f32.xlu0 %v3501
        %v3503 = vpop.xlane.xlu0 %3502
        %v3504 = vadd.f32 %v3371, %v3373
        %3505 = vadd.xlane.f32.xlu0 %v3504
        %v3506 = vpop.xlane.xlu0 %3505
        %v3507 = vadd.f32 %v3375, %v3377
        %3508 = vadd.xlane.f32.xlu0 %v3507
        %v3509 = vpop.xlane.xlu0 %3508
        %v3510 = vadd.f32 %v3379, %v3381
        %3511 = vadd.xlane.f32.xlu0 %v3510
        %v3512 = vpop.xlane.xlu0 %3511
        %v3513 = vadd.f32 %v3383, %v3385
        %3514 = vadd.xlane.f32.xlu0 %v3513
        %v3515 = vpop.xlane.xlu0 %3514
        %v3516 = vadd.f32 %v3387, %v3389
        %3517 = vadd.xlane.f32.xlu0 %v3516
        %v3518 = vpop.xlane.xlu0 %3517
        %v3519 = vadd.f32 %v3391, %v3393
        %3520 = vadd.xlane.f32.xlu0 %v3519
        %v3521 = vpop.xlane.xlu0 %3520
        %v3522 = vadd.f32 %v3394, %v3428
        %v3523 = vadd.f32 %v3395, %v3431
        %v3524 = vadd.f32 %v3396, %v3434
        %v3525 = vadd.f32 %v3397, %v3437
        %v3526 = vadd.f32 %v3398, %v3440
        %v3527 = vadd.f32 %v3399, %v3443
        %v3528 = vadd.f32 %v3400, %v3446
        %v3529 = vadd.f32 %v3401, %v3449
        %v3530 = vadd.f32 %v3402, %v3452
        %v3531 = vadd.f32 %v3403, %v3455
        %v3532 = vadd.f32 %v3404, %v3458
        %v3533 = vadd.f32 %v3405, %v3461
        %v3534 = vadd.f32 %v3406, %v3464
        %v3535 = vadd.f32 %v3407, %v3467
        %v3536 = vadd.f32 %v3408, %v3470
        %v3537 = vadd.f32 %v3409, %v3473
        %v3538 = vadd.f32 %v3410, %v3476
        %v3539 = vadd.f32 %v3411, %v3479
        %v3540 = vadd.f32 %v3412, %v3482
        %v3541 = vadd.f32 %v3413, %v3485
        %v3542 = vadd.f32 %v3414, %v3488
        %v3543 = vadd.f32 %v3415, %v3491
        %v3544 = vadd.f32 %v3416, %v3494
        %v3545 = vadd.f32 %v3417, %v3497
        %v3546 = vadd.f32 %v3418, %v3500
        %v3547 = vadd.f32 %v3419, %v3503
        %v3548 = vadd.f32 %v3420, %v3506
        %v3549 = vadd.f32 %v3421, %v3509
        %v3550 = vadd.f32 %v3422, %v3512
        %v3551 = vadd.f32 %v3423, %v3515
        %v3552 = vadd.f32 %v3424, %v3518
        %v3553 = vadd.f32 %v3425, %v3521
        %v3554 = vpack.c.bf16 %v3271, %v3267
        %v3555 = vpack.c.bf16 %v3273, %v3269
        %v3556 = vpack.c.bf16 %v3279, %v3275
        %v3557 = vpack.c.bf16 %v3281, %v3277
        %v3558 = vpack.c.bf16 %v3287, %v3283
        %v3559 = vpack.c.bf16 %v3289, %v3285
        %v3560 = vpack.c.bf16 %v3295, %v3291
        %v3561 = vpack.c.bf16 %v3297, %v3293
        %v3562 = vpack.c.bf16 %v3303, %v3299
        %v3563 = vpack.c.bf16 %v3305, %v3301
        %v3564 = vpack.c.bf16 %v3311, %v3307
        %v3565 = vpack.c.bf16 %v3313, %v3309
        %v3566 = vpack.c.bf16 %v3319, %v3315
        %v3567 = vpack.c.bf16 %v3321, %v3317
        %v3568 = vpack.c.bf16 %v3327, %v3323
        %v3569 = vpack.c.bf16 %v3329, %v3325
        %v3570 = vpack.c.bf16 %v3335, %v3331
        %v3571 = vpack.c.bf16 %v3337, %v3333
        %v3572 = vpack.c.bf16 %v3343, %v3339
        %v3573 = vpack.c.bf16 %v3345, %v3341
        %v3574 = vpack.c.bf16 %v3351, %v3347
        %v3575 = vpack.c.bf16 %v3353, %v3349
        %v3576 = vpack.c.bf16 %v3359, %v3355
        %v3577 = vpack.c.bf16 %v3361, %v3357
        %v3578 = vpack.c.bf16 %v3367, %v3363
        %v3579 = vpack.c.bf16 %v3369, %v3365
        %v3580 = vpack.c.bf16 %v3375, %v3371
        %v3581 = vpack.c.bf16 %v3377, %v3373
        %v3582 = vpack.c.bf16 %v3383, %v3379
        %v3583 = vpack.c.bf16 %v3385, %v3381
        %v3584 = vpack.c.bf16 %v3391, %v3387
        %v3585 = vpack.c.bf16 %v3393, %v3389
        %3586 = vmatpush.bf16.msra.mxu0 %v2133
        %3587 = vmatpush.bf16.msra.mxu0 %v2132
        %3588 = vmatpush.bf16.msra.mxu0 %v2131
        %3589 = vmatpush.bf16.msra.mxu0 %v2130
        %3590 = vmatpush.bf16.msra.mxu0 %v2129
        %3591 = vmatpush.bf16.msra.mxu0 %v2128
        %3592 = vmatpush.bf16.msra.mxu0 %v2127
        %3593 = vmatpush.bf16.msra.mxu0 %v2126
        %3594 = vmatmul.bf16.gmra.mxu0 %v3554
        %v3595 = vpop.f32.mrf.mxu0
        %v3596 = vadd.f32 0.0, %v3595
        %v3597 = vpop.f32.mrf.mxu0
        %v3598 = vadd.f32 0.0, %v3597
        %3599 = vmatmul.bf16.gmra.mxu0 %v3556
        %v3600 = vpop.f32.mrf.mxu0
        %v3601 = vadd.f32 0.0, %v3600
        %v3602 = vpop.f32.mrf.mxu0
        %v3603 = vadd.f32 0.0, %v3602
        %3604 = vmatmul.bf16.gmra.mxu0 %v3558
        %v3605 = vpop.f32.mrf.mxu0
        %v3606 = vadd.f32 0.0, %v3605
        %v3607 = vpop.f32.mrf.mxu0
        %v3608 = vadd.f32 0.0, %v3607
        %3609 = vmatmul.bf16.gmra.mxu0 %v3560
        %v3610 = vpop.f32.mrf.mxu0
        %v3611 = vadd.f32 0.0, %v3610
        %v3612 = vpop.f32.mrf.mxu0
        %v3613 = vadd.f32 0.0, %v3612
        %3614 = vmatmul.bf16.gmra.mxu0 %v3562
        %v3615 = vpop.f32.mrf.mxu0
        %v3616 = vadd.f32 0.0, %v3615
        %v3617 = vpop.f32.mrf.mxu0
        %v3618 = vadd.f32 0.0, %v3617
        %3619 = vmatmul.bf16.gmra.mxu0 %v3564
        %v3620 = vpop.f32.mrf.mxu0
        %v3621 = vadd.f32 0.0, %v3620
        %v3622 = vpop.f32.mrf.mxu0
        %v3623 = vadd.f32 0.0, %v3622
        %3624 = vmatmul.bf16.gmra.mxu0 %v3566
        %v3625 = vpop.f32.mrf.mxu0
        %v3626 = vadd.f32 0.0, %v3625
        %v3627 = vpop.f32.mrf.mxu0
        %v3628 = vadd.f32 0.0, %v3627
        %3629 = vmatmul.bf16.gmra.mxu0 %v3568
        %v3630 = vpop.f32.mrf.mxu0
        %v3631 = vadd.f32 0.0, %v3630
        %v3632 = vpop.f32.mrf.mxu0
        %v3633 = vadd.f32 0.0, %v3632
        %3634 = vmatmul.bf16.gmra.mxu0 %v3570
        %v3635 = vpop.f32.mrf.mxu0
        %v3636 = vadd.f32 0.0, %v3635
        %v3637 = vpop.f32.mrf.mxu0
        %v3638 = vadd.f32 0.0, %v3637
        %3639 = vmatmul.bf16.gmra.mxu0 %v3572
        %v3640 = vpop.f32.mrf.mxu0
        %v3641 = vadd.f32 0.0, %v3640
        %v3642 = vpop.f32.mrf.mxu0
        %v3643 = vadd.f32 0.0, %v3642
        %3644 = vmatmul.bf16.gmra.mxu0 %v3574
        %v3645 = vpop.f32.mrf.mxu0
        %v3646 = vadd.f32 0.0, %v3645
        %v3647 = vpop.f32.mrf.mxu0
        %v3648 = vadd.f32 0.0, %v3647
        %3649 = vmatmul.bf16.gmra.mxu0 %v3576
        %v3650 = vpop.f32.mrf.mxu0
        %v3651 = vadd.f32 0.0, %v3650
        %v3652 = vpop.f32.mrf.mxu0
        %v3653 = vadd.f32 0.0, %v3652
        %3654 = vmatmul.bf16.gmra.mxu0 %v3578
        %v3655 = vpop.f32.mrf.mxu0
        %v3656 = vadd.f32 0.0, %v3655
        %v3657 = vpop.f32.mrf.mxu0
        %v3658 = vadd.f32 0.0, %v3657
        %3659 = vmatmul.bf16.gmra.mxu0 %v3580
        %v3660 = vpop.f32.mrf.mxu0
        %v3661 = vadd.f32 0.0, %v3660
        %v3662 = vpop.f32.mrf.mxu0
        %v3663 = vadd.f32 0.0, %v3662
        %3664 = vmatmul.bf16.gmra.mxu0 %v3582
        %v3665 = vpop.f32.mrf.mxu0
        %v3666 = vadd.f32 0.0, %v3665
        %v3667 = vpop.f32.mrf.mxu0
        %v3668 = vadd.f32 0.0, %v3667
        %3669 = vmatmul.bf16.gmra.mxu0 %v3584
        %v3670 = vpop.f32.mrf.mxu0
        %v3671 = vadd.f32 0.0, %v3670
        %v3672 = vpop.f32.mrf.mxu0
        %v3673 = vadd.f32 0.0, %v3672
        %3674 = vdwg.mxu0
        %3675 = vmatpush.bf16.msra.mxu0 %v2141
        %3676 = vmatpush.bf16.msra.mxu0 %v2140
        %3677 = vmatpush.bf16.msra.mxu0 %v2139
        %3678 = vmatpush.bf16.msra.mxu0 %v2138
        %3679 = vmatpush.bf16.msra.mxu0 %v2137
        %3680 = vmatpush.bf16.msra.mxu0 %v2136
        %3681 = vmatpush.bf16.msra.mxu0 %v2135
        %3682 = vmatpush.bf16.msra.mxu0 %v2134
        %3683 = vmatmul.bf16.gmra.mxu0 %v3555
        %v3684 = vpop.f32.mrf.mxu0
        %v3685 = vadd.f32 %v3596, %v3684
        %v3686 = vpop.f32.mrf.mxu0
        %v3687 = vadd.f32 %v3598, %v3686
        %3688 = vmatmul.bf16.gmra.mxu0 %v3557
        %v3689 = vpop.f32.mrf.mxu0
        %v3690 = vadd.f32 %v3601, %v3689
        %v3691 = vpop.f32.mrf.mxu0
        %v3692 = vadd.f32 %v3603, %v3691
        %3693 = vmatmul.bf16.gmra.mxu0 %v3559
        %v3694 = vpop.f32.mrf.mxu0
        %v3695 = vadd.f32 %v3606, %v3694
        %v3696 = vpop.f32.mrf.mxu0
        %v3697 = vadd.f32 %v3608, %v3696
        %3698 = vmatmul.bf16.gmra.mxu0 %v3561
        %v3699 = vpop.f32.mrf.mxu0
        %v3700 = vadd.f32 %v3611, %v3699
        %v3701 = vpop.f32.mrf.mxu0
        %v3702 = vadd.f32 %v3613, %v3701
        %3703 = vmatmul.bf16.gmra.mxu0 %v3563
        %v3704 = vpop.f32.mrf.mxu0
        %v3705 = vadd.f32 %v3616, %v3704
        %v3706 = vpop.f32.mrf.mxu0
        %v3707 = vadd.f32 %v3618, %v3706
        %3708 = vmatmul.bf16.gmra.mxu0 %v3565
        %v3709 = vpop.f32.mrf.mxu0
        %v3710 = vadd.f32 %v3621, %v3709
        %v3711 = vpop.f32.mrf.mxu0
        %v3712 = vadd.f32 %v3623, %v3711
        %3713 = vmatmul.bf16.gmra.mxu0 %v3567
        %v3714 = vpop.f32.mrf.mxu0
        %v3715 = vadd.f32 %v3626, %v3714
        %v3716 = vpop.f32.mrf.mxu0
        %v3717 = vadd.f32 %v3628, %v3716
        %3718 = vmatmul.bf16.gmra.mxu0 %v3569
        %v3719 = vpop.f32.mrf.mxu0
        %v3720 = vadd.f32 %v3631, %v3719
        %v3721 = vpop.f32.mrf.mxu0
        %v3722 = vadd.f32 %v3633, %v3721
        %3723 = vmatmul.bf16.gmra.mxu0 %v3571
        %v3724 = vpop.f32.mrf.mxu0
        %v3725 = vadd.f32 %v3636, %v3724
        %v3726 = vpop.f32.mrf.mxu0
        %v3727 = vadd.f32 %v3638, %v3726
        %3728 = vmatmul.bf16.gmra.mxu0 %v3573
        %v3729 = vpop.f32.mrf.mxu0
        %v3730 = vadd.f32 %v3641, %v3729
        %v3731 = vpop.f32.mrf.mxu0
        %v3732 = vadd.f32 %v3643, %v3731
        %3733 = vmatmul.bf16.gmra.mxu0 %v3575
        %v3734 = vpop.f32.mrf.mxu0
        %v3735 = vadd.f32 %v3646, %v3734
        %v3736 = vpop.f32.mrf.mxu0
        %v3737 = vadd.f32 %v3648, %v3736
        %3738 = vmatmul.bf16.gmra.mxu0 %v3577
        %v3739 = vpop.f32.mrf.mxu0
        %v3740 = vadd.f32 %v3651, %v3739
        %v3741 = vpop.f32.mrf.mxu0
        %v3742 = vadd.f32 %v3653, %v3741
        %3743 = vmatmul.bf16.gmra.mxu0 %v3579
        %v3744 = vpop.f32.mrf.mxu0
        %v3745 = vadd.f32 %v3656, %v3744
        %v3746 = vpop.f32.mrf.mxu0
        %v3747 = vadd.f32 %v3658, %v3746
        %3748 = vmatmul.bf16.gmra.mxu0 %v3581
        %v3749 = vpop.f32.mrf.mxu0
        %v3750 = vadd.f32 %v3661, %v3749
        %v3751 = vpop.f32.mrf.mxu0
        %v3752 = vadd.f32 %v3663, %v3751
        %3753 = vmatmul.bf16.gmra.mxu0 %v3583
        %v3754 = vpop.f32.mrf.mxu0
        %v3755 = vadd.f32 %v3666, %v3754
        %v3756 = vpop.f32.mrf.mxu0
        %v3757 = vadd.f32 %v3668, %v3756
        %3758 = vmatmul.bf16.gmra.mxu0 %v3585
        %v3759 = vpop.f32.mrf.mxu0
        %v3760 = vadd.f32 %v3671, %v3759
        %v3761 = vpop.f32.mrf.mxu0
        %v3762 = vadd.f32 %v3673, %v3761
        %3763 = vdwg.mxu0
        %3765 = vset.pattern.permute.xlu0 1
        %3766 = vperm.xlu0 %3765, %v2979
        %v3767 = vpop.permute.xlu0 %3766
        %3770 = vset.pattern.permute.xlu0 1
        %3771 = vperm.xlu0 %3770, %v2981
        %v3772 = vpop.permute.xlu0 %3771
        %3775 = vset.pattern.permute.xlu0 1
        %3776 = vperm.xlu0 %3775, %v2983
        %v3777 = vpop.permute.xlu0 %3776
        %3780 = vset.pattern.permute.xlu0 1
        %3781 = vperm.xlu0 %3780, %v2985
        %v3782 = vpop.permute.xlu0 %3781
        %3785 = vset.pattern.permute.xlu0 1
        %3786 = vperm.xlu0 %3785, %v2987
        %v3787 = vpop.permute.xlu0 %3786
        %3790 = vset.pattern.permute.xlu0 1
        %3791 = vperm.xlu0 %3790, %v2989
        %v3792 = vpop.permute.xlu0 %3791
        %3795 = vset.pattern.permute.xlu0 1
        %3796 = vperm.xlu0 %3795, %v2991
        %v3797 = vpop.permute.xlu0 %3796
        %3800 = vset.pattern.permute.xlu0 1
        %3801 = vperm.xlu0 %3800, %v2993
        %v3802 = vpop.permute.xlu0 %3801
        %3805 = vset.pattern.permute.xlu0 1
        %3806 = vperm.xlu0 %3805, %v2995
        %v3807 = vpop.permute.xlu0 %3806
        %3810 = vset.pattern.permute.xlu0 1
        %3811 = vperm.xlu0 %3810, %v2997
        %v3812 = vpop.permute.xlu0 %3811
        %3815 = vset.pattern.permute.xlu0 1
        %3816 = vperm.xlu0 %3815, %v2999
        %v3817 = vpop.permute.xlu0 %3816
        %3820 = vset.pattern.permute.xlu0 1
        %3821 = vperm.xlu0 %3820, %v3001
        %v3822 = vpop.permute.xlu0 %3821
        %3825 = vset.pattern.permute.xlu0 1
        %3826 = vperm.xlu0 %3825, %v3003
        %v3827 = vpop.permute.xlu0 %3826
        %3830 = vset.pattern.permute.xlu0 1
        %3831 = vperm.xlu0 %3830, %v3005
        %v3832 = vpop.permute.xlu0 %3831
        %3835 = vset.pattern.permute.xlu0 1
        %3836 = vperm.xlu0 %3835, %v3007
        %v3837 = vpop.permute.xlu0 %3836
        %3840 = vset.pattern.permute.xlu0 1
        %3841 = vperm.xlu0 %3840, %v3009
        %v3842 = vpop.permute.xlu0 %3841
        %3845 = vset.pattern.permute.xlu0 1
        %3846 = vperm.xlu0 %3845, %v3011
        %v3847 = vpop.permute.xlu0 %3846
        %3850 = vset.pattern.permute.xlu0 1
        %3851 = vperm.xlu0 %3850, %v3013
        %v3852 = vpop.permute.xlu0 %3851
        %3855 = vset.pattern.permute.xlu0 1
        %3856 = vperm.xlu0 %3855, %v3015
        %v3857 = vpop.permute.xlu0 %3856
        %3860 = vset.pattern.permute.xlu0 1
        %3861 = vperm.xlu0 %3860, %v3017
        %v3862 = vpop.permute.xlu0 %3861
        %3865 = vset.pattern.permute.xlu0 1
        %3866 = vperm.xlu0 %3865, %v3019
        %v3867 = vpop.permute.xlu0 %3866
        %3870 = vset.pattern.permute.xlu0 1
        %3871 = vperm.xlu0 %3870, %v3021
        %v3872 = vpop.permute.xlu0 %3871
        %3875 = vset.pattern.permute.xlu0 1
        %3876 = vperm.xlu0 %3875, %v3023
        %v3877 = vpop.permute.xlu0 %3876
        %3880 = vset.pattern.permute.xlu0 1
        %3881 = vperm.xlu0 %3880, %v3025
        %v3882 = vpop.permute.xlu0 %3881
        %3885 = vset.pattern.permute.xlu0 1
        %3886 = vperm.xlu0 %3885, %v3027
        %v3887 = vpop.permute.xlu0 %3886
        %3890 = vset.pattern.permute.xlu0 1
        %3891 = vperm.xlu0 %3890, %v3029
        %v3892 = vpop.permute.xlu0 %3891
        %3895 = vset.pattern.permute.xlu0 1
        %3896 = vperm.xlu0 %3895, %v3031
        %v3897 = vpop.permute.xlu0 %3896
        %3900 = vset.pattern.permute.xlu0 1
        %3901 = vperm.xlu0 %3900, %v3033
        %v3902 = vpop.permute.xlu0 %3901
        %3905 = vset.pattern.permute.xlu0 1
        %3906 = vperm.xlu0 %3905, %v3035
        %v3907 = vpop.permute.xlu0 %3906
        %3910 = vset.pattern.permute.xlu0 1
        %3911 = vperm.xlu0 %3910, %v3037
        %v3912 = vpop.permute.xlu0 %3911
        %3915 = vset.pattern.permute.xlu0 1
        %3916 = vperm.xlu0 %3915, %v3039
        %v3917 = vpop.permute.xlu0 %3916
        %3920 = vset.pattern.permute.xlu0 1
        %3921 = vperm.xlu0 %3920, %v3041
        %v3922 = vpop.permute.xlu0 %3921
        %v3924 = vmul.f32 %v3767, %v827
        %v3925 = vmul.f32 %v3772, %v828
        %v3926 = vmul.f32 %v3777, %v829
        %v3927 = vmul.f32 %v3782, %v830
        %v3928 = vmul.f32 %v3787, %v831
        %v3929 = vmul.f32 %v3792, %v832
        %v3930 = vmul.f32 %v3797, %v833
        %v3931 = vmul.f32 %v3802, %v834
        %v3932 = vmul.f32 %v3807, %v835
        %v3933 = vmul.f32 %v3812, %v836
        %v3934 = vmul.f32 %v3817, %v837
        %v3935 = vmul.f32 %v3822, %v838
        %v3936 = vmul.f32 %v3827, %v839
        %v3937 = vmul.f32 %v3832, %v840
        %v3938 = vmul.f32 %v3837, %v841
        %v3939 = vmul.f32 %v3842, %v842
        %v3940 = vmul.f32 %v3847, %v843
        %v3941 = vmul.f32 %v3852, %v844
        %v3942 = vmul.f32 %v3857, %v845
        %v3943 = vmul.f32 %v3862, %v846
        %v3944 = vmul.f32 %v3867, %v847
        %v3945 = vmul.f32 %v3872, %v848
        %v3946 = vmul.f32 %v3877, %v849
        %v3947 = vmul.f32 %v3882, %v850
        %v3948 = vmul.f32 %v3887, %v851
        %v3949 = vmul.f32 %v3892, %v852
        %v3950 = vmul.f32 %v3897, %v853
        %v3951 = vmul.f32 %v3902, %v854
        %v3952 = vmul.f32 %v3907, %v855
        %v3953 = vmul.f32 %v3912, %v856
        %v3954 = vmul.f32 %v3917, %v857
        %v3955 = vmul.f32 %v3922, %v858
        %3988 = vrot.lane.b32.xlu0 %v3685, 64
        %v3989 = vpop.permute.xlu0 %3988
        %3990 = vrot.lane.b32.xlu0 %v3687, 64
        %v3991 = vpop.permute.xlu0 %3990
        %3992 = vrot.lane.b32.xlu0 %v3690, 64
        %v3993 = vpop.permute.xlu0 %3992
        %3994 = vrot.lane.b32.xlu0 %v3692, 64
        %v3995 = vpop.permute.xlu0 %3994
        %3996 = vrot.lane.b32.xlu0 %v3695, 64
        %v3997 = vpop.permute.xlu0 %3996
        %3998 = vrot.lane.b32.xlu0 %v3697, 64
        %v3999 = vpop.permute.xlu0 %3998
        %4000 = vrot.lane.b32.xlu0 %v3700, 64
        %v4001 = vpop.permute.xlu0 %4000
        %4002 = vrot.lane.b32.xlu0 %v3702, 64
        %v4003 = vpop.permute.xlu0 %4002
        %4004 = vrot.lane.b32.xlu0 %v3705, 64
        %v4005 = vpop.permute.xlu0 %4004
        %4006 = vrot.lane.b32.xlu0 %v3707, 64
        %v4007 = vpop.permute.xlu0 %4006
        %4008 = vrot.lane.b32.xlu0 %v3710, 64
        %v4009 = vpop.permute.xlu0 %4008
        %4010 = vrot.lane.b32.xlu0 %v3712, 64
        %v4011 = vpop.permute.xlu0 %4010
        %4012 = vrot.lane.b32.xlu0 %v3715, 64
        %v4013 = vpop.permute.xlu0 %4012
        %4014 = vrot.lane.b32.xlu0 %v3717, 64
        %v4015 = vpop.permute.xlu0 %4014
        %4016 = vrot.lane.b32.xlu0 %v3720, 64
        %v4017 = vpop.permute.xlu0 %4016
        %4018 = vrot.lane.b32.xlu0 %v3722, 64
        %v4019 = vpop.permute.xlu0 %4018
        %4020 = vrot.lane.b32.xlu0 %v3725, 64
        %v4021 = vpop.permute.xlu0 %4020
        %4022 = vrot.lane.b32.xlu0 %v3727, 64
        %v4023 = vpop.permute.xlu0 %4022
        %4024 = vrot.lane.b32.xlu0 %v3730, 64
        %v4025 = vpop.permute.xlu0 %4024
        %4026 = vrot.lane.b32.xlu0 %v3732, 64
        %v4027 = vpop.permute.xlu0 %4026
        %4028 = vrot.lane.b32.xlu0 %v3735, 64
        %v4029 = vpop.permute.xlu0 %4028
        %4030 = vrot.lane.b32.xlu0 %v3737, 64
        %v4031 = vpop.permute.xlu0 %4030
        %4032 = vrot.lane.b32.xlu0 %v3740, 64
        %v4033 = vpop.permute.xlu0 %4032
        %4034 = vrot.lane.b32.xlu0 %v3742, 64
        %v4035 = vpop.permute.xlu0 %4034
        %4036 = vrot.lane.b32.xlu0 %v3745, 64
        %v4037 = vpop.permute.xlu0 %4036
        %4038 = vrot.lane.b32.xlu0 %v3747, 64
        %v4039 = vpop.permute.xlu0 %4038
        %4040 = vrot.lane.b32.xlu0 %v3750, 64
        %v4041 = vpop.permute.xlu0 %4040
        %4042 = vrot.lane.b32.xlu0 %v3752, 64
        %v4043 = vpop.permute.xlu0 %4042
        %4044 = vrot.lane.b32.xlu0 %v3755, 64
        %v4045 = vpop.permute.xlu0 %4044
        %4046 = vrot.lane.b32.xlu0 %v3757, 64
        %v4047 = vpop.permute.xlu0 %4046
        %4048 = vrot.lane.b32.xlu0 %v3760, 64
        %v4049 = vpop.permute.xlu0 %4048
        %4050 = vrot.lane.b32.xlu0 %v3762, 64
        %v4051 = vpop.permute.xlu0 %4050
        %v4084 = vadd.f32 %v3924, %v3989
        %v4085 = vadd.f32 %v3925, %v3991
        %v4086 = vadd.f32 %v3926, %v3993
        %v4087 = vadd.f32 %v3927, %v3995
        %v4088 = vadd.f32 %v3928, %v3997
        %v4089 = vadd.f32 %v3929, %v3999
        %v4090 = vadd.f32 %v3930, %v4001
        %v4091 = vadd.f32 %v3931, %v4003
        %v4092 = vadd.f32 %v3932, %v4005
        %v4093 = vadd.f32 %v3933, %v4007
        %v4094 = vadd.f32 %v3934, %v4009
        %v4095 = vadd.f32 %v3935, %v4011
        %v4096 = vadd.f32 %v3936, %v4013
        %v4097 = vadd.f32 %v3937, %v4015
        %v4098 = vadd.f32 %v3938, %v4017
        %v4099 = vadd.f32 %v3939, %v4019
        %v4100 = vadd.f32 %v3940, %v4021
        %v4101 = vadd.f32 %v3941, %v4023
        %v4102 = vadd.f32 %v3942, %v4025
        %v4103 = vadd.f32 %v3943, %v4027
        %v4104 = vadd.f32 %v3944, %v4029
        %v4105 = vadd.f32 %v3945, %v4031
        %v4106 = vadd.f32 %v3946, %v4033
        %v4107 = vadd.f32 %v3947, %v4035
        %v4108 = vadd.f32 %v3948, %v4037
        %v4109 = vadd.f32 %v3949, %v4039
        %v4110 = vadd.f32 %v3950, %v4041
        %v4111 = vadd.f32 %v3951, %v4043
        %v4112 = vadd.f32 %v3952, %v4045
        %v4113 = vadd.f32 %v3953, %v4047
        %v4114 = vadd.f32 %v3954, %v4049
        %v4115 = vadd.f32 %v3955, %v4051
        %vm4116 = vcmask 7168
        %v4117 = vsel %vm4116, %v1390, %v2914
        %v4118 = vsel %vm4116, %v1391, %v2915
        %v4119 = vsel %vm4116, %v1392, %v2916
        %v4120 = vsel %vm4116, %v1393, %v2917
        %v4121 = vsel %vm4116, %v1394, %v2918
        %v4122 = vsel %vm4116, %v1395, %v2919
        %v4123 = vsel %vm4116, %v1396, %v2920
        %v4124 = vsel %vm4116, %v1397, %v2921
        %v4125 = vsel %vm4116, %v1398, %v2922
        %v4126 = vsel %vm4116, %v1399, %v2923
        %v4127 = vsel %vm4116, %v1400, %v2924
        %v4128 = vsel %vm4116, %v1401, %v2925
        %v4129 = vsel %vm4116, %v1402, %v2926
        %v4130 = vsel %vm4116, %v1403, %v2927
        %v4131 = vsel %vm4116, %v1404, %v2928
        %v4132 = vsel %vm4116, %v1405, %v2929
        %v4133 = vsel %vm4116, %v1406, %v2930
        %v4134 = vsel %vm4116, %v1407, %v2931
        %v4135 = vsel %vm4116, %v1408, %v2932
        %v4136 = vsel %vm4116, %v1409, %v2933
        %v4137 = vsel %vm4116, %v1410, %v2934
        %v4138 = vsel %vm4116, %v1411, %v2935
        %v4139 = vsel %vm4116, %v1412, %v2936
        %v4140 = vsel %vm4116, %v1413, %v2937
        %v4141 = vsel %vm4116, %v1414, %v2938
        %v4142 = vsel %vm4116, %v1415, %v2939
        %v4143 = vsel %vm4116, %v1416, %v2940
        %v4144 = vsel %vm4116, %v1417, %v2941
        %v4145 = vsel %vm4116, %v1418, %v2942
        %v4146 = vsel %vm4116, %v1419, %v2943
        %v4147 = vsel %vm4116, %v1420, %v2944
        %v4148 = vsel %vm4116, %v1421, %v2945
        %vm4149 = vcmask 15360
        %4150 = vst.msk [vmem:[#allocation2] sm:$0xff] %vm4149, %v4117
        %4151 = vst.msk [vmem:[#allocation2 + $0x8] sm:$0xff] %vm4149, %v4118
        %4152 = vst.msk [vmem:[#allocation2 + $0x10] sm:$0xff] %vm4149, %v4119
        %4153 = vst.msk [vmem:[#allocation2 + $0x18] sm:$0xff] %vm4149, %v4120
        %4154 = vst.msk [vmem:[#allocation2 + $0x20] sm:$0xff] %vm4149, %v4121
        %4155 = vst.msk [vmem:[#allocation2 + $0x28] sm:$0xff] %vm4149, %v4122
        %4156 = vst.msk [vmem:[#allocation2 + $0x30] sm:$0xff] %vm4149, %v4123
        %4157 = vst.msk [vmem:[#allocation2 + $0x38] sm:$0xff] %vm4149, %v4124
        %4158 = vst.msk [vmem:[#allocation2 + $0x40] sm:$0xff] %vm4149, %v4125
        %4159 = vst.msk [vmem:[#allocation2 + $0x48] sm:$0xff] %vm4149, %v4126
        %4160 = vst.msk [vmem:[#allocation2 + $0x50] sm:$0xff] %vm4149, %v4127
        %4161 = vst.msk [vmem:[#allocation2 + $0x58] sm:$0xff] %vm4149, %v4128
        %4162 = vst.msk [vmem:[#allocation2 + $0x60] sm:$0xff] %vm4149, %v4129
        %4163 = vst.msk [vmem:[#allocation2 + $0x68] sm:$0xff] %vm4149, %v4130
        %4164 = vst.msk [vmem:[#allocation2 + $0x70] sm:$0xff] %vm4149, %v4131
        %4165 = vst.msk [vmem:[#allocation2 + $0x78] sm:$0xff] %vm4149, %v4132
        %4166 = vst.msk [vmem:[#allocation2 + $0x80] sm:$0xff] %vm4149, %v4133
        %4167 = vst.msk [vmem:[#allocation2 + $0x88] sm:$0xff] %vm4149, %v4134
        %4168 = vst.msk [vmem:[#allocation2 + $0x90] sm:$0xff] %vm4149, %v4135
        %4169 = vst.msk [vmem:[#allocation2 + $0x98] sm:$0xff] %vm4149, %v4136
        %4170 = vst.msk [vmem:[#allocation2 + $0xa0] sm:$0xff] %vm4149, %v4137
        %4171 = vst.msk [vmem:[#allocation2 + $0xa8] sm:$0xff] %vm4149, %v4138
        %4172 = vst.msk [vmem:[#allocation2 + $0xb0] sm:$0xff] %vm4149, %v4139
        %4173 = vst.msk [vmem:[#allocation2 + $0xb8] sm:$0xff] %vm4149, %v4140
        %4174 = vst.msk [vmem:[#allocation2 + $0xc0] sm:$0xff] %vm4149, %v4141
        %4175 = vst.msk [vmem:[#allocation2 + $0xc8] sm:$0xff] %vm4149, %v4142
        %4176 = vst.msk [vmem:[#allocation2 + $0xd0] sm:$0xff] %vm4149, %v4143
        %4177 = vst.msk [vmem:[#allocation2 + $0xd8] sm:$0xff] %vm4149, %v4144
        %4178 = vst.msk [vmem:[#allocation2 + $0xe0] sm:$0xff] %vm4149, %v4145
        %4179 = vst.msk [vmem:[#allocation2 + $0xe8] sm:$0xff] %vm4149, %v4146
        %4180 = vst.msk [vmem:[#allocation2 + $0xf0] sm:$0xff] %vm4149, %v4147
        %4181 = vst.msk [vmem:[#allocation2 + $0xf8] sm:$0xff] %vm4149, %v4148
        %v4182 = vsel %vm4116, %v1998, %v3522
        %v4183 = vsel %vm4116, %v1999, %v3523
        %v4184 = vsel %vm4116, %v2000, %v3524
        %v4185 = vsel %vm4116, %v2001, %v3525
        %v4186 = vsel %vm4116, %v2002, %v3526
        %v4187 = vsel %vm4116, %v2003, %v3527
        %v4188 = vsel %vm4116, %v2004, %v3528
        %v4189 = vsel %vm4116, %v2005, %v3529
        %v4190 = vsel %vm4116, %v2006, %v3530
        %v4191 = vsel %vm4116, %v2007, %v3531
        %v4192 = vsel %vm4116, %v2008, %v3532
        %v4193 = vsel %vm4116, %v2009, %v3533
        %v4194 = vsel %vm4116, %v2010, %v3534
        %v4195 = vsel %vm4116, %v2011, %v3535
        %v4196 = vsel %vm4116, %v2012, %v3536
        %v4197 = vsel %vm4116, %v2013, %v3537
        %v4198 = vsel %vm4116, %v2014, %v3538
        %v4199 = vsel %vm4116, %v2015, %v3539
        %v4200 = vsel %vm4116, %v2016, %v3540
        %v4201 = vsel %vm4116, %v2017, %v3541
        %v4202 = vsel %vm4116, %v2018, %v3542
        %v4203 = vsel %vm4116, %v2019, %v3543
        %v4204 = vsel %vm4116, %v2020, %v3544
        %v4205 = vsel %vm4116, %v2021, %v3545
        %v4206 = vsel %vm4116, %v2022, %v3546
        %v4207 = vsel %vm4116, %v2023, %v3547
        %v4208 = vsel %vm4116, %v2024, %v3548
        %v4209 = vsel %vm4116, %v2025, %v3549
        %v4210 = vsel %vm4116, %v2026, %v3550
        %v4211 = vsel %vm4116, %v2027, %v3551
        %v4212 = vsel %vm4116, %v2028, %v3552
        %v4213 = vsel %vm4116, %v2029, %v3553
        %4214 = vst.msk [vmem:[#allocation3] sm:$0xff] %vm4149, %v4182
        %4215 = vst.msk [vmem:[#allocation3 + $0x8] sm:$0xff] %vm4149, %v4183
        %4216 = vst.msk [vmem:[#allocation3 + $0x10] sm:$0xff] %vm4149, %v4184
        %4217 = vst.msk [vmem:[#allocation3 + $0x18] sm:$0xff] %vm4149, %v4185
        %4218 = vst.msk [vmem:[#allocation3 + $0x20] sm:$0xff] %vm4149, %v4186
        %4219 = vst.msk [vmem:[#allocation3 + $0x28] sm:$0xff] %vm4149, %v4187
        %4220 = vst.msk [vmem:[#allocation3 + $0x30] sm:$0xff] %vm4149, %v4188
        %4221 = vst.msk [vmem:[#allocation3 + $0x38] sm:$0xff] %vm4149, %v4189
        %4222 = vst.msk [vmem:[#allocation3 + $0x40] sm:$0xff] %vm4149, %v4190
        %4223 = vst.msk [vmem:[#allocation3 + $0x48] sm:$0xff] %vm4149, %v4191
        %4224 = vst.msk [vmem:[#allocation3 + $0x50] sm:$0xff] %vm4149, %v4192
        %4225 = vst.msk [vmem:[#allocation3 + $0x58] sm:$0xff] %vm4149, %v4193
        %4226 = vst.msk [vmem:[#allocation3 + $0x60] sm:$0xff] %vm4149, %v4194
        %4227 = vst.msk [vmem:[#allocation3 + $0x68] sm:$0xff] %vm4149, %v4195
        %4228 = vst.msk [vmem:[#allocation3 + $0x70] sm:$0xff] %vm4149, %v4196
        %4229 = vst.msk [vmem:[#allocation3 + $0x78] sm:$0xff] %vm4149, %v4197
        %4230 = vst.msk [vmem:[#allocation3 + $0x80] sm:$0xff] %vm4149, %v4198
        %4231 = vst.msk [vmem:[#allocation3 + $0x88] sm:$0xff] %vm4149, %v4199
        %4232 = vst.msk [vmem:[#allocation3 + $0x90] sm:$0xff] %vm4149, %v4200
        %4233 = vst.msk [vmem:[#allocation3 + $0x98] sm:$0xff] %vm4149, %v4201
        %4234 = vst.msk [vmem:[#allocation3 + $0xa0] sm:$0xff] %vm4149, %v4202
        %4235 = vst.msk [vmem:[#allocation3 + $0xa8] sm:$0xff] %vm4149, %v4203
        %4236 = vst.msk [vmem:[#allocation3 + $0xb0] sm:$0xff] %vm4149, %v4204
        %4237 = vst.msk [vmem:[#allocation3 + $0xb8] sm:$0xff] %vm4149, %v4205
        %4238 = vst.msk [vmem:[#allocation3 + $0xc0] sm:$0xff] %vm4149, %v4206
        %4239 = vst.msk [vmem:[#allocation3 + $0xc8] sm:$0xff] %vm4149, %v4207
        %4240 = vst.msk [vmem:[#allocation3 + $0xd0] sm:$0xff] %vm4149, %v4208
        %4241 = vst.msk [vmem:[#allocation3 + $0xd8] sm:$0xff] %vm4149, %v4209
        %4242 = vst.msk [vmem:[#allocation3 + $0xe0] sm:$0xff] %vm4149, %v4210
        %4243 = vst.msk [vmem:[#allocation3 + $0xe8] sm:$0xff] %vm4149, %v4211
        %4244 = vst.msk [vmem:[#allocation3 + $0xf0] sm:$0xff] %vm4149, %v4212
        %4245 = vst.msk [vmem:[#allocation3 + $0xf8] sm:$0xff] %vm4149, %v4213
        %v4246 = vsel %vm1019, %v2528, %v4084
        %v4247 = vsel %vm1019, %v2529, %v4085
        %v4248 = vsel %vm1019, %v2530, %v4086
        %v4249 = vsel %vm1019, %v2531, %v4087
        %v4250 = vsel %vm1019, %v2532, %v4088
        %v4251 = vsel %vm1019, %v2533, %v4089
        %v4252 = vsel %vm1019, %v2534, %v4090
        %v4253 = vsel %vm1019, %v2535, %v4091
        %v4254 = vsel %vm1019, %v2536, %v4092
        %v4255 = vsel %vm1019, %v2537, %v4093
        %v4256 = vsel %vm1019, %v2538, %v4094
        %v4257 = vsel %vm1019, %v2539, %v4095
        %v4258 = vsel %vm1019, %v2540, %v4096
        %v4259 = vsel %vm1019, %v2541, %v4097
        %v4260 = vsel %vm1019, %v2542, %v4098
        %v4261 = vsel %vm1019, %v2543, %v4099
        %v4262 = vsel %vm1019, %v2544, %v4100
        %v4263 = vsel %vm1019, %v2545, %v4101
        %v4264 = vsel %vm1019, %v2546, %v4102
        %v4265 = vsel %vm1019, %v2547, %v4103
        %v4266 = vsel %vm1019, %v2548, %v4104
        %v4267 = vsel %vm1019, %v2549, %v4105
        %v4268 = vsel %vm1019, %v2550, %v4106
        %v4269 = vsel %vm1019, %v2551, %v4107
        %v4270 = vsel %vm1019, %v2552, %v4108
        %v4271 = vsel %vm1019, %v2553, %v4109
        %v4272 = vsel %vm1019, %v2554, %v4110
        %v4273 = vsel %vm1019, %v2555, %v4111
        %v4274 = vsel %vm1019, %v2556, %v4112
        %v4275 = vsel %vm1019, %v2557, %v4113
        %v4276 = vsel %vm1019, %v2558, %v4114
        %v4277 = vsel %vm1019, %v2559, %v4115
        %4278 = vst [vmem:[#allocation4] sm:$0xff] %v4246
        %4279 = vst [vmem:[#allocation4 + $0x10] sm:$0xff] %v4247
        %4280 = vst [vmem:[#allocation4 + $0x20] sm:$0xff] %v4248
        %4281 = vst [vmem:[#allocation4 + $0x30] sm:$0xff] %v4249
        %4282 = vst [vmem:[#allocation4 + $0x40] sm:$0xff] %v4250
        %4283 = vst [vmem:[#allocation4 + $0x50] sm:$0xff] %v4251
        %4284 = vst [vmem:[#allocation4 + $0x60] sm:$0xff] %v4252
        %4285 = vst [vmem:[#allocation4 + $0x70] sm:$0xff] %v4253
        %4286 = vst [vmem:[#allocation4 + $0x80] sm:$0xff] %v4254
        %4287 = vst [vmem:[#allocation4 + $0x90] sm:$0xff] %v4255
        %4288 = vst [vmem:[#allocation4 + $0xa0] sm:$0xff] %v4256
        %4289 = vst [vmem:[#allocation4 + $0xb0] sm:$0xff] %v4257
        %4290 = vst [vmem:[#allocation4 + $0xc0] sm:$0xff] %v4258
        %4291 = vst [vmem:[#allocation4 + $0xd0] sm:$0xff] %v4259
        %4292 = vst [vmem:[#allocation4 + $0xe0] sm:$0xff] %v4260
        %4293 = vst [vmem:[#allocation4 + $0xf0] sm:$0xff] %v4261
        %4294 = vst [vmem:[#allocation4 + $0x100] sm:$0xff] %v4262
        %4295 = vst [vmem:[#allocation4 + $0x110] sm:$0xff] %v4263
        %4296 = vst [vmem:[#allocation4 + $0x120] sm:$0xff] %v4264
        %4297 = vst [vmem:[#allocation4 + $0x130] sm:$0xff] %v4265
        %4298 = vst [vmem:[#allocation4 + $0x140] sm:$0xff] %v4266
        %4299 = vst [vmem:[#allocation4 + $0x150] sm:$0xff] %v4267
        %4300 = vst [vmem:[#allocation4 + $0x160] sm:$0xff] %v4268
        %4301 = vst [vmem:[#allocation4 + $0x170] sm:$0xff] %v4269
        %4302 = vst [vmem:[#allocation4 + $0x180] sm:$0xff] %v4270
        %4303 = vst [vmem:[#allocation4 + $0x190] sm:$0xff] %v4271
        %4304 = vst [vmem:[#allocation4 + $0x1a0] sm:$0xff] %v4272
        %4305 = vst [vmem:[#allocation4 + $0x1b0] sm:$0xff] %v4273
        %4306 = vst [vmem:[#allocation4 + $0x1c0] sm:$0xff] %v4274
        %4307 = vst [vmem:[#allocation4 + $0x1d0] sm:$0xff] %v4275
        %4308 = vst [vmem:[#allocation4 + $0x1e0] sm:$0xff] %v4276
        %4309 = vst [vmem:[#allocation4 + $0x1f0] sm:$0xff] %v4277
        %v4310 = vld [vmem:[%s262] sm:$0xf]
        %v4311 = vld [vmem:[%s262 + $0x4] sm:$0xf]
        %v4312 = vld [vmem:[%s262 + $0x8] sm:$0xf]
        %v4313 = vld [vmem:[%s262 + $0xc] sm:$0xf]
        %v4314 = vld [vmem:[%s262 + $0x10] sm:$0xf]
        %v4315 = vld [vmem:[%s262 + $0x14] sm:$0xf]
        %v4316 = vld [vmem:[%s262 + $0x18] sm:$0xf]
        %v4317 = vld [vmem:[%s262 + $0x1c] sm:$0xf]
        %v4318 = vld [vmem:[%s262 + $0x20] sm:$0xf]
        %v4319 = vld [vmem:[%s262 + $0x24] sm:$0xf]
        %v4320 = vld [vmem:[%s262 + $0x28] sm:$0xf]
        %v4321 = vld [vmem:[%s262 + $0x2c] sm:$0xf]
        %v4322 = vld [vmem:[%s262 + $0x30] sm:$0xf]
        %v4323 = vld [vmem:[%s262 + $0x34] sm:$0xf]
        %v4324 = vld [vmem:[%s262 + $0x38] sm:$0xf]
        %v4325 = vld [vmem:[%s262 + $0x3c] sm:$0xf]
        %v4326 = vld [vmem:[%s262 + $0x40] sm:$0xf]
        %v4327 = vld [vmem:[%s262 + $0x44] sm:$0xf]
        %v4328 = vld [vmem:[%s262 + $0x48] sm:$0xf]
        %v4329 = vld [vmem:[%s262 + $0x4c] sm:$0xf]
        %v4330 = vld [vmem:[%s262 + $0x50] sm:$0xf]
        %v4331 = vld [vmem:[%s262 + $0x54] sm:$0xf]
        %v4332 = vld [vmem:[%s262 + $0x58] sm:$0xf]
        %v4333 = vld [vmem:[%s262 + $0x5c] sm:$0xf]
        %v4334 = vld [vmem:[%s262 + $0x60] sm:$0xf]
        %v4335 = vld [vmem:[%s262 + $0x64] sm:$0xf]
        %v4336 = vld [vmem:[%s262 + $0x68] sm:$0xf]
        %v4337 = vld [vmem:[%s262 + $0x6c] sm:$0xf]
        %v4338 = vld [vmem:[%s262 + $0x70] sm:$0xf]
        %v4339 = vld [vmem:[%s262 + $0x74] sm:$0xf]
        %v4340 = vld [vmem:[%s262 + $0x78] sm:$0xf]
        %v4341 = vld [vmem:[%s262 + $0x7c] sm:$0xf]
        %v4342 = vld [vmem:[%s272] sm:$0xf]
        %v4343 = vld [vmem:[%s272 + $0x4] sm:$0xf]
        %v4344 = vld [vmem:[%s272 + $0x8] sm:$0xf]
        %v4345 = vld [vmem:[%s272 + $0xc] sm:$0xf]
        %v4346 = vld [vmem:[%s272 + $0x10] sm:$0xf]
        %v4347 = vld [vmem:[%s272 + $0x14] sm:$0xf]
        %v4348 = vld [vmem:[%s272 + $0x18] sm:$0xf]
        %v4349 = vld [vmem:[%s272 + $0x1c] sm:$0xf]
        %v4350 = vld [vmem:[%s272 + $0x20] sm:$0xf]
        %v4351 = vld [vmem:[%s272 + $0x24] sm:$0xf]
        %v4352 = vld [vmem:[%s272 + $0x28] sm:$0xf]
        %v4353 = vld [vmem:[%s272 + $0x2c] sm:$0xf]
        %v4354 = vld [vmem:[%s272 + $0x30] sm:$0xf]
        %v4355 = vld [vmem:[%s272 + $0x34] sm:$0xf]
        %v4356 = vld [vmem:[%s272 + $0x38] sm:$0xf]
        %v4357 = vld [vmem:[%s272 + $0x3c] sm:$0xf]
        %v4358 = vld [vmem:[%s272 + $0x40] sm:$0xf]
        %v4359 = vld [vmem:[%s272 + $0x44] sm:$0xf]
        %v4360 = vld [vmem:[%s272 + $0x48] sm:$0xf]
        %v4361 = vld [vmem:[%s272 + $0x4c] sm:$0xf]
        %v4362 = vld [vmem:[%s272 + $0x50] sm:$0xf]
        %v4363 = vld [vmem:[%s272 + $0x54] sm:$0xf]
        %v4364 = vld [vmem:[%s272 + $0x58] sm:$0xf]
        %v4365 = vld [vmem:[%s272 + $0x5c] sm:$0xf]
        %v4366 = vld [vmem:[%s272 + $0x60] sm:$0xf]
        %v4367 = vld [vmem:[%s272 + $0x64] sm:$0xf]
        %v4368 = vld [vmem:[%s272 + $0x68] sm:$0xf]
        %v4369 = vld [vmem:[%s272 + $0x6c] sm:$0xf]
        %v4370 = vld [vmem:[%s272 + $0x70] sm:$0xf]
        %v4371 = vld [vmem:[%s272 + $0x74] sm:$0xf]
        %v4372 = vld [vmem:[%s272 + $0x78] sm:$0xf]
        %v4373 = vld [vmem:[%s272 + $0x7c] sm:$0xf]
        %v4374 = vld [vmem:[#allocation5 + $0x4] sm:$0xf]
        %v4375 = vld [vmem:[#allocation5 + $0xc] sm:$0xf]
        %v4376 = vld [vmem:[#allocation5 + $0x14] sm:$0xf]
        %v4377 = vld [vmem:[#allocation5 + $0x1c] sm:$0xf]
        %v4378 = vld [vmem:[#allocation5 + $0x24] sm:$0xf]
        %v4379 = vld [vmem:[#allocation5 + $0x2c] sm:$0xf]
        %v4380 = vld [vmem:[#allocation5 + $0x34] sm:$0xf]
        %v4381 = vld [vmem:[#allocation5 + $0x3c] sm:$0xf]
        %v4382 = vld [vmem:[#allocation5 + $0x44] sm:$0xf]
        %v4383 = vld [vmem:[#allocation5 + $0x4c] sm:$0xf]
        %v4384 = vld [vmem:[#allocation5 + $0x54] sm:$0xf]
        %v4385 = vld [vmem:[#allocation5 + $0x5c] sm:$0xf]
        %v4386 = vld [vmem:[#allocation5 + $0x64] sm:$0xf]
        %v4387 = vld [vmem:[#allocation5 + $0x6c] sm:$0xf]
        %v4388 = vld [vmem:[#allocation5 + $0x74] sm:$0xf]
        %v4389 = vld [vmem:[#allocation5 + $0x7c] sm:$0xf]
        %v4390 = vld [vmem:[#allocation5 + $0x84] sm:$0xf]
        %v4391 = vld [vmem:[#allocation5 + $0x8c] sm:$0xf]
        %v4392 = vld [vmem:[#allocation5 + $0x94] sm:$0xf]
        %v4393 = vld [vmem:[#allocation5 + $0x9c] sm:$0xf]
        %v4394 = vld [vmem:[#allocation5 + $0xa4] sm:$0xf]
        %v4395 = vld [vmem:[#allocation5 + $0xac] sm:$0xf]
        %v4396 = vld [vmem:[#allocation5 + $0xb4] sm:$0xf]
        %v4397 = vld [vmem:[#allocation5 + $0xbc] sm:$0xf]
        %v4398 = vld [vmem:[#allocation5 + $0xc4] sm:$0xf]
        %v4399 = vld [vmem:[#allocation5 + $0xcc] sm:$0xf]
        %v4400 = vld [vmem:[#allocation5 + $0xd4] sm:$0xf]
        %v4401 = vld [vmem:[#allocation5 + $0xdc] sm:$0xf]
        %v4402 = vld [vmem:[#allocation5 + $0xe4] sm:$0xf]
        %v4403 = vld [vmem:[#allocation5 + $0xec] sm:$0xf]
        %v4404 = vld [vmem:[#allocation5 + $0xf4] sm:$0xf]
        %v4405 = vld [vmem:[#allocation5 + $0xfc] sm:$0xf]
        %v4406 = vld [vmem:[#allocation2] sm:$0xff]
        %v4407 = vld [vmem:[#allocation2 + $0x8] sm:$0xff]
        %v4408 = vld [vmem:[#allocation2 + $0x10] sm:$0xff]
        %v4409 = vld [vmem:[#allocation2 + $0x18] sm:$0xff]
        %v4410 = vld [vmem:[#allocation2 + $0x20] sm:$0xff]
        %v4411 = vld [vmem:[#allocation2 + $0x28] sm:$0xff]
        %v4412 = vld [vmem:[#allocation2 + $0x30] sm:$0xff]
        %v4413 = vld [vmem:[#allocation2 + $0x38] sm:$0xff]
        %v4414 = vld [vmem:[#allocation2 + $0x40] sm:$0xff]
        %v4415 = vld [vmem:[#allocation2 + $0x48] sm:$0xff]
        %v4416 = vld [vmem:[#allocation2 + $0x50] sm:$0xff]
        %v4417 = vld [vmem:[#allocation2 + $0x58] sm:$0xff]
        %v4418 = vld [vmem:[#allocation2 + $0x60] sm:$0xff]
        %v4419 = vld [vmem:[#allocation2 + $0x68] sm:$0xff]
        %v4420 = vld [vmem:[#allocation2 + $0x70] sm:$0xff]
        %v4421 = vld [vmem:[#allocation2 + $0x78] sm:$0xff]
        %v4422 = vld [vmem:[#allocation2 + $0x80] sm:$0xff]
        %v4423 = vld [vmem:[#allocation2 + $0x88] sm:$0xff]
        %v4424 = vld [vmem:[#allocation2 + $0x90] sm:$0xff]
        %v4425 = vld [vmem:[#allocation2 + $0x98] sm:$0xff]
        %v4426 = vld [vmem:[#allocation2 + $0xa0] sm:$0xff]
        %v4427 = vld [vmem:[#allocation2 + $0xa8] sm:$0xff]
        %v4428 = vld [vmem:[#allocation2 + $0xb0] sm:$0xff]
        %v4429 = vld [vmem:[#allocation2 + $0xb8] sm:$0xff]
        %v4430 = vld [vmem:[#allocation2 + $0xc0] sm:$0xff]
        %v4431 = vld [vmem:[#allocation2 + $0xc8] sm:$0xff]
        %v4432 = vld [vmem:[#allocation2 + $0xd0] sm:$0xff]
        %v4433 = vld [vmem:[#allocation2 + $0xd8] sm:$0xff]
        %v4434 = vld [vmem:[#allocation2 + $0xe0] sm:$0xff]
        %v4435 = vld [vmem:[#allocation2 + $0xe8] sm:$0xff]
        %v4436 = vld [vmem:[#allocation2 + $0xf0] sm:$0xff]
        %v4437 = vld [vmem:[#allocation2 + $0xf8] sm:$0xff]
        %v4438 = vld [vmem:[#allocation3] sm:$0xff]
        %v4439 = vld [vmem:[#allocation3 + $0x8] sm:$0xff]
        %v4440 = vld [vmem:[#allocation3 + $0x10] sm:$0xff]
        %v4441 = vld [vmem:[#allocation3 + $0x18] sm:$0xff]
        %v4442 = vld [vmem:[#allocation3 + $0x20] sm:$0xff]
        %v4443 = vld [vmem:[#allocation3 + $0x28] sm:$0xff]
        %v4444 = vld [vmem:[#allocation3 + $0x30] sm:$0xff]
        %v4445 = vld [vmem:[#allocation3 + $0x38] sm:$0xff]
        %v4446 = vld [vmem:[#allocation3 + $0x40] sm:$0xff]
        %v4447 = vld [vmem:[#allocation3 + $0x48] sm:$0xff]
        %v4448 = vld [vmem:[#allocation3 + $0x50] sm:$0xff]
        %v4449 = vld [vmem:[#allocation3 + $0x58] sm:$0xff]
        %v4450 = vld [vmem:[#allocation3 + $0x60] sm:$0xff]
        %v4451 = vld [vmem:[#allocation3 + $0x68] sm:$0xff]
        %v4452 = vld [vmem:[#allocation3 + $0x70] sm:$0xff]
        %v4453 = vld [vmem:[#allocation3 + $0x78] sm:$0xff]
        %v4454 = vld [vmem:[#allocation3 + $0x80] sm:$0xff]
        %v4455 = vld [vmem:[#allocation3 + $0x88] sm:$0xff]
        %v4456 = vld [vmem:[#allocation3 + $0x90] sm:$0xff]
        %v4457 = vld [vmem:[#allocation3 + $0x98] sm:$0xff]
        %v4458 = vld [vmem:[#allocation3 + $0xa0] sm:$0xff]
        %v4459 = vld [vmem:[#allocation3 + $0xa8] sm:$0xff]
        %v4460 = vld [vmem:[#allocation3 + $0xb0] sm:$0xff]
        %v4461 = vld [vmem:[#allocation3 + $0xb8] sm:$0xff]
        %v4462 = vld [vmem:[#allocation3 + $0xc0] sm:$0xff]
        %v4463 = vld [vmem:[#allocation3 + $0xc8] sm:$0xff]
        %v4464 = vld [vmem:[#allocation3 + $0xd0] sm:$0xff]
        %v4465 = vld [vmem:[#allocation3 + $0xd8] sm:$0xff]
        %v4466 = vld [vmem:[#allocation3 + $0xe0] sm:$0xff]
        %v4467 = vld [vmem:[#allocation3 + $0xe8] sm:$0xff]
        %v4468 = vld [vmem:[#allocation3 + $0xf0] sm:$0xff]
        %v4469 = vld [vmem:[#allocation3 + $0xf8] sm:$0xff]
        %v4470 = vld [vmem:[#allocation4 + $0x8] sm:$0xff]
        %v4471 = vld [vmem:[#allocation4 + $0x18] sm:$0xff]
        %v4472 = vld [vmem:[#allocation4 + $0x28] sm:$0xff]
        %v4473 = vld [vmem:[#allocation4 + $0x38] sm:$0xff]
        %v4474 = vld [vmem:[#allocation4 + $0x48] sm:$0xff]
        %v4475 = vld [vmem:[#allocation4 + $0x58] sm:$0xff]
        %v4476 = vld [vmem:[#allocation4 + $0x68] sm:$0xff]
        %v4477 = vld [vmem:[#allocation4 + $0x78] sm:$0xff]
        %v4478 = vld [vmem:[#allocation4 + $0x88] sm:$0xff]
        %v4479 = vld [vmem:[#allocation4 + $0x98] sm:$0xff]
        %v4480 = vld [vmem:[#allocation4 + $0xa8] sm:$0xff]
        %v4481 = vld [vmem:[#allocation4 + $0xb8] sm:$0xff]
        %v4482 = vld [vmem:[#allocation4 + $0xc8] sm:$0xff]
        %v4483 = vld [vmem:[#allocation4 + $0xd8] sm:$0xff]
        %v4484 = vld [vmem:[#allocation4 + $0xe8] sm:$0xff]
        %v4485 = vld [vmem:[#allocation4 + $0xf8] sm:$0xff]
        %v4486 = vld [vmem:[#allocation4 + $0x108] sm:$0xff]
        %v4487 = vld [vmem:[#allocation4 + $0x118] sm:$0xff]
        %v4488 = vld [vmem:[#allocation4 + $0x128] sm:$0xff]
        %v4489 = vld [vmem:[#allocation4 + $0x138] sm:$0xff]
        %v4490 = vld [vmem:[#allocation4 + $0x148] sm:$0xff]
        %v4491 = vld [vmem:[#allocation4 + $0x158] sm:$0xff]
        %v4492 = vld [vmem:[#allocation4 + $0x168] sm:$0xff]
        %v4493 = vld [vmem:[#allocation4 + $0x178] sm:$0xff]
        %v4494 = vld [vmem:[#allocation4 + $0x188] sm:$0xff]
        %v4495 = vld [vmem:[#allocation4 + $0x198] sm:$0xff]
        %v4496 = vld [vmem:[#allocation4 + $0x1a8] sm:$0xff]
        %v4497 = vld [vmem:[#allocation4 + $0x1b8] sm:$0xff]
        %v4498 = vld [vmem:[#allocation4 + $0x1c8] sm:$0xff]
        %v4499 = vld [vmem:[#allocation4 + $0x1d8] sm:$0xff]
        %v4500 = vld [vmem:[#allocation4 + $0x1e8] sm:$0xff]
        %v4501 = vld [vmem:[#allocation4 + $0x1f8] sm:$0xff]
        %v4534 = vunpack.c.l.b16 %v4374
        %v4535 = vunpack.c.l.b16 %v4375
        %v4536 = vunpack.c.l.b16 %v4376
        %v4537 = vunpack.c.l.b16 %v4377
        %v4538 = vunpack.c.l.b16 %v4378
        %v4539 = vunpack.c.l.b16 %v4379
        %v4540 = vunpack.c.l.b16 %v4380
        %v4541 = vunpack.c.l.b16 %v4381
        %v4542 = vunpack.c.l.b16 %v4382
        %v4543 = vunpack.c.l.b16 %v4383
        %v4544 = vunpack.c.l.b16 %v4384
        %v4545 = vunpack.c.l.b16 %v4385
        %v4546 = vunpack.c.l.b16 %v4386
        %v4547 = vunpack.c.l.b16 %v4387
        %v4548 = vunpack.c.l.b16 %v4388
        %v4549 = vunpack.c.l.b16 %v4389
        %v4550 = vunpack.c.l.b16 %v4390
        %v4551 = vunpack.c.l.b16 %v4391
        %v4552 = vunpack.c.l.b16 %v4392
        %v4553 = vunpack.c.l.b16 %v4393
        %v4554 = vunpack.c.l.b16 %v4394
        %v4555 = vunpack.c.l.b16 %v4395
        %v4556 = vunpack.c.l.b16 %v4396
        %v4557 = vunpack.c.l.b16 %v4397
        %v4558 = vunpack.c.l.b16 %v4398
        %v4559 = vunpack.c.l.b16 %v4399
        %v4560 = vunpack.c.l.b16 %v4400
        %v4561 = vunpack.c.l.b16 %v4401
        %v4562 = vunpack.c.l.b16 %v4402
        %v4563 = vunpack.c.l.b16 %v4403
        %v4564 = vunpack.c.l.b16 %v4404
        %v4565 = vunpack.c.l.b16 %v4405
        %v4566 = vpack.c.b16 %v4535, %v4534
        %v4567 = vpack.c.b16 %v4537, %v4536
        %v4568 = vpack.c.b16 %v4539, %v4538
        %v4569 = vpack.c.b16 %v4541, %v4540
        %v4570 = vpack.c.b16 %v4543, %v4542
        %v4571 = vpack.c.b16 %v4545, %v4544
        %v4572 = vpack.c.b16 %v4547, %v4546
        %v4573 = vpack.c.b16 %v4549, %v4548
        %v4574 = vpack.c.b16 %v4551, %v4550
        %v4575 = vpack.c.b16 %v4553, %v4552
        %v4576 = vpack.c.b16 %v4555, %v4554
        %v4577 = vpack.c.b16 %v4557, %v4556
        %v4578 = vpack.c.b16 %v4559, %v4558
        %v4579 = vpack.c.b16 %v4561, %v4560
        %v4580 = vpack.c.b16 %v4563, %v4562
        %v4581 = vpack.c.b16 %v4565, %v4564
        %v4614 = vunpack.c.l.b16 %v4310
        %v4615 = vunpack.c.l.b16 %v4311
        %v4616 = vunpack.c.l.b16 %v4312
        %v4617 = vunpack.c.l.b16 %v4313
        %v4618 = vunpack.c.l.b16 %v4314
        %v4619 = vunpack.c.l.b16 %v4315
        %v4620 = vunpack.c.l.b16 %v4316
        %v4621 = vunpack.c.l.b16 %v4317
        %v4622 = vunpack.c.l.b16 %v4318
        %v4623 = vunpack.c.l.b16 %v4319
        %v4624 = vunpack.c.l.b16 %v4320
        %v4625 = vunpack.c.l.b16 %v4321
        %v4626 = vunpack.c.l.b16 %v4322
        %v4627 = vunpack.c.l.b16 %v4323
        %v4628 = vunpack.c.l.b16 %v4324
        %v4629 = vunpack.c.l.b16 %v4325
        %v4630 = vunpack.c.l.b16 %v4326
        %v4631 = vunpack.c.l.b16 %v4327
        %v4632 = vunpack.c.l.b16 %v4328
        %v4633 = vunpack.c.l.b16 %v4329
        %v4634 = vunpack.c.l.b16 %v4330
        %v4635 = vunpack.c.l.b16 %v4331
        %v4636 = vunpack.c.l.b16 %v4332
        %v4637 = vunpack.c.l.b16 %v4333
        %v4638 = vunpack.c.l.b16 %v4334
        %v4639 = vunpack.c.l.b16 %v4335
        %v4640 = vunpack.c.l.b16 %v4336
        %v4641 = vunpack.c.l.b16 %v4337
        %v4642 = vunpack.c.l.b16 %v4338
        %v4643 = vunpack.c.l.b16 %v4339
        %v4644 = vunpack.c.l.b16 %v4340
        %v4645 = vunpack.c.l.b16 %v4341
        %v4646 = vpack.c.b16 %v4615, %v4614
        %v4647 = vpack.c.b16 %v4617, %v4616
        %v4648 = vpack.c.b16 %v4619, %v4618
        %v4649 = vpack.c.b16 %v4621, %v4620
        %v4650 = vpack.c.b16 %v4623, %v4622
        %v4651 = vpack.c.b16 %v4625, %v4624
        %v4652 = vpack.c.b16 %v4627, %v4626
        %v4653 = vpack.c.b16 %v4629, %v4628
        %v4654 = vpack.c.b16 %v4631, %v4630
        %v4655 = vpack.c.b16 %v4633, %v4632
        %v4656 = vpack.c.b16 %v4635, %v4634
        %v4657 = vpack.c.b16 %v4637, %v4636
        %v4658 = vpack.c.b16 %v4639, %v4638
        %v4659 = vpack.c.b16 %v4641, %v4640
        %v4660 = vpack.c.b16 %v4643, %v4642
        %v4661 = vpack.c.b16 %v4645, %v4644
        %4662 = vrot.lane.b32.xlu0 %v4646, 64
        %v4663 = vpop.permute.xlu0 %4662
        %4664 = vrot.lane.b32.xlu0 %v4647, 64
        %v4665 = vpop.permute.xlu0 %4664
        %4666 = vrot.lane.b32.xlu0 %v4648, 64
        %v4667 = vpop.permute.xlu0 %4666
        %4668 = vrot.lane.b32.xlu0 %v4649, 64
        %v4669 = vpop.permute.xlu0 %4668
        %4670 = vrot.lane.b32.xlu0 %v4650, 64
        %v4671 = vpop.permute.xlu0 %4670
        %4672 = vrot.lane.b32.xlu0 %v4651, 64
        %v4673 = vpop.permute.xlu0 %4672
        %4674 = vrot.lane.b32.xlu0 %v4652, 64
        %v4675 = vpop.permute.xlu0 %4674
        %4676 = vrot.lane.b32.xlu0 %v4653, 64
        %v4677 = vpop.permute.xlu0 %4676
        %4678 = vrot.lane.b32.xlu0 %v4654, 64
        %v4679 = vpop.permute.xlu0 %4678
        %4680 = vrot.lane.b32.xlu0 %v4655, 64
        %v4681 = vpop.permute.xlu0 %4680
        %4682 = vrot.lane.b32.xlu0 %v4656, 64
        %v4683 = vpop.permute.xlu0 %4682
        %4684 = vrot.lane.b32.xlu0 %v4657, 64
        %v4685 = vpop.permute.xlu0 %4684
        %4686 = vrot.lane.b32.xlu0 %v4658, 64
        %v4687 = vpop.permute.xlu0 %4686
        %4688 = vrot.lane.b32.xlu0 %v4659, 64
        %v4689 = vpop.permute.xlu0 %4688
        %4690 = vrot.lane.b32.xlu0 %v4660, 64
        %v4691 = vpop.permute.xlu0 %4690
        %4692 = vrot.lane.b32.xlu0 %v4661, 64
        %v4693 = vpop.permute.xlu0 %4692
        %v4695 = vsel %vm1019, %v4566, 0
        %v4698 = vsel %vm1019, %v4567, 0
        %v4701 = vsel %vm1019, %v4568, 0
        %v4704 = vsel %vm1019, %v4569, 0
        %v4707 = vsel %vm1019, %v4570, 0
        %v4710 = vsel %vm1019, %v4571, 0
        %v4713 = vsel %vm1019, %v4572, 0
        %v4716 = vsel %vm1019, %v4573, 0
        %v4719 = vsel %vm1019, %v4574, 0
        %v4722 = vsel %vm1019, %v4575, 0
        %v4725 = vsel %vm1019, %v4576, 0
        %v4728 = vsel %vm1019, %v4577, 0
        %v4731 = vsel %vm1019, %v4578, 0
        %v4734 = vsel %vm1019, %v4579, 0
        %v4737 = vsel %vm1019, %v4580, 0
        %v4740 = vsel %vm1019, %v4581, 0
        %v4743 = vsel %vm1019, %v4663, 0
        %v4746 = vsel %vm1019, %v4665, 0
        %v4749 = vsel %vm1019, %v4667, 0
        %v4752 = vsel %vm1019, %v4669, 0
        %v4755 = vsel %vm1019, %v4671, 0
        %v4758 = vsel %vm1019, %v4673, 0
        %v4761 = vsel %vm1019, %v4675, 0
        %v4764 = vsel %vm1019, %v4677, 0
        %v4767 = vsel %vm1019, %v4679, 0
        %v4770 = vsel %vm1019, %v4681, 0
        %v4773 = vsel %vm1019, %v4683, 0
        %v4776 = vsel %vm1019, %v4685, 0
        %v4779 = vsel %vm1019, %v4687, 0
        %v4782 = vsel %vm1019, %v4689, 0
        %v4785 = vsel %vm1019, %v4691, 0
        %v4788 = vsel %vm1019, %v4693, 0
        %4790 = vmatpush.bf16.xpose.msra.mxu0 %v4764
        %4791 = vmatpush.bf16.xpose.msra.mxu0 %v4761
        %4792 = vmatpush.bf16.xpose.msra.mxu0 %v4758
        %4793 = vmatpush.bf16.xpose.msra.mxu0 %v4755
        %4794 = vmatpush.bf16.xpose.msra.mxu0 %v4752
        %4795 = vmatpush.bf16.xpose.msra.mxu0 %v4749
        %4796 = vmatpush.bf16.xpose.msra.mxu0 %v4746
        %4797 = vmatpush.bf16.xpose.msra.mxu0 %v4743
        %4798 = vmatmul.bf16.gmra.mxu0 %v4695
        %v4799 = vpop.f32.mrf.mxu0
        %v4800 = vadd.f32 0.0, %v4799
        %v4801 = vpop.f32.mrf.mxu0
        %v4802 = vadd.f32 0.0, %v4801
        %4803 = vmatmul.bf16.gmra.mxu0 %v4698
        %v4804 = vpop.f32.mrf.mxu0
        %v4805 = vadd.f32 0.0, %v4804
        %v4806 = vpop.f32.mrf.mxu0
        %v4807 = vadd.f32 0.0, %v4806
        %4808 = vmatmul.bf16.gmra.mxu0 %v4701
        %v4809 = vpop.f32.mrf.mxu0
        %v4810 = vadd.f32 0.0, %v4809
        %v4811 = vpop.f32.mrf.mxu0
        %v4812 = vadd.f32 0.0, %v4811
        %4813 = vmatmul.bf16.gmra.mxu0 %v4704
        %v4814 = vpop.f32.mrf.mxu0
        %v4815 = vadd.f32 0.0, %v4814
        %v4816 = vpop.f32.mrf.mxu0
        %v4817 = vadd.f32 0.0, %v4816
        %4818 = vmatmul.bf16.gmra.mxu0 %v4707
        %v4819 = vpop.f32.mrf.mxu0
        %v4820 = vadd.f32 0.0, %v4819
        %v4821 = vpop.f32.mrf.mxu0
        %v4822 = vadd.f32 0.0, %v4821
        %4823 = vmatmul.bf16.gmra.mxu0 %v4710
        %v4824 = vpop.f32.mrf.mxu0
        %v4825 = vadd.f32 0.0, %v4824
        %v4826 = vpop.f32.mrf.mxu0
        %v4827 = vadd.f32 0.0, %v4826
        %4828 = vmatmul.bf16.gmra.mxu0 %v4713
        %v4829 = vpop.f32.mrf.mxu0
        %v4830 = vadd.f32 0.0, %v4829
        %v4831 = vpop.f32.mrf.mxu0
        %v4832 = vadd.f32 0.0, %v4831
        %4833 = vmatmul.bf16.gmra.mxu0 %v4716
        %v4834 = vpop.f32.mrf.mxu0
        %v4835 = vadd.f32 0.0, %v4834
        %v4836 = vpop.f32.mrf.mxu0
        %v4837 = vadd.f32 0.0, %v4836
        %4838 = vmatmul.bf16.gmra.mxu0 %v4719
        %v4839 = vpop.f32.mrf.mxu0
        %v4840 = vadd.f32 0.0, %v4839
        %v4841 = vpop.f32.mrf.mxu0
        %v4842 = vadd.f32 0.0, %v4841
        %4843 = vmatmul.bf16.gmra.mxu0 %v4722
        %v4844 = vpop.f32.mrf.mxu0
        %v4845 = vadd.f32 0.0, %v4844
        %v4846 = vpop.f32.mrf.mxu0
        %v4847 = vadd.f32 0.0, %v4846
        %4848 = vmatmul.bf16.gmra.mxu0 %v4725
        %v4849 = vpop.f32.mrf.mxu0
        %v4850 = vadd.f32 0.0, %v4849
        %v4851 = vpop.f32.mrf.mxu0
        %v4852 = vadd.f32 0.0, %v4851
        %4853 = vmatmul.bf16.gmra.mxu0 %v4728
        %v4854 = vpop.f32.mrf.mxu0
        %v4855 = vadd.f32 0.0, %v4854
        %v4856 = vpop.f32.mrf.mxu0
        %v4857 = vadd.f32 0.0, %v4856
        %4858 = vmatmul.bf16.gmra.mxu0 %v4731
        %v4859 = vpop.f32.mrf.mxu0
        %v4860 = vadd.f32 0.0, %v4859
        %v4861 = vpop.f32.mrf.mxu0
        %v4862 = vadd.f32 0.0, %v4861
        %4863 = vmatmul.bf16.gmra.mxu0 %v4734
        %v4864 = vpop.f32.mrf.mxu0
        %v4865 = vadd.f32 0.0, %v4864
        %v4866 = vpop.f32.mrf.mxu0
        %v4867 = vadd.f32 0.0, %v4866
        %4868 = vmatmul.bf16.gmra.mxu0 %v4737
        %v4869 = vpop.f32.mrf.mxu0
        %v4870 = vadd.f32 0.0, %v4869
        %v4871 = vpop.f32.mrf.mxu0
        %v4872 = vadd.f32 0.0, %v4871
        %4873 = vmatmul.bf16.gmra.mxu0 %v4740
        %v4874 = vpop.f32.mrf.mxu0
        %v4875 = vadd.f32 0.0, %v4874
        %v4876 = vpop.f32.mrf.mxu0
        %v4877 = vadd.f32 0.0, %v4876
        %4878 = vdwg.mxu0
        %4879 = vmatpush.bf16.xpose.msra.mxu0 %v4788
        %4880 = vmatpush.bf16.xpose.msra.mxu0 %v4785
        %4881 = vmatpush.bf16.xpose.msra.mxu0 %v4782
        %4882 = vmatpush.bf16.xpose.msra.mxu0 %v4779
        %4883 = vmatpush.bf16.xpose.msra.mxu0 %v4776
        %4884 = vmatpush.bf16.xpose.msra.mxu0 %v4773
        %4885 = vmatpush.bf16.xpose.msra.mxu0 %v4770
        %4886 = vmatpush.bf16.xpose.msra.mxu0 %v4767
        %4887 = vmatmul.bf16.gmra.mxu0 %v4695
        %v4888 = vpop.f32.mrf.mxu0
        %v4889 = vadd.f32 0.0, %v4888
        %v4890 = vpop.f32.mrf.mxu0
        %v4891 = vadd.f32 0.0, %v4890
        %4892 = vmatmul.bf16.gmra.mxu0 %v4698
        %v4893 = vpop.f32.mrf.mxu0
        %v4894 = vadd.f32 0.0, %v4893
        %v4895 = vpop.f32.mrf.mxu0
        %v4896 = vadd.f32 0.0, %v4895
        %4897 = vmatmul.bf16.gmra.mxu0 %v4701
        %v4898 = vpop.f32.mrf.mxu0
        %v4899 = vadd.f32 0.0, %v4898
        %v4900 = vpop.f32.mrf.mxu0
        %v4901 = vadd.f32 0.0, %v4900
        %4902 = vmatmul.bf16.gmra.mxu0 %v4704
        %v4903 = vpop.f32.mrf.mxu0
        %v4904 = vadd.f32 0.0, %v4903
        %v4905 = vpop.f32.mrf.mxu0
        %v4906 = vadd.f32 0.0, %v4905
        %4907 = vmatmul.bf16.gmra.mxu0 %v4707
        %v4908 = vpop.f32.mrf.mxu0
        %v4909 = vadd.f32 0.0, %v4908
        %v4910 = vpop.f32.mrf.mxu0
        %v4911 = vadd.f32 0.0, %v4910
        %4912 = vmatmul.bf16.gmra.mxu0 %v4710
        %v4913 = vpop.f32.mrf.mxu0
        %v4914 = vadd.f32 0.0, %v4913
        %v4915 = vpop.f32.mrf.mxu0
        %v4916 = vadd.f32 0.0, %v4915
        %4917 = vmatmul.bf16.gmra.mxu0 %v4713
        %v4918 = vpop.f32.mrf.mxu0
        %v4919 = vadd.f32 0.0, %v4918
        %v4920 = vpop.f32.mrf.mxu0
        %v4921 = vadd.f32 0.0, %v4920
        %4922 = vmatmul.bf16.gmra.mxu0 %v4716
        %v4923 = vpop.f32.mrf.mxu0
        %v4924 = vadd.f32 0.0, %v4923
        %v4925 = vpop.f32.mrf.mxu0
        %v4926 = vadd.f32 0.0, %v4925
        %4927 = vmatmul.bf16.gmra.mxu0 %v4719
        %v4928 = vpop.f32.mrf.mxu0
        %v4929 = vadd.f32 0.0, %v4928
        %v4930 = vpop.f32.mrf.mxu0
        %v4931 = vadd.f32 0.0, %v4930
        %4932 = vmatmul.bf16.gmra.mxu0 %v4722
        %v4933 = vpop.f32.mrf.mxu0
        %v4934 = vadd.f32 0.0, %v4933
        %v4935 = vpop.f32.mrf.mxu0
        %v4936 = vadd.f32 0.0, %v4935
        %4937 = vmatmul.bf16.gmra.mxu0 %v4725
        %v4938 = vpop.f32.mrf.mxu0
        %v4939 = vadd.f32 0.0, %v4938
        %v4940 = vpop.f32.mrf.mxu0
        %v4941 = vadd.f32 0.0, %v4940
        %4942 = vmatmul.bf16.gmra.mxu0 %v4728
        %v4943 = vpop.f32.mrf.mxu0
        %v4944 = vadd.f32 0.0, %v4943
        %v4945 = vpop.f32.mrf.mxu0
        %v4946 = vadd.f32 0.0, %v4945
        %4947 = vmatmul.bf16.gmra.mxu0 %v4731
        %v4948 = vpop.f32.mrf.mxu0
        %v4949 = vadd.f32 0.0, %v4948
        %v4950 = vpop.f32.mrf.mxu0
        %v4951 = vadd.f32 0.0, %v4950
        %4952 = vmatmul.bf16.gmra.mxu0 %v4734
        %v4953 = vpop.f32.mrf.mxu0
        %v4954 = vadd.f32 0.0, %v4953
        %v4955 = vpop.f32.mrf.mxu0
        %v4956 = vadd.f32 0.0, %v4955
        %4957 = vmatmul.bf16.gmra.mxu0 %v4737
        %v4958 = vpop.f32.mrf.mxu0
        %v4959 = vadd.f32 0.0, %v4958
        %v4960 = vpop.f32.mrf.mxu0
        %v4961 = vadd.f32 0.0, %v4960
        %4962 = vmatmul.bf16.gmra.mxu0 %v4740
        %v4963 = vpop.f32.mrf.mxu0
        %v4964 = vadd.f32 0.0, %v4963
        %v4965 = vpop.f32.mrf.mxu0
        %v4966 = vadd.f32 0.0, %v4965
        %4967 = vdwg.mxu0
        %v4968 = vmax.f32 %v4800, %v4889
        %4969 = vmax.xlane.f32.xlu0 %v4968
        %v4970 = vpop.xlane.xlu0 %4969
        %v4971 = vmax.f32 %v4802, %v4891
        %4972 = vmax.xlane.f32.xlu0 %v4971
        %v4973 = vpop.xlane.xlu0 %4972
        %v4974 = vmax.f32 %v4805, %v4894
        %4975 = vmax.xlane.f32.xlu0 %v4974
        %v4976 = vpop.xlane.xlu0 %4975
        %v4977 = vmax.f32 %v4807, %v4896
        %4978 = vmax.xlane.f32.xlu0 %v4977
        %v4979 = vpop.xlane.xlu0 %4978
        %v4980 = vmax.f32 %v4810, %v4899
        %4981 = vmax.xlane.f32.xlu0 %v4980
        %v4982 = vpop.xlane.xlu0 %4981
        %v4983 = vmax.f32 %v4812, %v4901
        %4984 = vmax.xlane.f32.xlu0 %v4983
        %v4985 = vpop.xlane.xlu0 %4984
        %v4986 = vmax.f32 %v4815, %v4904
        %4987 = vmax.xlane.f32.xlu0 %v4986
        %v4988 = vpop.xlane.xlu0 %4987
        %v4989 = vmax.f32 %v4817, %v4906
        %4990 = vmax.xlane.f32.xlu0 %v4989
        %v4991 = vpop.xlane.xlu0 %4990
        %v4992 = vmax.f32 %v4820, %v4909
        %4993 = vmax.xlane.f32.xlu0 %v4992
        %v4994 = vpop.xlane.xlu0 %4993
        %v4995 = vmax.f32 %v4822, %v4911
        %4996 = vmax.xlane.f32.xlu0 %v4995
        %v4997 = vpop.xlane.xlu0 %4996
        %v4998 = vmax.f32 %v4825, %v4914
        %4999 = vmax.xlane.f32.xlu0 %v4998
        %v5000 = vpop.xlane.xlu0 %4999
        %v5001 = vmax.f32 %v4827, %v4916
        %5002 = vmax.xlane.f32.xlu0 %v5001
        %v5003 = vpop.xlane.xlu0 %5002
        %v5004 = vmax.f32 %v4830, %v4919
        %5005 = vmax.xlane.f32.xlu0 %v5004
        %v5006 = vpop.xlane.xlu0 %5005
        %v5007 = vmax.f32 %v4832, %v4921
        %5008 = vmax.xlane.f32.xlu0 %v5007
        %v5009 = vpop.xlane.xlu0 %5008
        %v5010 = vmax.f32 %v4835, %v4924
        %5011 = vmax.xlane.f32.xlu0 %v5010
        %v5012 = vpop.xlane.xlu0 %5011
        %v5013 = vmax.f32 %v4837, %v4926
        %5014 = vmax.xlane.f32.xlu0 %v5013
        %v5015 = vpop.xlane.xlu0 %5014
        %v5016 = vmax.f32 %v4840, %v4929
        %5017 = vmax.xlane.f32.xlu0 %v5016
        %v5018 = vpop.xlane.xlu0 %5017
        %v5019 = vmax.f32 %v4842, %v4931
        %5020 = vmax.xlane.f32.xlu0 %v5019
        %v5021 = vpop.xlane.xlu0 %5020
        %v5022 = vmax.f32 %v4845, %v4934
        %5023 = vmax.xlane.f32.xlu0 %v5022
        %v5024 = vpop.xlane.xlu0 %5023
        %v5025 = vmax.f32 %v4847, %v4936
        %5026 = vmax.xlane.f32.xlu0 %v5025
        %v5027 = vpop.xlane.xlu0 %5026
        %v5028 = vmax.f32 %v4850, %v4939
        %5029 = vmax.xlane.f32.xlu0 %v5028
        %v5030 = vpop.xlane.xlu0 %5029
        %v5031 = vmax.f32 %v4852, %v4941
        %5032 = vmax.xlane.f32.xlu0 %v5031
        %v5033 = vpop.xlane.xlu0 %5032
        %v5034 = vmax.f32 %v4855, %v4944
        %5035 = vmax.xlane.f32.xlu0 %v5034
        %v5036 = vpop.xlane.xlu0 %5035
        %v5037 = vmax.f32 %v4857, %v4946
        %5038 = vmax.xlane.f32.xlu0 %v5037
        %v5039 = vpop.xlane.xlu0 %5038
        %v5040 = vmax.f32 %v4860, %v4949
        %5041 = vmax.xlane.f32.xlu0 %v5040
        %v5042 = vpop.xlane.xlu0 %5041
        %v5043 = vmax.f32 %v4862, %v4951
        %5044 = vmax.xlane.f32.xlu0 %v5043
        %v5045 = vpop.xlane.xlu0 %5044
        %v5046 = vmax.f32 %v4865, %v4954
        %5047 = vmax.xlane.f32.xlu0 %v5046
        %v5048 = vpop.xlane.xlu0 %5047
        %v5049 = vmax.f32 %v4867, %v4956
        %5050 = vmax.xlane.f32.xlu0 %v5049
        %v5051 = vpop.xlane.xlu0 %5050
        %v5052 = vmax.f32 %v4870, %v4959
        %5053 = vmax.xlane.f32.xlu0 %v5052
        %v5054 = vpop.xlane.xlu0 %5053
        %v5055 = vmax.f32 %v4872, %v4961
        %5056 = vmax.xlane.f32.xlu0 %v5055
        %v5057 = vpop.xlane.xlu0 %5056
        %v5058 = vmax.f32 %v4875, %v4964
        %5059 = vmax.xlane.f32.xlu0 %v5058
        %v5060 = vpop.xlane.xlu0 %5059
        %v5061 = vmax.f32 %v4877, %v4966
        %5062 = vmax.xlane.f32.xlu0 %v5061
        %v5063 = vpop.xlane.xlu0 %5062
        %v5064 = vmax.f32 %v4406, %v4970
        %v5065 = vmax.f32 %v4407, %v4973
        %v5066 = vmax.f32 %v4408, %v4976
        %v5067 = vmax.f32 %v4409, %v4979
        %v5068 = vmax.f32 %v4410, %v4982
        %v5069 = vmax.f32 %v4411, %v4985
        %v5070 = vmax.f32 %v4412, %v4988
        %v5071 = vmax.f32 %v4413, %v4991
        %v5072 = vmax.f32 %v4414, %v4994
        %v5073 = vmax.f32 %v4415, %v4997
        %v5074 = vmax.f32 %v4416, %v5000
        %v5075 = vmax.f32 %v4417, %v5003
        %v5076 = vmax.f32 %v4418, %v5006
        %v5077 = vmax.f32 %v4419, %v5009
        %v5078 = vmax.f32 %v4420, %v5012
        %v5079 = vmax.f32 %v4421, %v5015
        %v5080 = vmax.f32 %v4422, %v5018
        %v5081 = vmax.f32 %v4423, %v5021
        %v5082 = vmax.f32 %v4424, %v5024
        %v5083 = vmax.f32 %v4425, %v5027
        %v5084 = vmax.f32 %v4426, %v5030
        %v5085 = vmax.f32 %v4427, %v5033
        %v5086 = vmax.f32 %v4428, %v5036
        %v5087 = vmax.f32 %v4429, %v5039
        %v5088 = vmax.f32 %v4430, %v5042
        %v5089 = vmax.f32 %v4431, %v5045
        %v5090 = vmax.f32 %v4432, %v5048
        %v5091 = vmax.f32 %v4433, %v5051
        %v5092 = vmax.f32 %v4434, %v5054
        %v5093 = vmax.f32 %v4435, %v5057
        %v5094 = vmax.f32 %v4436, %v5060
        %v5095 = vmax.f32 %v4437, %v5063
        %v5096 = vsub.f32 %v4406, %v5064
        %v5097 = vsub.f32 %v4407, %v5065
        %v5098 = vsub.f32 %v4408, %v5066
        %v5099 = vsub.f32 %v4409, %v5067
        %v5100 = vsub.f32 %v4410, %v5068
        %v5101 = vsub.f32 %v4411, %v5069
        %v5102 = vsub.f32 %v4412, %v5070
        %v5103 = vsub.f32 %v4413, %v5071
        %v5104 = vsub.f32 %v4414, %v5072
        %v5105 = vsub.f32 %v4415, %v5073
        %v5106 = vsub.f32 %v4416, %v5074
        %v5107 = vsub.f32 %v4417, %v5075
        %v5108 = vsub.f32 %v4418, %v5076
        %v5109 = vsub.f32 %v4419, %v5077
        %v5110 = vsub.f32 %v4420, %v5078
        %v5111 = vsub.f32 %v4421, %v5079
        %v5112 = vsub.f32 %v4422, %v5080
        %v5113 = vsub.f32 %v4423, %v5081
        %v5114 = vsub.f32 %v4424, %v5082
        %v5115 = vsub.f32 %v4425, %v5083
        %v5116 = vsub.f32 %v4426, %v5084
        %v5117 = vsub.f32 %v4427, %v5085
        %v5118 = vsub.f32 %v4428, %v5086
        %v5119 = vsub.f32 %v4429, %v5087
        %v5120 = vsub.f32 %v4430, %v5088
        %v5121 = vsub.f32 %v4431, %v5089
        %v5122 = vsub.f32 %v4432, %v5090
        %v5123 = vsub.f32 %v4433, %v5091
        %v5124 = vsub.f32 %v4434, %v5092
        %v5125 = vsub.f32 %v4435, %v5093
        %v5126 = vsub.f32 %v4436, %v5094
        %v5127 = vsub.f32 %v4437, %v5095
        %v5128 = vmul.f32 %v5096, 1.442695
        %v5129 = vpow.pop %v5128
        %v5130 = vmul.f32 %v5097, 1.442695
        %v5131 = vpow.pop %v5130
        %v5132 = vmul.f32 %v5098, 1.442695
        %v5133 = vpow.pop %v5132
        %v5134 = vmul.f32 %v5099, 1.442695
        %v5135 = vpow.pop %v5134
        %v5136 = vmul.f32 %v5100, 1.442695
        %v5137 = vpow.pop %v5136
        %v5138 = vmul.f32 %v5101, 1.442695
        %v5139 = vpow.pop %v5138
        %v5140 = vmul.f32 %v5102, 1.442695
        %v5141 = vpow.pop %v5140
        %v5142 = vmul.f32 %v5103, 1.442695
        %v5143 = vpow.pop %v5142
        %v5144 = vmul.f32 %v5104, 1.442695
        %v5145 = vpow.pop %v5144
        %v5146 = vmul.f32 %v5105, 1.442695
        %v5147 = vpow.pop %v5146
        %v5148 = vmul.f32 %v5106, 1.442695
        %v5149 = vpow.pop %v5148
        %v5150 = vmul.f32 %v5107, 1.442695
        %v5151 = vpow.pop %v5150
        %v5152 = vmul.f32 %v5108, 1.442695
        %v5153 = vpow.pop %v5152
        %v5154 = vmul.f32 %v5109, 1.442695
        %v5155 = vpow.pop %v5154
        %v5156 = vmul.f32 %v5110, 1.442695
        %v5157 = vpow.pop %v5156
        %v5158 = vmul.f32 %v5111, 1.442695
        %v5159 = vpow.pop %v5158
        %v5160 = vmul.f32 %v5112, 1.442695
        %v5161 = vpow.pop %v5160
        %v5162 = vmul.f32 %v5113, 1.442695
        %v5163 = vpow.pop %v5162
        %v5164 = vmul.f32 %v5114, 1.442695
        %v5165 = vpow.pop %v5164
        %v5166 = vmul.f32 %v5115, 1.442695
        %v5167 = vpow.pop %v5166
        %v5168 = vmul.f32 %v5116, 1.442695
        %v5169 = vpow.pop %v5168
        %v5170 = vmul.f32 %v5117, 1.442695
        %v5171 = vpow.pop %v5170
        %v5172 = vmul.f32 %v5118, 1.442695
        %v5173 = vpow.pop %v5172
        %v5174 = vmul.f32 %v5119, 1.442695
        %v5175 = vpow.pop %v5174
        %v5176 = vmul.f32 %v5120, 1.442695
        %v5177 = vpow.pop %v5176
        %v5178 = vmul.f32 %v5121, 1.442695
        %v5179 = vpow.pop %v5178
        %v5180 = vmul.f32 %v5122, 1.442695
        %v5181 = vpow.pop %v5180
        %v5182 = vmul.f32 %v5123, 1.442695
        %v5183 = vpow.pop %v5182
        %v5184 = vmul.f32 %v5124, 1.442695
        %v5185 = vpow.pop %v5184
        %v5186 = vmul.f32 %v5125, 1.442695
        %v5187 = vpow.pop %v5186
        %v5188 = vmul.f32 %v5126, 1.442695
        %v5189 = vpow.pop %v5188
        %v5190 = vmul.f32 %v5127, 1.442695
        %v5191 = vpow.pop %v5190
        %5193 = vset.pattern.permute.xlu0 2
        %5194 = vperm.xlu0 %5193, %v5064
        %v5195 = vpop.permute.xlu0 %5194
        %5198 = vset.pattern.permute.xlu0 2
        %5199 = vperm.xlu0 %5198, %v5065
        %v5200 = vpop.permute.xlu0 %5199
        %5203 = vset.pattern.permute.xlu0 2
        %5204 = vperm.xlu0 %5203, %v5066
        %v5205 = vpop.permute.xlu0 %5204
        %5208 = vset.pattern.permute.xlu0 2
        %5209 = vperm.xlu0 %5208, %v5067
        %v5210 = vpop.permute.xlu0 %5209
        %5213 = vset.pattern.permute.xlu0 2
        %5214 = vperm.xlu0 %5213, %v5068
        %v5215 = vpop.permute.xlu0 %5214
        %5218 = vset.pattern.permute.xlu0 2
        %5219 = vperm.xlu0 %5218, %v5069
        %v5220 = vpop.permute.xlu0 %5219
        %5223 = vset.pattern.permute.xlu0 2
        %5224 = vperm.xlu0 %5223, %v5070
        %v5225 = vpop.permute.xlu0 %5224
        %5228 = vset.pattern.permute.xlu0 2
        %5229 = vperm.xlu0 %5228, %v5071
        %v5230 = vpop.permute.xlu0 %5229
        %5233 = vset.pattern.permute.xlu0 2
        %5234 = vperm.xlu0 %5233, %v5072
        %v5235 = vpop.permute.xlu0 %5234
        %5238 = vset.pattern.permute.xlu0 2
        %5239 = vperm.xlu0 %5238, %v5073
        %v5240 = vpop.permute.xlu0 %5239
        %5243 = vset.pattern.permute.xlu0 2
        %5244 = vperm.xlu0 %5243, %v5074
        %v5245 = vpop.permute.xlu0 %5244
        %5248 = vset.pattern.permute.xlu0 2
        %5249 = vperm.xlu0 %5248, %v5075
        %v5250 = vpop.permute.xlu0 %5249
        %5253 = vset.pattern.permute.xlu0 2
        %5254 = vperm.xlu0 %5253, %v5076
        %v5255 = vpop.permute.xlu0 %5254
        %5258 = vset.pattern.permute.xlu0 2
        %5259 = vperm.xlu0 %5258, %v5077
        %v5260 = vpop.permute.xlu0 %5259
        %5263 = vset.pattern.permute.xlu0 2
        %5264 = vperm.xlu0 %5263, %v5078
        %v5265 = vpop.permute.xlu0 %5264
        %5268 = vset.pattern.permute.xlu0 2
        %5269 = vperm.xlu0 %5268, %v5079
        %v5270 = vpop.permute.xlu0 %5269
        %5273 = vset.pattern.permute.xlu0 2
        %5274 = vperm.xlu0 %5273, %v5080
        %v5275 = vpop.permute.xlu0 %5274
        %5278 = vset.pattern.permute.xlu0 2
        %5279 = vperm.xlu0 %5278, %v5081
        %v5280 = vpop.permute.xlu0 %5279
        %5283 = vset.pattern.permute.xlu0 2
        %5284 = vperm.xlu0 %5283, %v5082
        %v5285 = vpop.permute.xlu0 %5284
        %5288 = vset.pattern.permute.xlu0 2
        %5289 = vperm.xlu0 %5288, %v5083
        %v5290 = vpop.permute.xlu0 %5289
        %5293 = vset.pattern.permute.xlu0 2
        %5294 = vperm.xlu0 %5293, %v5084
        %v5295 = vpop.permute.xlu0 %5294
        %5298 = vset.pattern.permute.xlu0 2
        %5299 = vperm.xlu0 %5298, %v5085
        %v5300 = vpop.permute.xlu0 %5299
        %5303 = vset.pattern.permute.xlu0 2
        %5304 = vperm.xlu0 %5303, %v5086
        %v5305 = vpop.permute.xlu0 %5304
        %5308 = vset.pattern.permute.xlu0 2
        %5309 = vperm.xlu0 %5308, %v5087
        %v5310 = vpop.permute.xlu0 %5309
        %5313 = vset.pattern.permute.xlu0 2
        %5314 = vperm.xlu0 %5313, %v5088
        %v5315 = vpop.permute.xlu0 %5314
        %5318 = vset.pattern.permute.xlu0 2
        %5319 = vperm.xlu0 %5318, %v5089
        %v5320 = vpop.permute.xlu0 %5319
        %5323 = vset.pattern.permute.xlu0 2
        %5324 = vperm.xlu0 %5323, %v5090
        %v5325 = vpop.permute.xlu0 %5324
        %5328 = vset.pattern.permute.xlu0 2
        %5329 = vperm.xlu0 %5328, %v5091
        %v5330 = vpop.permute.xlu0 %5329
        %5333 = vset.pattern.permute.xlu0 2
        %5334 = vperm.xlu0 %5333, %v5092
        %v5335 = vpop.permute.xlu0 %5334
        %5338 = vset.pattern.permute.xlu0 2
        %5339 = vperm.xlu0 %5338, %v5093
        %v5340 = vpop.permute.xlu0 %5339
        %5343 = vset.pattern.permute.xlu0 2
        %5344 = vperm.xlu0 %5343, %v5094
        %v5345 = vpop.permute.xlu0 %5344
        %5348 = vset.pattern.permute.xlu0 2
        %5349 = vperm.xlu0 %5348, %v5095
        %v5350 = vpop.permute.xlu0 %5349
        %v5352 = vsub.f32 %v4800, %v5195
        %v5353 = vsub.f32 %v4889, %v5195
        %v5354 = vsub.f32 %v4802, %v5200
        %v5355 = vsub.f32 %v4891, %v5200
        %v5356 = vsub.f32 %v4805, %v5205
        %v5357 = vsub.f32 %v4894, %v5205
        %v5358 = vsub.f32 %v4807, %v5210
        %v5359 = vsub.f32 %v4896, %v5210
        %v5360 = vsub.f32 %v4810, %v5215
        %v5361 = vsub.f32 %v4899, %v5215
        %v5362 = vsub.f32 %v4812, %v5220
        %v5363 = vsub.f32 %v4901, %v5220
        %v5364 = vsub.f32 %v4815, %v5225
        %v5365 = vsub.f32 %v4904, %v5225
        %v5366 = vsub.f32 %v4817, %v5230
        %v5367 = vsub.f32 %v4906, %v5230
        %v5368 = vsub.f32 %v4820, %v5235
        %v5369 = vsub.f32 %v4909, %v5235
        %v5370 = vsub.f32 %v4822, %v5240
        %v5371 = vsub.f32 %v4911, %v5240
        %v5372 = vsub.f32 %v4825, %v5245
        %v5373 = vsub.f32 %v4914, %v5245
        %v5374 = vsub.f32 %v4827, %v5250
        %v5375 = vsub.f32 %v4916, %v5250
        %v5376 = vsub.f32 %v4830, %v5255
        %v5377 = vsub.f32 %v4919, %v5255
        %v5378 = vsub.f32 %v4832, %v5260
        %v5379 = vsub.f32 %v4921, %v5260
        %v5380 = vsub.f32 %v4835, %v5265
        %v5381 = vsub.f32 %v4924, %v5265
        %v5382 = vsub.f32 %v4837, %v5270
        %v5383 = vsub.f32 %v4926, %v5270
        %v5384 = vsub.f32 %v4840, %v5275
        %v5385 = vsub.f32 %v4929, %v5275
        %v5386 = vsub.f32 %v4842, %v5280
        %v5387 = vsub.f32 %v4931, %v5280
        %v5388 = vsub.f32 %v4845, %v5285
        %v5389 = vsub.f32 %v4934, %v5285
        %v5390 = vsub.f32 %v4847, %v5290
        %v5391 = vsub.f32 %v4936, %v5290
        %v5392 = vsub.f32 %v4850, %v5295
        %v5393 = vsub.f32 %v4939, %v5295
        %v5394 = vsub.f32 %v4852, %v5300
        %v5395 = vsub.f32 %v4941, %v5300
        %v5396 = vsub.f32 %v4855, %v5305
        %v5397 = vsub.f32 %v4944, %v5305
        %v5398 = vsub.f32 %v4857, %v5310
        %v5399 = vsub.f32 %v4946, %v5310
        %v5400 = vsub.f32 %v4860, %v5315
        %v5401 = vsub.f32 %v4949, %v5315
        %v5402 = vsub.f32 %v4862, %v5320
        %v5403 = vsub.f32 %v4951, %v5320
        %v5404 = vsub.f32 %v4865, %v5325
        %v5405 = vsub.f32 %v4954, %v5325
        %v5406 = vsub.f32 %v4867, %v5330
        %v5407 = vsub.f32 %v4956, %v5330
        %v5408 = vsub.f32 %v4870, %v5335
        %v5409 = vsub.f32 %v4959, %v5335
        %v5410 = vsub.f32 %v4872, %v5340
        %v5411 = vsub.f32 %v4961, %v5340
        %v5412 = vsub.f32 %v4875, %v5345
        %v5413 = vsub.f32 %v4964, %v5345
        %v5414 = vsub.f32 %v4877, %v5350
        %v5415 = vsub.f32 %v4966, %v5350
        %v5416 = vmul.f32 %v5352, 1.442695
        %v5417 = vpow.pop %v5416
        %v5418 = vmul.f32 %v5353, 1.442695
        %v5419 = vpow.pop %v5418
        %v5420 = vmul.f32 %v5354, 1.442695
        %v5421 = vpow.pop %v5420
        %v5422 = vmul.f32 %v5355, 1.442695
        %v5423 = vpow.pop %v5422
        %v5424 = vmul.f32 %v5356, 1.442695
        %v5425 = vpow.pop %v5424
        %v5426 = vmul.f32 %v5357, 1.442695
        %v5427 = vpow.pop %v5426
        %v5428 = vmul.f32 %v5358, 1.442695
        %v5429 = vpow.pop %v5428
        %v5430 = vmul.f32 %v5359, 1.442695
        %v5431 = vpow.pop %v5430
        %v5432 = vmul.f32 %v5360, 1.442695
        %v5433 = vpow.pop %v5432
        %v5434 = vmul.f32 %v5361, 1.442695
        %v5435 = vpow.pop %v5434
        %v5436 = vmul.f32 %v5362, 1.442695
        %v5437 = vpow.pop %v5436
        %v5438 = vmul.f32 %v5363, 1.442695
        %v5439 = vpow.pop %v5438
        %v5440 = vmul.f32 %v5364, 1.442695
        %v5441 = vpow.pop %v5440
        %v5442 = vmul.f32 %v5365, 1.442695
        %v5443 = vpow.pop %v5442
        %v5444 = vmul.f32 %v5366, 1.442695
        %v5445 = vpow.pop %v5444
        %v5446 = vmul.f32 %v5367, 1.442695
        %v5447 = vpow.pop %v5446
        %v5448 = vmul.f32 %v5368, 1.442695
        %v5449 = vpow.pop %v5448
        %v5450 = vmul.f32 %v5369, 1.442695
        %v5451 = vpow.pop %v5450
        %v5452 = vmul.f32 %v5370, 1.442695
        %v5453 = vpow.pop %v5452
        %v5454 = vmul.f32 %v5371, 1.442695
        %v5455 = vpow.pop %v5454
        %v5456 = vmul.f32 %v5372, 1.442695
        %v5457 = vpow.pop %v5456
        %v5458 = vmul.f32 %v5373, 1.442695
        %v5459 = vpow.pop %v5458
        %v5460 = vmul.f32 %v5374, 1.442695
        %v5461 = vpow.pop %v5460
        %v5462 = vmul.f32 %v5375, 1.442695
        %v5463 = vpow.pop %v5462
        %v5464 = vmul.f32 %v5376, 1.442695
        %v5465 = vpow.pop %v5464
        %v5466 = vmul.f32 %v5377, 1.442695
        %v5467 = vpow.pop %v5466
        %v5468 = vmul.f32 %v5378, 1.442695
        %v5469 = vpow.pop %v5468
        %v5470 = vmul.f32 %v5379, 1.442695
        %v5471 = vpow.pop %v5470
        %v5472 = vmul.f32 %v5380, 1.442695
        %v5473 = vpow.pop %v5472
        %v5474 = vmul.f32 %v5381, 1.442695
        %v5475 = vpow.pop %v5474
        %v5476 = vmul.f32 %v5382, 1.442695
        %v5477 = vpow.pop %v5476
        %v5478 = vmul.f32 %v5383, 1.442695
        %v5479 = vpow.pop %v5478
        %v5480 = vmul.f32 %v5384, 1.442695
        %v5481 = vpow.pop %v5480
        %v5482 = vmul.f32 %v5385, 1.442695
        %v5483 = vpow.pop %v5482
        %v5484 = vmul.f32 %v5386, 1.442695
        %v5485 = vpow.pop %v5484
        %v5486 = vmul.f32 %v5387, 1.442695
        %v5487 = vpow.pop %v5486
        %v5488 = vmul.f32 %v5388, 1.442695
        %v5489 = vpow.pop %v5488
        %v5490 = vmul.f32 %v5389, 1.442695
        %v5491 = vpow.pop %v5490
        %v5492 = vmul.f32 %v5390, 1.442695
        %v5493 = vpow.pop %v5492
        %v5494 = vmul.f32 %v5391, 1.442695
        %v5495 = vpow.pop %v5494
        %v5496 = vmul.f32 %v5392, 1.442695
        %v5497 = vpow.pop %v5496
        %v5498 = vmul.f32 %v5393, 1.442695
        %v5499 = vpow.pop %v5498
        %v5500 = vmul.f32 %v5394, 1.442695
        %v5501 = vpow.pop %v5500
        %v5502 = vmul.f32 %v5395, 1.442695
        %v5503 = vpow.pop %v5502
        %v5504 = vmul.f32 %v5396, 1.442695
        %v5505 = vpow.pop %v5504
        %v5506 = vmul.f32 %v5397, 1.442695
        %v5507 = vpow.pop %v5506
        %v5508 = vmul.f32 %v5398, 1.442695
        %v5509 = vpow.pop %v5508
        %v5510 = vmul.f32 %v5399, 1.442695
        %v5511 = vpow.pop %v5510
        %v5512 = vmul.f32 %v5400, 1.442695
        %v5513 = vpow.pop %v5512
        %v5514 = vmul.f32 %v5401, 1.442695
        %v5515 = vpow.pop %v5514
        %v5516 = vmul.f32 %v5402, 1.442695
        %v5517 = vpow.pop %v5516
        %v5518 = vmul.f32 %v5403, 1.442695
        %v5519 = vpow.pop %v5518
        %v5520 = vmul.f32 %v5404, 1.442695
        %v5521 = vpow.pop %v5520
        %v5522 = vmul.f32 %v5405, 1.442695
        %v5523 = vpow.pop %v5522
        %v5524 = vmul.f32 %v5406, 1.442695
        %v5525 = vpow.pop %v5524
        %v5526 = vmul.f32 %v5407, 1.442695
        %v5527 = vpow.pop %v5526
        %v5528 = vmul.f32 %v5408, 1.442695
        %v5529 = vpow.pop %v5528
        %v5530 = vmul.f32 %v5409, 1.442695
        %v5531 = vpow.pop %v5530
        %v5532 = vmul.f32 %v5410, 1.442695
        %v5533 = vpow.pop %v5532
        %v5534 = vmul.f32 %v5411, 1.442695
        %v5535 = vpow.pop %v5534
        %v5536 = vmul.f32 %v5412, 1.442695
        %v5537 = vpow.pop %v5536
        %v5538 = vmul.f32 %v5413, 1.442695
        %v5539 = vpow.pop %v5538
        %v5540 = vmul.f32 %v5414, 1.442695
        %v5541 = vpow.pop %v5540
        %v5542 = vmul.f32 %v5415, 1.442695
        %v5543 = vpow.pop %v5542
        %v5544 = vmul.f32 %v5129, %v4438
        %v5545 = vmul.f32 %v5131, %v4439
        %v5546 = vmul.f32 %v5133, %v4440
        %v5547 = vmul.f32 %v5135, %v4441
        %v5548 = vmul.f32 %v5137, %v4442
        %v5549 = vmul.f32 %v5139, %v4443
        %v5550 = vmul.f32 %v5141, %v4444
        %v5551 = vmul.f32 %v5143, %v4445
        %v5552 = vmul.f32 %v5145, %v4446
        %v5553 = vmul.f32 %v5147, %v4447
        %v5554 = vmul.f32 %v5149, %v4448
        %v5555 = vmul.f32 %v5151, %v4449
        %v5556 = vmul.f32 %v5153, %v4450
        %v5557 = vmul.f32 %v5155, %v4451
        %v5558 = vmul.f32 %v5157, %v4452
        %v5559 = vmul.f32 %v5159, %v4453
        %v5560 = vmul.f32 %v5161, %v4454
        %v5561 = vmul.f32 %v5163, %v4455
        %v5562 = vmul.f32 %v5165, %v4456
        %v5563 = vmul.f32 %v5167, %v4457
        %v5564 = vmul.f32 %v5169, %v4458
        %v5565 = vmul.f32 %v5171, %v4459
        %v5566 = vmul.f32 %v5173, %v4460
        %v5567 = vmul.f32 %v5175, %v4461
        %v5568 = vmul.f32 %v5177, %v4462
        %v5569 = vmul.f32 %v5179, %v4463
        %v5570 = vmul.f32 %v5181, %v4464
        %v5571 = vmul.f32 %v5183, %v4465
        %v5572 = vmul.f32 %v5185, %v4466
        %v5573 = vmul.f32 %v5187, %v4467
        %v5574 = vmul.f32 %v5189, %v4468
        %v5575 = vmul.f32 %v5191, %v4469
        %v5576 = vadd.f32 %v5417, %v5419
        %5577 = vadd.xlane.f32.xlu0 %v5576
        %v5578 = vpop.xlane.xlu0 %5577
        %v5579 = vadd.f32 %v5421, %v5423
        %5580 = vadd.xlane.f32.xlu0 %v5579
        %v5581 = vpop.xlane.xlu0 %5580
        %v5582 = vadd.f32 %v5425, %v5427
        %5583 = vadd.xlane.f32.xlu0 %v5582
        %v5584 = vpop.xlane.xlu0 %5583
        %v5585 = vadd.f32 %v5429, %v5431
        %5586 = vadd.xlane.f32.xlu0 %v5585
        %v5587 = vpop.xlane.xlu0 %5586
        %v5588 = vadd.f32 %v5433, %v5435
        %5589 = vadd.xlane.f32.xlu0 %v5588
        %v5590 = vpop.xlane.xlu0 %5589
        %v5591 = vadd.f32 %v5437, %v5439
        %5592 = vadd.xlane.f32.xlu0 %v5591
        %v5593 = vpop.xlane.xlu0 %5592
        %v5594 = vadd.f32 %v5441, %v5443
        %5595 = vadd.xlane.f32.xlu0 %v5594
        %v5596 = vpop.xlane.xlu0 %5595
        %v5597 = vadd.f32 %v5445, %v5447
        %5598 = vadd.xlane.f32.xlu0 %v5597
        %v5599 = vpop.xlane.xlu0 %5598
        %v5600 = vadd.f32 %v5449, %v5451
        %5601 = vadd.xlane.f32.xlu0 %v5600
        %v5602 = vpop.xlane.xlu0 %5601
        %v5603 = vadd.f32 %v5453, %v5455
        %5604 = vadd.xlane.f32.xlu0 %v5603
        %v5605 = vpop.xlane.xlu0 %5604
        %v5606 = vadd.f32 %v5457, %v5459
        %5607 = vadd.xlane.f32.xlu0 %v5606
        %v5608 = vpop.xlane.xlu0 %5607
        %v5609 = vadd.f32 %v5461, %v5463
        %5610 = vadd.xlane.f32.xlu0 %v5609
        %v5611 = vpop.xlane.xlu0 %5610
        %v5612 = vadd.f32 %v5465, %v5467
        %5613 = vadd.xlane.f32.xlu0 %v5612
        %v5614 = vpop.xlane.xlu0 %5613
        %v5615 = vadd.f32 %v5469, %v5471
        %5616 = vadd.xlane.f32.xlu0 %v5615
        %v5617 = vpop.xlane.xlu0 %5616
        %v5618 = vadd.f32 %v5473, %v5475
        %5619 = vadd.xlane.f32.xlu0 %v5618
        %v5620 = vpop.xlane.xlu0 %5619
        %v5621 = vadd.f32 %v5477, %v5479
        %5622 = vadd.xlane.f32.xlu0 %v5621
        %v5623 = vpop.xlane.xlu0 %5622
        %v5624 = vadd.f32 %v5481, %v5483
        %5625 = vadd.xlane.f32.xlu0 %v5624
        %v5626 = vpop.xlane.xlu0 %5625
        %v5627 = vadd.f32 %v5485, %v5487
        %5628 = vadd.xlane.f32.xlu0 %v5627
        %v5629 = vpop.xlane.xlu0 %5628
        %v5630 = vadd.f32 %v5489, %v5491
        %5631 = vadd.xlane.f32.xlu0 %v5630
        %v5632 = vpop.xlane.xlu0 %5631
        %v5633 = vadd.f32 %v5493, %v5495
        %5634 = vadd.xlane.f32.xlu0 %v5633
        %v5635 = vpop.xlane.xlu0 %5634
        %v5636 = vadd.f32 %v5497, %v5499
        %5637 = vadd.xlane.f32.xlu0 %v5636
        %v5638 = vpop.xlane.xlu0 %5637
        %v5639 = vadd.f32 %v5501, %v5503
        %5640 = vadd.xlane.f32.xlu0 %v5639
        %v5641 = vpop.xlane.xlu0 %5640
        %v5642 = vadd.f32 %v5505, %v5507
        %5643 = vadd.xlane.f32.xlu0 %v5642
        %v5644 = vpop.xlane.xlu0 %5643
        %v5645 = vadd.f32 %v5509, %v5511
        %5646 = vadd.xlane.f32.xlu0 %v5645
        %v5647 = vpop.xlane.xlu0 %5646
        %v5648 = vadd.f32 %v5513, %v5515
        %5649 = vadd.xlane.f32.xlu0 %v5648
        %v5650 = vpop.xlane.xlu0 %5649
        %v5651 = vadd.f32 %v5517, %v5519
        %5652 = vadd.xlane.f32.xlu0 %v5651
        %v5653 = vpop.xlane.xlu0 %5652
        %v5654 = vadd.f32 %v5521, %v5523
        %5655 = vadd.xlane.f32.xlu0 %v5654
        %v5656 = vpop.xlane.xlu0 %5655
        %v5657 = vadd.f32 %v5525, %v5527
        %5658 = vadd.xlane.f32.xlu0 %v5657
        %v5659 = vpop.xlane.xlu0 %5658
        %v5660 = vadd.f32 %v5529, %v5531
        %5661 = vadd.xlane.f32.xlu0 %v5660
        %v5662 = vpop.xlane.xlu0 %5661
        %v5663 = vadd.f32 %v5533, %v5535
        %5664 = vadd.xlane.f32.xlu0 %v5663
        %v5665 = vpop.xlane.xlu0 %5664
        %v5666 = vadd.f32 %v5537, %v5539
        %5667 = vadd.xlane.f32.xlu0 %v5666
        %v5668 = vpop.xlane.xlu0 %5667
        %v5669 = vadd.f32 %v5541, %v5543
        %5670 = vadd.xlane.f32.xlu0 %v5669
        %v5671 = vpop.xlane.xlu0 %5670
        %v5672 = vadd.f32 %v5544, %v5578
        %v5673 = vadd.f32 %v5545, %v5581
        %v5674 = vadd.f32 %v5546, %v5584
        %v5675 = vadd.f32 %v5547, %v5587
        %v5676 = vadd.f32 %v5548, %v5590
        %v5677 = vadd.f32 %v5549, %v5593
        %v5678 = vadd.f32 %v5550, %v5596
        %v5679 = vadd.f32 %v5551, %v5599
        %v5680 = vadd.f32 %v5552, %v5602
        %v5681 = vadd.f32 %v5553, %v5605
        %v5682 = vadd.f32 %v5554, %v5608
        %v5683 = vadd.f32 %v5555, %v5611
        %v5684 = vadd.f32 %v5556, %v5614
        %v5685 = vadd.f32 %v5557, %v5617
        %v5686 = vadd.f32 %v5558, %v5620
        %v5687 = vadd.f32 %v5559, %v5623
        %v5688 = vadd.f32 %v5560, %v5626
        %v5689 = vadd.f32 %v5561, %v5629
        %v5690 = vadd.f32 %v5562, %v5632
        %v5691 = vadd.f32 %v5563, %v5635
        %v5692 = vadd.f32 %v5564, %v5638
        %v5693 = vadd.f32 %v5565, %v5641
        %v5694 = vadd.f32 %v5566, %v5644
        %v5695 = vadd.f32 %v5567, %v5647
        %v5696 = vadd.f32 %v5568, %v5650
        %v5697 = vadd.f32 %v5569, %v5653
        %v5698 = vadd.f32 %v5570, %v5656
        %v5699 = vadd.f32 %v5571, %v5659
        %v5700 = vadd.f32 %v5572, %v5662
        %v5701 = vadd.f32 %v5573, %v5665
        %v5702 = vadd.f32 %v5574, %v5668
        %v5703 = vadd.f32 %v5575, %v5671
        %v5704 = vpack.c.bf16 %v5421, %v5417
        %v5705 = vpack.c.bf16 %v5423, %v5419
        %v5706 = vpack.c.bf16 %v5429, %v5425
        %v5707 = vpack.c.bf16 %v5431, %v5427
        %v5708 = vpack.c.bf16 %v5437, %v5433
        %v5709 = vpack.c.bf16 %v5439, %v5435
        %v5710 = vpack.c.bf16 %v5445, %v5441
        %v5711 = vpack.c.bf16 %v5447, %v5443
        %v5712 = vpack.c.bf16 %v5453, %v5449
        %v5713 = vpack.c.bf16 %v5455, %v5451
        %v5714 = vpack.c.bf16 %v5461, %v5457
        %v5715 = vpack.c.bf16 %v5463, %v5459
        %v5716 = vpack.c.bf16 %v5469, %v5465
        %v5717 = vpack.c.bf16 %v5471, %v5467
        %v5718 = vpack.c.bf16 %v5477, %v5473
        %v5719 = vpack.c.bf16 %v5479, %v5475
        %v5720 = vpack.c.bf16 %v5485, %v5481
        %v5721 = vpack.c.bf16 %v5487, %v5483
        %v5722 = vpack.c.bf16 %v5493, %v5489
        %v5723 = vpack.c.bf16 %v5495, %v5491
        %v5724 = vpack.c.bf16 %v5501, %v5497
        %v5725 = vpack.c.bf16 %v5503, %v5499
        %v5726 = vpack.c.bf16 %v5509, %v5505
        %v5727 = vpack.c.bf16 %v5511, %v5507
        %v5728 = vpack.c.bf16 %v5517, %v5513
        %v5729 = vpack.c.bf16 %v5519, %v5515
        %v5730 = vpack.c.bf16 %v5525, %v5521
        %v5731 = vpack.c.bf16 %v5527, %v5523
        %v5732 = vpack.c.bf16 %v5533, %v5529
        %v5733 = vpack.c.bf16 %v5535, %v5531
        %v5734 = vpack.c.bf16 %v5541, %v5537
        %v5735 = vpack.c.bf16 %v5543, %v5539
        %v5768 = vunpack.c.l.b16 %v4342
        %v5769 = vunpack.c.l.b16 %v4343
        %v5770 = vunpack.c.l.b16 %v4344
        %v5771 = vunpack.c.l.b16 %v4345
        %v5772 = vunpack.c.l.b16 %v4346
        %v5773 = vunpack.c.l.b16 %v4347
        %v5774 = vunpack.c.l.b16 %v4348
        %v5775 = vunpack.c.l.b16 %v4349
        %v5776 = vunpack.c.l.b16 %v4350
        %v5777 = vunpack.c.l.b16 %v4351
        %v5778 = vunpack.c.l.b16 %v4352
        %v5779 = vunpack.c.l.b16 %v4353
        %v5780 = vunpack.c.l.b16 %v4354
        %v5781 = vunpack.c.l.b16 %v4355
        %v5782 = vunpack.c.l.b16 %v4356
        %v5783 = vunpack.c.l.b16 %v4357
        %v5784 = vunpack.c.l.b16 %v4358
        %v5785 = vunpack.c.l.b16 %v4359
        %v5786 = vunpack.c.l.b16 %v4360
        %v5787 = vunpack.c.l.b16 %v4361
        %v5788 = vunpack.c.l.b16 %v4362
        %v5789 = vunpack.c.l.b16 %v4363
        %v5790 = vunpack.c.l.b16 %v4364
        %v5791 = vunpack.c.l.b16 %v4365
        %v5792 = vunpack.c.l.b16 %v4366
        %v5793 = vunpack.c.l.b16 %v4367
        %v5794 = vunpack.c.l.b16 %v4368
        %v5795 = vunpack.c.l.b16 %v4369
        %v5796 = vunpack.c.l.b16 %v4370
        %v5797 = vunpack.c.l.b16 %v4371
        %v5798 = vunpack.c.l.b16 %v4372
        %v5799 = vunpack.c.l.b16 %v4373
        %v5800 = vpack.c.b16 %v5769, %v5768
        %v5801 = vpack.c.b16 %v5771, %v5770
        %v5802 = vpack.c.b16 %v5773, %v5772
        %v5803 = vpack.c.b16 %v5775, %v5774
        %v5804 = vpack.c.b16 %v5777, %v5776
        %v5805 = vpack.c.b16 %v5779, %v5778
        %v5806 = vpack.c.b16 %v5781, %v5780
        %v5807 = vpack.c.b16 %v5783, %v5782
        %v5808 = vpack.c.b16 %v5785, %v5784
        %v5809 = vpack.c.b16 %v5787, %v5786
        %v5810 = vpack.c.b16 %v5789, %v5788
        %v5811 = vpack.c.b16 %v5791, %v5790
        %v5812 = vpack.c.b16 %v5793, %v5792
        %v5813 = vpack.c.b16 %v5795, %v5794
        %v5814 = vpack.c.b16 %v5797, %v5796
        %v5815 = vpack.c.b16 %v5799, %v5798
        %5816 = vrot.lane.b32.xlu0 %v5800, 64
        %v5817 = vpop.permute.xlu0 %5816
        %5818 = vrot.lane.b32.xlu0 %v5801, 64
        %v5819 = vpop.permute.xlu0 %5818
        %5820 = vrot.lane.b32.xlu0 %v5802, 64
        %v5821 = vpop.permute.xlu0 %5820
        %5822 = vrot.lane.b32.xlu0 %v5803, 64
        %v5823 = vpop.permute.xlu0 %5822
        %5824 = vrot.lane.b32.xlu0 %v5804, 64
        %v5825 = vpop.permute.xlu0 %5824
        %5826 = vrot.lane.b32.xlu0 %v5805, 64
        %v5827 = vpop.permute.xlu0 %5826
        %5828 = vrot.lane.b32.xlu0 %v5806, 64
        %v5829 = vpop.permute.xlu0 %5828
        %5830 = vrot.lane.b32.xlu0 %v5807, 64
        %v5831 = vpop.permute.xlu0 %5830
        %5832 = vrot.lane.b32.xlu0 %v5808, 64
        %v5833 = vpop.permute.xlu0 %5832
        %5834 = vrot.lane.b32.xlu0 %v5809, 64
        %v5835 = vpop.permute.xlu0 %5834
        %5836 = vrot.lane.b32.xlu0 %v5810, 64
        %v5837 = vpop.permute.xlu0 %5836
        %5838 = vrot.lane.b32.xlu0 %v5811, 64
        %v5839 = vpop.permute.xlu0 %5838
        %5840 = vrot.lane.b32.xlu0 %v5812, 64
        %v5841 = vpop.permute.xlu0 %5840
        %5842 = vrot.lane.b32.xlu0 %v5813, 64
        %v5843 = vpop.permute.xlu0 %5842
        %5844 = vrot.lane.b32.xlu0 %v5814, 64
        %v5845 = vpop.permute.xlu0 %5844
        %5846 = vrot.lane.b32.xlu0 %v5815, 64
        %v5847 = vpop.permute.xlu0 %5846
        %5864 = vmatpush.bf16.msra.mxu0 %v5831
        %5865 = vmatpush.bf16.msra.mxu0 %v5829
        %5866 = vmatpush.bf16.msra.mxu0 %v5827
        %5867 = vmatpush.bf16.msra.mxu0 %v5825
        %5868 = vmatpush.bf16.msra.mxu0 %v5823
        %5869 = vmatpush.bf16.msra.mxu0 %v5821
        %5870 = vmatpush.bf16.msra.mxu0 %v5819
        %5871 = vmatpush.bf16.msra.mxu0 %v5817
        %5872 = vmatmul.bf16.gmra.mxu0 %v5704
        %v5873 = vpop.f32.mrf.mxu0
        %v5874 = vadd.f32 0.0, %v5873
        %v5875 = vpop.f32.mrf.mxu0
        %v5876 = vadd.f32 0.0, %v5875
        %5877 = vmatmul.bf16.gmra.mxu0 %v5706
        %v5878 = vpop.f32.mrf.mxu0
        %v5879 = vadd.f32 0.0, %v5878
        %v5880 = vpop.f32.mrf.mxu0
        %v5881 = vadd.f32 0.0, %v5880
        %5882 = vmatmul.bf16.gmra.mxu0 %v5708
        %v5883 = vpop.f32.mrf.mxu0
        %v5884 = vadd.f32 0.0, %v5883
        %v5885 = vpop.f32.mrf.mxu0
        %v5886 = vadd.f32 0.0, %v5885
        %5887 = vmatmul.bf16.gmra.mxu0 %v5710
        %v5888 = vpop.f32.mrf.mxu0
        %v5889 = vadd.f32 0.0, %v5888
        %v5890 = vpop.f32.mrf.mxu0
        %v5891 = vadd.f32 0.0, %v5890
        %5892 = vmatmul.bf16.gmra.mxu0 %v5712
        %v5893 = vpop.f32.mrf.mxu0
        %v5894 = vadd.f32 0.0, %v5893
        %v5895 = vpop.f32.mrf.mxu0
        %v5896 = vadd.f32 0.0, %v5895
        %5897 = vmatmul.bf16.gmra.mxu0 %v5714
        %v5898 = vpop.f32.mrf.mxu0
        %v5899 = vadd.f32 0.0, %v5898
        %v5900 = vpop.f32.mrf.mxu0
        %v5901 = vadd.f32 0.0, %v5900
        %5902 = vmatmul.bf16.gmra.mxu0 %v5716
        %v5903 = vpop.f32.mrf.mxu0
        %v5904 = vadd.f32 0.0, %v5903
        %v5905 = vpop.f32.mrf.mxu0
        %v5906 = vadd.f32 0.0, %v5905
        %5907 = vmatmul.bf16.gmra.mxu0 %v5718
        %v5908 = vpop.f32.mrf.mxu0
        %v5909 = vadd.f32 0.0, %v5908
        %v5910 = vpop.f32.mrf.mxu0
        %v5911 = vadd.f32 0.0, %v5910
        %5912 = vmatmul.bf16.gmra.mxu0 %v5720
        %v5913 = vpop.f32.mrf.mxu0
        %v5914 = vadd.f32 0.0, %v5913
        %v5915 = vpop.f32.mrf.mxu0
        %v5916 = vadd.f32 0.0, %v5915
        %5917 = vmatmul.bf16.gmra.mxu0 %v5722
        %v5918 = vpop.f32.mrf.mxu0
        %v5919 = vadd.f32 0.0, %v5918
        %v5920 = vpop.f32.mrf.mxu0
        %v5921 = vadd.f32 0.0, %v5920
        %5922 = vmatmul.bf16.gmra.mxu0 %v5724
        %v5923 = vpop.f32.mrf.mxu0
        %v5924 = vadd.f32 0.0, %v5923
        %v5925 = vpop.f32.mrf.mxu0
        %v5926 = vadd.f32 0.0, %v5925
        %5927 = vmatmul.bf16.gmra.mxu0 %v5726
        %v5928 = vpop.f32.mrf.mxu0
        %v5929 = vadd.f32 0.0, %v5928
        %v5930 = vpop.f32.mrf.mxu0
        %v5931 = vadd.f32 0.0, %v5930
        %5932 = vmatmul.bf16.gmra.mxu0 %v5728
        %v5933 = vpop.f32.mrf.mxu0
        %v5934 = vadd.f32 0.0, %v5933
        %v5935 = vpop.f32.mrf.mxu0
        %v5936 = vadd.f32 0.0, %v5935
        %5937 = vmatmul.bf16.gmra.mxu0 %v5730
        %v5938 = vpop.f32.mrf.mxu0
        %v5939 = vadd.f32 0.0, %v5938
        %v5940 = vpop.f32.mrf.mxu0
        %v5941 = vadd.f32 0.0, %v5940
        %5942 = vmatmul.bf16.gmra.mxu0 %v5732
        %v5943 = vpop.f32.mrf.mxu0
        %v5944 = vadd.f32 0.0, %v5943
        %v5945 = vpop.f32.mrf.mxu0
        %v5946 = vadd.f32 0.0, %v5945
        %5947 = vmatmul.bf16.gmra.mxu0 %v5734
        %v5948 = vpop.f32.mrf.mxu0
        %v5949 = vadd.f32 0.0, %v5948
        %v5950 = vpop.f32.mrf.mxu0
        %v5951 = vadd.f32 0.0, %v5950
        %5952 = vdwg.mxu0
        %5953 = vmatpush.bf16.msra.mxu0 %v5847
        %5954 = vmatpush.bf16.msra.mxu0 %v5845
        %5955 = vmatpush.bf16.msra.mxu0 %v5843
        %5956 = vmatpush.bf16.msra.mxu0 %v5841
        %5957 = vmatpush.bf16.msra.mxu0 %v5839
        %5958 = vmatpush.bf16.msra.mxu0 %v5837
        %5959 = vmatpush.bf16.msra.mxu0 %v5835
        %5960 = vmatpush.bf16.msra.mxu0 %v5833
        %5961 = vmatmul.bf16.gmra.mxu0 %v5705
        %v5962 = vpop.f32.mrf.mxu0
        %v5963 = vadd.f32 %v5874, %v5962
        %v5964 = vpop.f32.mrf.mxu0
        %v5965 = vadd.f32 %v5876, %v5964
        %5966 = vmatmul.bf16.gmra.mxu0 %v5707
        %v5967 = vpop.f32.mrf.mxu0
        %v5968 = vadd.f32 %v5879, %v5967
        %v5969 = vpop.f32.mrf.mxu0
        %v5970 = vadd.f32 %v5881, %v5969
        %5971 = vmatmul.bf16.gmra.mxu0 %v5709
        %v5972 = vpop.f32.mrf.mxu0
        %v5973 = vadd.f32 %v5884, %v5972
        %v5974 = vpop.f32.mrf.mxu0
        %v5975 = vadd.f32 %v5886, %v5974
        %5976 = vmatmul.bf16.gmra.mxu0 %v5711
        %v5977 = vpop.f32.mrf.mxu0
        %v5978 = vadd.f32 %v5889, %v5977
        %v5979 = vpop.f32.mrf.mxu0
        %v5980 = vadd.f32 %v5891, %v5979
        %5981 = vmatmul.bf16.gmra.mxu0 %v5713
        %v5982 = vpop.f32.mrf.mxu0
        %v5983 = vadd.f32 %v5894, %v5982
        %v5984 = vpop.f32.mrf.mxu0
        %v5985 = vadd.f32 %v5896, %v5984
        %5986 = vmatmul.bf16.gmra.mxu0 %v5715
        %v5987 = vpop.f32.mrf.mxu0
        %v5988 = vadd.f32 %v5899, %v5987
        %v5989 = vpop.f32.mrf.mxu0
        %v5990 = vadd.f32 %v5901, %v5989
        %5991 = vmatmul.bf16.gmra.mxu0 %v5717
        %v5992 = vpop.f32.mrf.mxu0
        %v5993 = vadd.f32 %v5904, %v5992
        %v5994 = vpop.f32.mrf.mxu0
        %v5995 = vadd.f32 %v5906, %v5994
        %5996 = vmatmul.bf16.gmra.mxu0 %v5719
        %v5997 = vpop.f32.mrf.mxu0
        %v5998 = vadd.f32 %v5909, %v5997
        %v5999 = vpop.f32.mrf.mxu0
        %v6000 = vadd.f32 %v5911, %v5999
        %6001 = vmatmul.bf16.gmra.mxu0 %v5721
        %v6002 = vpop.f32.mrf.mxu0
        %v6003 = vadd.f32 %v5914, %v6002
        %v6004 = vpop.f32.mrf.mxu0
        %v6005 = vadd.f32 %v5916, %v6004
        %6006 = vmatmul.bf16.gmra.mxu0 %v5723
        %v6007 = vpop.f32.mrf.mxu0
        %v6008 = vadd.f32 %v5919, %v6007
        %v6009 = vpop.f32.mrf.mxu0
        %v6010 = vadd.f32 %v5921, %v6009
        %6011 = vmatmul.bf16.gmra.mxu0 %v5725
        %v6012 = vpop.f32.mrf.mxu0
        %v6013 = vadd.f32 %v5924, %v6012
        %v6014 = vpop.f32.mrf.mxu0
        %v6015 = vadd.f32 %v5926, %v6014
        %6016 = vmatmul.bf16.gmra.mxu0 %v5727
        %v6017 = vpop.f32.mrf.mxu0
        %v6018 = vadd.f32 %v5929, %v6017
        %v6019 = vpop.f32.mrf.mxu0
        %v6020 = vadd.f32 %v5931, %v6019
        %6021 = vmatmul.bf16.gmra.mxu0 %v5729
        %v6022 = vpop.f32.mrf.mxu0
        %v6023 = vadd.f32 %v5934, %v6022
        %v6024 = vpop.f32.mrf.mxu0
        %v6025 = vadd.f32 %v5936, %v6024
        %6026 = vmatmul.bf16.gmra.mxu0 %v5731
        %v6027 = vpop.f32.mrf.mxu0
        %v6028 = vadd.f32 %v5939, %v6027
        %v6029 = vpop.f32.mrf.mxu0
        %v6030 = vadd.f32 %v5941, %v6029
        %6031 = vmatmul.bf16.gmra.mxu0 %v5733
        %v6032 = vpop.f32.mrf.mxu0
        %v6033 = vadd.f32 %v5944, %v6032
        %v6034 = vpop.f32.mrf.mxu0
        %v6035 = vadd.f32 %v5946, %v6034
        %6036 = vmatmul.bf16.gmra.mxu0 %v5735
        %v6037 = vpop.f32.mrf.mxu0
        %v6038 = vadd.f32 %v5949, %v6037
        %v6039 = vpop.f32.mrf.mxu0
        %v6040 = vadd.f32 %v5951, %v6039
        %6041 = vdwg.mxu0
        %6043 = vset.pattern.permute.xlu0 2
        %6044 = vperm.xlu0 %6043, %v5129
        %v6045 = vpop.permute.xlu0 %6044
        %6048 = vset.pattern.permute.xlu0 2
        %6049 = vperm.xlu0 %6048, %v5131
        %v6050 = vpop.permute.xlu0 %6049
        %6053 = vset.pattern.permute.xlu0 2
        %6054 = vperm.xlu0 %6053, %v5133
        %v6055 = vpop.permute.xlu0 %6054
        %6058 = vset.pattern.permute.xlu0 2
        %6059 = vperm.xlu0 %6058, %v5135
        %v6060 = vpop.permute.xlu0 %6059
        %6063 = vset.pattern.permute.xlu0 2
        %6064 = vperm.xlu0 %6063, %v5137
        %v6065 = vpop.permute.xlu0 %6064
        %6068 = vset.pattern.permute.xlu0 2
        %6069 = vperm.xlu0 %6068, %v5139
        %v6070 = vpop.permute.xlu0 %6069
        %6073 = vset.pattern.permute.xlu0 2
        %6074 = vperm.xlu0 %6073, %v5141
        %v6075 = vpop.permute.xlu0 %6074
        %6078 = vset.pattern.permute.xlu0 2
        %6079 = vperm.xlu0 %6078, %v5143
        %v6080 = vpop.permute.xlu0 %6079
        %6083 = vset.pattern.permute.xlu0 2
        %6084 = vperm.xlu0 %6083, %v5145
        %v6085 = vpop.permute.xlu0 %6084
        %6088 = vset.pattern.permute.xlu0 2
        %6089 = vperm.xlu0 %6088, %v5147
        %v6090 = vpop.permute.xlu0 %6089
        %6093 = vset.pattern.permute.xlu0 2
        %6094 = vperm.xlu0 %6093, %v5149
        %v6095 = vpop.permute.xlu0 %6094
        %6098 = vset.pattern.permute.xlu0 2
        %6099 = vperm.xlu0 %6098, %v5151
        %v6100 = vpop.permute.xlu0 %6099
        %6103 = vset.pattern.permute.xlu0 2
        %6104 = vperm.xlu0 %6103, %v5153
        %v6105 = vpop.permute.xlu0 %6104
        %6108 = vset.pattern.permute.xlu0 2
        %6109 = vperm.xlu0 %6108, %v5155
        %v6110 = vpop.permute.xlu0 %6109
        %6113 = vset.pattern.permute.xlu0 2
        %6114 = vperm.xlu0 %6113, %v5157
        %v6115 = vpop.permute.xlu0 %6114
        %6118 = vset.pattern.permute.xlu0 2
        %6119 = vperm.xlu0 %6118, %v5159
        %v6120 = vpop.permute.xlu0 %6119
        %6123 = vset.pattern.permute.xlu0 2
        %6124 = vperm.xlu0 %6123, %v5161
        %v6125 = vpop.permute.xlu0 %6124
        %6128 = vset.pattern.permute.xlu0 2
        %6129 = vperm.xlu0 %6128, %v5163
        %v6130 = vpop.permute.xlu0 %6129
        %6133 = vset.pattern.permute.xlu0 2
        %6134 = vperm.xlu0 %6133, %v5165
        %v6135 = vpop.permute.xlu0 %6134
        %6138 = vset.pattern.permute.xlu0 2
        %6139 = vperm.xlu0 %6138, %v5167
        %v6140 = vpop.permute.xlu0 %6139
        %6143 = vset.pattern.permute.xlu0 2
        %6144 = vperm.xlu0 %6143, %v5169
        %v6145 = vpop.permute.xlu0 %6144
        %6148 = vset.pattern.permute.xlu0 2
        %6149 = vperm.xlu0 %6148, %v5171
        %v6150 = vpop.permute.xlu0 %6149
        %6153 = vset.pattern.permute.xlu0 2
        %6154 = vperm.xlu0 %6153, %v5173
        %v6155 = vpop.permute.xlu0 %6154
        %6158 = vset.pattern.permute.xlu0 2
        %6159 = vperm.xlu0 %6158, %v5175
        %v6160 = vpop.permute.xlu0 %6159
        %6163 = vset.pattern.permute.xlu0 2
        %6164 = vperm.xlu0 %6163, %v5177
        %v6165 = vpop.permute.xlu0 %6164
        %6168 = vset.pattern.permute.xlu0 2
        %6169 = vperm.xlu0 %6168, %v5179
        %v6170 = vpop.permute.xlu0 %6169
        %6173 = vset.pattern.permute.xlu0 2
        %6174 = vperm.xlu0 %6173, %v5181
        %v6175 = vpop.permute.xlu0 %6174
        %6178 = vset.pattern.permute.xlu0 2
        %6179 = vperm.xlu0 %6178, %v5183
        %v6180 = vpop.permute.xlu0 %6179
        %6183 = vset.pattern.permute.xlu0 2
        %6184 = vperm.xlu0 %6183, %v5185
        %v6185 = vpop.permute.xlu0 %6184
        %6188 = vset.pattern.permute.xlu0 2
        %6189 = vperm.xlu0 %6188, %v5187
        %v6190 = vpop.permute.xlu0 %6189
        %6193 = vset.pattern.permute.xlu0 2
        %6194 = vperm.xlu0 %6193, %v5189
        %v6195 = vpop.permute.xlu0 %6194
        %6198 = vset.pattern.permute.xlu0 2
        %6199 = vperm.xlu0 %6198, %v5191
        %v6200 = vpop.permute.xlu0 %6199
        %v6202 = vmul.f32 %v6045, %v4470
        %v6203 = vmul.f32 %v6050, %v4471
        %v6204 = vmul.f32 %v6055, %v4472
        %v6205 = vmul.f32 %v6060, %v4473
        %v6206 = vmul.f32 %v6065, %v4474
        %v6207 = vmul.f32 %v6070, %v4475
        %v6208 = vmul.f32 %v6075, %v4476
        %v6209 = vmul.f32 %v6080, %v4477
        %v6210 = vmul.f32 %v6085, %v4478
        %v6211 = vmul.f32 %v6090, %v4479
        %v6212 = vmul.f32 %v6095, %v4480
        %v6213 = vmul.f32 %v6100, %v4481
        %v6214 = vmul.f32 %v6105, %v4482
        %v6215 = vmul.f32 %v6110, %v4483
        %v6216 = vmul.f32 %v6115, %v4484
        %v6217 = vmul.f32 %v6120, %v4485
        %v6218 = vmul.f32 %v6125, %v4486
        %v6219 = vmul.f32 %v6130, %v4487
        %v6220 = vmul.f32 %v6135, %v4488
        %v6221 = vmul.f32 %v6140, %v4489
        %v6222 = vmul.f32 %v6145, %v4490
        %v6223 = vmul.f32 %v6150, %v4491
        %v6224 = vmul.f32 %v6155, %v4492
        %v6225 = vmul.f32 %v6160, %v4493
        %v6226 = vmul.f32 %v6165, %v4494
        %v6227 = vmul.f32 %v6170, %v4495
        %v6228 = vmul.f32 %v6175, %v4496
        %v6229 = vmul.f32 %v6180, %v4497
        %v6230 = vmul.f32 %v6185, %v4498
        %v6231 = vmul.f32 %v6190, %v4499
        %v6232 = vmul.f32 %v6195, %v4500
        %v6233 = vmul.f32 %v6200, %v4501
        %v6234 = vadd.f32 %v6202, %v5963
        %v6235 = vadd.f32 %v6203, %v5965
        %v6236 = vadd.f32 %v6204, %v5968
        %v6237 = vadd.f32 %v6205, %v5970
        %v6238 = vadd.f32 %v6206, %v5973
        %v6239 = vadd.f32 %v6207, %v5975
        %v6240 = vadd.f32 %v6208, %v5978
        %v6241 = vadd.f32 %v6209, %v5980
        %v6242 = vadd.f32 %v6210, %v5983
        %v6243 = vadd.f32 %v6211, %v5985
        %v6244 = vadd.f32 %v6212, %v5988
        %v6245 = vadd.f32 %v6213, %v5990
        %v6246 = vadd.f32 %v6214, %v5993
        %v6247 = vadd.f32 %v6215, %v5995
        %v6248 = vadd.f32 %v6216, %v5998
        %v6249 = vadd.f32 %v6217, %v6000
        %v6250 = vadd.f32 %v6218, %v6003
        %v6251 = vadd.f32 %v6219, %v6005
        %v6252 = vadd.f32 %v6220, %v6008
        %v6253 = vadd.f32 %v6221, %v6010
        %v6254 = vadd.f32 %v6222, %v6013
        %v6255 = vadd.f32 %v6223, %v6015
        %v6256 = vadd.f32 %v6224, %v6018
        %v6257 = vadd.f32 %v6225, %v6020
        %v6258 = vadd.f32 %v6226, %v6023
        %v6259 = vadd.f32 %v6227, %v6025
        %v6260 = vadd.f32 %v6228, %v6028
        %v6261 = vadd.f32 %v6229, %v6030
        %v6262 = vadd.f32 %v6230, %v6033
        %v6263 = vadd.f32 %v6231, %v6035
        %v6264 = vadd.f32 %v6232, %v6038
        %v6265 = vadd.f32 %v6233, %v6040
        %6266 = vrot.lane.b32.xlu0 %v4566, 64
        %v6267 = vpop.permute.xlu0 %6266
        %6268 = vrot.lane.b32.xlu0 %v4567, 64
        %v6269 = vpop.permute.xlu0 %6268
        %6270 = vrot.lane.b32.xlu0 %v4568, 64
        %v6271 = vpop.permute.xlu0 %6270
        %6272 = vrot.lane.b32.xlu0 %v4569, 64
        %v6273 = vpop.permute.xlu0 %6272
        %6274 = vrot.lane.b32.xlu0 %v4570, 64
        %v6275 = vpop.permute.xlu0 %6274
        %6276 = vrot.lane.b32.xlu0 %v4571, 64
        %v6277 = vpop.permute.xlu0 %6276
        %6278 = vrot.lane.b32.xlu0 %v4572, 64
        %v6279 = vpop.permute.xlu0 %6278
        %6280 = vrot.lane.b32.xlu0 %v4573, 64
        %v6281 = vpop.permute.xlu0 %6280
        %6282 = vrot.lane.b32.xlu0 %v4574, 64
        %v6283 = vpop.permute.xlu0 %6282
        %6284 = vrot.lane.b32.xlu0 %v4575, 64
        %v6285 = vpop.permute.xlu0 %6284
        %6286 = vrot.lane.b32.xlu0 %v4576, 64
        %v6287 = vpop.permute.xlu0 %6286
        %6288 = vrot.lane.b32.xlu0 %v4577, 64
        %v6289 = vpop.permute.xlu0 %6288
        %6290 = vrot.lane.b32.xlu0 %v4578, 64
        %v6291 = vpop.permute.xlu0 %6290
        %6292 = vrot.lane.b32.xlu0 %v4579, 64
        %v6293 = vpop.permute.xlu0 %6292
        %6294 = vrot.lane.b32.xlu0 %v4580, 64
        %v6295 = vpop.permute.xlu0 %6294
        %6296 = vrot.lane.b32.xlu0 %v4581, 64
        %v6297 = vpop.permute.xlu0 %6296
        %v6299 = vsel %vm1019, %v6267, 0
        %v6302 = vsel %vm1019, %v6269, 0
        %v6305 = vsel %vm1019, %v6271, 0
        %v6308 = vsel %vm1019, %v6273, 0
        %v6311 = vsel %vm1019, %v6275, 0
        %v6314 = vsel %vm1019, %v6277, 0
        %v6317 = vsel %vm1019, %v6279, 0
        %v6320 = vsel %vm1019, %v6281, 0
        %v6323 = vsel %vm1019, %v6283, 0
        %v6326 = vsel %vm1019, %v6285, 0
        %v6329 = vsel %vm1019, %v6287, 0
        %v6332 = vsel %vm1019, %v6289, 0
        %v6335 = vsel %vm1019, %v6291, 0
        %v6338 = vsel %vm1019, %v6293, 0
        %v6341 = vsel %vm1019, %v6295, 0
        %v6344 = vsel %vm1019, %v6297, 0
        %6346 = vmatpush.bf16.xpose.msra.mxu0 %v4764
        %6347 = vmatpush.bf16.xpose.msra.mxu0 %v4761
        %6348 = vmatpush.bf16.xpose.msra.mxu0 %v4758
        %6349 = vmatpush.bf16.xpose.msra.mxu0 %v4755
        %6350 = vmatpush.bf16.xpose.msra.mxu0 %v4752
        %6351 = vmatpush.bf16.xpose.msra.mxu0 %v4749
        %6352 = vmatpush.bf16.xpose.msra.mxu0 %v4746
        %6353 = vmatpush.bf16.xpose.msra.mxu0 %v4743
        %6354 = vmatmul.bf16.gmra.mxu0 %v6299
        %v6355 = vpop.f32.mrf.mxu0
        %v6356 = vadd.f32 0.0, %v6355
        %v6357 = vpop.f32.mrf.mxu0
        %v6358 = vadd.f32 0.0, %v6357
        %6359 = vmatmul.bf16.gmra.mxu0 %v6302
        %v6360 = vpop.f32.mrf.mxu0
        %v6361 = vadd.f32 0.0, %v6360
        %v6362 = vpop.f32.mrf.mxu0
        %v6363 = vadd.f32 0.0, %v6362
        %6364 = vmatmul.bf16.gmra.mxu0 %v6305
        %v6365 = vpop.f32.mrf.mxu0
        %v6366 = vadd.f32 0.0, %v6365
        %v6367 = vpop.f32.mrf.mxu0
        %v6368 = vadd.f32 0.0, %v6367
        %6369 = vmatmul.bf16.gmra.mxu0 %v6308
        %v6370 = vpop.f32.mrf.mxu0
        %v6371 = vadd.f32 0.0, %v6370
        %v6372 = vpop.f32.mrf.mxu0
        %v6373 = vadd.f32 0.0, %v6372
        %6374 = vmatmul.bf16.gmra.mxu0 %v6311
        %v6375 = vpop.f32.mrf.mxu0
        %v6376 = vadd.f32 0.0, %v6375
        %v6377 = vpop.f32.mrf.mxu0
        %v6378 = vadd.f32 0.0, %v6377
        %6379 = vmatmul.bf16.gmra.mxu0 %v6314
        %v6380 = vpop.f32.mrf.mxu0
        %v6381 = vadd.f32 0.0, %v6380
        %v6382 = vpop.f32.mrf.mxu0
        %v6383 = vadd.f32 0.0, %v6382
        %6384 = vmatmul.bf16.gmra.mxu0 %v6317
        %v6385 = vpop.f32.mrf.mxu0
        %v6386 = vadd.f32 0.0, %v6385
        %v6387 = vpop.f32.mrf.mxu0
        %v6388 = vadd.f32 0.0, %v6387
        %6389 = vmatmul.bf16.gmra.mxu0 %v6320
        %v6390 = vpop.f32.mrf.mxu0
        %v6391 = vadd.f32 0.0, %v6390
        %v6392 = vpop.f32.mrf.mxu0
        %v6393 = vadd.f32 0.0, %v6392
        %6394 = vmatmul.bf16.gmra.mxu0 %v6323
        %v6395 = vpop.f32.mrf.mxu0
        %v6396 = vadd.f32 0.0, %v6395
        %v6397 = vpop.f32.mrf.mxu0
        %v6398 = vadd.f32 0.0, %v6397
        %6399 = vmatmul.bf16.gmra.mxu0 %v6326
        %v6400 = vpop.f32.mrf.mxu0
        %v6401 = vadd.f32 0.0, %v6400
        %v6402 = vpop.f32.mrf.mxu0
        %v6403 = vadd.f32 0.0, %v6402
        %6404 = vmatmul.bf16.gmra.mxu0 %v6329
        %v6405 = vpop.f32.mrf.mxu0
        %v6406 = vadd.f32 0.0, %v6405
        %v6407 = vpop.f32.mrf.mxu0
        %v6408 = vadd.f32 0.0, %v6407
        %6409 = vmatmul.bf16.gmra.mxu0 %v6332
        %v6410 = vpop.f32.mrf.mxu0
        %v6411 = vadd.f32 0.0, %v6410
        %v6412 = vpop.f32.mrf.mxu0
        %v6413 = vadd.f32 0.0, %v6412
        %6414 = vmatmul.bf16.gmra.mxu0 %v6335
        %v6415 = vpop.f32.mrf.mxu0
        %v6416 = vadd.f32 0.0, %v6415
        %v6417 = vpop.f32.mrf.mxu0
        %v6418 = vadd.f32 0.0, %v6417
        %6419 = vmatmul.bf16.gmra.mxu0 %v6338
        %v6420 = vpop.f32.mrf.mxu0
        %v6421 = vadd.f32 0.0, %v6420
        %v6422 = vpop.f32.mrf.mxu0
        %v6423 = vadd.f32 0.0, %v6422
        %6424 = vmatmul.bf16.gmra.mxu0 %v6341
        %v6425 = vpop.f32.mrf.mxu0
        %v6426 = vadd.f32 0.0, %v6425
        %v6427 = vpop.f32.mrf.mxu0
        %v6428 = vadd.f32 0.0, %v6427
        %6429 = vmatmul.bf16.gmra.mxu0 %v6344
        %v6430 = vpop.f32.mrf.mxu0
        %v6431 = vadd.f32 0.0, %v6430
        %v6432 = vpop.f32.mrf.mxu0
        %v6433 = vadd.f32 0.0, %v6432
        %6434 = vdwg.mxu0
        %6435 = vmatpush.bf16.xpose.msra.mxu0 %v4788
        %6436 = vmatpush.bf16.xpose.msra.mxu0 %v4785
        %6437 = vmatpush.bf16.xpose.msra.mxu0 %v4782
        %6438 = vmatpush.bf16.xpose.msra.mxu0 %v4779
        %6439 = vmatpush.bf16.xpose.msra.mxu0 %v4776
        %6440 = vmatpush.bf16.xpose.msra.mxu0 %v4773
        %6441 = vmatpush.bf16.xpose.msra.mxu0 %v4770
        %6442 = vmatpush.bf16.xpose.msra.mxu0 %v4767
        %6443 = vmatmul.bf16.gmra.mxu0 %v6299
        %v6444 = vpop.f32.mrf.mxu0
        %v6445 = vadd.f32 0.0, %v6444
        %v6446 = vpop.f32.mrf.mxu0
        %v6447 = vadd.f32 0.0, %v6446
        %6448 = vmatmul.bf16.gmra.mxu0 %v6302
        %v6449 = vpop.f32.mrf.mxu0
        %v6450 = vadd.f32 0.0, %v6449
        %v6451 = vpop.f32.mrf.mxu0
        %v6452 = vadd.f32 0.0, %v6451
        %6453 = vmatmul.bf16.gmra.mxu0 %v6305
        %v6454 = vpop.f32.mrf.mxu0
        %v6455 = vadd.f32 0.0, %v6454
        %v6456 = vpop.f32.mrf.mxu0
        %v6457 = vadd.f32 0.0, %v6456
        %6458 = vmatmul.bf16.gmra.mxu0 %v6308
        %v6459 = vpop.f32.mrf.mxu0
        %v6460 = vadd.f32 0.0, %v6459
        %v6461 = vpop.f32.mrf.mxu0
        %v6462 = vadd.f32 0.0, %v6461
        %6463 = vmatmul.bf16.gmra.mxu0 %v6311
        %v6464 = vpop.f32.mrf.mxu0
        %v6465 = vadd.f32 0.0, %v6464
        %v6466 = vpop.f32.mrf.mxu0
        %v6467 = vadd.f32 0.0, %v6466
        %6468 = vmatmul.bf16.gmra.mxu0 %v6314
        %v6469 = vpop.f32.mrf.mxu0
        %v6470 = vadd.f32 0.0, %v6469
        %v6471 = vpop.f32.mrf.mxu0
        %v6472 = vadd.f32 0.0, %v6471
        %6473 = vmatmul.bf16.gmra.mxu0 %v6317
        %v6474 = vpop.f32.mrf.mxu0
        %v6475 = vadd.f32 0.0, %v6474
        %v6476 = vpop.f32.mrf.mxu0
        %v6477 = vadd.f32 0.0, %v6476
        %6478 = vmatmul.bf16.gmra.mxu0 %v6320
        %v6479 = vpop.f32.mrf.mxu0
        %v6480 = vadd.f32 0.0, %v6479
        %v6481 = vpop.f32.mrf.mxu0
        %v6482 = vadd.f32 0.0, %v6481
        %6483 = vmatmul.bf16.gmra.mxu0 %v6323
        %v6484 = vpop.f32.mrf.mxu0
        %v6485 = vadd.f32 0.0, %v6484
        %v6486 = vpop.f32.mrf.mxu0
        %v6487 = vadd.f32 0.0, %v6486
        %6488 = vmatmul.bf16.gmra.mxu0 %v6326
        %v6489 = vpop.f32.mrf.mxu0
        %v6490 = vadd.f32 0.0, %v6489
        %v6491 = vpop.f32.mrf.mxu0
        %v6492 = vadd.f32 0.0, %v6491
        %6493 = vmatmul.bf16.gmra.mxu0 %v6329
        %v6494 = vpop.f32.mrf.mxu0
        %v6495 = vadd.f32 0.0, %v6494
        %v6496 = vpop.f32.mrf.mxu0
        %v6497 = vadd.f32 0.0, %v6496
        %6498 = vmatmul.bf16.gmra.mxu0 %v6332
        %v6499 = vpop.f32.mrf.mxu0
        %v6500 = vadd.f32 0.0, %v6499
        %v6501 = vpop.f32.mrf.mxu0
        %v6502 = vadd.f32 0.0, %v6501
        %6503 = vmatmul.bf16.gmra.mxu0 %v6335
        %v6504 = vpop.f32.mrf.mxu0
        %v6505 = vadd.f32 0.0, %v6504
        %v6506 = vpop.f32.mrf.mxu0
        %v6507 = vadd.f32 0.0, %v6506
        %6508 = vmatmul.bf16.gmra.mxu0 %v6338
        %v6509 = vpop.f32.mrf.mxu0
        %v6510 = vadd.f32 0.0, %v6509
        %v6511 = vpop.f32.mrf.mxu0
        %v6512 = vadd.f32 0.0, %v6511
        %6513 = vmatmul.bf16.gmra.mxu0 %v6341
        %v6514 = vpop.f32.mrf.mxu0
        %v6515 = vadd.f32 0.0, %v6514
        %v6516 = vpop.f32.mrf.mxu0
        %v6517 = vadd.f32 0.0, %v6516
        %6518 = vmatmul.bf16.gmra.mxu0 %v6344
        %v6519 = vpop.f32.mrf.mxu0
        %v6520 = vadd.f32 0.0, %v6519
        %v6521 = vpop.f32.mrf.mxu0
        %v6522 = vadd.f32 0.0, %v6521
        %6523 = vdwg.mxu0
        %v6524 = vmax.f32 %v6356, %v6445
        %6525 = vmax.xlane.f32.xlu0 %v6524
        %v6526 = vpop.xlane.xlu0 %6525
        %v6527 = vmax.f32 %v6358, %v6447
        %6528 = vmax.xlane.f32.xlu0 %v6527
        %v6529 = vpop.xlane.xlu0 %6528
        %v6530 = vmax.f32 %v6361, %v6450
        %6531 = vmax.xlane.f32.xlu0 %v6530
        %v6532 = vpop.xlane.xlu0 %6531
        %v6533 = vmax.f32 %v6363, %v6452
        %6534 = vmax.xlane.f32.xlu0 %v6533
        %v6535 = vpop.xlane.xlu0 %6534
        %v6536 = vmax.f32 %v6366, %v6455
        %6537 = vmax.xlane.f32.xlu0 %v6536
        %v6538 = vpop.xlane.xlu0 %6537
        %v6539 = vmax.f32 %v6368, %v6457
        %6540 = vmax.xlane.f32.xlu0 %v6539
        %v6541 = vpop.xlane.xlu0 %6540
        %v6542 = vmax.f32 %v6371, %v6460
        %6543 = vmax.xlane.f32.xlu0 %v6542
        %v6544 = vpop.xlane.xlu0 %6543
        %v6545 = vmax.f32 %v6373, %v6462
        %6546 = vmax.xlane.f32.xlu0 %v6545
        %v6547 = vpop.xlane.xlu0 %6546
        %v6548 = vmax.f32 %v6376, %v6465
        %6549 = vmax.xlane.f32.xlu0 %v6548
        %v6550 = vpop.xlane.xlu0 %6549
        %v6551 = vmax.f32 %v6378, %v6467
        %6552 = vmax.xlane.f32.xlu0 %v6551
        %v6553 = vpop.xlane.xlu0 %6552
        %v6554 = vmax.f32 %v6381, %v6470
        %6555 = vmax.xlane.f32.xlu0 %v6554
        %v6556 = vpop.xlane.xlu0 %6555
        %v6557 = vmax.f32 %v6383, %v6472
        %6558 = vmax.xlane.f32.xlu0 %v6557
        %v6559 = vpop.xlane.xlu0 %6558
        %v6560 = vmax.f32 %v6386, %v6475
        %6561 = vmax.xlane.f32.xlu0 %v6560
        %v6562 = vpop.xlane.xlu0 %6561
        %v6563 = vmax.f32 %v6388, %v6477
        %6564 = vmax.xlane.f32.xlu0 %v6563
        %v6565 = vpop.xlane.xlu0 %6564
        %v6566 = vmax.f32 %v6391, %v6480
        %6567 = vmax.xlane.f32.xlu0 %v6566
        %v6568 = vpop.xlane.xlu0 %6567
        %v6569 = vmax.f32 %v6393, %v6482
        %6570 = vmax.xlane.f32.xlu0 %v6569
        %v6571 = vpop.xlane.xlu0 %6570
        %v6572 = vmax.f32 %v6396, %v6485
        %6573 = vmax.xlane.f32.xlu0 %v6572
        %v6574 = vpop.xlane.xlu0 %6573
        %v6575 = vmax.f32 %v6398, %v6487
        %6576 = vmax.xlane.f32.xlu0 %v6575
        %v6577 = vpop.xlane.xlu0 %6576
        %v6578 = vmax.f32 %v6401, %v6490
        %6579 = vmax.xlane.f32.xlu0 %v6578
        %v6580 = vpop.xlane.xlu0 %6579
        %v6581 = vmax.f32 %v6403, %v6492
        %6582 = vmax.xlane.f32.xlu0 %v6581
        %v6583 = vpop.xlane.xlu0 %6582
        %v6584 = vmax.f32 %v6406, %v6495
        %6585 = vmax.xlane.f32.xlu0 %v6584
        %v6586 = vpop.xlane.xlu0 %6585
        %v6587 = vmax.f32 %v6408, %v6497
        %6588 = vmax.xlane.f32.xlu0 %v6587
        %v6589 = vpop.xlane.xlu0 %6588
        %v6590 = vmax.f32 %v6411, %v6500
        %6591 = vmax.xlane.f32.xlu0 %v6590
        %v6592 = vpop.xlane.xlu0 %6591
        %v6593 = vmax.f32 %v6413, %v6502
        %6594 = vmax.xlane.f32.xlu0 %v6593
        %v6595 = vpop.xlane.xlu0 %6594
        %v6596 = vmax.f32 %v6416, %v6505
        %6597 = vmax.xlane.f32.xlu0 %v6596
        %v6598 = vpop.xlane.xlu0 %6597
        %v6599 = vmax.f32 %v6418, %v6507
        %6600 = vmax.xlane.f32.xlu0 %v6599
        %v6601 = vpop.xlane.xlu0 %6600
        %v6602 = vmax.f32 %v6421, %v6510
        %6603 = vmax.xlane.f32.xlu0 %v6602
        %v6604 = vpop.xlane.xlu0 %6603
        %v6605 = vmax.f32 %v6423, %v6512
        %6606 = vmax.xlane.f32.xlu0 %v6605
        %v6607 = vpop.xlane.xlu0 %6606
        %v6608 = vmax.f32 %v6426, %v6515
        %6609 = vmax.xlane.f32.xlu0 %v6608
        %v6610 = vpop.xlane.xlu0 %6609
        %v6611 = vmax.f32 %v6428, %v6517
        %6612 = vmax.xlane.f32.xlu0 %v6611
        %v6613 = vpop.xlane.xlu0 %6612
        %v6614 = vmax.f32 %v6431, %v6520
        %6615 = vmax.xlane.f32.xlu0 %v6614
        %v6616 = vpop.xlane.xlu0 %6615
        %v6617 = vmax.f32 %v6433, %v6522
        %6618 = vmax.xlane.f32.xlu0 %v6617
        %v6619 = vpop.xlane.xlu0 %6618
        %v6620 = vmax.f32 %v4406, %v6526
        %v6621 = vmax.f32 %v4407, %v6529
        %v6622 = vmax.f32 %v4408, %v6532
        %v6623 = vmax.f32 %v4409, %v6535
        %v6624 = vmax.f32 %v4410, %v6538
        %v6625 = vmax.f32 %v4411, %v6541
        %v6626 = vmax.f32 %v4412, %v6544
        %v6627 = vmax.f32 %v4413, %v6547
        %v6628 = vmax.f32 %v4414, %v6550
        %v6629 = vmax.f32 %v4415, %v6553
        %v6630 = vmax.f32 %v4416, %v6556
        %v6631 = vmax.f32 %v4417, %v6559
        %v6632 = vmax.f32 %v4418, %v6562
        %v6633 = vmax.f32 %v4419, %v6565
        %v6634 = vmax.f32 %v4420, %v6568
        %v6635 = vmax.f32 %v4421, %v6571
        %v6636 = vmax.f32 %v4422, %v6574
        %v6637 = vmax.f32 %v4423, %v6577
        %v6638 = vmax.f32 %v4424, %v6580
        %v6639 = vmax.f32 %v4425, %v6583
        %v6640 = vmax.f32 %v4426, %v6586
        %v6641 = vmax.f32 %v4427, %v6589
        %v6642 = vmax.f32 %v4428, %v6592
        %v6643 = vmax.f32 %v4429, %v6595
        %v6644 = vmax.f32 %v4430, %v6598
        %v6645 = vmax.f32 %v4431, %v6601
        %v6646 = vmax.f32 %v4432, %v6604
        %v6647 = vmax.f32 %v4433, %v6607
        %v6648 = vmax.f32 %v4434, %v6610
        %v6649 = vmax.f32 %v4435, %v6613
        %v6650 = vmax.f32 %v4436, %v6616
        %v6651 = vmax.f32 %v4437, %v6619
        %v6652 = vsub.f32 %v4406, %v6620
        %v6653 = vsub.f32 %v4407, %v6621
        %v6654 = vsub.f32 %v4408, %v6622
        %v6655 = vsub.f32 %v4409, %v6623
        %v6656 = vsub.f32 %v4410, %v6624
        %v6657 = vsub.f32 %v4411, %v6625
        %v6658 = vsub.f32 %v4412, %v6626
        %v6659 = vsub.f32 %v4413, %v6627
        %v6660 = vsub.f32 %v4414, %v6628
        %v6661 = vsub.f32 %v4415, %v6629
        %v6662 = vsub.f32 %v4416, %v6630
        %v6663 = vsub.f32 %v4417, %v6631
        %v6664 = vsub.f32 %v4418, %v6632
        %v6665 = vsub.f32 %v4419, %v6633
        %v6666 = vsub.f32 %v4420, %v6634
        %v6667 = vsub.f32 %v4421, %v6635
        %v6668 = vsub.f32 %v4422, %v6636
        %v6669 = vsub.f32 %v4423, %v6637
        %v6670 = vsub.f32 %v4424, %v6638
        %v6671 = vsub.f32 %v4425, %v6639
        %v6672 = vsub.f32 %v4426, %v6640
        %v6673 = vsub.f32 %v4427, %v6641
        %v6674 = vsub.f32 %v4428, %v6642
        %v6675 = vsub.f32 %v4429, %v6643
        %v6676 = vsub.f32 %v4430, %v6644
        %v6677 = vsub.f32 %v4431, %v6645
        %v6678 = vsub.f32 %v4432, %v6646
        %v6679 = vsub.f32 %v4433, %v6647
        %v6680 = vsub.f32 %v4434, %v6648
        %v6681 = vsub.f32 %v4435, %v6649
        %v6682 = vsub.f32 %v4436, %v6650
        %v6683 = vsub.f32 %v4437, %v6651
        %v6684 = vmul.f32 %v6652, 1.442695
        %v6685 = vpow.pop %v6684
        %v6686 = vmul.f32 %v6653, 1.442695
        %v6687 = vpow.pop %v6686
        %v6688 = vmul.f32 %v6654, 1.442695
        %v6689 = vpow.pop %v6688
        %v6690 = vmul.f32 %v6655, 1.442695
        %v6691 = vpow.pop %v6690
        %v6692 = vmul.f32 %v6656, 1.442695
        %v6693 = vpow.pop %v6692
        %v6694 = vmul.f32 %v6657, 1.442695
        %v6695 = vpow.pop %v6694
        %v6696 = vmul.f32 %v6658, 1.442695
        %v6697 = vpow.pop %v6696
        %v6698 = vmul.f32 %v6659, 1.442695
        %v6699 = vpow.pop %v6698
        %v6700 = vmul.f32 %v6660, 1.442695
        %v6701 = vpow.pop %v6700
        %v6702 = vmul.f32 %v6661, 1.442695
        %v6703 = vpow.pop %v6702
        %v6704 = vmul.f32 %v6662, 1.442695
        %v6705 = vpow.pop %v6704
        %v6706 = vmul.f32 %v6663, 1.442695
        %v6707 = vpow.pop %v6706
        %v6708 = vmul.f32 %v6664, 1.442695
        %v6709 = vpow.pop %v6708
        %v6710 = vmul.f32 %v6665, 1.442695
        %v6711 = vpow.pop %v6710
        %v6712 = vmul.f32 %v6666, 1.442695
        %v6713 = vpow.pop %v6712
        %v6714 = vmul.f32 %v6667, 1.442695
        %v6715 = vpow.pop %v6714
        %v6716 = vmul.f32 %v6668, 1.442695
        %v6717 = vpow.pop %v6716
        %v6718 = vmul.f32 %v6669, 1.442695
        %v6719 = vpow.pop %v6718
        %v6720 = vmul.f32 %v6670, 1.442695
        %v6721 = vpow.pop %v6720
        %v6722 = vmul.f32 %v6671, 1.442695
        %v6723 = vpow.pop %v6722
        %v6724 = vmul.f32 %v6672, 1.442695
        %v6725 = vpow.pop %v6724
        %v6726 = vmul.f32 %v6673, 1.442695
        %v6727 = vpow.pop %v6726
        %v6728 = vmul.f32 %v6674, 1.442695
        %v6729 = vpow.pop %v6728
        %v6730 = vmul.f32 %v6675, 1.442695
        %v6731 = vpow.pop %v6730
        %v6732 = vmul.f32 %v6676, 1.442695
        %v6733 = vpow.pop %v6732
        %v6734 = vmul.f32 %v6677, 1.442695
        %v6735 = vpow.pop %v6734
        %v6736 = vmul.f32 %v6678, 1.442695
        %v6737 = vpow.pop %v6736
        %v6738 = vmul.f32 %v6679, 1.442695
        %v6739 = vpow.pop %v6738
        %v6740 = vmul.f32 %v6680, 1.442695
        %v6741 = vpow.pop %v6740
        %v6742 = vmul.f32 %v6681, 1.442695
        %v6743 = vpow.pop %v6742
        %v6744 = vmul.f32 %v6682, 1.442695
        %v6745 = vpow.pop %v6744
        %v6746 = vmul.f32 %v6683, 1.442695
        %v6747 = vpow.pop %v6746
        %6749 = vset.pattern.permute.xlu0 3
        %6750 = vperm.xlu0 %6749, %v6620
        %v6751 = vpop.permute.xlu0 %6750
        %6754 = vset.pattern.permute.xlu0 3
        %6755 = vperm.xlu0 %6754, %v6621
        %v6756 = vpop.permute.xlu0 %6755
        %6759 = vset.pattern.permute.xlu0 3
        %6760 = vperm.xlu0 %6759, %v6622
        %v6761 = vpop.permute.xlu0 %6760
        %6764 = vset.pattern.permute.xlu0 3
        %6765 = vperm.xlu0 %6764, %v6623
        %v6766 = vpop.permute.xlu0 %6765
        %6769 = vset.pattern.permute.xlu0 3
        %6770 = vperm.xlu0 %6769, %v6624
        %v6771 = vpop.permute.xlu0 %6770
        %6774 = vset.pattern.permute.xlu0 3
        %6775 = vperm.xlu0 %6774, %v6625
        %v6776 = vpop.permute.xlu0 %6775
        %6779 = vset.pattern.permute.xlu0 3
        %6780 = vperm.xlu0 %6779, %v6626
        %v6781 = vpop.permute.xlu0 %6780
        %6784 = vset.pattern.permute.xlu0 3
        %6785 = vperm.xlu0 %6784, %v6627
        %v6786 = vpop.permute.xlu0 %6785
        %6789 = vset.pattern.permute.xlu0 3
        %6790 = vperm.xlu0 %6789, %v6628
        %v6791 = vpop.permute.xlu0 %6790
        %6794 = vset.pattern.permute.xlu0 3
        %6795 = vperm.xlu0 %6794, %v6629
        %v6796 = vpop.permute.xlu0 %6795
        %6799 = vset.pattern.permute.xlu0 3
        %6800 = vperm.xlu0 %6799, %v6630
        %v6801 = vpop.permute.xlu0 %6800
        %6804 = vset.pattern.permute.xlu0 3
        %6805 = vperm.xlu0 %6804, %v6631
        %v6806 = vpop.permute.xlu0 %6805
        %6809 = vset.pattern.permute.xlu0 3
        %6810 = vperm.xlu0 %6809, %v6632
        %v6811 = vpop.permute.xlu0 %6810
        %6814 = vset.pattern.permute.xlu0 3
        %6815 = vperm.xlu0 %6814, %v6633
        %v6816 = vpop.permute.xlu0 %6815
        %6819 = vset.pattern.permute.xlu0 3
        %6820 = vperm.xlu0 %6819, %v6634
        %v6821 = vpop.permute.xlu0 %6820
        %6824 = vset.pattern.permute.xlu0 3
        %6825 = vperm.xlu0 %6824, %v6635
        %v6826 = vpop.permute.xlu0 %6825
        %6829 = vset.pattern.permute.xlu0 3
        %6830 = vperm.xlu0 %6829, %v6636
        %v6831 = vpop.permute.xlu0 %6830
        %6834 = vset.pattern.permute.xlu0 3
        %6835 = vperm.xlu0 %6834, %v6637
        %v6836 = vpop.permute.xlu0 %6835
        %6839 = vset.pattern.permute.xlu0 3
        %6840 = vperm.xlu0 %6839, %v6638
        %v6841 = vpop.permute.xlu0 %6840
        %6844 = vset.pattern.permute.xlu0 3
        %6845 = vperm.xlu0 %6844, %v6639
        %v6846 = vpop.permute.xlu0 %6845
        %6849 = vset.pattern.permute.xlu0 3
        %6850 = vperm.xlu0 %6849, %v6640
        %v6851 = vpop.permute.xlu0 %6850
        %6854 = vset.pattern.permute.xlu0 3
        %6855 = vperm.xlu0 %6854, %v6641
        %v6856 = vpop.permute.xlu0 %6855
        %6859 = vset.pattern.permute.xlu0 3
        %6860 = vperm.xlu0 %6859, %v6642
        %v6861 = vpop.permute.xlu0 %6860
        %6864 = vset.pattern.permute.xlu0 3
        %6865 = vperm.xlu0 %6864, %v6643
        %v6866 = vpop.permute.xlu0 %6865
        %6869 = vset.pattern.permute.xlu0 3
        %6870 = vperm.xlu0 %6869, %v6644
        %v6871 = vpop.permute.xlu0 %6870
        %6874 = vset.pattern.permute.xlu0 3
        %6875 = vperm.xlu0 %6874, %v6645
        %v6876 = vpop.permute.xlu0 %6875
        %6879 = vset.pattern.permute.xlu0 3
        %6880 = vperm.xlu0 %6879, %v6646
        %v6881 = vpop.permute.xlu0 %6880
        %6884 = vset.pattern.permute.xlu0 3
        %6885 = vperm.xlu0 %6884, %v6647
        %v6886 = vpop.permute.xlu0 %6885
        %6889 = vset.pattern.permute.xlu0 3
        %6890 = vperm.xlu0 %6889, %v6648
        %v6891 = vpop.permute.xlu0 %6890
        %6894 = vset.pattern.permute.xlu0 3
        %6895 = vperm.xlu0 %6894, %v6649
        %v6896 = vpop.permute.xlu0 %6895
        %6899 = vset.pattern.permute.xlu0 3
        %6900 = vperm.xlu0 %6899, %v6650
        %v6901 = vpop.permute.xlu0 %6900
        %6904 = vset.pattern.permute.xlu0 3
        %6905 = vperm.xlu0 %6904, %v6651
        %v6906 = vpop.permute.xlu0 %6905
        %v6908 = vsub.f32 %v6356, %v6751
        %v6909 = vsub.f32 %v6445, %v6751
        %v6910 = vsub.f32 %v6358, %v6756
        %v6911 = vsub.f32 %v6447, %v6756
        %v6912 = vsub.f32 %v6361, %v6761
        %v6913 = vsub.f32 %v6450, %v6761
        %v6914 = vsub.f32 %v6363, %v6766
        %v6915 = vsub.f32 %v6452, %v6766
        %v6916 = vsub.f32 %v6366, %v6771
        %v6917 = vsub.f32 %v6455, %v6771
        %v6918 = vsub.f32 %v6368, %v6776
        %v6919 = vsub.f32 %v6457, %v6776
        %v6920 = vsub.f32 %v6371, %v6781
        %v6921 = vsub.f32 %v6460, %v6781
        %v6922 = vsub.f32 %v6373, %v6786
        %v6923 = vsub.f32 %v6462, %v6786
        %v6924 = vsub.f32 %v6376, %v6791
        %v6925 = vsub.f32 %v6465, %v6791
        %v6926 = vsub.f32 %v6378, %v6796
        %v6927 = vsub.f32 %v6467, %v6796
        %v6928 = vsub.f32 %v6381, %v6801
        %v6929 = vsub.f32 %v6470, %v6801
        %v6930 = vsub.f32 %v6383, %v6806
        %v6931 = vsub.f32 %v6472, %v6806
        %v6932 = vsub.f32 %v6386, %v6811
        %v6933 = vsub.f32 %v6475, %v6811
        %v6934 = vsub.f32 %v6388, %v6816
        %v6935 = vsub.f32 %v6477, %v6816
        %v6936 = vsub.f32 %v6391, %v6821
        %v6937 = vsub.f32 %v6480, %v6821
        %v6938 = vsub.f32 %v6393, %v6826
        %v6939 = vsub.f32 %v6482, %v6826
        %v6940 = vsub.f32 %v6396, %v6831
        %v6941 = vsub.f32 %v6485, %v6831
        %v6942 = vsub.f32 %v6398, %v6836
        %v6943 = vsub.f32 %v6487, %v6836
        %v6944 = vsub.f32 %v6401, %v6841
        %v6945 = vsub.f32 %v6490, %v6841
        %v6946 = vsub.f32 %v6403, %v6846
        %v6947 = vsub.f32 %v6492, %v6846
        %v6948 = vsub.f32 %v6406, %v6851
        %v6949 = vsub.f32 %v6495, %v6851
        %v6950 = vsub.f32 %v6408, %v6856
        %v6951 = vsub.f32 %v6497, %v6856
        %v6952 = vsub.f32 %v6411, %v6861
        %v6953 = vsub.f32 %v6500, %v6861
        %v6954 = vsub.f32 %v6413, %v6866
        %v6955 = vsub.f32 %v6502, %v6866
        %v6956 = vsub.f32 %v6416, %v6871
        %v6957 = vsub.f32 %v6505, %v6871
        %v6958 = vsub.f32 %v6418, %v6876
        %v6959 = vsub.f32 %v6507, %v6876
        %v6960 = vsub.f32 %v6421, %v6881
        %v6961 = vsub.f32 %v6510, %v6881
        %v6962 = vsub.f32 %v6423, %v6886
        %v6963 = vsub.f32 %v6512, %v6886
        %v6964 = vsub.f32 %v6426, %v6891
        %v6965 = vsub.f32 %v6515, %v6891
        %v6966 = vsub.f32 %v6428, %v6896
        %v6967 = vsub.f32 %v6517, %v6896
        %v6968 = vsub.f32 %v6431, %v6901
        %v6969 = vsub.f32 %v6520, %v6901
        %v6970 = vsub.f32 %v6433, %v6906
        %v6971 = vsub.f32 %v6522, %v6906
        %v6972 = vmul.f32 %v6908, 1.442695
        %v6973 = vpow.pop %v6972
        %v6974 = vmul.f32 %v6909, 1.442695
        %v6975 = vpow.pop %v6974
        %v6976 = vmul.f32 %v6910, 1.442695
        %v6977 = vpow.pop %v6976
        %v6978 = vmul.f32 %v6911, 1.442695
        %v6979 = vpow.pop %v6978
        %v6980 = vmul.f32 %v6912, 1.442695
        %v6981 = vpow.pop %v6980
        %v6982 = vmul.f32 %v6913, 1.442695
        %v6983 = vpow.pop %v6982
        %v6984 = vmul.f32 %v6914, 1.442695
        %v6985 = vpow.pop %v6984
        %v6986 = vmul.f32 %v6915, 1.442695
        %v6987 = vpow.pop %v6986
        %v6988 = vmul.f32 %v6916, 1.442695
        %v6989 = vpow.pop %v6988
        %v6990 = vmul.f32 %v6917, 1.442695
        %v6991 = vpow.pop %v6990
        %v6992 = vmul.f32 %v6918, 1.442695
        %v6993 = vpow.pop %v6992
        %v6994 = vmul.f32 %v6919, 1.442695
        %v6995 = vpow.pop %v6994
        %v6996 = vmul.f32 %v6920, 1.442695
        %v6997 = vpow.pop %v6996
        %v6998 = vmul.f32 %v6921, 1.442695
        %v6999 = vpow.pop %v6998
        %v7000 = vmul.f32 %v6922, 1.442695
        %v7001 = vpow.pop %v7000
        %v7002 = vmul.f32 %v6923, 1.442695
        %v7003 = vpow.pop %v7002
        %v7004 = vmul.f32 %v6924, 1.442695
        %v7005 = vpow.pop %v7004
        %v7006 = vmul.f32 %v6925, 1.442695
        %v7007 = vpow.pop %v7006
        %v7008 = vmul.f32 %v6926, 1.442695
        %v7009 = vpow.pop %v7008
        %v7010 = vmul.f32 %v6927, 1.442695
        %v7011 = vpow.pop %v7010
        %v7012 = vmul.f32 %v6928, 1.442695
        %v7013 = vpow.pop %v7012
        %v7014 = vmul.f32 %v6929, 1.442695
        %v7015 = vpow.pop %v7014
        %v7016 = vmul.f32 %v6930, 1.442695
        %v7017 = vpow.pop %v7016
        %v7018 = vmul.f32 %v6931, 1.442695
        %v7019 = vpow.pop %v7018
        %v7020 = vmul.f32 %v6932, 1.442695
        %v7021 = vpow.pop %v7020
        %v7022 = vmul.f32 %v6933, 1.442695
        %v7023 = vpow.pop %v7022
        %v7024 = vmul.f32 %v6934, 1.442695
        %v7025 = vpow.pop %v7024
        %v7026 = vmul.f32 %v6935, 1.442695
        %v7027 = vpow.pop %v7026
        %v7028 = vmul.f32 %v6936, 1.442695
        %v7029 = vpow.pop %v7028
        %v7030 = vmul.f32 %v6937, 1.442695
        %v7031 = vpow.pop %v7030
        %v7032 = vmul.f32 %v6938, 1.442695
        %v7033 = vpow.pop %v7032
        %v7034 = vmul.f32 %v6939, 1.442695
        %v7035 = vpow.pop %v7034
        %v7036 = vmul.f32 %v6940, 1.442695
        %v7037 = vpow.pop %v7036
        %v7038 = vmul.f32 %v6941, 1.442695
        %v7039 = vpow.pop %v7038
        %v7040 = vmul.f32 %v6942, 1.442695
        %v7041 = vpow.pop %v7040
        %v7042 = vmul.f32 %v6943, 1.442695
        %v7043 = vpow.pop %v7042
        %v7044 = vmul.f32 %v6944, 1.442695
        %v7045 = vpow.pop %v7044
        %v7046 = vmul.f32 %v6945, 1.442695
        %v7047 = vpow.pop %v7046
        %v7048 = vmul.f32 %v6946, 1.442695
        %v7049 = vpow.pop %v7048
        %v7050 = vmul.f32 %v6947, 1.442695
        %v7051 = vpow.pop %v7050
        %v7052 = vmul.f32 %v6948, 1.442695
        %v7053 = vpow.pop %v7052
        %v7054 = vmul.f32 %v6949, 1.442695
        %v7055 = vpow.pop %v7054
        %v7056 = vmul.f32 %v6950, 1.442695
        %v7057 = vpow.pop %v7056
        %v7058 = vmul.f32 %v6951, 1.442695
        %v7059 = vpow.pop %v7058
        %v7060 = vmul.f32 %v6952, 1.442695
        %v7061 = vpow.pop %v7060
        %v7062 = vmul.f32 %v6953, 1.442695
        %v7063 = vpow.pop %v7062
        %v7064 = vmul.f32 %v6954, 1.442695
        %v7065 = vpow.pop %v7064
        %v7066 = vmul.f32 %v6955, 1.442695
        %v7067 = vpow.pop %v7066
        %v7068 = vmul.f32 %v6956, 1.442695
        %v7069 = vpow.pop %v7068
        %v7070 = vmul.f32 %v6957, 1.442695
        %v7071 = vpow.pop %v7070
        %v7072 = vmul.f32 %v6958, 1.442695
        %v7073 = vpow.pop %v7072
        %v7074 = vmul.f32 %v6959, 1.442695
        %v7075 = vpow.pop %v7074
        %v7076 = vmul.f32 %v6960, 1.442695
        %v7077 = vpow.pop %v7076
        %v7078 = vmul.f32 %v6961, 1.442695
        %v7079 = vpow.pop %v7078
        %v7080 = vmul.f32 %v6962, 1.442695
        %v7081 = vpow.pop %v7080
        %v7082 = vmul.f32 %v6963, 1.442695
        %v7083 = vpow.pop %v7082
        %v7084 = vmul.f32 %v6964, 1.442695
        %v7085 = vpow.pop %v7084
        %v7086 = vmul.f32 %v6965, 1.442695
        %v7087 = vpow.pop %v7086
        %v7088 = vmul.f32 %v6966, 1.442695
        %v7089 = vpow.pop %v7088
        %v7090 = vmul.f32 %v6967, 1.442695
        %v7091 = vpow.pop %v7090
        %v7092 = vmul.f32 %v6968, 1.442695
        %v7093 = vpow.pop %v7092
        %v7094 = vmul.f32 %v6969, 1.442695
        %v7095 = vpow.pop %v7094
        %v7096 = vmul.f32 %v6970, 1.442695
        %v7097 = vpow.pop %v7096
        %v7098 = vmul.f32 %v6971, 1.442695
        %v7099 = vpow.pop %v7098
        %v7100 = vmul.f32 %v6685, %v4438
        %v7101 = vmul.f32 %v6687, %v4439
        %v7102 = vmul.f32 %v6689, %v4440
        %v7103 = vmul.f32 %v6691, %v4441
        %v7104 = vmul.f32 %v6693, %v4442
        %v7105 = vmul.f32 %v6695, %v4443
        %v7106 = vmul.f32 %v6697, %v4444
        %v7107 = vmul.f32 %v6699, %v4445
        %v7108 = vmul.f32 %v6701, %v4446
        %v7109 = vmul.f32 %v6703, %v4447
        %v7110 = vmul.f32 %v6705, %v4448
        %v7111 = vmul.f32 %v6707, %v4449
        %v7112 = vmul.f32 %v6709, %v4450
        %v7113 = vmul.f32 %v6711, %v4451
        %v7114 = vmul.f32 %v6713, %v4452
        %v7115 = vmul.f32 %v6715, %v4453
        %v7116 = vmul.f32 %v6717, %v4454
        %v7117 = vmul.f32 %v6719, %v4455
        %v7118 = vmul.f32 %v6721, %v4456
        %v7119 = vmul.f32 %v6723, %v4457
        %v7120 = vmul.f32 %v6725, %v4458
        %v7121 = vmul.f32 %v6727, %v4459
        %v7122 = vmul.f32 %v6729, %v4460
        %v7123 = vmul.f32 %v6731, %v4461
        %v7124 = vmul.f32 %v6733, %v4462
        %v7125 = vmul.f32 %v6735, %v4463
        %v7126 = vmul.f32 %v6737, %v4464
        %v7127 = vmul.f32 %v6739, %v4465
        %v7128 = vmul.f32 %v6741, %v4466
        %v7129 = vmul.f32 %v6743, %v4467
        %v7130 = vmul.f32 %v6745, %v4468
        %v7131 = vmul.f32 %v6747, %v4469
        %v7132 = vadd.f32 %v6973, %v6975
        %7133 = vadd.xlane.f32.xlu0 %v7132
        %v7134 = vpop.xlane.xlu0 %7133
        %v7135 = vadd.f32 %v6977, %v6979
        %7136 = vadd.xlane.f32.xlu0 %v7135
        %v7137 = vpop.xlane.xlu0 %7136
        %v7138 = vadd.f32 %v6981, %v6983
        %7139 = vadd.xlane.f32.xlu0 %v7138
        %v7140 = vpop.xlane.xlu0 %7139
        %v7141 = vadd.f32 %v6985, %v6987
        %7142 = vadd.xlane.f32.xlu0 %v7141
        %v7143 = vpop.xlane.xlu0 %7142
        %v7144 = vadd.f32 %v6989, %v6991
        %7145 = vadd.xlane.f32.xlu0 %v7144
        %v7146 = vpop.xlane.xlu0 %7145
        %v7147 = vadd.f32 %v6993, %v6995
        %7148 = vadd.xlane.f32.xlu0 %v7147
        %v7149 = vpop.xlane.xlu0 %7148
        %v7150 = vadd.f32 %v6997, %v6999
        %7151 = vadd.xlane.f32.xlu0 %v7150
        %v7152 = vpop.xlane.xlu0 %7151
        %v7153 = vadd.f32 %v7001, %v7003
        %7154 = vadd.xlane.f32.xlu0 %v7153
        %v7155 = vpop.xlane.xlu0 %7154
        %v7156 = vadd.f32 %v7005, %v7007
        %7157 = vadd.xlane.f32.xlu0 %v7156
        %v7158 = vpop.xlane.xlu0 %7157
        %v7159 = vadd.f32 %v7009, %v7011
        %7160 = vadd.xlane.f32.xlu0 %v7159
        %v7161 = vpop.xlane.xlu0 %7160
        %v7162 = vadd.f32 %v7013, %v7015
        %7163 = vadd.xlane.f32.xlu0 %v7162
        %v7164 = vpop.xlane.xlu0 %7163
        %v7165 = vadd.f32 %v7017, %v7019
        %7166 = vadd.xlane.f32.xlu0 %v7165
        %v7167 = vpop.xlane.xlu0 %7166
        %v7168 = vadd.f32 %v7021, %v7023
        %7169 = vadd.xlane.f32.xlu0 %v7168
        %v7170 = vpop.xlane.xlu0 %7169
        %v7171 = vadd.f32 %v7025, %v7027
        %7172 = vadd.xlane.f32.xlu0 %v7171
        %v7173 = vpop.xlane.xlu0 %7172
        %v7174 = vadd.f32 %v7029, %v7031
        %7175 = vadd.xlane.f32.xlu0 %v7174
        %v7176 = vpop.xlane.xlu0 %7175
        %v7177 = vadd.f32 %v7033, %v7035
        %7178 = vadd.xlane.f32.xlu0 %v7177
        %v7179 = vpop.xlane.xlu0 %7178
        %v7180 = vadd.f32 %v7037, %v7039
        %7181 = vadd.xlane.f32.xlu0 %v7180
        %v7182 = vpop.xlane.xlu0 %7181
        %v7183 = vadd.f32 %v7041, %v7043
        %7184 = vadd.xlane.f32.xlu0 %v7183
        %v7185 = vpop.xlane.xlu0 %7184
        %v7186 = vadd.f32 %v7045, %v7047
        %7187 = vadd.xlane.f32.xlu0 %v7186
        %v7188 = vpop.xlane.xlu0 %7187
        %v7189 = vadd.f32 %v7049, %v7051
        %7190 = vadd.xlane.f32.xlu0 %v7189
        %v7191 = vpop.xlane.xlu0 %7190
        %v7192 = vadd.f32 %v7053, %v7055
        %7193 = vadd.xlane.f32.xlu0 %v7192
        %v7194 = vpop.xlane.xlu0 %7193
        %v7195 = vadd.f32 %v7057, %v7059
        %7196 = vadd.xlane.f32.xlu0 %v7195
        %v7197 = vpop.xlane.xlu0 %7196
        %v7198 = vadd.f32 %v7061, %v7063
        %7199 = vadd.xlane.f32.xlu0 %v7198
        %v7200 = vpop.xlane.xlu0 %7199
        %v7201 = vadd.f32 %v7065, %v7067
        %7202 = vadd.xlane.f32.xlu0 %v7201
        %v7203 = vpop.xlane.xlu0 %7202
        %v7204 = vadd.f32 %v7069, %v7071
        %7205 = vadd.xlane.f32.xlu0 %v7204
        %v7206 = vpop.xlane.xlu0 %7205
        %v7207 = vadd.f32 %v7073, %v7075
        %7208 = vadd.xlane.f32.xlu0 %v7207
        %v7209 = vpop.xlane.xlu0 %7208
        %v7210 = vadd.f32 %v7077, %v7079
        %7211 = vadd.xlane.f32.xlu0 %v7210
        %v7212 = vpop.xlane.xlu0 %7211
        %v7213 = vadd.f32 %v7081, %v7083
        %7214 = vadd.xlane.f32.xlu0 %v7213
        %v7215 = vpop.xlane.xlu0 %7214
        %v7216 = vadd.f32 %v7085, %v7087
        %7217 = vadd.xlane.f32.xlu0 %v7216
        %v7218 = vpop.xlane.xlu0 %7217
        %v7219 = vadd.f32 %v7089, %v7091
        %7220 = vadd.xlane.f32.xlu0 %v7219
        %v7221 = vpop.xlane.xlu0 %7220
        %v7222 = vadd.f32 %v7093, %v7095
        %7223 = vadd.xlane.f32.xlu0 %v7222
        %v7224 = vpop.xlane.xlu0 %7223
        %v7225 = vadd.f32 %v7097, %v7099
        %7226 = vadd.xlane.f32.xlu0 %v7225
        %v7227 = vpop.xlane.xlu0 %7226
        %v7228 = vadd.f32 %v7100, %v7134
        %v7229 = vadd.f32 %v7101, %v7137
        %v7230 = vadd.f32 %v7102, %v7140
        %v7231 = vadd.f32 %v7103, %v7143
        %v7232 = vadd.f32 %v7104, %v7146
        %v7233 = vadd.f32 %v7105, %v7149
        %v7234 = vadd.f32 %v7106, %v7152
        %v7235 = vadd.f32 %v7107, %v7155
        %v7236 = vadd.f32 %v7108, %v7158
        %v7237 = vadd.f32 %v7109, %v7161
        %v7238 = vadd.f32 %v7110, %v7164
        %v7239 = vadd.f32 %v7111, %v7167
        %v7240 = vadd.f32 %v7112, %v7170
        %v7241 = vadd.f32 %v7113, %v7173
        %v7242 = vadd.f32 %v7114, %v7176
        %v7243 = vadd.f32 %v7115, %v7179
        %v7244 = vadd.f32 %v7116, %v7182
        %v7245 = vadd.f32 %v7117, %v7185
        %v7246 = vadd.f32 %v7118, %v7188
        %v7247 = vadd.f32 %v7119, %v7191
        %v7248 = vadd.f32 %v7120, %v7194
        %v7249 = vadd.f32 %v7121, %v7197
        %v7250 = vadd.f32 %v7122, %v7200
        %v7251 = vadd.f32 %v7123, %v7203
        %v7252 = vadd.f32 %v7124, %v7206
        %v7253 = vadd.f32 %v7125, %v7209
        %v7254 = vadd.f32 %v7126, %v7212
        %v7255 = vadd.f32 %v7127, %v7215
        %v7256 = vadd.f32 %v7128, %v7218
        %v7257 = vadd.f32 %v7129, %v7221
        %v7258 = vadd.f32 %v7130, %v7224
        %v7259 = vadd.f32 %v7131, %v7227
        %v7260 = vpack.c.bf16 %v6977, %v6973
        %v7261 = vpack.c.bf16 %v6979, %v6975
        %v7262 = vpack.c.bf16 %v6985, %v6981
        %v7263 = vpack.c.bf16 %v6987, %v6983
        %v7264 = vpack.c.bf16 %v6993, %v6989
        %v7265 = vpack.c.bf16 %v6995, %v6991
        %v7266 = vpack.c.bf16 %v7001, %v6997
        %v7267 = vpack.c.bf16 %v7003, %v6999
        %v7268 = vpack.c.bf16 %v7009, %v7005
        %v7269 = vpack.c.bf16 %v7011, %v7007
        %v7270 = vpack.c.bf16 %v7017, %v7013
        %v7271 = vpack.c.bf16 %v7019, %v7015
        %v7272 = vpack.c.bf16 %v7025, %v7021
        %v7273 = vpack.c.bf16 %v7027, %v7023
        %v7274 = vpack.c.bf16 %v7033, %v7029
        %v7275 = vpack.c.bf16 %v7035, %v7031
        %v7276 = vpack.c.bf16 %v7041, %v7037
        %v7277 = vpack.c.bf16 %v7043, %v7039
        %v7278 = vpack.c.bf16 %v7049, %v7045
        %v7279 = vpack.c.bf16 %v7051, %v7047
        %v7280 = vpack.c.bf16 %v7057, %v7053
        %v7281 = vpack.c.bf16 %v7059, %v7055
        %v7282 = vpack.c.bf16 %v7065, %v7061
        %v7283 = vpack.c.bf16 %v7067, %v7063
        %v7284 = vpack.c.bf16 %v7073, %v7069
        %v7285 = vpack.c.bf16 %v7075, %v7071
        %v7286 = vpack.c.bf16 %v7081, %v7077
        %v7287 = vpack.c.bf16 %v7083, %v7079
        %v7288 = vpack.c.bf16 %v7089, %v7085
        %v7289 = vpack.c.bf16 %v7091, %v7087
        %v7290 = vpack.c.bf16 %v7097, %v7093
        %v7291 = vpack.c.bf16 %v7099, %v7095
        %7292 = vmatpush.bf16.msra.mxu0 %v5831
        %7293 = vmatpush.bf16.msra.mxu0 %v5829
        %7294 = vmatpush.bf16.msra.mxu0 %v5827
        %7295 = vmatpush.bf16.msra.mxu0 %v5825
        %7296 = vmatpush.bf16.msra.mxu0 %v5823
        %7297 = vmatpush.bf16.msra.mxu0 %v5821
        %7298 = vmatpush.bf16.msra.mxu0 %v5819
        %7299 = vmatpush.bf16.msra.mxu0 %v5817
        %7300 = vmatmul.bf16.gmra.mxu0 %v7260
        %v7301 = vpop.f32.mrf.mxu0
        %v7302 = vadd.f32 0.0, %v7301
        %v7303 = vpop.f32.mrf.mxu0
        %v7304 = vadd.f32 0.0, %v7303
        %7305 = vmatmul.bf16.gmra.mxu0 %v7262
        %v7306 = vpop.f32.mrf.mxu0
        %v7307 = vadd.f32 0.0, %v7306
        %v7308 = vpop.f32.mrf.mxu0
        %v7309 = vadd.f32 0.0, %v7308
        %7310 = vmatmul.bf16.gmra.mxu0 %v7264
        %v7311 = vpop.f32.mrf.mxu0
        %v7312 = vadd.f32 0.0, %v7311
        %v7313 = vpop.f32.mrf.mxu0
        %v7314 = vadd.f32 0.0, %v7313
        %7315 = vmatmul.bf16.gmra.mxu0 %v7266
        %v7316 = vpop.f32.mrf.mxu0
        %v7317 = vadd.f32 0.0, %v7316
        %v7318 = vpop.f32.mrf.mxu0
        %v7319 = vadd.f32 0.0, %v7318
        %7320 = vmatmul.bf16.gmra.mxu0 %v7268
        %v7321 = vpop.f32.mrf.mxu0
        %v7322 = vadd.f32 0.0, %v7321
        %v7323 = vpop.f32.mrf.mxu0
        %v7324 = vadd.f32 0.0, %v7323
        %7325 = vmatmul.bf16.gmra.mxu0 %v7270
        %v7326 = vpop.f32.mrf.mxu0
        %v7327 = vadd.f32 0.0, %v7326
        %v7328 = vpop.f32.mrf.mxu0
        %v7329 = vadd.f32 0.0, %v7328
        %7330 = vmatmul.bf16.gmra.mxu0 %v7272
        %v7331 = vpop.f32.mrf.mxu0
        %v7332 = vadd.f32 0.0, %v7331
        %v7333 = vpop.f32.mrf.mxu0
        %v7334 = vadd.f32 0.0, %v7333
        %7335 = vmatmul.bf16.gmra.mxu0 %v7274
        %v7336 = vpop.f32.mrf.mxu0
        %v7337 = vadd.f32 0.0, %v7336
        %v7338 = vpop.f32.mrf.mxu0
        %v7339 = vadd.f32 0.0, %v7338
        %7340 = vmatmul.bf16.gmra.mxu0 %v7276
        %v7341 = vpop.f32.mrf.mxu0
        %v7342 = vadd.f32 0.0, %v7341
        %v7343 = vpop.f32.mrf.mxu0
        %v7344 = vadd.f32 0.0, %v7343
        %7345 = vmatmul.bf16.gmra.mxu0 %v7278
        %v7346 = vpop.f32.mrf.mxu0
        %v7347 = vadd.f32 0.0, %v7346
        %v7348 = vpop.f32.mrf.mxu0
        %v7349 = vadd.f32 0.0, %v7348
        %7350 = vmatmul.bf16.gmra.mxu0 %v7280
        %v7351 = vpop.f32.mrf.mxu0
        %v7352 = vadd.f32 0.0, %v7351
        %v7353 = vpop.f32.mrf.mxu0
        %v7354 = vadd.f32 0.0, %v7353
        %7355 = vmatmul.bf16.gmra.mxu0 %v7282
        %v7356 = vpop.f32.mrf.mxu0
        %v7357 = vadd.f32 0.0, %v7356
        %v7358 = vpop.f32.mrf.mxu0
        %v7359 = vadd.f32 0.0, %v7358
        %7360 = vmatmul.bf16.gmra.mxu0 %v7284
        %v7361 = vpop.f32.mrf.mxu0
        %v7362 = vadd.f32 0.0, %v7361
        %v7363 = vpop.f32.mrf.mxu0
        %v7364 = vadd.f32 0.0, %v7363
        %7365 = vmatmul.bf16.gmra.mxu0 %v7286
        %v7366 = vpop.f32.mrf.mxu0
        %v7367 = vadd.f32 0.0, %v7366
        %v7368 = vpop.f32.mrf.mxu0
        %v7369 = vadd.f32 0.0, %v7368
        %7370 = vmatmul.bf16.gmra.mxu0 %v7288
        %v7371 = vpop.f32.mrf.mxu0
        %v7372 = vadd.f32 0.0, %v7371
        %v7373 = vpop.f32.mrf.mxu0
        %v7374 = vadd.f32 0.0, %v7373
        %7375 = vmatmul.bf16.gmra.mxu0 %v7290
        %v7376 = vpop.f32.mrf.mxu0
        %v7377 = vadd.f32 0.0, %v7376
        %v7378 = vpop.f32.mrf.mxu0
        %v7379 = vadd.f32 0.0, %v7378
        %7380 = vdwg.mxu0
        %7381 = vmatpush.bf16.msra.mxu0 %v5847
        %7382 = vmatpush.bf16.msra.mxu0 %v5845
        %7383 = vmatpush.bf16.msra.mxu0 %v5843
        %7384 = vmatpush.bf16.msra.mxu0 %v5841
        %7385 = vmatpush.bf16.msra.mxu0 %v5839
        %7386 = vmatpush.bf16.msra.mxu0 %v5837
        %7387 = vmatpush.bf16.msra.mxu0 %v5835
        %7388 = vmatpush.bf16.msra.mxu0 %v5833
        %7389 = vmatmul.bf16.gmra.mxu0 %v7261
        %v7390 = vpop.f32.mrf.mxu0
        %v7391 = vadd.f32 %v7302, %v7390
        %v7392 = vpop.f32.mrf.mxu0
        %v7393 = vadd.f32 %v7304, %v7392
        %7394 = vmatmul.bf16.gmra.mxu0 %v7263
        %v7395 = vpop.f32.mrf.mxu0
        %v7396 = vadd.f32 %v7307, %v7395
        %v7397 = vpop.f32.mrf.mxu0
        %v7398 = vadd.f32 %v7309, %v7397
        %7399 = vmatmul.bf16.gmra.mxu0 %v7265
        %v7400 = vpop.f32.mrf.mxu0
        %v7401 = vadd.f32 %v7312, %v7400
        %v7402 = vpop.f32.mrf.mxu0
        %v7403 = vadd.f32 %v7314, %v7402
        %7404 = vmatmul.bf16.gmra.mxu0 %v7267
        %v7405 = vpop.f32.mrf.mxu0
        %v7406 = vadd.f32 %v7317, %v7405
        %v7407 = vpop.f32.mrf.mxu0
        %v7408 = vadd.f32 %v7319, %v7407
        %7409 = vmatmul.bf16.gmra.mxu0 %v7269
        %v7410 = vpop.f32.mrf.mxu0
        %v7411 = vadd.f32 %v7322, %v7410
        %v7412 = vpop.f32.mrf.mxu0
        %v7413 = vadd.f32 %v7324, %v7412
        %7414 = vmatmul.bf16.gmra.mxu0 %v7271
        %v7415 = vpop.f32.mrf.mxu0
        %v7416 = vadd.f32 %v7327, %v7415
        %v7417 = vpop.f32.mrf.mxu0
        %v7418 = vadd.f32 %v7329, %v7417
        %7419 = vmatmul.bf16.gmra.mxu0 %v7273
        %v7420 = vpop.f32.mrf.mxu0
        %v7421 = vadd.f32 %v7332, %v7420
        %v7422 = vpop.f32.mrf.mxu0
        %v7423 = vadd.f32 %v7334, %v7422
        %7424 = vmatmul.bf16.gmra.mxu0 %v7275
        %v7425 = vpop.f32.mrf.mxu0
        %v7426 = vadd.f32 %v7337, %v7425
        %v7427 = vpop.f32.mrf.mxu0
        %v7428 = vadd.f32 %v7339, %v7427
        %7429 = vmatmul.bf16.gmra.mxu0 %v7277
        %v7430 = vpop.f32.mrf.mxu0
        %v7431 = vadd.f32 %v7342, %v7430
        %v7432 = vpop.f32.mrf.mxu0
        %v7433 = vadd.f32 %v7344, %v7432
        %7434 = vmatmul.bf16.gmra.mxu0 %v7279
        %v7435 = vpop.f32.mrf.mxu0
        %v7436 = vadd.f32 %v7347, %v7435
        %v7437 = vpop.f32.mrf.mxu0
        %v7438 = vadd.f32 %v7349, %v7437
        %7439 = vmatmul.bf16.gmra.mxu0 %v7281
        %v7440 = vpop.f32.mrf.mxu0
        %v7441 = vadd.f32 %v7352, %v7440
        %v7442 = vpop.f32.mrf.mxu0
        %v7443 = vadd.f32 %v7354, %v7442
        %7444 = vmatmul.bf16.gmra.mxu0 %v7283
        %v7445 = vpop.f32.mrf.mxu0
        %v7446 = vadd.f32 %v7357, %v7445
        %v7447 = vpop.f32.mrf.mxu0
        %v7448 = vadd.f32 %v7359, %v7447
        %7449 = vmatmul.bf16.gmra.mxu0 %v7285
        %v7450 = vpop.f32.mrf.mxu0
        %v7451 = vadd.f32 %v7362, %v7450
        %v7452 = vpop.f32.mrf.mxu0
        %v7453 = vadd.f32 %v7364, %v7452
        %7454 = vmatmul.bf16.gmra.mxu0 %v7287
        %v7455 = vpop.f32.mrf.mxu0
        %v7456 = vadd.f32 %v7367, %v7455
        %v7457 = vpop.f32.mrf.mxu0
        %v7458 = vadd.f32 %v7369, %v7457
        %7459 = vmatmul.bf16.gmra.mxu0 %v7289
        %v7460 = vpop.f32.mrf.mxu0
        %v7461 = vadd.f32 %v7372, %v7460
        %v7462 = vpop.f32.mrf.mxu0
        %v7463 = vadd.f32 %v7374, %v7462
        %7464 = vmatmul.bf16.gmra.mxu0 %v7291
        %v7465 = vpop.f32.mrf.mxu0
        %v7466 = vadd.f32 %v7377, %v7465
        %v7467 = vpop.f32.mrf.mxu0
        %v7468 = vadd.f32 %v7379, %v7467
        %7469 = vdwg.mxu0
        %7471 = vset.pattern.permute.xlu0 3
        %7472 = vperm.xlu0 %7471, %v6685
        %v7473 = vpop.permute.xlu0 %7472
        %7476 = vset.pattern.permute.xlu0 3
        %7477 = vperm.xlu0 %7476, %v6687
        %v7478 = vpop.permute.xlu0 %7477
        %7481 = vset.pattern.permute.xlu0 3
        %7482 = vperm.xlu0 %7481, %v6689
        %v7483 = vpop.permute.xlu0 %7482
        %7486 = vset.pattern.permute.xlu0 3
        %7487 = vperm.xlu0 %7486, %v6691
        %v7488 = vpop.permute.xlu0 %7487
        %7491 = vset.pattern.permute.xlu0 3
        %7492 = vperm.xlu0 %7491, %v6693
        %v7493 = vpop.permute.xlu0 %7492
        %7496 = vset.pattern.permute.xlu0 3
        %7497 = vperm.xlu0 %7496, %v6695
        %v7498 = vpop.permute.xlu0 %7497
        %7501 = vset.pattern.permute.xlu0 3
        %7502 = vperm.xlu0 %7501, %v6697
        %v7503 = vpop.permute.xlu0 %7502
        %7506 = vset.pattern.permute.xlu0 3
        %7507 = vperm.xlu0 %7506, %v6699
        %v7508 = vpop.permute.xlu0 %7507
        %7511 = vset.pattern.permute.xlu0 3
        %7512 = vperm.xlu0 %7511, %v6701
        %v7513 = vpop.permute.xlu0 %7512
        %7516 = vset.pattern.permute.xlu0 3
        %7517 = vperm.xlu0 %7516, %v6703
        %v7518 = vpop.permute.xlu0 %7517
        %7521 = vset.pattern.permute.xlu0 3
        %7522 = vperm.xlu0 %7521, %v6705
        %v7523 = vpop.permute.xlu0 %7522
        %7526 = vset.pattern.permute.xlu0 3
        %7527 = vperm.xlu0 %7526, %v6707
        %v7528 = vpop.permute.xlu0 %7527
        %7531 = vset.pattern.permute.xlu0 3
        %7532 = vperm.xlu0 %7531, %v6709
        %v7533 = vpop.permute.xlu0 %7532
        %7536 = vset.pattern.permute.xlu0 3
        %7537 = vperm.xlu0 %7536, %v6711
        %v7538 = vpop.permute.xlu0 %7537
        %7541 = vset.pattern.permute.xlu0 3
        %7542 = vperm.xlu0 %7541, %v6713
        %v7543 = vpop.permute.xlu0 %7542
        %7546 = vset.pattern.permute.xlu0 3
        %7547 = vperm.xlu0 %7546, %v6715
        %v7548 = vpop.permute.xlu0 %7547
        %7551 = vset.pattern.permute.xlu0 3
        %7552 = vperm.xlu0 %7551, %v6717
        %v7553 = vpop.permute.xlu0 %7552
        %7556 = vset.pattern.permute.xlu0 3
        %7557 = vperm.xlu0 %7556, %v6719
        %v7558 = vpop.permute.xlu0 %7557
        %7561 = vset.pattern.permute.xlu0 3
        %7562 = vperm.xlu0 %7561, %v6721
        %v7563 = vpop.permute.xlu0 %7562
        %7566 = vset.pattern.permute.xlu0 3
        %7567 = vperm.xlu0 %7566, %v6723
        %v7568 = vpop.permute.xlu0 %7567
        %7571 = vset.pattern.permute.xlu0 3
        %7572 = vperm.xlu0 %7571, %v6725
        %v7573 = vpop.permute.xlu0 %7572
        %7576 = vset.pattern.permute.xlu0 3
        %7577 = vperm.xlu0 %7576, %v6727
        %v7578 = vpop.permute.xlu0 %7577
        %7581 = vset.pattern.permute.xlu0 3
        %7582 = vperm.xlu0 %7581, %v6729
        %v7583 = vpop.permute.xlu0 %7582
        %7586 = vset.pattern.permute.xlu0 3
        %7587 = vperm.xlu0 %7586, %v6731
        %v7588 = vpop.permute.xlu0 %7587
        %7591 = vset.pattern.permute.xlu0 3
        %7592 = vperm.xlu0 %7591, %v6733
        %v7593 = vpop.permute.xlu0 %7592
        %7596 = vset.pattern.permute.xlu0 3
        %7597 = vperm.xlu0 %7596, %v6735
        %v7598 = vpop.permute.xlu0 %7597
        %7601 = vset.pattern.permute.xlu0 3
        %7602 = vperm.xlu0 %7601, %v6737
        %v7603 = vpop.permute.xlu0 %7602
        %7606 = vset.pattern.permute.xlu0 3
        %7607 = vperm.xlu0 %7606, %v6739
        %v7608 = vpop.permute.xlu0 %7607
        %7611 = vset.pattern.permute.xlu0 3
        %7612 = vperm.xlu0 %7611, %v6741
        %v7613 = vpop.permute.xlu0 %7612
        %7616 = vset.pattern.permute.xlu0 3
        %7617 = vperm.xlu0 %7616, %v6743
        %v7618 = vpop.permute.xlu0 %7617
        %7621 = vset.pattern.permute.xlu0 3
        %7622 = vperm.xlu0 %7621, %v6745
        %v7623 = vpop.permute.xlu0 %7622
        %7626 = vset.pattern.permute.xlu0 3
        %7627 = vperm.xlu0 %7626, %v6747
        %v7628 = vpop.permute.xlu0 %7627
        %v7630 = vmul.f32 %v7473, %v4470
        %v7631 = vmul.f32 %v7478, %v4471
        %v7632 = vmul.f32 %v7483, %v4472
        %v7633 = vmul.f32 %v7488, %v4473
        %v7634 = vmul.f32 %v7493, %v4474
        %v7635 = vmul.f32 %v7498, %v4475
        %v7636 = vmul.f32 %v7503, %v4476
        %v7637 = vmul.f32 %v7508, %v4477
        %v7638 = vmul.f32 %v7513, %v4478
        %v7639 = vmul.f32 %v7518, %v4479
        %v7640 = vmul.f32 %v7523, %v4480
        %v7641 = vmul.f32 %v7528, %v4481
        %v7642 = vmul.f32 %v7533, %v4482
        %v7643 = vmul.f32 %v7538, %v4483
        %v7644 = vmul.f32 %v7543, %v4484
        %v7645 = vmul.f32 %v7548, %v4485
        %v7646 = vmul.f32 %v7553, %v4486
        %v7647 = vmul.f32 %v7558, %v4487
        %v7648 = vmul.f32 %v7563, %v4488
        %v7649 = vmul.f32 %v7568, %v4489
        %v7650 = vmul.f32 %v7573, %v4490
        %v7651 = vmul.f32 %v7578, %v4491
        %v7652 = vmul.f32 %v7583, %v4492
        %v7653 = vmul.f32 %v7588, %v4493
        %v7654 = vmul.f32 %v7593, %v4494
        %v7655 = vmul.f32 %v7598, %v4495
        %v7656 = vmul.f32 %v7603, %v4496
        %v7657 = vmul.f32 %v7608, %v4497
        %v7658 = vmul.f32 %v7613, %v4498
        %v7659 = vmul.f32 %v7618, %v4499
        %v7660 = vmul.f32 %v7623, %v4500
        %v7661 = vmul.f32 %v7628, %v4501
        %7694 = vrot.lane.b32.xlu0 %v7391, 64
        %v7695 = vpop.permute.xlu0 %7694
        %7696 = vrot.lane.b32.xlu0 %v7393, 64
        %v7697 = vpop.permute.xlu0 %7696
        %7698 = vrot.lane.b32.xlu0 %v7396, 64
        %v7699 = vpop.permute.xlu0 %7698
        %7700 = vrot.lane.b32.xlu0 %v7398, 64
        %v7701 = vpop.permute.xlu0 %7700
        %7702 = vrot.lane.b32.xlu0 %v7401, 64
        %v7703 = vpop.permute.xlu0 %7702
        %7704 = vrot.lane.b32.xlu0 %v7403, 64
        %v7705 = vpop.permute.xlu0 %7704
        %7706 = vrot.lane.b32.xlu0 %v7406, 64
        %v7707 = vpop.permute.xlu0 %7706
        %7708 = vrot.lane.b32.xlu0 %v7408, 64
        %v7709 = vpop.permute.xlu0 %7708
        %7710 = vrot.lane.b32.xlu0 %v7411, 64
        %v7711 = vpop.permute.xlu0 %7710
        %7712 = vrot.lane.b32.xlu0 %v7413, 64
        %v7713 = vpop.permute.xlu0 %7712
        %7714 = vrot.lane.b32.xlu0 %v7416, 64
        %v7715 = vpop.permute.xlu0 %7714
        %7716 = vrot.lane.b32.xlu0 %v7418, 64
        %v7717 = vpop.permute.xlu0 %7716
        %7718 = vrot.lane.b32.xlu0 %v7421, 64
        %v7719 = vpop.permute.xlu0 %7718
        %7720 = vrot.lane.b32.xlu0 %v7423, 64
        %v7721 = vpop.permute.xlu0 %7720
        %7722 = vrot.lane.b32.xlu0 %v7426, 64
        %v7723 = vpop.permute.xlu0 %7722
        %7724 = vrot.lane.b32.xlu0 %v7428, 64
        %v7725 = vpop.permute.xlu0 %7724
        %7726 = vrot.lane.b32.xlu0 %v7431, 64
        %v7727 = vpop.permute.xlu0 %7726
        %7728 = vrot.lane.b32.xlu0 %v7433, 64
        %v7729 = vpop.permute.xlu0 %7728
        %7730 = vrot.lane.b32.xlu0 %v7436, 64
        %v7731 = vpop.permute.xlu0 %7730
        %7732 = vrot.lane.b32.xlu0 %v7438, 64
        %v7733 = vpop.permute.xlu0 %7732
        %7734 = vrot.lane.b32.xlu0 %v7441, 64
        %v7735 = vpop.permute.xlu0 %7734
        %7736 = vrot.lane.b32.xlu0 %v7443, 64
        %v7737 = vpop.permute.xlu0 %7736
        %7738 = vrot.lane.b32.xlu0 %v7446, 64
        %v7739 = vpop.permute.xlu0 %7738
        %7740 = vrot.lane.b32.xlu0 %v7448, 64
        %v7741 = vpop.permute.xlu0 %7740
        %7742 = vrot.lane.b32.xlu0 %v7451, 64
        %v7743 = vpop.permute.xlu0 %7742
        %7744 = vrot.lane.b32.xlu0 %v7453, 64
        %v7745 = vpop.permute.xlu0 %7744
        %7746 = vrot.lane.b32.xlu0 %v7456, 64
        %v7747 = vpop.permute.xlu0 %7746
        %7748 = vrot.lane.b32.xlu0 %v7458, 64
        %v7749 = vpop.permute.xlu0 %7748
        %7750 = vrot.lane.b32.xlu0 %v7461, 64
        %v7751 = vpop.permute.xlu0 %7750
        %7752 = vrot.lane.b32.xlu0 %v7463, 64
        %v7753 = vpop.permute.xlu0 %7752
        %7754 = vrot.lane.b32.xlu0 %v7466, 64
        %v7755 = vpop.permute.xlu0 %7754
        %7756 = vrot.lane.b32.xlu0 %v7468, 64
        %v7757 = vpop.permute.xlu0 %7756
        %v7790 = vadd.f32 %v7630, %v7695
        %v7791 = vadd.f32 %v7631, %v7697
        %v7792 = vadd.f32 %v7632, %v7699
        %v7793 = vadd.f32 %v7633, %v7701
        %v7794 = vadd.f32 %v7634, %v7703
        %v7795 = vadd.f32 %v7635, %v7705
        %v7796 = vadd.f32 %v7636, %v7707
        %v7797 = vadd.f32 %v7637, %v7709
        %v7798 = vadd.f32 %v7638, %v7711
        %v7799 = vadd.f32 %v7639, %v7713
        %v7800 = vadd.f32 %v7640, %v7715
        %v7801 = vadd.f32 %v7641, %v7717
        %v7802 = vadd.f32 %v7642, %v7719
        %v7803 = vadd.f32 %v7643, %v7721
        %v7804 = vadd.f32 %v7644, %v7723
        %v7805 = vadd.f32 %v7645, %v7725
        %v7806 = vadd.f32 %v7646, %v7727
        %v7807 = vadd.f32 %v7647, %v7729
        %v7808 = vadd.f32 %v7648, %v7731
        %v7809 = vadd.f32 %v7649, %v7733
        %v7810 = vadd.f32 %v7650, %v7735
        %v7811 = vadd.f32 %v7651, %v7737
        %v7812 = vadd.f32 %v7652, %v7739
        %v7813 = vadd.f32 %v7653, %v7741
        %v7814 = vadd.f32 %v7654, %v7743
        %v7815 = vadd.f32 %v7655, %v7745
        %v7816 = vadd.f32 %v7656, %v7747
        %v7817 = vadd.f32 %v7657, %v7749
        %v7818 = vadd.f32 %v7658, %v7751
        %v7819 = vadd.f32 %v7659, %v7753
        %v7820 = vadd.f32 %v7660, %v7755
        %v7821 = vadd.f32 %v7661, %v7757
        %7822 = vrot.lane.b32.xlu0 %v5064, 126
        %v7823 = vpop.permute.xlu0 %7822
        %7824 = vrot.lane.b32.xlu0 %v5065, 126
        %v7825 = vpop.permute.xlu0 %7824
        %7826 = vrot.lane.b32.xlu0 %v5066, 126
        %v7827 = vpop.permute.xlu0 %7826
        %7828 = vrot.lane.b32.xlu0 %v5067, 126
        %v7829 = vpop.permute.xlu0 %7828
        %7830 = vrot.lane.b32.xlu0 %v5068, 126
        %v7831 = vpop.permute.xlu0 %7830
        %7832 = vrot.lane.b32.xlu0 %v5069, 126
        %v7833 = vpop.permute.xlu0 %7832
        %7834 = vrot.lane.b32.xlu0 %v5070, 126
        %v7835 = vpop.permute.xlu0 %7834
        %7836 = vrot.lane.b32.xlu0 %v5071, 126
        %v7837 = vpop.permute.xlu0 %7836
        %7838 = vrot.lane.b32.xlu0 %v5072, 126
        %v7839 = vpop.permute.xlu0 %7838
        %7840 = vrot.lane.b32.xlu0 %v5073, 126
        %v7841 = vpop.permute.xlu0 %7840
        %7842 = vrot.lane.b32.xlu0 %v5074, 126
        %v7843 = vpop.permute.xlu0 %7842
        %7844 = vrot.lane.b32.xlu0 %v5075, 126
        %v7845 = vpop.permute.xlu0 %7844
        %7846 = vrot.lane.b32.xlu0 %v5076, 126
        %v7847 = vpop.permute.xlu0 %7846
        %7848 = vrot.lane.b32.xlu0 %v5077, 126
        %v7849 = vpop.permute.xlu0 %7848
        %7850 = vrot.lane.b32.xlu0 %v5078, 126
        %v7851 = vpop.permute.xlu0 %7850
        %7852 = vrot.lane.b32.xlu0 %v5079, 126
        %v7853 = vpop.permute.xlu0 %7852
        %7854 = vrot.lane.b32.xlu0 %v5080, 126
        %v7855 = vpop.permute.xlu0 %7854
        %7856 = vrot.lane.b32.xlu0 %v5081, 126
        %v7857 = vpop.permute.xlu0 %7856
        %7858 = vrot.lane.b32.xlu0 %v5082, 126
        %v7859 = vpop.permute.xlu0 %7858
        %7860 = vrot.lane.b32.xlu0 %v5083, 126
        %v7861 = vpop.permute.xlu0 %7860
        %7862 = vrot.lane.b32.xlu0 %v5084, 126
        %v7863 = vpop.permute.xlu0 %7862
        %7864 = vrot.lane.b32.xlu0 %v5085, 126
        %v7865 = vpop.permute.xlu0 %7864
        %7866 = vrot.lane.b32.xlu0 %v5086, 126
        %v7867 = vpop.permute.xlu0 %7866
        %7868 = vrot.lane.b32.xlu0 %v5087, 126
        %v7869 = vpop.permute.xlu0 %7868
        %7870 = vrot.lane.b32.xlu0 %v5088, 126
        %v7871 = vpop.permute.xlu0 %7870
        %7872 = vrot.lane.b32.xlu0 %v5089, 126
        %v7873 = vpop.permute.xlu0 %7872
        %7874 = vrot.lane.b32.xlu0 %v5090, 126
        %v7875 = vpop.permute.xlu0 %7874
        %7876 = vrot.lane.b32.xlu0 %v5091, 126
        %v7877 = vpop.permute.xlu0 %7876
        %7878 = vrot.lane.b32.xlu0 %v5092, 126
        %v7879 = vpop.permute.xlu0 %7878
        %7880 = vrot.lane.b32.xlu0 %v5093, 126
        %v7881 = vpop.permute.xlu0 %7880
        %7882 = vrot.lane.b32.xlu0 %v5094, 126
        %v7883 = vpop.permute.xlu0 %7882
        %7884 = vrot.lane.b32.xlu0 %v5095, 126
        %v7885 = vpop.permute.xlu0 %7884
        %7918 = vrot.lane.b32.xlu0 %v6620, 126
        %v7919 = vpop.permute.xlu0 %7918
        %7920 = vrot.lane.b32.xlu0 %v6621, 126
        %v7921 = vpop.permute.xlu0 %7920
        %7922 = vrot.lane.b32.xlu0 %v6622, 126
        %v7923 = vpop.permute.xlu0 %7922
        %7924 = vrot.lane.b32.xlu0 %v6623, 126
        %v7925 = vpop.permute.xlu0 %7924
        %7926 = vrot.lane.b32.xlu0 %v6624, 126
        %v7927 = vpop.permute.xlu0 %7926
        %7928 = vrot.lane.b32.xlu0 %v6625, 126
        %v7929 = vpop.permute.xlu0 %7928
        %7930 = vrot.lane.b32.xlu0 %v6626, 126
        %v7931 = vpop.permute.xlu0 %7930
        %7932 = vrot.lane.b32.xlu0 %v6627, 126
        %v7933 = vpop.permute.xlu0 %7932
        %7934 = vrot.lane.b32.xlu0 %v6628, 126
        %v7935 = vpop.permute.xlu0 %7934
        %7936 = vrot.lane.b32.xlu0 %v6629, 126
        %v7937 = vpop.permute.xlu0 %7936
        %7938 = vrot.lane.b32.xlu0 %v6630, 126
        %v7939 = vpop.permute.xlu0 %7938
        %7940 = vrot.lane.b32.xlu0 %v6631, 126
        %v7941 = vpop.permute.xlu0 %7940
        %7942 = vrot.lane.b32.xlu0 %v6632, 126
        %v7943 = vpop.permute.xlu0 %7942
        %7944 = vrot.lane.b32.xlu0 %v6633, 126
        %v7945 = vpop.permute.xlu0 %7944
        %7946 = vrot.lane.b32.xlu0 %v6634, 126
        %v7947 = vpop.permute.xlu0 %7946
        %7948 = vrot.lane.b32.xlu0 %v6635, 126
        %v7949 = vpop.permute.xlu0 %7948
        %7950 = vrot.lane.b32.xlu0 %v6636, 126
        %v7951 = vpop.permute.xlu0 %7950
        %7952 = vrot.lane.b32.xlu0 %v6637, 126
        %v7953 = vpop.permute.xlu0 %7952
        %7954 = vrot.lane.b32.xlu0 %v6638, 126
        %v7955 = vpop.permute.xlu0 %7954
        %7956 = vrot.lane.b32.xlu0 %v6639, 126
        %v7957 = vpop.permute.xlu0 %7956
        %7958 = vrot.lane.b32.xlu0 %v6640, 126
        %v7959 = vpop.permute.xlu0 %7958
        %7960 = vrot.lane.b32.xlu0 %v6641, 126
        %v7961 = vpop.permute.xlu0 %7960
        %7962 = vrot.lane.b32.xlu0 %v6642, 126
        %v7963 = vpop.permute.xlu0 %7962
        %7964 = vrot.lane.b32.xlu0 %v6643, 126
        %v7965 = vpop.permute.xlu0 %7964
        %7966 = vrot.lane.b32.xlu0 %v6644, 126
        %v7967 = vpop.permute.xlu0 %7966
        %7968 = vrot.lane.b32.xlu0 %v6645, 126
        %v7969 = vpop.permute.xlu0 %7968
        %7970 = vrot.lane.b32.xlu0 %v6646, 126
        %v7971 = vpop.permute.xlu0 %7970
        %7972 = vrot.lane.b32.xlu0 %v6647, 126
        %v7973 = vpop.permute.xlu0 %7972
        %7974 = vrot.lane.b32.xlu0 %v6648, 126
        %v7975 = vpop.permute.xlu0 %7974
        %7976 = vrot.lane.b32.xlu0 %v6649, 126
        %v7977 = vpop.permute.xlu0 %7976
        %7978 = vrot.lane.b32.xlu0 %v6650, 126
        %v7979 = vpop.permute.xlu0 %7978
        %7980 = vrot.lane.b32.xlu0 %v6651, 126
        %v7981 = vpop.permute.xlu0 %7980
        %v8014 = vsel %vm4116, %v7823, %v7919
        %v8015 = vsel %vm4116, %v7825, %v7921
        %v8016 = vsel %vm4116, %v7827, %v7923
        %v8017 = vsel %vm4116, %v7829, %v7925
        %v8018 = vsel %vm4116, %v7831, %v7927
        %v8019 = vsel %vm4116, %v7833, %v7929
        %v8020 = vsel %vm4116, %v7835, %v7931
        %v8021 = vsel %vm4116, %v7837, %v7933
        %v8022 = vsel %vm4116, %v7839, %v7935
        %v8023 = vsel %vm4116, %v7841, %v7937
        %v8024 = vsel %vm4116, %v7843, %v7939
        %v8025 = vsel %vm4116, %v7845, %v7941
        %v8026 = vsel %vm4116, %v7847, %v7943
        %v8027 = vsel %vm4116, %v7849, %v7945
        %v8028 = vsel %vm4116, %v7851, %v7947
        %v8029 = vsel %vm4116, %v7853, %v7949
        %v8030 = vsel %vm4116, %v7855, %v7951
        %v8031 = vsel %vm4116, %v7857, %v7953
        %v8032 = vsel %vm4116, %v7859, %v7955
        %v8033 = vsel %vm4116, %v7861, %v7957
        %v8034 = vsel %vm4116, %v7863, %v7959
        %v8035 = vsel %vm4116, %v7865, %v7961
        %v8036 = vsel %vm4116, %v7867, %v7963
        %v8037 = vsel %vm4116, %v7869, %v7965
        %v8038 = vsel %vm4116, %v7871, %v7967
        %v8039 = vsel %vm4116, %v7873, %v7969
        %v8040 = vsel %vm4116, %v7875, %v7971
        %v8041 = vsel %vm4116, %v7877, %v7973
        %v8042 = vsel %vm4116, %v7879, %v7975
        %v8043 = vsel %vm4116, %v7881, %v7977
        %v8044 = vsel %vm4116, %v7883, %v7979
        %v8045 = vsel %vm4116, %v7885, %v7981
        %8078 = vrot.lane.b32.xlu0 %v8014, 2
        %v8079 = vpop.permute.xlu0 %8078
        %8080 = vrot.lane.b32.xlu0 %v8015, 2
        %v8081 = vpop.permute.xlu0 %8080
        %8082 = vrot.lane.b32.xlu0 %v8016, 2
        %v8083 = vpop.permute.xlu0 %8082
        %8084 = vrot.lane.b32.xlu0 %v8017, 2
        %v8085 = vpop.permute.xlu0 %8084
        %8086 = vrot.lane.b32.xlu0 %v8018, 2
        %v8087 = vpop.permute.xlu0 %8086
        %8088 = vrot.lane.b32.xlu0 %v8019, 2
        %v8089 = vpop.permute.xlu0 %8088
        %8090 = vrot.lane.b32.xlu0 %v8020, 2
        %v8091 = vpop.permute.xlu0 %8090
        %8092 = vrot.lane.b32.xlu0 %v8021, 2
        %v8093 = vpop.permute.xlu0 %8092
        %8094 = vrot.lane.b32.xlu0 %v8022, 2
        %v8095 = vpop.permute.xlu0 %8094
        %8096 = vrot.lane.b32.xlu0 %v8023, 2
        %v8097 = vpop.permute.xlu0 %8096
        %8098 = vrot.lane.b32.xlu0 %v8024, 2
        %v8099 = vpop.permute.xlu0 %8098
        %8100 = vrot.lane.b32.xlu0 %v8025, 2
        %v8101 = vpop.permute.xlu0 %8100
        %8102 = vrot.lane.b32.xlu0 %v8026, 2
        %v8103 = vpop.permute.xlu0 %8102
        %8104 = vrot.lane.b32.xlu0 %v8027, 2
        %v8105 = vpop.permute.xlu0 %8104
        %8106 = vrot.lane.b32.xlu0 %v8028, 2
        %v8107 = vpop.permute.xlu0 %8106
        %8108 = vrot.lane.b32.xlu0 %v8029, 2
        %v8109 = vpop.permute.xlu0 %8108
        %8110 = vrot.lane.b32.xlu0 %v8030, 2
        %v8111 = vpop.permute.xlu0 %8110
        %8112 = vrot.lane.b32.xlu0 %v8031, 2
        %v8113 = vpop.permute.xlu0 %8112
        %8114 = vrot.lane.b32.xlu0 %v8032, 2
        %v8115 = vpop.permute.xlu0 %8114
        %8116 = vrot.lane.b32.xlu0 %v8033, 2
        %v8117 = vpop.permute.xlu0 %8116
        %8118 = vrot.lane.b32.xlu0 %v8034, 2
        %v8119 = vpop.permute.xlu0 %8118
        %8120 = vrot.lane.b32.xlu0 %v8035, 2
        %v8121 = vpop.permute.xlu0 %8120
        %8122 = vrot.lane.b32.xlu0 %v8036, 2
        %v8123 = vpop.permute.xlu0 %8122
        %8124 = vrot.lane.b32.xlu0 %v8037, 2
        %v8125 = vpop.permute.xlu0 %8124
        %8126 = vrot.lane.b32.xlu0 %v8038, 2
        %v8127 = vpop.permute.xlu0 %8126
        %8128 = vrot.lane.b32.xlu0 %v8039, 2
        %v8129 = vpop.permute.xlu0 %8128
        %8130 = vrot.lane.b32.xlu0 %v8040, 2
        %v8131 = vpop.permute.xlu0 %8130
        %8132 = vrot.lane.b32.xlu0 %v8041, 2
        %v8133 = vpop.permute.xlu0 %8132
        %8134 = vrot.lane.b32.xlu0 %v8042, 2
        %v8135 = vpop.permute.xlu0 %8134
        %8136 = vrot.lane.b32.xlu0 %v8043, 2
        %v8137 = vpop.permute.xlu0 %8136
        %8138 = vrot.lane.b32.xlu0 %v8044, 2
        %v8139 = vpop.permute.xlu0 %8138
        %8140 = vrot.lane.b32.xlu0 %v8045, 2
        %v8141 = vpop.permute.xlu0 %8140
        %vm8174 = vcmask 31760
        %8175 = vst.msk [vmem:[#allocation2] sm:$0xff] %vm8174, %v8079
        %8176 = vst.msk [vmem:[#allocation2 + $0x8] sm:$0xff] %vm8174, %v8081
        %8177 = vst.msk [vmem:[#allocation2 + $0x10] sm:$0xff] %vm8174, %v8083
        %8178 = vst.msk [vmem:[#allocation2 + $0x18] sm:$0xff] %vm8174, %v8085
        %8179 = vst.msk [vmem:[#allocation2 + $0x20] sm:$0xff] %vm8174, %v8087
        %8180 = vst.msk [vmem:[#allocation2 + $0x28] sm:$0xff] %vm8174, %v8089
        %8181 = vst.msk [vmem:[#allocation2 + $0x30] sm:$0xff] %vm8174, %v8091
        %8182 = vst.msk [vmem:[#allocation2 + $0x38] sm:$0xff] %vm8174, %v8093
        %8183 = vst.msk [vmem:[#allocation2 + $0x40] sm:$0xff] %vm8174, %v8095
        %8184 = vst.msk [vmem:[#allocation2 + $0x48] sm:$0xff] %vm8174, %v8097
        %8185 = vst.msk [vmem:[#allocation2 + $0x50] sm:$0xff] %vm8174, %v8099
        %8186 = vst.msk [vmem:[#allocation2 + $0x58] sm:$0xff] %vm8174, %v8101
        %8187 = vst.msk [vmem:[#allocation2 + $0x60] sm:$0xff] %vm8174, %v8103
        %8188 = vst.msk [vmem:[#allocation2 + $0x68] sm:$0xff] %vm8174, %v8105
        %8189 = vst.msk [vmem:[#allocation2 + $0x70] sm:$0xff] %vm8174, %v8107
        %8190 = vst.msk [vmem:[#allocation2 + $0x78] sm:$0xff] %vm8174, %v8109
        %8191 = vst.msk [vmem:[#allocation2 + $0x80] sm:$0xff] %vm8174, %v8111
        %8192 = vst.msk [vmem:[#allocation2 + $0x88] sm:$0xff] %vm8174, %v8113
        %8193 = vst.msk [vmem:[#allocation2 + $0x90] sm:$0xff] %vm8174, %v8115
        %8194 = vst.msk [vmem:[#allocation2 + $0x98] sm:$0xff] %vm8174, %v8117
        %8195 = vst.msk [vmem:[#allocation2 + $0xa0] sm:$0xff] %vm8174, %v8119
        %8196 = vst.msk [vmem:[#allocation2 + $0xa8] sm:$0xff] %vm8174, %v8121
        %8197 = vst.msk [vmem:[#allocation2 + $0xb0] sm:$0xff] %vm8174, %v8123
        %8198 = vst.msk [vmem:[#allocation2 + $0xb8] sm:$0xff] %vm8174, %v8125
        %8199 = vst.msk [vmem:[#allocation2 + $0xc0] sm:$0xff] %vm8174, %v8127
        %8200 = vst.msk [vmem:[#allocation2 + $0xc8] sm:$0xff] %vm8174, %v8129
        %8201 = vst.msk [vmem:[#allocation2 + $0xd0] sm:$0xff] %vm8174, %v8131
        %8202 = vst.msk [vmem:[#allocation2 + $0xd8] sm:$0xff] %vm8174, %v8133
        %8203 = vst.msk [vmem:[#allocation2 + $0xe0] sm:$0xff] %vm8174, %v8135
        %8204 = vst.msk [vmem:[#allocation2 + $0xe8] sm:$0xff] %vm8174, %v8137
        %8205 = vst.msk [vmem:[#allocation2 + $0xf0] sm:$0xff] %vm8174, %v8139
        %8206 = vst.msk [vmem:[#allocation2 + $0xf8] sm:$0xff] %vm8174, %v8141
        %8239 = vrot.lane.b32.xlu0 %v5672, 126
        %v8240 = vpop.permute.xlu0 %8239
        %8241 = vrot.lane.b32.xlu0 %v5673, 126
        %v8242 = vpop.permute.xlu0 %8241
        %8243 = vrot.lane.b32.xlu0 %v5674, 126
        %v8244 = vpop.permute.xlu0 %8243
        %8245 = vrot.lane.b32.xlu0 %v5675, 126
        %v8246 = vpop.permute.xlu0 %8245
        %8247 = vrot.lane.b32.xlu0 %v5676, 126
        %v8248 = vpop.permute.xlu0 %8247
        %8249 = vrot.lane.b32.xlu0 %v5677, 126
        %v8250 = vpop.permute.xlu0 %8249
        %8251 = vrot.lane.b32.xlu0 %v5678, 126
        %v8252 = vpop.permute.xlu0 %8251
        %8253 = vrot.lane.b32.xlu0 %v5679, 126
        %v8254 = vpop.permute.xlu0 %8253
        %8255 = vrot.lane.b32.xlu0 %v5680, 126
        %v8256 = vpop.permute.xlu0 %8255
        %8257 = vrot.lane.b32.xlu0 %v5681, 126
        %v8258 = vpop.permute.xlu0 %8257
        %8259 = vrot.lane.b32.xlu0 %v5682, 126
        %v8260 = vpop.permute.xlu0 %8259
        %8261 = vrot.lane.b32.xlu0 %v5683, 126
        %v8262 = vpop.permute.xlu0 %8261
        %8263 = vrot.lane.b32.xlu0 %v5684, 126
        %v8264 = vpop.permute.xlu0 %8263
        %8265 = vrot.lane.b32.xlu0 %v5685, 126
        %v8266 = vpop.permute.xlu0 %8265
        %8267 = vrot.lane.b32.xlu0 %v5686, 126
        %v8268 = vpop.permute.xlu0 %8267
        %8269 = vrot.lane.b32.xlu0 %v5687, 126
        %v8270 = vpop.permute.xlu0 %8269
        %8271 = vrot.lane.b32.xlu0 %v5688, 126
        %v8272 = vpop.permute.xlu0 %8271
        %8273 = vrot.lane.b32.xlu0 %v5689, 126
        %v8274 = vpop.permute.xlu0 %8273
        %8275 = vrot.lane.b32.xlu0 %v5690, 126
        %v8276 = vpop.permute.xlu0 %8275
        %8277 = vrot.lane.b32.xlu0 %v5691, 126
        %v8278 = vpop.permute.xlu0 %8277
        %8279 = vrot.lane.b32.xlu0 %v5692, 126
        %v8280 = vpop.permute.xlu0 %8279
        %8281 = vrot.lane.b32.xlu0 %v5693, 126
        %v8282 = vpop.permute.xlu0 %8281
        %8283 = vrot.lane.b32.xlu0 %v5694, 126
        %v8284 = vpop.permute.xlu0 %8283
        %8285 = vrot.lane.b32.xlu0 %v5695, 126
        %v8286 = vpop.permute.xlu0 %8285
        %8287 = vrot.lane.b32.xlu0 %v5696, 126
        %v8288 = vpop.permute.xlu0 %8287
        %8289 = vrot.lane.b32.xlu0 %v5697, 126
        %v8290 = vpop.permute.xlu0 %8289
        %8291 = vrot.lane.b32.xlu0 %v5698, 126
        %v8292 = vpop.permute.xlu0 %8291
        %8293 = vrot.lane.b32.xlu0 %v5699, 126
        %v8294 = vpop.permute.xlu0 %8293
        %8295 = vrot.lane.b32.xlu0 %v5700, 126
        %v8296 = vpop.permute.xlu0 %8295
        %8297 = vrot.lane.b32.xlu0 %v5701, 126
        %v8298 = vpop.permute.xlu0 %8297
        %8299 = vrot.lane.b32.xlu0 %v5702, 126
        %v8300 = vpop.permute.xlu0 %8299
        %8301 = vrot.lane.b32.xlu0 %v5703, 126
        %v8302 = vpop.permute.xlu0 %8301
        %8367 = vrot.lane.b32.xlu0 %v7228, 126
        %v8368 = vpop.permute.xlu0 %8367
        %8369 = vrot.lane.b32.xlu0 %v7229, 126
        %v8370 = vpop.permute.xlu0 %8369
        %8371 = vrot.lane.b32.xlu0 %v7230, 126
        %v8372 = vpop.permute.xlu0 %8371
        %8373 = vrot.lane.b32.xlu0 %v7231, 126
        %v8374 = vpop.permute.xlu0 %8373
        %8375 = vrot.lane.b32.xlu0 %v7232, 126
        %v8376 = vpop.permute.xlu0 %8375
        %8377 = vrot.lane.b32.xlu0 %v7233, 126
        %v8378 = vpop.permute.xlu0 %8377
        %8379 = vrot.lane.b32.xlu0 %v7234, 126
        %v8380 = vpop.permute.xlu0 %8379
        %8381 = vrot.lane.b32.xlu0 %v7235, 126
        %v8382 = vpop.permute.xlu0 %8381
        %8383 = vrot.lane.b32.xlu0 %v7236, 126
        %v8384 = vpop.permute.xlu0 %8383
        %8385 = vrot.lane.b32.xlu0 %v7237, 126
        %v8386 = vpop.permute.xlu0 %8385
        %8387 = vrot.lane.b32.xlu0 %v7238, 126
        %v8388 = vpop.permute.xlu0 %8387
        %8389 = vrot.lane.b32.xlu0 %v7239, 126
        %v8390 = vpop.permute.xlu0 %8389
        %8391 = vrot.lane.b32.xlu0 %v7240, 126
        %v8392 = vpop.permute.xlu0 %8391
        %8393 = vrot.lane.b32.xlu0 %v7241, 126
        %v8394 = vpop.permute.xlu0 %8393
        %8395 = vrot.lane.b32.xlu0 %v7242, 126
        %v8396 = vpop.permute.xlu0 %8395
        %8397 = vrot.lane.b32.xlu0 %v7243, 126
        %v8398 = vpop.permute.xlu0 %8397
        %8399 = vrot.lane.b32.xlu0 %v7244, 126
        %v8400 = vpop.permute.xlu0 %8399
        %8401 = vrot.lane.b32.xlu0 %v7245, 126
        %v8402 = vpop.permute.xlu0 %8401
        %8403 = vrot.lane.b32.xlu0 %v7246, 126
        %v8404 = vpop.permute.xlu0 %8403
        %8405 = vrot.lane.b32.xlu0 %v7247, 126
        %v8406 = vpop.permute.xlu0 %8405
        %8407 = vrot.lane.b32.xlu0 %v7248, 126
        %v8408 = vpop.permute.xlu0 %8407
        %8409 = vrot.lane.b32.xlu0 %v7249, 126
        %v8410 = vpop.permute.xlu0 %8409
        %8411 = vrot.lane.b32.xlu0 %v7250, 126
        %v8412 = vpop.permute.xlu0 %8411
        %8413 = vrot.lane.b32.xlu0 %v7251, 126
        %v8414 = vpop.permute.xlu0 %8413
        %8415 = vrot.lane.b32.xlu0 %v7252, 126
        %v8416 = vpop.permute.xlu0 %8415
        %8417 = vrot.lane.b32.xlu0 %v7253, 126
        %v8418 = vpop.permute.xlu0 %8417
        %8419 = vrot.lane.b32.xlu0 %v7254, 126
        %v8420 = vpop.permute.xlu0 %8419
        %8421 = vrot.lane.b32.xlu0 %v7255, 126
        %v8422 = vpop.permute.xlu0 %8421
        %8423 = vrot.lane.b32.xlu0 %v7256, 126
        %v8424 = vpop.permute.xlu0 %8423
        %8425 = vrot.lane.b32.xlu0 %v7257, 126
        %v8426 = vpop.permute.xlu0 %8425
        %8427 = vrot.lane.b32.xlu0 %v7258, 126
        %v8428 = vpop.permute.xlu0 %8427
        %8429 = vrot.lane.b32.xlu0 %v7259, 126
        %v8430 = vpop.permute.xlu0 %8429
        %v8463 = vsel %vm4116, %v8240, %v8368
        %v8464 = vsel %vm4116, %v8242, %v8370
        %v8465 = vsel %vm4116, %v8244, %v8372
        %v8466 = vsel %vm4116, %v8246, %v8374
        %v8467 = vsel %vm4116, %v8248, %v8376
        %v8468 = vsel %vm4116, %v8250, %v8378
        %v8469 = vsel %vm4116, %v8252, %v8380
        %v8470 = vsel %vm4116, %v8254, %v8382
        %v8471 = vsel %vm4116, %v8256, %v8384
        %v8472 = vsel %vm4116, %v8258, %v8386
        %v8473 = vsel %vm4116, %v8260, %v8388
        %v8474 = vsel %vm4116, %v8262, %v8390
        %v8475 = vsel %vm4116, %v8264, %v8392
        %v8476 = vsel %vm4116, %v8266, %v8394
        %v8477 = vsel %vm4116, %v8268, %v8396
        %v8478 = vsel %vm4116, %v8270, %v8398
        %v8479 = vsel %vm4116, %v8272, %v8400
        %v8480 = vsel %vm4116, %v8274, %v8402
        %v8481 = vsel %vm4116, %v8276, %v8404
        %v8482 = vsel %vm4116, %v8278, %v8406
        %v8483 = vsel %vm4116, %v8280, %v8408
        %v8484 = vsel %vm4116, %v8282, %v8410
        %v8485 = vsel %vm4116, %v8284, %v8412
        %v8486 = vsel %vm4116, %v8286, %v8414
        %v8487 = vsel %vm4116, %v8288, %v8416
        %v8488 = vsel %vm4116, %v8290, %v8418
        %v8489 = vsel %vm4116, %v8292, %v8420
        %v8490 = vsel %vm4116, %v8294, %v8422
        %v8491 = vsel %vm4116, %v8296, %v8424
        %v8492 = vsel %vm4116, %v8298, %v8426
        %v8493 = vsel %vm4116, %v8300, %v8428
        %v8494 = vsel %vm4116, %v8302, %v8430
        %8527 = vrot.lane.b32.xlu0 %v8463, 2
        %v8528 = vpop.permute.xlu0 %8527
        %8529 = vrot.lane.b32.xlu0 %v8464, 2
        %v8530 = vpop.permute.xlu0 %8529
        %8531 = vrot.lane.b32.xlu0 %v8465, 2
        %v8532 = vpop.permute.xlu0 %8531
        %8533 = vrot.lane.b32.xlu0 %v8466, 2
        %v8534 = vpop.permute.xlu0 %8533
        %8535 = vrot.lane.b32.xlu0 %v8467, 2
        %v8536 = vpop.permute.xlu0 %8535
        %8537 = vrot.lane.b32.xlu0 %v8468, 2
        %v8538 = vpop.permute.xlu0 %8537
        %8539 = vrot.lane.b32.xlu0 %v8469, 2
        %v8540 = vpop.permute.xlu0 %8539
        %8541 = vrot.lane.b32.xlu0 %v8470, 2
        %v8542 = vpop.permute.xlu0 %8541
        %8543 = vrot.lane.b32.xlu0 %v8471, 2
        %v8544 = vpop.permute.xlu0 %8543
        %8545 = vrot.lane.b32.xlu0 %v8472, 2
        %v8546 = vpop.permute.xlu0 %8545
        %8547 = vrot.lane.b32.xlu0 %v8473, 2
        %v8548 = vpop.permute.xlu0 %8547
        %8549 = vrot.lane.b32.xlu0 %v8474, 2
        %v8550 = vpop.permute.xlu0 %8549
        %8551 = vrot.lane.b32.xlu0 %v8475, 2
        %v8552 = vpop.permute.xlu0 %8551
        %8553 = vrot.lane.b32.xlu0 %v8476, 2
        %v8554 = vpop.permute.xlu0 %8553
        %8555 = vrot.lane.b32.xlu0 %v8477, 2
        %v8556 = vpop.permute.xlu0 %8555
        %8557 = vrot.lane.b32.xlu0 %v8478, 2
        %v8558 = vpop.permute.xlu0 %8557
        %8559 = vrot.lane.b32.xlu0 %v8479, 2
        %v8560 = vpop.permute.xlu0 %8559
        %8561 = vrot.lane.b32.xlu0 %v8480, 2
        %v8562 = vpop.permute.xlu0 %8561
        %8563 = vrot.lane.b32.xlu0 %v8481, 2
        %v8564 = vpop.permute.xlu0 %8563
        %8565 = vrot.lane.b32.xlu0 %v8482, 2
        %v8566 = vpop.permute.xlu0 %8565
        %8567 = vrot.lane.b32.xlu0 %v8483, 2
        %v8568 = vpop.permute.xlu0 %8567
        %8569 = vrot.lane.b32.xlu0 %v8484, 2
        %v8570 = vpop.permute.xlu0 %8569
        %8571 = vrot.lane.b32.xlu0 %v8485, 2
        %v8572 = vpop.permute.xlu0 %8571
        %8573 = vrot.lane.b32.xlu0 %v8486, 2
        %v8574 = vpop.permute.xlu0 %8573
        %8575 = vrot.lane.b32.xlu0 %v8487, 2
        %v8576 = vpop.permute.xlu0 %8575
        %8577 = vrot.lane.b32.xlu0 %v8488, 2
        %v8578 = vpop.permute.xlu0 %8577
        %8579 = vrot.lane.b32.xlu0 %v8489, 2
        %v8580 = vpop.permute.xlu0 %8579
        %8581 = vrot.lane.b32.xlu0 %v8490, 2
        %v8582 = vpop.permute.xlu0 %8581
        %8583 = vrot.lane.b32.xlu0 %v8491, 2
        %v8584 = vpop.permute.xlu0 %8583
        %8585 = vrot.lane.b32.xlu0 %v8492, 2
        %v8586 = vpop.permute.xlu0 %8585
        %8587 = vrot.lane.b32.xlu0 %v8493, 2
        %v8588 = vpop.permute.xlu0 %8587
        %8589 = vrot.lane.b32.xlu0 %v8494, 2
        %v8590 = vpop.permute.xlu0 %8589
        %8623 = vst.msk [vmem:[#allocation3] sm:$0xff] %vm8174, %v8528
        %8624 = vst.msk [vmem:[#allocation3 + $0x8] sm:$0xff] %vm8174, %v8530
        %8625 = vst.msk [vmem:[#allocation3 + $0x10] sm:$0xff] %vm8174, %v8532
        %8626 = vst.msk [vmem:[#allocation3 + $0x18] sm:$0xff] %vm8174, %v8534
        %8627 = vst.msk [vmem:[#allocation3 + $0x20] sm:$0xff] %vm8174, %v8536
        %8628 = vst.msk [vmem:[#allocation3 + $0x28] sm:$0xff] %vm8174, %v8538
        %8629 = vst.msk [vmem:[#allocation3 + $0x30] sm:$0xff] %vm8174, %v8540
        %8630 = vst.msk [vmem:[#allocation3 + $0x38] sm:$0xff] %vm8174, %v8542
        %8631 = vst.msk [vmem:[#allocation3 + $0x40] sm:$0xff] %vm8174, %v8544
        %8632 = vst.msk [vmem:[#allocation3 + $0x48] sm:$0xff] %vm8174, %v8546
        %8633 = vst.msk [vmem:[#allocation3 + $0x50] sm:$0xff] %vm8174, %v8548
        %8634 = vst.msk [vmem:[#allocation3 + $0x58] sm:$0xff] %vm8174, %v8550
        %8635 = vst.msk [vmem:[#allocation3 + $0x60] sm:$0xff] %vm8174, %v8552
        %8636 = vst.msk [vmem:[#allocation3 + $0x68] sm:$0xff] %vm8174, %v8554
        %8637 = vst.msk [vmem:[#allocation3 + $0x70] sm:$0xff] %vm8174, %v8556
        %8638 = vst.msk [vmem:[#allocation3 + $0x78] sm:$0xff] %vm8174, %v8558
        %8639 = vst.msk [vmem:[#allocation3 + $0x80] sm:$0xff] %vm8174, %v8560
        %8640 = vst.msk [vmem:[#allocation3 + $0x88] sm:$0xff] %vm8174, %v8562
        %8641 = vst.msk [vmem:[#allocation3 + $0x90] sm:$0xff] %vm8174, %v8564
        %8642 = vst.msk [vmem:[#allocation3 + $0x98] sm:$0xff] %vm8174, %v8566
        %8643 = vst.msk [vmem:[#allocation3 + $0xa0] sm:$0xff] %vm8174, %v8568
        %8644 = vst.msk [vmem:[#allocation3 + $0xa8] sm:$0xff] %vm8174, %v8570
        %8645 = vst.msk [vmem:[#allocation3 + $0xb0] sm:$0xff] %vm8174, %v8572
        %8646 = vst.msk [vmem:[#allocation3 + $0xb8] sm:$0xff] %vm8174, %v8574
        %8647 = vst.msk [vmem:[#allocation3 + $0xc0] sm:$0xff] %vm8174, %v8576
        %8648 = vst.msk [vmem:[#allocation3 + $0xc8] sm:$0xff] %vm8174, %v8578
        %8649 = vst.msk [vmem:[#allocation3 + $0xd0] sm:$0xff] %vm8174, %v8580
        %8650 = vst.msk [vmem:[#allocation3 + $0xd8] sm:$0xff] %vm8174, %v8582
        %8651 = vst.msk [vmem:[#allocation3 + $0xe0] sm:$0xff] %vm8174, %v8584
        %8652 = vst.msk [vmem:[#allocation3 + $0xe8] sm:$0xff] %vm8174, %v8586
        %8653 = vst.msk [vmem:[#allocation3 + $0xf0] sm:$0xff] %vm8174, %v8588
        %8654 = vst.msk [vmem:[#allocation3 + $0xf8] sm:$0xff] %vm8174, %v8590
        %v8655 = vsel %vm1019, %v6234, %v7790
        %v8656 = vsel %vm1019, %v6235, %v7791
        %v8657 = vsel %vm1019, %v6236, %v7792
        %v8658 = vsel %vm1019, %v6237, %v7793
        %v8659 = vsel %vm1019, %v6238, %v7794
        %v8660 = vsel %vm1019, %v6239, %v7795
        %v8661 = vsel %vm1019, %v6240, %v7796
        %v8662 = vsel %vm1019, %v6241, %v7797
        %v8663 = vsel %vm1019, %v6242, %v7798
        %v8664 = vsel %vm1019, %v6243, %v7799
        %v8665 = vsel %vm1019, %v6244, %v7800
        %v8666 = vsel %vm1019, %v6245, %v7801
        %v8667 = vsel %vm1019, %v6246, %v7802
        %v8668 = vsel %vm1019, %v6247, %v7803
        %v8669 = vsel %vm1019, %v6248, %v7804
        %v8670 = vsel %vm1019, %v6249, %v7805
        %v8671 = vsel %vm1019, %v6250, %v7806
        %v8672 = vsel %vm1019, %v6251, %v7807
        %v8673 = vsel %vm1019, %v6252, %v7808
        %v8674 = vsel %vm1019, %v6253, %v7809
        %v8675 = vsel %vm1019, %v6254, %v7810
        %v8676 = vsel %vm1019, %v6255, %v7811
        %v8677 = vsel %vm1019, %v6256, %v7812
        %v8678 = vsel %vm1019, %v6257, %v7813
        %v8679 = vsel %vm1019, %v6258, %v7814
        %v8680 = vsel %vm1019, %v6259, %v7815
        %v8681 = vsel %vm1019, %v6260, %v7816
        %v8682 = vsel %vm1019, %v6261, %v7817
        %v8683 = vsel %vm1019, %v6262, %v7818
        %v8684 = vsel %vm1019, %v6263, %v7819
        %v8685 = vsel %vm1019, %v6264, %v7820
        %v8686 = vsel %vm1019, %v6265, %v7821
        %8687 = vst [vmem:[#allocation4 + $0x8] sm:$0xff] %v8655
        %8688 = vst [vmem:[#allocation4 + $0x18] sm:$0xff] %v8656
        %8689 = vst [vmem:[#allocation4 + $0x28] sm:$0xff] %v8657
        %8690 = vst [vmem:[#allocation4 + $0x38] sm:$0xff] %v8658
        %8691 = vst [vmem:[#allocation4 + $0x48] sm:$0xff] %v8659
        %8692 = vst [vmem:[#allocation4 + $0x58] sm:$0xff] %v8660
        %8693 = vst [vmem:[#allocation4 + $0x68] sm:$0xff] %v8661
        %8694 = vst [vmem:[#allocation4 + $0x78] sm:$0xff] %v8662
        %8695 = vst [vmem:[#allocation4 + $0x88] sm:$0xff] %v8663
        %8696 = vst [vmem:[#allocation4 + $0x98] sm:$0xff] %v8664
        %8697 = vst [vmem:[#allocation4 + $0xa8] sm:$0xff] %v8665
        %8698 = vst [vmem:[#allocation4 + $0xb8] sm:$0xff] %v8666
        %8699 = vst [vmem:[#allocation4 + $0xc8] sm:$0xff] %v8667
        %8700 = vst [vmem:[#allocation4 + $0xd8] sm:$0xff] %v8668
        %8701 = vst [vmem:[#allocation4 + $0xe8] sm:$0xff] %v8669
        %8702 = vst [vmem:[#allocation4 + $0xf8] sm:$0xff] %v8670
        %8703 = vst [vmem:[#allocation4 + $0x108] sm:$0xff] %v8671
        %8704 = vst [vmem:[#allocation4 + $0x118] sm:$0xff] %v8672
        %8705 = vst [vmem:[#allocation4 + $0x128] sm:$0xff] %v8673
        %8706 = vst [vmem:[#allocation4 + $0x138] sm:$0xff] %v8674
        %8707 = vst [vmem:[#allocation4 + $0x148] sm:$0xff] %v8675
        %8708 = vst [vmem:[#allocation4 + $0x158] sm:$0xff] %v8676
        %8709 = vst [vmem:[#allocation4 + $0x168] sm:$0xff] %v8677
        %8710 = vst [vmem:[#allocation4 + $0x178] sm:$0xff] %v8678
        %8711 = vst [vmem:[#allocation4 + $0x188] sm:$0xff] %v8679
        %8712 = vst [vmem:[#allocation4 + $0x198] sm:$0xff] %v8680
        %8713 = vst [vmem:[#allocation4 + $0x1a8] sm:$0xff] %v8681
        %8714 = vst [vmem:[#allocation4 + $0x1b8] sm:$0xff] %v8682
        %8715 = vst [vmem:[#allocation4 + $0x1c8] sm:$0xff] %v8683
        %8716 = vst [vmem:[#allocation4 + $0x1d8] sm:$0xff] %v8684
        %8717 = vst [vmem:[#allocation4 + $0x1e8] sm:$0xff] %v8685
        %8718 = vst [vmem:[#allocation4 + $0x1f8] sm:$0xff] %v8686
        // Predicated region
        $region49: #{tpu_custom_call.1} parent=31 // pred_check
          %p8719 = pneg %p310
        $region50: #{tpu_custom_call.1} parent=31 // pred_check_branch
          %8721 = sbr.rel (%p8719) target = $region52
        $region51: #{tpu_custom_call.1} parent=31 // pred_region
          %v8722 = vld [vmem:[#allocation3] sm:$0xff]
          %v8723 = vld [vmem:[#allocation3 + $0x8] sm:$0xff]
          %v8724 = vld [vmem:[#allocation3 + $0x10] sm:$0xff]
          %v8725 = vld [vmem:[#allocation3 + $0x18] sm:$0xff]
          %v8726 = vld [vmem:[#allocation3 + $0x20] sm:$0xff]
          %v8727 = vld [vmem:[#allocation3 + $0x28] sm:$0xff]
          %v8728 = vld [vmem:[#allocation3 + $0x30] sm:$0xff]
          %v8729 = vld [vmem:[#allocation3 + $0x38] sm:$0xff]
          %v8730 = vld [vmem:[#allocation3 + $0x40] sm:$0xff]
          %v8731 = vld [vmem:[#allocation3 + $0x48] sm:$0xff]
          %v8732 = vld [vmem:[#allocation3 + $0x50] sm:$0xff]
          %v8733 = vld [vmem:[#allocation3 + $0x58] sm:$0xff]
          %v8734 = vld [vmem:[#allocation3 + $0x60] sm:$0xff]
          %v8735 = vld [vmem:[#allocation3 + $0x68] sm:$0xff]
          %v8736 = vld [vmem:[#allocation3 + $0x70] sm:$0xff]
          %v8737 = vld [vmem:[#allocation3 + $0x78] sm:$0xff]
          %v8738 = vld [vmem:[#allocation3 + $0x80] sm:$0xff]
          %v8739 = vld [vmem:[#allocation3 + $0x88] sm:$0xff]
          %v8740 = vld [vmem:[#allocation3 + $0x90] sm:$0xff]
          %v8741 = vld [vmem:[#allocation3 + $0x98] sm:$0xff]
          %v8742 = vld [vmem:[#allocation3 + $0xa0] sm:$0xff]
          %v8743 = vld [vmem:[#allocation3 + $0xa8] sm:$0xff]
          %v8744 = vld [vmem:[#allocation3 + $0xb0] sm:$0xff]
          %v8745 = vld [vmem:[#allocation3 + $0xb8] sm:$0xff]
          %v8746 = vld [vmem:[#allocation3 + $0xc0] sm:$0xff]
          %v8747 = vld [vmem:[#allocation3 + $0xc8] sm:$0xff]
          %v8748 = vld [vmem:[#allocation3 + $0xd0] sm:$0xff]
          %v8749 = vld [vmem:[#allocation3 + $0xd8] sm:$0xff]
          %v8750 = vld [vmem:[#allocation3 + $0xe0] sm:$0xff]
          %v8751 = vld [vmem:[#allocation3 + $0xe8] sm:$0xff]
          %v8752 = vld [vmem:[#allocation3 + $0xf0] sm:$0xff]
          %v8753 = vld [vmem:[#allocation3 + $0xf8] sm:$0xff]
          %v8754 = vrcp.pop %v8722
          %v8755 = vrcp.pop %v8723
          %v8756 = vrcp.pop %v8724
          %v8757 = vrcp.pop %v8725
          %v8758 = vrcp.pop %v8726
          %v8759 = vrcp.pop %v8727
          %v8760 = vrcp.pop %v8728
          %v8761 = vrcp.pop %v8729
          %v8762 = vrcp.pop %v8730
          %v8763 = vrcp.pop %v8731
          %v8764 = vrcp.pop %v8732
          %v8765 = vrcp.pop %v8733
          %v8766 = vrcp.pop %v8734
          %v8767 = vrcp.pop %v8735
          %v8768 = vrcp.pop %v8736
          %v8769 = vrcp.pop %v8737
          %v8770 = vrcp.pop %v8738
          %v8771 = vrcp.pop %v8739
          %v8772 = vrcp.pop %v8740
          %v8773 = vrcp.pop %v8741
          %v8774 = vrcp.pop %v8742
          %v8775 = vrcp.pop %v8743
          %v8776 = vrcp.pop %v8744
          %v8777 = vrcp.pop %v8745
          %v8778 = vrcp.pop %v8746
          %v8779 = vrcp.pop %v8747
          %v8780 = vrcp.pop %v8748
          %v8781 = vrcp.pop %v8749
          %v8782 = vrcp.pop %v8750
          %v8783 = vrcp.pop %v8751
          %v8784 = vrcp.pop %v8752
          %v8785 = vrcp.pop %v8753
          %8787 = vset.pattern.permute.xlu0 0
          %8788 = vperm.xlu0 %8787, %v8754
          %v8789 = vpop.permute.xlu0 %8788
          %8792 = vset.pattern.permute.xlu0 0
          %8793 = vperm.xlu0 %8792, %v8755
          %v8794 = vpop.permute.xlu0 %8793
          %8797 = vset.pattern.permute.xlu0 0
          %8798 = vperm.xlu0 %8797, %v8756
          %v8799 = vpop.permute.xlu0 %8798
          %8802 = vset.pattern.permute.xlu0 0
          %8803 = vperm.xlu0 %8802, %v8757
          %v8804 = vpop.permute.xlu0 %8803
          %8807 = vset.pattern.permute.xlu0 0
          %8808 = vperm.xlu0 %8807, %v8758
          %v8809 = vpop.permute.xlu0 %8808
          %8812 = vset.pattern.permute.xlu0 0
          %8813 = vperm.xlu0 %8812, %v8759
          %v8814 = vpop.permute.xlu0 %8813
          %8817 = vset.pattern.permute.xlu0 0
          %8818 = vperm.xlu0 %8817, %v8760
          %v8819 = vpop.permute.xlu0 %8818
          %8822 = vset.pattern.permute.xlu0 0
          %8823 = vperm.xlu0 %8822, %v8761
          %v8824 = vpop.permute.xlu0 %8823
          %8827 = vset.pattern.permute.xlu0 0
          %8828 = vperm.xlu0 %8827, %v8762
          %v8829 = vpop.permute.xlu0 %8828
          %8832 = vset.pattern.permute.xlu0 0
          %8833 = vperm.xlu0 %8832, %v8763
          %v8834 = vpop.permute.xlu0 %8833
          %8837 = vset.pattern.permute.xlu0 0
          %8838 = vperm.xlu0 %8837, %v8764
          %v8839 = vpop.permute.xlu0 %8838
          %8842 = vset.pattern.permute.xlu0 0
          %8843 = vperm.xlu0 %8842, %v8765
          %v8844 = vpop.permute.xlu0 %8843
          %8847 = vset.pattern.permute.xlu0 0
          %8848 = vperm.xlu0 %8847, %v8766
          %v8849 = vpop.permute.xlu0 %8848
          %8852 = vset.pattern.permute.xlu0 0
          %8853 = vperm.xlu0 %8852, %v8767
          %v8854 = vpop.permute.xlu0 %8853
          %8857 = vset.pattern.permute.xlu0 0
          %8858 = vperm.xlu0 %8857, %v8768
          %v8859 = vpop.permute.xlu0 %8858
          %8862 = vset.pattern.permute.xlu0 0
          %8863 = vperm.xlu0 %8862, %v8769
          %v8864 = vpop.permute.xlu0 %8863
          %8867 = vset.pattern.permute.xlu0 0
          %8868 = vperm.xlu0 %8867, %v8770
          %v8869 = vpop.permute.xlu0 %8868
          %8872 = vset.pattern.permute.xlu0 0
          %8873 = vperm.xlu0 %8872, %v8771
          %v8874 = vpop.permute.xlu0 %8873
          %8877 = vset.pattern.permute.xlu0 0
          %8878 = vperm.xlu0 %8877, %v8772
          %v8879 = vpop.permute.xlu0 %8878
          %8882 = vset.pattern.permute.xlu0 0
          %8883 = vperm.xlu0 %8882, %v8773
          %v8884 = vpop.permute.xlu0 %8883
          %8887 = vset.pattern.permute.xlu0 0
          %8888 = vperm.xlu0 %8887, %v8774
          %v8889 = vpop.permute.xlu0 %8888
          %8892 = vset.pattern.permute.xlu0 0
          %8893 = vperm.xlu0 %8892, %v8775
          %v8894 = vpop.permute.xlu0 %8893
          %8897 = vset.pattern.permute.xlu0 0
          %8898 = vperm.xlu0 %8897, %v8776
          %v8899 = vpop.permute.xlu0 %8898
          %8902 = vset.pattern.permute.xlu0 0
          %8903 = vperm.xlu0 %8902, %v8777
          %v8904 = vpop.permute.xlu0 %8903
          %8907 = vset.pattern.permute.xlu0 0
          %8908 = vperm.xlu0 %8907, %v8778
          %v8909 = vpop.permute.xlu0 %8908
          %8912 = vset.pattern.permute.xlu0 0
          %8913 = vperm.xlu0 %8912, %v8779
          %v8914 = vpop.permute.xlu0 %8913
          %8917 = vset.pattern.permute.xlu0 0
          %8918 = vperm.xlu0 %8917, %v8780
          %v8919 = vpop.permute.xlu0 %8918
          %8922 = vset.pattern.permute.xlu0 0
          %8923 = vperm.xlu0 %8922, %v8781
          %v8924 = vpop.permute.xlu0 %8923
          %8927 = vset.pattern.permute.xlu0 0
          %8928 = vperm.xlu0 %8927, %v8782
          %v8929 = vpop.permute.xlu0 %8928
          %8932 = vset.pattern.permute.xlu0 0
          %8933 = vperm.xlu0 %8932, %v8783
          %v8934 = vpop.permute.xlu0 %8933
          %8937 = vset.pattern.permute.xlu0 0
          %8938 = vperm.xlu0 %8937, %v8784
          %v8939 = vpop.permute.xlu0 %8938
          %8942 = vset.pattern.permute.xlu0 0
          %8943 = vperm.xlu0 %8942, %v8785
          %v8944 = vpop.permute.xlu0 %8943
          %8946 = vset.pattern.permute.xlu0 1
          %8947 = vperm.xlu0 %8946, %v8754
          %v8948 = vpop.permute.xlu0 %8947
          %8950 = vset.pattern.permute.xlu0 1
          %8951 = vperm.xlu0 %8950, %v8755
          %v8952 = vpop.permute.xlu0 %8951
          %8954 = vset.pattern.permute.xlu0 1
          %8955 = vperm.xlu0 %8954, %v8756
          %v8956 = vpop.permute.xlu0 %8955
          %8958 = vset.pattern.permute.xlu0 1
          %8959 = vperm.xlu0 %8958, %v8757
          %v8960 = vpop.permute.xlu0 %8959
          %8962 = vset.pattern.permute.xlu0 1
          %8963 = vperm.xlu0 %8962, %v8758
          %v8964 = vpop.permute.xlu0 %8963
          %8966 = vset.pattern.permute.xlu0 1
          %8967 = vperm.xlu0 %8966, %v8759
          %v8968 = vpop.permute.xlu0 %8967
          %8970 = vset.pattern.permute.xlu0 1
          %8971 = vperm.xlu0 %8970, %v8760
          %v8972 = vpop.permute.xlu0 %8971
          %8974 = vset.pattern.permute.xlu0 1
          %8975 = vperm.xlu0 %8974, %v8761
          %v8976 = vpop.permute.xlu0 %8975
          %8978 = vset.pattern.permute.xlu0 1
          %8979 = vperm.xlu0 %8978, %v8762
          %v8980 = vpop.permute.xlu0 %8979
          %8982 = vset.pattern.permute.xlu0 1
          %8983 = vperm.xlu0 %8982, %v8763
          %v8984 = vpop.permute.xlu0 %8983
          %8986 = vset.pattern.permute.xlu0 1
          %8987 = vperm.xlu0 %8986, %v8764
          %v8988 = vpop.permute.xlu0 %8987
          %8990 = vset.pattern.permute.xlu0 1
          %8991 = vperm.xlu0 %8990, %v8765
          %v8992 = vpop.permute.xlu0 %8991
          %8994 = vset.pattern.permute.xlu0 1
          %8995 = vperm.xlu0 %8994, %v8766
          %v8996 = vpop.permute.xlu0 %8995
          %8998 = vset.pattern.permute.xlu0 1
          %8999 = vperm.xlu0 %8998, %v8767
          %v9000 = vpop.permute.xlu0 %8999
          %9002 = vset.pattern.permute.xlu0 1
          %9003 = vperm.xlu0 %9002, %v8768
          %v9004 = vpop.permute.xlu0 %9003
          %9006 = vset.pattern.permute.xlu0 1
          %9007 = vperm.xlu0 %9006, %v8769
          %v9008 = vpop.permute.xlu0 %9007
          %9010 = vset.pattern.permute.xlu0 1
          %9011 = vperm.xlu0 %9010, %v8770
          %v9012 = vpop.permute.xlu0 %9011
          %9014 = vset.pattern.permute.xlu0 1
          %9015 = vperm.xlu0 %9014, %v8771
          %v9016 = vpop.permute.xlu0 %9015
          %9018 = vset.pattern.permute.xlu0 1
          %9019 = vperm.xlu0 %9018, %v8772
          %v9020 = vpop.permute.xlu0 %9019
          %9022 = vset.pattern.permute.xlu0 1
          %9023 = vperm.xlu0 %9022, %v8773
          %v9024 = vpop.permute.xlu0 %9023
          %9026 = vset.pattern.permute.xlu0 1
          %9027 = vperm.xlu0 %9026, %v8774
          %v9028 = vpop.permute.xlu0 %9027
          %9030 = vset.pattern.permute.xlu0 1
          %9031 = vperm.xlu0 %9030, %v8775
          %v9032 = vpop.permute.xlu0 %9031
          %9034 = vset.pattern.permute.xlu0 1
          %9035 = vperm.xlu0 %9034, %v8776
          %v9036 = vpop.permute.xlu0 %9035
          %9038 = vset.pattern.permute.xlu0 1
          %9039 = vperm.xlu0 %9038, %v8777
          %v9040 = vpop.permute.xlu0 %9039
          %9042 = vset.pattern.permute.xlu0 1
          %9043 = vperm.xlu0 %9042, %v8778
          %v9044 = vpop.permute.xlu0 %9043
          %9046 = vset.pattern.permute.xlu0 1
          %9047 = vperm.xlu0 %9046, %v8779
          %v9048 = vpop.permute.xlu0 %9047
          %9050 = vset.pattern.permute.xlu0 1
          %9051 = vperm.xlu0 %9050, %v8780
          %v9052 = vpop.permute.xlu0 %9051
          %9054 = vset.pattern.permute.xlu0 1
          %9055 = vperm.xlu0 %9054, %v8781
          %v9056 = vpop.permute.xlu0 %9055
          %9058 = vset.pattern.permute.xlu0 1
          %9059 = vperm.xlu0 %9058, %v8782
          %v9060 = vpop.permute.xlu0 %9059
          %9062 = vset.pattern.permute.xlu0 1
          %9063 = vperm.xlu0 %9062, %v8783
          %v9064 = vpop.permute.xlu0 %9063
          %9066 = vset.pattern.permute.xlu0 1
          %9067 = vperm.xlu0 %9066, %v8784
          %v9068 = vpop.permute.xlu0 %9067
          %9070 = vset.pattern.permute.xlu0 1
          %9071 = vperm.xlu0 %9070, %v8785
          %v9072 = vpop.permute.xlu0 %9071
          %9074 = vset.pattern.permute.xlu0 2
          %9075 = vperm.xlu0 %9074, %v8754
          %v9076 = vpop.permute.xlu0 %9075
          %9078 = vset.pattern.permute.xlu0 2
          %9079 = vperm.xlu0 %9078, %v8755
          %v9080 = vpop.permute.xlu0 %9079
          %9082 = vset.pattern.permute.xlu0 2
          %9083 = vperm.xlu0 %9082, %v8756
          %v9084 = vpop.permute.xlu0 %9083
          %9086 = vset.pattern.permute.xlu0 2
          %9087 = vperm.xlu0 %9086, %v8757
          %v9088 = vpop.permute.xlu0 %9087
          %9090 = vset.pattern.permute.xlu0 2
          %9091 = vperm.xlu0 %9090, %v8758
          %v9092 = vpop.permute.xlu0 %9091
          %9094 = vset.pattern.permute.xlu0 2
          %9095 = vperm.xlu0 %9094, %v8759
          %v9096 = vpop.permute.xlu0 %9095
          %9098 = vset.pattern.permute.xlu0 2
          %9099 = vperm.xlu0 %9098, %v8760
          %v9100 = vpop.permute.xlu0 %9099
          %9102 = vset.pattern.permute.xlu0 2
          %9103 = vperm.xlu0 %9102, %v8761
          %v9104 = vpop.permute.xlu0 %9103
          %9106 = vset.pattern.permute.xlu0 2
          %9107 = vperm.xlu0 %9106, %v8762
          %v9108 = vpop.permute.xlu0 %9107
          %9110 = vset.pattern.permute.xlu0 2
          %9111 = vperm.xlu0 %9110, %v8763
          %v9112 = vpop.permute.xlu0 %9111
          %9114 = vset.pattern.permute.xlu0 2
          %9115 = vperm.xlu0 %9114, %v8764
          %v9116 = vpop.permute.xlu0 %9115
          %9118 = vset.pattern.permute.xlu0 2
          %9119 = vperm.xlu0 %9118, %v8765
          %v9120 = vpop.permute.xlu0 %9119
          %9122 = vset.pattern.permute.xlu0 2
          %9123 = vperm.xlu0 %9122, %v8766
          %v9124 = vpop.permute.xlu0 %9123
          %9126 = vset.pattern.permute.xlu0 2
          %9127 = vperm.xlu0 %9126, %v8767
          %v9128 = vpop.permute.xlu0 %9127
          %9130 = vset.pattern.permute.xlu0 2
          %9131 = vperm.xlu0 %9130, %v8768
          %v9132 = vpop.permute.xlu0 %9131
          %9134 = vset.pattern.permute.xlu0 2
          %9135 = vperm.xlu0 %9134, %v8769
          %v9136 = vpop.permute.xlu0 %9135
          %9138 = vset.pattern.permute.xlu0 2
          %9139 = vperm.xlu0 %9138, %v8770
          %v9140 = vpop.permute.xlu0 %9139
          %9142 = vset.pattern.permute.xlu0 2
          %9143 = vperm.xlu0 %9142, %v8771
          %v9144 = vpop.permute.xlu0 %9143
          %9146 = vset.pattern.permute.xlu0 2
          %9147 = vperm.xlu0 %9146, %v8772
          %v9148 = vpop.permute.xlu0 %9147
          %9150 = vset.pattern.permute.xlu0 2
          %9151 = vperm.xlu0 %9150, %v8773
          %v9152 = vpop.permute.xlu0 %9151
          %9154 = vset.pattern.permute.xlu0 2
          %9155 = vperm.xlu0 %9154, %v8774
          %v9156 = vpop.permute.xlu0 %9155
          %9158 = vset.pattern.permute.xlu0 2
          %9159 = vperm.xlu0 %9158, %v8775
          %v9160 = vpop.permute.xlu0 %9159
          %9162 = vset.pattern.permute.xlu0 2
          %9163 = vperm.xlu0 %9162, %v8776
          %v9164 = vpop.permute.xlu0 %9163
          %9166 = vset.pattern.permute.xlu0 2
          %9167 = vperm.xlu0 %9166, %v8777
          %v9168 = vpop.permute.xlu0 %9167
          %9170 = vset.pattern.permute.xlu0 2
          %9171 = vperm.xlu0 %9170, %v8778
          %v9172 = vpop.permute.xlu0 %9171
          %9174 = vset.pattern.permute.xlu0 2
          %9175 = vperm.xlu0 %9174, %v8779
          %v9176 = vpop.permute.xlu0 %9175
          %9178 = vset.pattern.permute.xlu0 2
          %9179 = vperm.xlu0 %9178, %v8780
          %v9180 = vpop.permute.xlu0 %9179
          %9182 = vset.pattern.permute.xlu0 2
          %9183 = vperm.xlu0 %9182, %v8781
          %v9184 = vpop.permute.xlu0 %9183
          %9186 = vset.pattern.permute.xlu0 2
          %9187 = vperm.xlu0 %9186, %v8782
          %v9188 = vpop.permute.xlu0 %9187
          %9190 = vset.pattern.permute.xlu0 2
          %9191 = vperm.xlu0 %9190, %v8783
          %v9192 = vpop.permute.xlu0 %9191
          %9194 = vset.pattern.permute.xlu0 2
          %9195 = vperm.xlu0 %9194, %v8784
          %v9196 = vpop.permute.xlu0 %9195
          %9198 = vset.pattern.permute.xlu0 2
          %9199 = vperm.xlu0 %9198, %v8785
          %v9200 = vpop.permute.xlu0 %9199
          %9202 = vset.pattern.permute.xlu0 3
          %9203 = vperm.xlu0 %9202, %v8754
          %v9204 = vpop.permute.xlu0 %9203
          %9206 = vset.pattern.permute.xlu0 3
          %9207 = vperm.xlu0 %9206, %v8755
          %v9208 = vpop.permute.xlu0 %9207
          %9210 = vset.pattern.permute.xlu0 3
          %9211 = vperm.xlu0 %9210, %v8756
          %v9212 = vpop.permute.xlu0 %9211
          %9214 = vset.pattern.permute.xlu0 3
          %9215 = vperm.xlu0 %9214, %v8757
          %v9216 = vpop.permute.xlu0 %9215
          %9218 = vset.pattern.permute.xlu0 3
          %9219 = vperm.xlu0 %9218, %v8758
          %v9220 = vpop.permute.xlu0 %9219
          %9222 = vset.pattern.permute.xlu0 3
          %9223 = vperm.xlu0 %9222, %v8759
          %v9224 = vpop.permute.xlu0 %9223
          %9226 = vset.pattern.permute.xlu0 3
          %9227 = vperm.xlu0 %9226, %v8760
          %v9228 = vpop.permute.xlu0 %9227
          %9230 = vset.pattern.permute.xlu0 3
          %9231 = vperm.xlu0 %9230, %v8761
          %v9232 = vpop.permute.xlu0 %9231
          %9234 = vset.pattern.permute.xlu0 3
          %9235 = vperm.xlu0 %9234, %v8762
          %v9236 = vpop.permute.xlu0 %9235
          %9238 = vset.pattern.permute.xlu0 3
          %9239 = vperm.xlu0 %9238, %v8763
          %v9240 = vpop.permute.xlu0 %9239
          %9242 = vset.pattern.permute.xlu0 3
          %9243 = vperm.xlu0 %9242, %v8764
          %v9244 = vpop.permute.xlu0 %9243
          %9246 = vset.pattern.permute.xlu0 3
          %9247 = vperm.xlu0 %9246, %v8765
          %v9248 = vpop.permute.xlu0 %9247
          %9250 = vset.pattern.permute.xlu0 3
          %9251 = vperm.xlu0 %9250, %v8766
          %v9252 = vpop.permute.xlu0 %9251
          %9254 = vset.pattern.permute.xlu0 3
          %9255 = vperm.xlu0 %9254, %v8767
          %v9256 = vpop.permute.xlu0 %9255
          %9258 = vset.pattern.permute.xlu0 3
          %9259 = vperm.xlu0 %9258, %v8768
          %v9260 = vpop.permute.xlu0 %9259
          %9262 = vset.pattern.permute.xlu0 3
          %9263 = vperm.xlu0 %9262, %v8769
          %v9264 = vpop.permute.xlu0 %9263
          %9266 = vset.pattern.permute.xlu0 3
          %9267 = vperm.xlu0 %9266, %v8770
          %v9268 = vpop.permute.xlu0 %9267
          %9270 = vset.pattern.permute.xlu0 3
          %9271 = vperm.xlu0 %9270, %v8771
          %v9272 = vpop.permute.xlu0 %9271
          %9274 = vset.pattern.permute.xlu0 3
          %9275 = vperm.xlu0 %9274, %v8772
          %v9276 = vpop.permute.xlu0 %9275
          %9278 = vset.pattern.permute.xlu0 3
          %9279 = vperm.xlu0 %9278, %v8773
          %v9280 = vpop.permute.xlu0 %9279
          %9282 = vset.pattern.permute.xlu0 3
          %9283 = vperm.xlu0 %9282, %v8774
          %v9284 = vpop.permute.xlu0 %9283
          %9286 = vset.pattern.permute.xlu0 3
          %9287 = vperm.xlu0 %9286, %v8775
          %v9288 = vpop.permute.xlu0 %9287
          %9290 = vset.pattern.permute.xlu0 3
          %9291 = vperm.xlu0 %9290, %v8776
          %v9292 = vpop.permute.xlu0 %9291
          %9294 = vset.pattern.permute.xlu0 3
          %9295 = vperm.xlu0 %9294, %v8777
          %v9296 = vpop.permute.xlu0 %9295
          %9298 = vset.pattern.permute.xlu0 3
          %9299 = vperm.xlu0 %9298, %v8778
          %v9300 = vpop.permute.xlu0 %9299
          %9302 = vset.pattern.permute.xlu0 3
          %9303 = vperm.xlu0 %9302, %v8779
          %v9304 = vpop.permute.xlu0 %9303
          %9306 = vset.pattern.permute.xlu0 3
          %9307 = vperm.xlu0 %9306, %v8780
          %v9308 = vpop.permute.xlu0 %9307
          %9310 = vset.pattern.permute.xlu0 3
          %9311 = vperm.xlu0 %9310, %v8781
          %v9312 = vpop.permute.xlu0 %9311
          %9314 = vset.pattern.permute.xlu0 3
          %9315 = vperm.xlu0 %9314, %v8782
          %v9316 = vpop.permute.xlu0 %9315
          %9318 = vset.pattern.permute.xlu0 3
          %9319 = vperm.xlu0 %9318, %v8783
          %v9320 = vpop.permute.xlu0 %9319
          %9322 = vset.pattern.permute.xlu0 3
          %9323 = vperm.xlu0 %9322, %v8784
          %v9324 = vpop.permute.xlu0 %9323
          %9326 = vset.pattern.permute.xlu0 3
          %9327 = vperm.xlu0 %9326, %v8785
          %v9328 = vpop.permute.xlu0 %9327
          %v9330 = vsel %vm1019, %v8789, %v8948
          %v9331 = vsel %vm1019, %v8794, %v8952
          %v9332 = vsel %vm1019, %v8799, %v8956
          %v9333 = vsel %vm1019, %v8804, %v8960
          %v9334 = vsel %vm1019, %v8809, %v8964
          %v9335 = vsel %vm1019, %v8814, %v8968
          %v9336 = vsel %vm1019, %v8819, %v8972
          %v9337 = vsel %vm1019, %v8824, %v8976
          %v9338 = vsel %vm1019, %v8829, %v8980
          %v9339 = vsel %vm1019, %v8834, %v8984
          %v9340 = vsel %vm1019, %v8839, %v8988
          %v9341 = vsel %vm1019, %v8844, %v8992
          %v9342 = vsel %vm1019, %v8849, %v8996
          %v9343 = vsel %vm1019, %v8854, %v9000
          %v9344 = vsel %vm1019, %v8859, %v9004
          %v9345 = vsel %vm1019, %v8864, %v9008
          %v9346 = vsel %vm1019, %v8869, %v9012
          %v9347 = vsel %vm1019, %v8874, %v9016
          %v9348 = vsel %vm1019, %v8879, %v9020
          %v9349 = vsel %vm1019, %v8884, %v9024
          %v9350 = vsel %vm1019, %v8889, %v9028
          %v9351 = vsel %vm1019, %v8894, %v9032
          %v9352 = vsel %vm1019, %v8899, %v9036
          %v9353 = vsel %vm1019, %v8904, %v9040
          %v9354 = vsel %vm1019, %v8909, %v9044
          %v9355 = vsel %vm1019, %v8914, %v9048
          %v9356 = vsel %vm1019, %v8919, %v9052
          %v9357 = vsel %vm1019, %v8924, %v9056
          %v9358 = vsel %vm1019, %v8929, %v9060
          %v9359 = vsel %vm1019, %v8934, %v9064
          %v9360 = vsel %vm1019, %v8939, %v9068
          %v9361 = vsel %vm1019, %v8944, %v9072
          %v9362 = vsel %vm1019, %v9076, %v9204
          %v9363 = vsel %vm1019, %v9080, %v9208
          %v9364 = vsel %vm1019, %v9084, %v9212
          %v9365 = vsel %vm1019, %v9088, %v9216
          %v9366 = vsel %vm1019, %v9092, %v9220
          %v9367 = vsel %vm1019, %v9096, %v9224
          %v9368 = vsel %vm1019, %v9100, %v9228
          %v9369 = vsel %vm1019, %v9104, %v9232
          %v9370 = vsel %vm1019, %v9108, %v9236
          %v9371 = vsel %vm1019, %v9112, %v9240
          %v9372 = vsel %vm1019, %v9116, %v9244
          %v9373 = vsel %vm1019, %v9120, %v9248
          %v9374 = vsel %vm1019, %v9124, %v9252
          %v9375 = vsel %vm1019, %v9128, %v9256
          %v9376 = vsel %vm1019, %v9132, %v9260
          %v9377 = vsel %vm1019, %v9136, %v9264
          %v9378 = vsel %vm1019, %v9140, %v9268
          %v9379 = vsel %vm1019, %v9144, %v9272
          %v9380 = vsel %vm1019, %v9148, %v9276
          %v9381 = vsel %vm1019, %v9152, %v9280
          %v9382 = vsel %vm1019, %v9156, %v9284
          %v9383 = vsel %vm1019, %v9160, %v9288
          %v9384 = vsel %vm1019, %v9164, %v9292
          %v9385 = vsel %vm1019, %v9168, %v9296
          %v9386 = vsel %vm1019, %v9172, %v9300
          %v9387 = vsel %vm1019, %v9176, %v9304
          %v9388 = vsel %vm1019, %v9180, %v9308
          %v9389 = vsel %vm1019, %v9184, %v9312
          %v9390 = vsel %vm1019, %v9188, %v9316
          %v9391 = vsel %vm1019, %v9192, %v9320
          %v9392 = vsel %vm1019, %v9196, %v9324
          %v9393 = vsel %vm1019, %v9200, %v9328
          %v9394 = vld [vmem:[#allocation4] sm:$0xff]
          %v9395 = vld [vmem:[#allocation4 + $0x8] sm:$0xff]
          %v9396 = vld [vmem:[#allocation4 + $0x10] sm:$0xff]
          %v9397 = vld [vmem:[#allocation4 + $0x18] sm:$0xff]
          %v9398 = vld [vmem:[#allocation4 + $0x20] sm:$0xff]
          %v9399 = vld [vmem:[#allocation4 + $0x28] sm:$0xff]
          %v9400 = vld [vmem:[#allocation4 + $0x30] sm:$0xff]
          %v9401 = vld [vmem:[#allocation4 + $0x38] sm:$0xff]
          %v9402 = vld [vmem:[#allocation4 + $0x40] sm:$0xff]
          %v9403 = vld [vmem:[#allocation4 + $0x48] sm:$0xff]
          %v9404 = vld [vmem:[#allocation4 + $0x50] sm:$0xff]
          %v9405 = vld [vmem:[#allocation4 + $0x58] sm:$0xff]
          %v9406 = vld [vmem:[#allocation4 + $0x60] sm:$0xff]
          %v9407 = vld [vmem:[#allocation4 + $0x68] sm:$0xff]
          %v9408 = vld [vmem:[#allocation4 + $0x70] sm:$0xff]
          %v9409 = vld [vmem:[#allocation4 + $0x78] sm:$0xff]
          %v9410 = vld [vmem:[#allocation4 + $0x80] sm:$0xff]
          %v9411 = vld [vmem:[#allocation4 + $0x88] sm:$0xff]
          %v9412 = vld [vmem:[#allocation4 + $0x90] sm:$0xff]
          %v9413 = vld [vmem:[#allocation4 + $0x98] sm:$0xff]
          %v9414 = vld [vmem:[#allocation4 + $0xa0] sm:$0xff]
          %v9415 = vld [vmem:[#allocation4 + $0xa8] sm:$0xff]
          %v9416 = vld [vmem:[#allocation4 + $0xb0] sm:$0xff]
          %v9417 = vld [vmem:[#allocation4 + $0xb8] sm:$0xff]
          %v9418 = vld [vmem:[#allocation4 + $0xc0] sm:$0xff]
          %v9419 = vld [vmem:[#allocation4 + $0xc8] sm:$0xff]
          %v9420 = vld [vmem:[#allocation4 + $0xd0] sm:$0xff]
          %v9421 = vld [vmem:[#allocation4 + $0xd8] sm:$0xff]
          %v9422 = vld [vmem:[#allocation4 + $0xe0] sm:$0xff]
          %v9423 = vld [vmem:[#allocation4 + $0xe8] sm:$0xff]
          %v9424 = vld [vmem:[#allocation4 + $0xf0] sm:$0xff]
          %v9425 = vld [vmem:[#allocation4 + $0xf8] sm:$0xff]
          %v9426 = vld [vmem:[#allocation4 + $0x100] sm:$0xff]
          %v9427 = vld [vmem:[#allocation4 + $0x108] sm:$0xff]
          %v9428 = vld [vmem:[#allocation4 + $0x110] sm:$0xff]
          %v9429 = vld [vmem:[#allocation4 + $0x118] sm:$0xff]
          %v9430 = vld [vmem:[#allocation4 + $0x120] sm:$0xff]
          %v9431 = vld [vmem:[#allocation4 + $0x128] sm:$0xff]
          %v9432 = vld [vmem:[#allocation4 + $0x130] sm:$0xff]
          %v9433 = vld [vmem:[#allocation4 + $0x138] sm:$0xff]
          %v9434 = vld [vmem:[#allocation4 + $0x140] sm:$0xff]
          %v9435 = vld [vmem:[#allocation4 + $0x148] sm:$0xff]
          %v9436 = vld [vmem:[#allocation4 + $0x150] sm:$0xff]
          %v9437 = vld [vmem:[#allocation4 + $0x158] sm:$0xff]
          %v9438 = vld [vmem:[#allocation4 + $0x160] sm:$0xff]
          %v9439 = vld [vmem:[#allocation4 + $0x168] sm:$0xff]
          %v9440 = vld [vmem:[#allocation4 + $0x170] sm:$0xff]
          %v9441 = vld [vmem:[#allocation4 + $0x178] sm:$0xff]
          %v9442 = vld [vmem:[#allocation4 + $0x180] sm:$0xff]
          %v9443 = vld [vmem:[#allocation4 + $0x188] sm:$0xff]
          %v9444 = vld [vmem:[#allocation4 + $0x190] sm:$0xff]
          %v9445 = vld [vmem:[#allocation4 + $0x198] sm:$0xff]
          %v9446 = vld [vmem:[#allocation4 + $0x1a0] sm:$0xff]
          %v9447 = vld [vmem:[#allocation4 + $0x1a8] sm:$0xff]
          %v9448 = vld [vmem:[#allocation4 + $0x1b0] sm:$0xff]
          %v9449 = vld [vmem:[#allocation4 + $0x1b8] sm:$0xff]
          %v9450 = vld [vmem:[#allocation4 + $0x1c0] sm:$0xff]
          %v9451 = vld [vmem:[#allocation4 + $0x1c8] sm:$0xff]
          %v9452 = vld [vmem:[#allocation4 + $0x1d0] sm:$0xff]
          %v9453 = vld [vmem:[#allocation4 + $0x1d8] sm:$0xff]
          %v9454 = vld [vmem:[#allocation4 + $0x1e0] sm:$0xff]
          %v9455 = vld [vmem:[#allocation4 + $0x1e8] sm:$0xff]
          %v9456 = vld [vmem:[#allocation4 + $0x1f0] sm:$0xff]
          %v9457 = vld [vmem:[#allocation4 + $0x1f8] sm:$0xff]
          %v9458 = vmul.f32 %v9394, %v9330
          %v9459 = vmul.f32 %v9395, %v9362
          %v9460 = vmul.f32 %v9396, %v9331
          %v9461 = vmul.f32 %v9397, %v9363
          %v9462 = vmul.f32 %v9398, %v9332
          %v9463 = vmul.f32 %v9399, %v9364
          %v9464 = vmul.f32 %v9400, %v9333
          %v9465 = vmul.f32 %v9401, %v9365
          %v9466 = vmul.f32 %v9402, %v9334
          %v9467 = vmul.f32 %v9403, %v9366
          %v9468 = vmul.f32 %v9404, %v9335
          %v9469 = vmul.f32 %v9405, %v9367
          %v9470 = vmul.f32 %v9406, %v9336
          %v9471 = vmul.f32 %v9407, %v9368
          %v9472 = vmul.f32 %v9408, %v9337
          %v9473 = vmul.f32 %v9409, %v9369
          %v9474 = vmul.f32 %v9410, %v9338
          %v9475 = vmul.f32 %v9411, %v9370
          %v9476 = vmul.f32 %v9412, %v9339
          %v9477 = vmul.f32 %v9413, %v9371
          %v9478 = vmul.f32 %v9414, %v9340
          %v9479 = vmul.f32 %v9415, %v9372
          %v9480 = vmul.f32 %v9416, %v9341
          %v9481 = vmul.f32 %v9417, %v9373
          %v9482 = vmul.f32 %v9418, %v9342
          %v9483 = vmul.f32 %v9419, %v9374
          %v9484 = vmul.f32 %v9420, %v9343
          %v9485 = vmul.f32 %v9421, %v9375
          %v9486 = vmul.f32 %v9422, %v9344
          %v9487 = vmul.f32 %v9423, %v9376
          %v9488 = vmul.f32 %v9424, %v9345
          %v9489 = vmul.f32 %v9425, %v9377
          %v9490 = vmul.f32 %v9426, %v9346
          %v9491 = vmul.f32 %v9427, %v9378
          %v9492 = vmul.f32 %v9428, %v9347
          %v9493 = vmul.f32 %v9429, %v9379
          %v9494 = vmul.f32 %v9430, %v9348
          %v9495 = vmul.f32 %v9431, %v9380
          %v9496 = vmul.f32 %v9432, %v9349
          %v9497 = vmul.f32 %v9433, %v9381
          %v9498 = vmul.f32 %v9434, %v9350
          %v9499 = vmul.f32 %v9435, %v9382
          %v9500 = vmul.f32 %v9436, %v9351
          %v9501 = vmul.f32 %v9437, %v9383
          %v9502 = vmul.f32 %v9438, %v9352
          %v9503 = vmul.f32 %v9439, %v9384
          %v9504 = vmul.f32 %v9440, %v9353
          %v9505 = vmul.f32 %v9441, %v9385
          %v9506 = vmul.f32 %v9442, %v9354
          %v9507 = vmul.f32 %v9443, %v9386
          %v9508 = vmul.f32 %v9444, %v9355
          %v9509 = vmul.f32 %v9445, %v9387
          %v9510 = vmul.f32 %v9446, %v9356
          %v9511 = vmul.f32 %v9447, %v9388
          %v9512 = vmul.f32 %v9448, %v9357
          %v9513 = vmul.f32 %v9449, %v9389
          %v9514 = vmul.f32 %v9450, %v9358
          %v9515 = vmul.f32 %v9451, %v9390
          %v9516 = vmul.f32 %v9452, %v9359
          %v9517 = vmul.f32 %v9453, %v9391
          %v9518 = vmul.f32 %v9454, %v9360
          %v9519 = vmul.f32 %v9455, %v9392
          %v9520 = vmul.f32 %v9456, %v9361
          %v9521 = vmul.f32 %v9457, %v9393
          %v9522 = vpack.c.bf16 %v9459, %v9458
          %v9523 = vpack.c.bf16 %v9461, %v9460
          %v9524 = vpack.c.bf16 %v9463, %v9462
          %v9525 = vpack.c.bf16 %v9465, %v9464
          %v9526 = vpack.c.bf16 %v9467, %v9466
          %v9527 = vpack.c.bf16 %v9469, %v9468
          %v9528 = vpack.c.bf16 %v9471, %v9470
          %v9529 = vpack.c.bf16 %v9473, %v9472
          %v9530 = vpack.c.bf16 %v9475, %v9474
          %v9531 = vpack.c.bf16 %v9477, %v9476
          %v9532 = vpack.c.bf16 %v9479, %v9478
          %v9533 = vpack.c.bf16 %v9481, %v9480
          %v9534 = vpack.c.bf16 %v9483, %v9482
          %v9535 = vpack.c.bf16 %v9485, %v9484
          %v9536 = vpack.c.bf16 %v9487, %v9486
          %v9537 = vpack.c.bf16 %v9489, %v9488
          %v9538 = vpack.c.bf16 %v9491, %v9490
          %v9539 = vpack.c.bf16 %v9493, %v9492
          %v9540 = vpack.c.bf16 %v9495, %v9494
          %v9541 = vpack.c.bf16 %v9497, %v9496
          %v9542 = vpack.c.bf16 %v9499, %v9498
          %v9543 = vpack.c.bf16 %v9501, %v9500
          %v9544 = vpack.c.bf16 %v9503, %v9502
          %v9545 = vpack.c.bf16 %v9505, %v9504
          %v9546 = vpack.c.bf16 %v9507, %v9506
          %v9547 = vpack.c.bf16 %v9509, %v9508
          %v9548 = vpack.c.bf16 %v9511, %v9510
          %v9549 = vpack.c.bf16 %v9513, %v9512
          %v9550 = vpack.c.bf16 %v9515, %v9514
          %v9551 = vpack.c.bf16 %v9517, %v9516
          %v9552 = vpack.c.bf16 %v9519, %v9518
          %v9553 = vpack.c.bf16 %v9521, %v9520
          %9554 = vst [vmem:[%s305] sm:$0xff] %v9522
          %9555 = vst [vmem:[%s305 + $0x8] sm:$0xff] %v9523
          %9556 = vst [vmem:[%s305 + $0x10] sm:$0xff] %v9524
          %9557 = vst [vmem:[%s305 + $0x18] sm:$0xff] %v9525
          %9558 = vst [vmem:[%s305 + $0x20] sm:$0xff] %v9526
          %9559 = vst [vmem:[%s305 + $0x28] sm:$0xff] %v9527
          %9560 = vst [vmem:[%s305 + $0x30] sm:$0xff] %v9528
          %9561 = vst [vmem:[%s305 + $0x38] sm:$0xff] %v9529
          %9562 = vst [vmem:[%s305 + $0x40] sm:$0xff] %v9530
          %9563 = vst [vmem:[%s305 + $0x48] sm:$0xff] %v9531
          %9564 = vst [vmem:[%s305 + $0x50] sm:$0xff] %v9532
          %9565 = vst [vmem:[%s305 + $0x58] sm:$0xff] %v9533
          %9566 = vst [vmem:[%s305 + $0x60] sm:$0xff] %v9534
          %9567 = vst [vmem:[%s305 + $0x68] sm:$0xff] %v9535
          %9568 = vst [vmem:[%s305 + $0x70] sm:$0xff] %v9536
          %9569 = vst [vmem:[%s305 + $0x78] sm:$0xff] %v9537
          %9570 = vst [vmem:[%s305 + $0x80] sm:$0xff] %v9538
          %9571 = vst [vmem:[%s305 + $0x88] sm:$0xff] %v9539
          %9572 = vst [vmem:[%s305 + $0x90] sm:$0xff] %v9540
          %9573 = vst [vmem:[%s305 + $0x98] sm:$0xff] %v9541
          %9574 = vst [vmem:[%s305 + $0xa0] sm:$0xff] %v9542
          %9575 = vst [vmem:[%s305 + $0xa8] sm:$0xff] %v9543
          %9576 = vst [vmem:[%s305 + $0xb0] sm:$0xff] %v9544
          %9577 = vst [vmem:[%s305 + $0xb8] sm:$0xff] %v9545
          %9578 = vst [vmem:[%s305 + $0xc0] sm:$0xff] %v9546
          %9579 = vst [vmem:[%s305 + $0xc8] sm:$0xff] %v9547
          %9580 = vst [vmem:[%s305 + $0xd0] sm:$0xff] %v9548
          %9581 = vst [vmem:[%s305 + $0xd8] sm:$0xff] %v9549
          %9582 = vst [vmem:[%s305 + $0xe0] sm:$0xff] %v9550
          %9583 = vst [vmem:[%s305 + $0xe8] sm:$0xff] %v9551
          %9584 = vst [vmem:[%s305 + $0xf0] sm:$0xff] %v9552
          %9585 = vst [vmem:[%s305 + $0xf8] sm:$0xff] %v9553
        $region52: #{tpu_custom_call.1} parent=31 // pred_fallthru
          _
        %s9586 = sand.u32 %s136, 1
        %s9587 = scalar_lea.sflag [#allocation8], %s9586
        %s9588 = sand.u32 %s136, 1
        %s9589 = smul.addr %s9588, 256
        %s9590 = scalar_lea.vmem [#allocation12], %s9589
        // Predicated region
        $region53: #{tpu_custom_call.1} parent=31 // pred_check
          %p9591 = pneg %p146
        $region54: #{tpu_custom_call.1} parent=31 // pred_check_branch
          %9593 = sbr.rel (%p9591) target = $region56
        $region55: #{tpu_custom_call.1} parent=31 // pred_region
          %s9594 = smul.u32 32, %s29
          %9596 = vsyncadd %s9587, 0
          %s9597 = smul.addr %s9594, 2
          %s9598 = smul.addr %s28, 64
          %s9599 = sadd.s32 %s9597, %s9598
          %s9600 = smul.addr %s9599, 4
          %s9601 = scalar_lea.hbm %s3, %s9600
          %s9602 = sshll.u32 %s9590, 4
          %s9603 = int_to_ptr.vmem [resolvable:$true] %s9602
          %s9604 = sshll.u32 %s9601, 4
          %s9605 = int_to_ptr.hbm [resolvable:$true] %s9604
          %9610 = dma.vmem_to_hbm [thread:$0]  %s9603, 4096, %s9605, %s9587, 128, 128, 8
        $region56: #{tpu_custom_call.1} parent=31 // pred_fallthru
          _
      $region32: #{tpu_custom_call.1} parent=5 // pred_fallthru
        _
      %p9611 = scmp.le.s32.totalorder 2, %s18
      // Predicated region
      $region57: #{tpu_custom_call.1} parent=5 // pred_check
        %p9612 = pneg %p9611
      $region58: #{tpu_custom_call.1} parent=5 // pred_check_branch
        %9614 = sbr.rel (%p9612) target = $region60
      $region59: #{tpu_custom_call.1} parent=5 // pred_region
        %s9615 = ssub.s32 %s18, 2
        // Predicated region
        $region61: #{tpu_custom_call.1} parent=59 // pred_check
          %p9616 = pneg %p152
        $region62: #{tpu_custom_call.1} parent=59 // pred_check_branch
          %9618 = sbr.rel (%p9616) target = $region64
        $region63: #{tpu_custom_call.1} parent=59 // pred_region
          %s9619 = sand.u32 %s137, 1
          %s9620 = scalar_lea.sflag [#allocation8], %s9619
          %s9621 = sand.u32 %s137, 1
          %s9622 = smul.addr %s9621, 256
          %s9623 = scalar_lea.vmem [#allocation12], %s9622
          %9625 = dma.done %s9620, 4096
        $region64: #{tpu_custom_call.1} parent=59 // pred_fallthru
          _
      $region60: #{tpu_custom_call.1} parent=5 // pred_fallthru
        _
    $region6: #{tpu_custom_call.1} parent=1 // loop_footer
      %s22 = sadd.s32 1, %s18
    $region7: #{tpu_custom_call.1} parent=1 // loop_footer_branch
      %17 = sbr.rel target = $region3
    $region8: #{tpu_custom_call.1} parent=1 // loop_exit
      _
    %9626 = vsyncpa [#allocation7], 1
    %s9627 = scalar_lea.sflag [#allocation7], 1
    %9628 = vsyncpa %s9627, 1
    %9629 = vsyncpa [#allocation10], 1
    %s9630 = scalar_lea.sflag [#allocation10], 1
    %9631 = vsyncpa %s9630, 1
    %9632 = vsyncpa [#allocation8], 1
    %s9633 = scalar_lea.sflag [#allocation8], 1
    %9634 = vsyncpa %s9633, 1

</llo_original>
